<compile_context>
chip_gen: v7x
topology: tpu7x:2x2x1
jax: 0.10.0
libtpu: 0.0.40
codegen_flags: <defaults>
</compile_context>

<pallas_src>
import functools

import jax
import jax.numpy as jnp
from jax.experimental import pallas as pl
from jax.experimental.pallas import tpu as pltpu


# ---------------------------------------------------------------------------
# Fused GEMM kernel: y = x @ w + b, optional relu, optional dropout mask.
# Grid = (M-tiles, N-tiles, K-tiles); K innermost ("arbitrary") with a VMEM
# f32 accumulator keyed to the (tm, tn) output block.
# ---------------------------------------------------------------------------
def _gemm_kernel(*refs, relu, has_mask):
    if has_mask:
        x_ref, w_ref, b_ref, m_ref, o_ref, acc_ref = refs
    else:
        x_ref, w_ref, b_ref, o_ref, acc_ref = refs
        m_ref = None

    k = pl.program_id(2)

    @pl.when(k == 0)
    def _():
        acc_ref[...] = jnp.zeros_like(acc_ref)

    acc_ref[...] += jnp.dot(x_ref[...], w_ref[...],
                            preferred_element_type=jnp.float32)

    @pl.when(k == pl.num_programs(2) - 1)
    def _():
        r = acc_ref[...] + b_ref[...]
        if relu:
            r = jnp.maximum(r, 0.0)
        if m_ref is not None:
            # dropout epilogue: mask holds {0.0, 2.0} (keep * 1/(1-p), p=0.5)
            r = r * m_ref[...]
        o_ref[...] = r.astype(o_ref.dtype)


def matmul_bias(x, w, b, *, relu=False, dropout_mask=None,
                tm=None, tn=None, tk=None):
    """y = x @ w + b (optional relu / dropout epilogue).  x:(M,K), w:(K,N)."""
    M, K = x.shape
    K2, N = w.shape
    assert K == K2
    if tm is None or tm >= M:
        tm = M
    if tn is None or tn >= N:
        tn = N
    # K tiling must divide exactly (a padded K block would corrupt the sum);
    # fall back to full K otherwise (all shapes here keep full K small).
    if tk is None or K % tk != 0:
        tk = K
    nm, nn, nk = pl.cdiv(M, tm), pl.cdiv(N, tn), K // tk

    b2 = b.reshape(1, N).astype(jnp.float32)
    in_specs = [
        pl.BlockSpec((tm, tk), lambda i, j, k: (i, k)),
        pl.BlockSpec((tk, tn), lambda i, j, k: (k, j)),
        pl.BlockSpec((1, tn), lambda i, j, k: (0, j)),
    ]
    inputs = [x, w, b2]
    has_mask = dropout_mask is not None
    if has_mask:
        in_specs.append(pl.BlockSpec((tm, tn), lambda i, j, k: (i, j)))
        inputs.append(dropout_mask.astype(jnp.float32))

    kernel = functools.partial(_gemm_kernel, relu=relu, has_mask=has_mask)
    return pl.pallas_call(
        kernel,
        out_shape=jax.ShapeDtypeStruct((M, N), jnp.float32),
        grid_spec=pltpu.PrefetchScalarGridSpec(
            num_scalar_prefetch=0,
            grid=(nm, nn, nk),
            in_specs=in_specs,
            out_specs=pl.BlockSpec((tm, tn), lambda i, j, k: (i, j)),
            scratch_shapes=[pltpu.VMEM((tm, tn), jnp.float32)],
        ),
        compiler_params=pltpu.CompilerParams(
            dimension_semantics=("parallel", "parallel", "arbitrary")),
    )(*inputs)


# ---------------------------------------------------------------------------
# 2x2 max-pool: window decomposition is glue, the max reduction is a
# lane-dense Pallas kernel.
# ---------------------------------------------------------------------------
def _maxpool_reduce_kernel(x_ref, o_ref):
    o_ref[...] = jnp.maximum(jnp.maximum(x_ref[0], x_ref[1]),
                             jnp.maximum(x_ref[2], x_ref[3]))


def maxpool2x2(x_nhwc):
    B, H, W, C = x_nhwc.shape
    oh, ow = H // 2, W // 2
    stacked = jnp.stack(
        [x_nhwc[:, 0::2, 0::2, :],
         x_nhwc[:, 0::2, 1::2, :],
         x_nhwc[:, 1::2, 0::2, :],
         x_nhwc[:, 1::2, 1::2, :]], axis=0)       # (4, B, oh, ow, C)
    L = B * oh * ow * C
    # Lane-dense layout: last dim a multiple of 128 so stores are full vregs.
    lanes = 128 if L % 128 == 0 else C
    rows = L // lanes
    flat = stacked.reshape(4, rows, lanes)
    out = pl.pallas_call(
        _maxpool_reduce_kernel,
        out_shape=jax.ShapeDtypeStruct((rows, lanes), x_nhwc.dtype),
    )(flat)
    return out.reshape(B, oh, ow, C)


# ---------------------------------------------------------------------------
# Conv2d (valid padding, stride 1) as im2col + fused Pallas GEMM.
# ---------------------------------------------------------------------------
def _im2col(x_nhwc, kh, kw):
    B, H, W, C = x_nhwc.shape
    oh, ow = H - kh + 1, W - kw + 1
    cols = []
    for i in range(kh):
        for j in range(kw):
            cols.append(x_nhwc[:, i:i + oh, j:j + ow, :])
    p = jnp.stack(cols, axis=3)                       # (B, oh, ow, kh*kw, C)
    return p.reshape(B * oh * ow, kh * kw * C), (B, oh, ow)


def conv2d_valid(x_nhwc, w_ko, b, kh, kw, *, relu=False, tm=512):
    """w_ko is the pre-reshaped weight of shape (kh*kw*C_in, C_out)."""
    cols, (B, oh, ow) = _im2col(x_nhwc, kh, kw)
    O = w_ko.shape[1]
    y = matmul_bias(cols, w_ko, b, relu=relu, tm=min(tm, cols.shape[0]))
    return y.reshape(B, oh, ow, O)


# ---------------------------------------------------------------------------
# Parameters: torch-layout init + one-time prep (reshape / transpose / cast).
# ---------------------------------------------------------------------------
def init_params():
    key = jax.random.PRNGKey(42)
    k1, k2, k3, k4, k5, k6 = jax.random.split(key, 6)
    return {
        "w1": jax.random.normal(k1, (32, 1, 5, 5), jnp.float32) * 0.10,
        "b1": jax.random.normal(k2, (32,), jnp.float32) * 0.10,
        "w2": jax.random.normal(k3, (64, 32, 3, 3), jnp.float32) * 0.05,
        "b2": jax.random.normal(k4, (64,), jnp.float32) * 0.05,
        "wfc": jax.random.normal(k5, (1600, 4096), jnp.float32) * 0.02,  # torch Linear (out, in)
        "bfc": jax.random.normal(k6, (1600,), jnp.float32) * 0.02,
    }


def prepare_params(p):
    """One-time (outside jit) weight re-layout so the forward pass does none."""
    def conv_w(w_oihw):  # (O,I,kh,kw) -> (kh*kw*I, O), matching im2col order
        O = w_oihw.shape[0]
        return jnp.transpose(w_oihw, (2, 3, 1, 0)).reshape(-1, O).astype(jnp.float32)

    return {
        "w1": conv_w(p["w1"]), "b1": p["b1"].astype(jnp.float32),
        "w2": conv_w(p["w2"]), "b2": p["b2"].astype(jnp.float32),
        # fc1: pre-transposed to (4096, 1600), streamed in bf16 (fc1 is
        # weight-bandwidth bound); accumulation in the kernel remains f32.
        "wfc_t": p["wfc"].T.astype(jnp.bfloat16),
        "bfc": p["bfc"].astype(jnp.float32),
    }


# ---------------------------------------------------------------------------
# Full forward pass (matches torch LeNet.forward with training dropout).
# ---------------------------------------------------------------------------
def lenet_forward(x_nchw, params, dropout_key, *, training=True):
    x = jnp.transpose(x_nchw, (0, 2, 3, 1))                          # NCHW -> NHWC
    x = conv2d_valid(x, params["w1"], params["b1"], 5, 5, relu=False)  # (B,36,36,32)
    x = maxpool2x2(x)                                                # (B,18,18,32)
    x = conv2d_valid(x, params["w2"], params["b2"], 3, 3, relu=True)   # (B,16,16,64)
    x = maxpool2x2(x)                                                # (B, 8, 8,64)
    B = x.shape[0]
    # back to NCHW before flatten to match torch's view(-1, C*H*W) ordering
    x = jnp.transpose(x, (0, 3, 1, 2)).reshape(B, -1)                # (B, 4096)

    N = params["wfc_t"].shape[1]
    mask = None
    if training:
        # TODO(synk): RNG stream differs from torch; semantics match
        # F.dropout(p=0.5, training=True): drop prob 0.5, survivors scaled 2x.
        keep = jax.random.bernoulli(dropout_key, 0.5, (B, N))
        mask = keep.astype(jnp.float32) * 2.0

    # fc1 (+ fused dropout epilogue): bf16 operands, f32 accumulate.
    x = matmul_bias(x.astype(jnp.bfloat16), params["wfc_t"], params["bfc"],
                    relu=False, dropout_mask=mask, tm=B, tn=512, tk=1024)
    return x


if __name__ == "__main__":
    # Spatial size 40 is implied by fc1's in_features=4096 (64*8*8).
    x = jax.random.normal(jax.random.PRNGKey(0), (2, 1, 40, 40), jnp.float32)
    params = prepare_params(init_params())
    dropout_key = jax.random.PRNGKey(123)

    fwd = jax.jit(functools.partial(lenet_forward, training=True))
    out = fwd(x, params, dropout_key)
    out = jax.block_until_ready(out)

    assert out.shape == (2, 1600), out.shape
    assert out.dtype == jnp.float32
    assert bool(jnp.all(jnp.isfinite(out)))
    print("KERNEL_OK")
</pallas_src>

<mosaic_0001>
module attributes {stable_mosaic.version = 11 : i64} {
  func.func @_gemm_kernel(%arg0: i32, %arg1: i32, %arg2: i32, %arg3: memref<512x25xf32, #tpu.memory_space<vmem>>, %arg4: memref<25x32xf32, #tpu.memory_space<vmem>>, %arg5: memref<1x32xf32, #tpu.memory_space<vmem>>, %arg6: memref<512x32xf32, #tpu.memory_space<vmem>>, %arg7: memref<512x32xf32, #tpu.memory_space<vmem>>) attributes {dimension_semantics = [#tpu.dimension_semantics<parallel>, #tpu.dimension_semantics<parallel>, #tpu.dimension_semantics<arbitrary>], iteration_bounds = array<i64: 6, 1, 1>, scalar_prefetch = 0 : i64, scratch_operands = 1 : i64, tpu.core_type = #tpu.core_type<tc>, window_params = [{transform_indices = @transform_0, window_bounds = array<i64: 512, 25>}, {transform_indices = @transform_1, window_bounds = array<i64: 25, 32>}, {transform_indices = @transform_2, window_bounds = array<i64: 1, 32>}, {transform_indices = @transform_3, window_bounds = array<i64: 512, 32>}]} {
    %c0_i32 = arith.constant 0 : i32
    %0 = arith.cmpi eq, %arg2, %c0_i32 : i32
    %1 = arith.extui %0 : i1 to i32
    %c0_i32_0 = arith.constant 0 : i32
    %2 = arith.cmpi ne, %1, %c0_i32_0 : i32
    scf.if %2 {
      %cst_10 = arith.constant 0.000000e+00 : f32
      %12 = vector.broadcast %cst_10 : f32 to vector<512x32xf32>
      %c0_11 = arith.constant 0 : index
      %c0_12 = arith.constant 0 : index
      %13 = vector.load %arg7[%c0_11, %c0_12] : memref<512x32xf32, #tpu.memory_space<vmem>>, vector<512x32xf32>
      tpu.vector_store %arg7[%c0_11, %c0_12], %12 {strides = array<i32>} : memref<512x32xf32, #tpu.memory_space<vmem>>, vector<512x32xf32>,
    } else {
    }
    %c0 = arith.constant 0 : index
    %c0_1 = arith.constant 0 : index
    %3 = vector.load %arg7[%c0, %c0_1] : memref<512x32xf32, #tpu.memory_space<vmem>>, vector<512x32xf32>
    %c0_2 = arith.constant 0 : index
    %c0_3 = arith.constant 0 : index
    %4 = vector.load %arg3[%c0_2, %c0_3] : memref<512x25xf32, #tpu.memory_space<vmem>>, vector<512x25xf32>
    %c0_4 = arith.constant 0 : index
    %c0_5 = arith.constant 0 : index
    %5 = vector.load %arg4[%c0_4, %c0_5] : memref<25x32xf32, #tpu.memory_space<vmem>>, vector<25x32xf32>
    %cst = arith.constant dense<0.000000e+00> : vector<512x32xf32>
    %6 = tpu.matmul %4, %5, %cst {dimension_numbers = #tpu.dot_dimension_numbers<[1], [0], [0], [1], [0, 0, 1, 1], [], []>} : vector<512x25xf32>, vector<25x32xf32>, vector<512x32xf32> -> vector<512x32xf32>
    %7 = arith.addf %3, %6 : vector<512x32xf32>
    %c0_6 = arith.constant 0 : index
    %c0_7 = arith.constant 0 : index
    %8 = vector.load %arg7[%c0_6, %c0_7] : memref<512x32xf32, #tpu.memory_space<vmem>>, vector<512x32xf32>
    tpu.vector_store %arg7[%c0_6, %c0_7], %7 {strides = array<i32>} : memref<512x32xf32, #tpu.memory_space<vmem>>, vector<512x32xf32>,
    %c0_i32_8 = arith.constant 0 : i32
    %9 = arith.cmpi eq, %arg2, %c0_i32_8 : i32
    %10 = arith.extui %9 : i1 to i32
    %c0_i32_9 = arith.constant 0 : i32
    %11 = arith.cmpi ne, %10, %c0_i32_9 : i32
    scf.if %11 {
      %c0_10 = arith.constant 0 : index
      %c0_11 = arith.constant 0 : index
      %12 = vector.load %arg7[%c0_10, %c0_11] : memref<512x32xf32, #tpu.memory_space<vmem>>, vector<512x32xf32>
      %c0_12 = arith.constant 0 : index
      %c0_13 = arith.constant 0 : index
      %13 = vector.load %arg5[%c0_12, %c0_13] : memref<1x32xf32, #tpu.memory_space<vmem>>, vector<1x32xf32>
      %14 = vector.broadcast %13 : vector<1x32xf32> to vector<512x32xf32>
      %15 = arith.addf %12, %14 : vector<512x32xf32>
      %c0_14 = arith.constant 0 : index
      %c0_15 = arith.constant 0 : index
      %16 = vector.load %arg6[%c0_14, %c0_15] : memref<512x32xf32, #tpu.memory_space<vmem>>, vector<512x32xf32>
      tpu.vector_store %arg6[%c0_14, %c0_15], %15 {strides = array<i32>} : memref<512x32xf32, #tpu.memory_space<vmem>>, vector<512x32xf32>,
    } else {
    }
    return
  }
  func.func @transform_0(%arg0: i32, %arg1: i32, %arg2: i32) -> (i32, i32) {
    %c0_i32 = arith.constant 0 : i32
    return %arg0, %arg2 : i32, i32
  }
  func.func @transform_1(%arg0: i32, %arg1: i32, %arg2: i32) -> (i32, i32) {
    %c0_i32 = arith.constant 0 : i32
    return %arg2, %arg1 : i32, i32
  }
  func.func @transform_2(%arg0: i32, %arg1: i32, %arg2: i32) -> (i32, i32) {
    %c0_i32 = arith.constant 0 : i32
    %c0_i32_0 = arith.constant 0 : i32
    return %c0_i32, %arg1 : i32, i32
  }
  func.func @transform_3(%arg0: i32, %arg1: i32, %arg2: i32) -> (i32, i32) {
    %c0_i32 = arith.constant 0 : i32
    return %arg0, %arg1 : i32, i32
  }
}

module attributes {stable_mosaic.version = 11 : i64} {
  func.func @_maxpool_reduce_kernel(%arg0: memref<4x162x128xf32, #tpu.memory_space<vmem>>, %arg1: memref<162x128xf32, #tpu.memory_space<vmem>>) attributes {dimension_semantics = [], scalar_prefetch = 0 : i64, scratch_operands = 0 : i64, tpu.core_type = #tpu.core_type<tc>} {
    %c0 = arith.constant 0 : index
    %c0_0 = arith.constant 0 : index
    %c0_1 = arith.constant 0 : index
    %0 = vector.load %arg0[%c0, %c0_0, %c0_1] : memref<4x162x128xf32, #tpu.memory_space<vmem>>, vector<1x162x128xf32>
    %1 = vector.shape_cast %0 : vector<1x162x128xf32> to vector<162x128xf32>
    %c1 = arith.constant 1 : index
    %c0_2 = arith.constant 0 : index
    %c0_3 = arith.constant 0 : index
    %2 = vector.load %arg0[%c1, %c0_2, %c0_3] : memref<4x162x128xf32, #tpu.memory_space<vmem>>, vector<1x162x128xf32>
    %3 = vector.shape_cast %2 : vector<1x162x128xf32> to vector<162x128xf32>
    %4 = arith.maximumf %1, %3 : vector<162x128xf32>
    %c2 = arith.constant 2 : index
    %c0_4 = arith.constant 0 : index
    %c0_5 = arith.constant 0 : index
    %5 = vector.load %arg0[%c2, %c0_4, %c0_5] : memref<4x162x128xf32, #tpu.memory_space<vmem>>, vector<1x162x128xf32>
    %6 = vector.shape_cast %5 : vector<1x162x128xf32> to vector<162x128xf32>
    %c3 = arith.constant 3 : index
    %c0_6 = arith.constant 0 : index
    %c0_7 = arith.constant 0 : index
    %7 = vector.load %arg0[%c3, %c0_6, %c0_7] : memref<4x162x128xf32, #tpu.memory_space<vmem>>, vector<1x162x128xf32>
    %8 = vector.shape_cast %7 : vector<1x162x128xf32> to vector<162x128xf32>
    %9 = arith.maximumf %6, %8 : vector<162x128xf32>
    %10 = arith.maximumf %4, %9 : vector<162x128xf32>
    %c0_8 = arith.constant 0 : index
    %c0_9 = arith.constant 0 : index
    %11 = vector.load %arg1[%c0_8, %c0_9] : memref<162x128xf32, #tpu.memory_space<vmem>>, vector<162x128xf32>
    tpu.vector_store %arg1[%c0_8, %c0_9], %10 {strides = array<i32>} : memref<162x128xf32, #tpu.memory_space<vmem>>, vector<162x128xf32>,
    return
  }
}

module attributes {stable_mosaic.version = 11 : i64} {
  func.func @_gemm_kernel(%arg0: i32, %arg1: i32, %arg2: i32, %arg3: memref<512x288xf32, #tpu.memory_space<vmem>>, %arg4: memref<288x64xf32, #tpu.memory_space<vmem>>, %arg5: memref<1x64xf32, #tpu.memory_space<vmem>>, %arg6: memref<512x64xf32, #tpu.memory_space<vmem>>, %arg7: memref<512x64xf32, #tpu.memory_space<vmem>>) attributes {dimension_semantics = [#tpu.dimension_semantics<parallel>, #tpu.dimension_semantics<parallel>, #tpu.dimension_semantics<arbitrary>], iteration_bounds = array<i64: 1, 1, 1>, scalar_prefetch = 0 : i64, scratch_operands = 1 : i64, tpu.core_type = #tpu.core_type<tc>, window_params = [{transform_indices = @transform_0, window_bounds = array<i64: 512, 288>}, {transform_indices = @transform_1, window_bounds = array<i64: 288, 64>}, {transform_indices = @transform_2, window_bounds = array<i64: 1, 64>}, {transform_indices = @transform_3, window_bounds = array<i64: 512, 64>}]} {
    %c0_i32 = arith.constant 0 : i32
    %0 = arith.cmpi eq, %arg2, %c0_i32 : i32
    %1 = arith.extui %0 : i1 to i32
    %c0_i32_0 = arith.constant 0 : i32
    %2 = arith.cmpi ne, %1, %c0_i32_0 : i32
    scf.if %2 {
      %cst_10 = arith.constant 0.000000e+00 : f32
      %12 = vector.broadcast %cst_10 : f32 to vector<512x64xf32>
      %c0_11 = arith.constant 0 : index
      %c0_12 = arith.constant 0 : index
      %13 = vector.load %arg7[%c0_11, %c0_12] : memref<512x64xf32, #tpu.memory_space<vmem>>, vector<512x64xf32>
      tpu.vector_store %arg7[%c0_11, %c0_12], %12 {strides = array<i32>} : memref<512x64xf32, #tpu.memory_space<vmem>>, vector<512x64xf32>,
    } else {
    }
    %c0 = arith.constant 0 : index
    %c0_1 = arith.constant 0 : index
    %3 = vector.load %arg7[%c0, %c0_1] : memref<512x64xf32, #tpu.memory_space<vmem>>, vector<512x64xf32>
    %c0_2 = arith.constant 0 : index
    %c0_3 = arith.constant 0 : index
    %4 = vector.load %arg3[%c0_2, %c0_3] : memref<512x288xf32, #tpu.memory_space<vmem>>, vector<512x288xf32>
    %c0_4 = arith.constant 0 : index
    %c0_5 = arith.constant 0 : index
    %5 = vector.load %arg4[%c0_4, %c0_5] : memref<288x64xf32, #tpu.memory_space<vmem>>, vector<288x64xf32>
    %cst = arith.constant dense<0.000000e+00> : vector<512x64xf32>
    %6 = tpu.matmul %4, %5, %cst {dimension_numbers = #tpu.dot_dimension_numbers<[1], [0], [0], [1], [0, 0, 1, 1], [], []>} : vector<512x288xf32>, vector<288x64xf32>, vector<512x64xf32> -> vector<512x64xf32>
    %7 = arith.addf %3, %6 : vector<512x64xf32>
    %c0_6 = arith.constant 0 : index
    %c0_7 = arith.constant 0 : index
    %8 = vector.load %arg7[%c0_6, %c0_7] : memref<512x64xf32, #tpu.memory_space<vmem>>, vector<512x64xf32>
    tpu.vector_store %arg7[%c0_6, %c0_7], %7 {strides = array<i32>} : memref<512x64xf32, #tpu.memory_space<vmem>>, vector<512x64xf32>,
    %c0_i32_8 = arith.constant 0 : i32
    %9 = arith.cmpi eq, %arg2, %c0_i32_8 : i32
    %10 = arith.extui %9 : i1 to i32
    %c0_i32_9 = arith.constant 0 : i32
    %11 = arith.cmpi ne, %10, %c0_i32_9 : i32
    scf.if %11 {
      %c0_10 = arith.constant 0 : index
      %c0_11 = arith.constant 0 : index
      %12 = vector.load %arg7[%c0_10, %c0_11] : memref<512x64xf32, #tpu.memory_space<vmem>>, vector<512x64xf32>
      %c0_12 = arith.constant 0 : index
      %c0_13 = arith.constant 0 : index
      %13 = vector.load %arg5[%c0_12, %c0_13] : memref<1x64xf32, #tpu.memory_space<vmem>>, vector<1x64xf32>
      %14 = vector.broadcast %13 : vector<1x64xf32> to vector<512x64xf32>
      %15 = arith.addf %12, %14 : vector<512x64xf32>
      %cst_14 = arith.constant 0.000000e+00 : f32
      %16 = vector.broadcast %cst_14 : f32 to vector<512x64xf32>
      %17 = arith.maximumf %15, %16 : vector<512x64xf32>
      %c0_15 = arith.constant 0 : index
      %c0_16 = arith.constant 0 : index
      %18 = vector.load %arg6[%c0_15, %c0_16] : memref<512x64xf32, #tpu.memory_space<vmem>>, vector<512x64xf32>
      tpu.vector_store %arg6[%c0_15, %c0_16], %17 {strides = array<i32>} : memref<512x64xf32, #tpu.memory_space<vmem>>, vector<512x64xf32>,
    } else {
    }
    return
  }
  func.func @transform_0(%arg0: i32, %arg1: i32, %arg2: i32) -> (i32, i32) {
    %c0_i32 = arith.constant 0 : i32
    return %arg0, %arg2 : i32, i32
  }
  func.func @transform_1(%arg0: i32, %arg1: i32, %arg2: i32) -> (i32, i32) {
    %c0_i32 = arith.constant 0 : i32
    return %arg2, %arg1 : i32, i32
  }
  func.func @transform_2(%arg0: i32, %arg1: i32, %arg2: i32) -> (i32, i32) {
    %c0_i32 = arith.constant 0 : i32
    %c0_i32_0 = arith.constant 0 : i32
    return %c0_i32, %arg1 : i32, i32
  }
  func.func @transform_3(%arg0: i32, %arg1: i32, %arg2: i32) -> (i32, i32) {
    %c0_i32 = arith.constant 0 : i32
    return %arg0, %arg1 : i32, i32
  }
}

module attributes {stable_mosaic.version = 11 : i64} {
  func.func @_maxpool_reduce_kernel(%arg0: memref<4x64x128xf32, #tpu.memory_space<vmem>>, %arg1: memref<64x128xf32, #tpu.memory_space<vmem>>) attributes {dimension_semantics = [], scalar_prefetch = 0 : i64, scratch_operands = 0 : i64, tpu.core_type = #tpu.core_type<tc>} {
    %c0 = arith.constant 0 : index
    %c0_0 = arith.constant 0 : index
    %c0_1 = arith.constant 0 : index
    %0 = vector.load %arg0[%c0, %c0_0, %c0_1] : memref<4x64x128xf32, #tpu.memory_space<vmem>>, vector<1x64x128xf32>
    %1 = vector.shape_cast %0 : vector<1x64x128xf32> to vector<64x128xf32>
    %c1 = arith.constant 1 : index
    %c0_2 = arith.constant 0 : index
    %c0_3 = arith.constant 0 : index
    %2 = vector.load %arg0[%c1, %c0_2, %c0_3] : memref<4x64x128xf32, #tpu.memory_space<vmem>>, vector<1x64x128xf32>
    %3 = vector.shape_cast %2 : vector<1x64x128xf32> to vector<64x128xf32>
    %4 = arith.maximumf %1, %3 : vector<64x128xf32>
    %c2 = arith.constant 2 : index
    %c0_4 = arith.constant 0 : index
    %c0_5 = arith.constant 0 : index
    %5 = vector.load %arg0[%c2, %c0_4, %c0_5] : memref<4x64x128xf32, #tpu.memory_space<vmem>>, vector<1x64x128xf32>
    %6 = vector.shape_cast %5 : vector<1x64x128xf32> to vector<64x128xf32>
    %c3 = arith.constant 3 : index
    %c0_6 = arith.constant 0 : index
    %c0_7 = arith.constant 0 : index
    %7 = vector.load %arg0[%c3, %c0_6, %c0_7] : memref<4x64x128xf32, #tpu.memory_space<vmem>>, vector<1x64x128xf32>
    %8 = vector.shape_cast %7 : vector<1x64x128xf32> to vector<64x128xf32>
    %9 = arith.maximumf %6, %8 : vector<64x128xf32>
    %10 = arith.maximumf %4, %9 : vector<64x128xf32>
    %c0_8 = arith.constant 0 : index
    %c0_9 = arith.constant 0 : index
    %11 = vector.load %arg1[%c0_8, %c0_9] : memref<64x128xf32, #tpu.memory_space<vmem>>, vector<64x128xf32>
    tpu.vector_store %arg1[%c0_8, %c0_9], %10 {strides = array<i32>} : memref<64x128xf32, #tpu.memory_space<vmem>>, vector<64x128xf32>,
    return
  }
}

module attributes {stable_mosaic.version = 11 : i64} {
  func.func @_gemm_kernel(%arg0: i32, %arg1: i32, %arg2: i32, %arg3: memref<2x1024xbf16, #tpu.memory_space<vmem>>, %arg4: memref<1024x512xbf16, #tpu.memory_space<vmem>>, %arg5: memref<1x512xf32, #tpu.memory_space<vmem>>, %arg6: memref<2x512xf32, #tpu.memory_space<vmem>>, %arg7: memref<2x512xf32, #tpu.memory_space<vmem>>, %arg8: memref<2x512xf32, #tpu.memory_space<vmem>>) attributes {dimension_semantics = [#tpu.dimension_semantics<parallel>, #tpu.dimension_semantics<parallel>, #tpu.dimension_semantics<arbitrary>], iteration_bounds = array<i64: 1, 4, 4>, scalar_prefetch = 0 : i64, scratch_operands = 1 : i64, tpu.core_type = #tpu.core_type<tc>, window_params = [{transform_indices = @transform_0, window_bounds = array<i64: 2, 1024>}, {transform_indices = @transform_1, window_bounds = array<i64: 1024, 512>}, {transform_indices = @transform_2, window_bounds = array<i64: 1, 512>}, {transform_indices = @transform_3, window_bounds = array<i64: 2, 512>}, {transform_indices = @transform_4, window_bounds = array<i64: 2, 512>}]} {
    %c0_i32 = arith.constant 0 : i32
    %0 = arith.cmpi eq, %arg2, %c0_i32 : i32
    %1 = arith.extui %0 : i1 to i32
    %c0_i32_0 = arith.constant 0 : i32
    %2 = arith.cmpi ne, %1, %c0_i32_0 : i32
    scf.if %2 {
      %cst_9 = arith.constant 0.000000e+00 : f32
      %12 = vector.broadcast %cst_9 : f32 to vector<2x512xf32>
      %c0_10 = arith.constant 0 : index
      %c0_11 = arith.constant 0 : index
      %13 = vector.load %arg8[%c0_10, %c0_11] : memref<2x512xf32, #tpu.memory_space<vmem>>, vector<2x512xf32>
      tpu.vector_store %arg8[%c0_10, %c0_11], %12 {strides = array<i32>} : memref<2x512xf32, #tpu.memory_space<vmem>>, vector<2x512xf32>,
    } else {
    }
    %c0 = arith.constant 0 : index
    %c0_1 = arith.constant 0 : index
    %3 = vector.load %arg8[%c0, %c0_1] : memref<2x512xf32, #tpu.memory_space<vmem>>, vector<2x512xf32>
    %c0_2 = arith.constant 0 : index
    %c0_3 = arith.constant 0 : index
    %4 = vector.load %arg3[%c0_2, %c0_3] : memref<2x1024xbf16, #tpu.memory_space<vmem>>, vector<2x1024xbf16>
    %c0_4 = arith.constant 0 : index
    %c0_5 = arith.constant 0 : index
    %5 = vector.load %arg4[%c0_4, %c0_5] : memref<1024x512xbf16, #tpu.memory_space<vmem>>, vector<1024x512xbf16>
    %cst = arith.constant dense<0.000000e+00> : vector<2x512xf32>
    %6 = tpu.matmul %4, %5, %cst {dimension_numbers = #tpu.dot_dimension_numbers<[1], [0], [0], [1], [0, 0, 1, 1], [], []>} : vector<2x1024xbf16>, vector<1024x512xbf16>, vector<2x512xf32> -> vector<2x512xf32>
    %7 = arith.addf %3, %6 : vector<2x512xf32>
    %c0_6 = arith.constant 0 : index
    %c0_7 = arith.constant 0 : index
    %8 = vector.load %arg8[%c0_6, %c0_7] : memref<2x512xf32, #tpu.memory_space<vmem>>, vector<2x512xf32>
    tpu.vector_store %arg8[%c0_6, %c0_7], %7 {strides = array<i32>} : memref<2x512xf32, #tpu.memory_space<vmem>>, vector<2x512xf32>,
    %c3_i32 = arith.constant 3 : i32
    %9 = arith.cmpi eq, %arg2, %c3_i32 : i32
    %10 = arith.extui %9 : i1 to i32
    %c0_i32_8 = arith.constant 0 : i32
    %11 = arith.cmpi ne, %10, %c0_i32_8 : i32
    scf.if %11 {
      %c0_9 = arith.constant 0 : index
      %c0_10 = arith.constant 0 : index
      %12 = vector.load %arg8[%c0_9, %c0_10] : memref<2x512xf32, #tpu.memory_space<vmem>>, vector<2x512xf32>
      %c0_11 = arith.constant 0 : index
      %c0_12 = arith.constant 0 : index
      %13 = vector.load %arg5[%c0_11, %c0_12] : memref<1x512xf32, #tpu.memory_space<vmem>>, vector<1x512xf32>
      %14 = vector.broadcast %13 : vector<1x512xf32> to vector<2x512xf32>
      %15 = arith.addf %12, %14 : vector<2x512xf32>
      %c0_13 = arith.constant 0 : index
      %c0_14 = arith.constant 0 : index
      %16 = vector.load %arg6[%c0_13, %c0_14] : memref<2x512xf32, #tpu.memory_space<vmem>>, vector<2x512xf32>
      %17 = arith.mulf %15, %16 : vector<2x512xf32>
      %c0_15 = arith.constant 0 : index
      %c0_16 = arith.constant 0 : index
      %18 = vector.load %arg7[%c0_15, %c0_16] : memref<2x512xf32, #tpu.memory_space<vmem>>, vector<2x512xf32>
      tpu.vector_store %arg7[%c0_15, %c0_16], %17 {strides = array<i32>} : memref<2x512xf32, #tpu.memory_space<vmem>>, vector<2x512xf32>,
    } else {
    }
    return
  }
  func.func @transform_0(%arg0: i32, %arg1: i32, %arg2: i32) -> (i32, i32) {
    %c0_i32 = arith.constant 0 : i32
    return %arg0, %arg2 : i32, i32
  }
  func.func @transform_1(%arg0: i32, %arg1: i32, %arg2: i32) -> (i32, i32) {
    %c0_i32 = arith.constant 0 : i32
    return %arg2, %arg1 : i32, i32
  }
  func.func @transform_2(%arg0: i32, %arg1: i32, %arg2: i32) -> (i32, i32) {
    %c0_i32 = arith.constant 0 : i32
    %c0_i32_0 = arith.constant 0 : i32
    return %c0_i32, %arg1 : i32, i32
  }
  func.func @transform_3(%arg0: i32, %arg1: i32, %arg2: i32) -> (i32, i32) {
    %c0_i32 = arith.constant 0 : i32
    return %arg0, %arg1 : i32, i32
  }
  func.func @transform_4(%arg0: i32, %arg1: i32, %arg2: i32) -> (i32, i32) {
    %c0_i32 = arith.constant 0 : i32
    return %arg0, %arg1 : i32, i32
  }
}

</mosaic_0001>

<llo_original>
// kernel: lenet_forward.5
$region0: #{lenet_forward.5}
  #allocation0 [shape = 'u32[]', space=smem, size = 0x4, offset = 0x4, fixed_abs, tag = 'smem constant byte address 0x4 - core index']
  #allocation1 [shape = 'u32[144,128]{1,0:T(1,128)}', space=vmem, size = 0x12000, scoped, tag = 'internal scratch']
  #allocation2 [shape = 'f32[512,32]{1,0:T(8,128)}', space=vmem, size = 0x40000, scoped, tag = 'scratch operand']
  %s0 = inlined_call_operand.vmem [shape: f32[2592,25], index: 0, kind: input, shape index: {}]
  %s1 = inlined_call_operand.vmem [shape: f32[25,32], index: 1, kind: input, shape index: {}]
  %s2 = inlined_call_operand.vmem [shape: f32[1,32], index: 2, kind: input, shape index: {}]
  %s3 = inlined_call_operand.vmem [shape: f32[2592,32], index: 3, kind: output, shape index: {}]
  %s4 = sld [smem:[#allocation0]]
  $region101: #{lenet_forward.5} parent=0
    _
  %s6 = ssub.s32 1, %s4
  %s7 = scalar_select 0, %s6, %s4
  $region1: #{lenet_forward.5} parent=0
    #allocation3 [shape = 'u8[524288]{0}', space=vmem, size = 0x80000, scoped, tag = 'output window, operand 0']
    loop: start=0, step=1, limit=8
    $region2: #{lenet_forward.5} parent=1 // loop_pre_header
      _
    $region3: #{lenet_forward.5} parent=1 // loop_header
      %s9 = sphi 0, %s13
      %p10 = scmp.ge.s32.totalorder %s9, 8
      %s16 = sphi 0, %s35
      %s17 = sphi 0, %s31
      %s18 = sphi 0, %s27
      %s19 = sphi 0, %s16
      %s20 = sphi 0, %s17
      %s21 = sphi 0, %s18
      %s22 = sphi 0, %s19
      %s23 = sphi 0, %s20
      %s24 = sphi 0, %s21
      %s40 = sphi 0, %s42
      %s43 = sphi 0, %s40
      %s44 = sphi 0, %s43
      %s60 = sphi 0, %s44
      %s68 = sphi 0, %s70
      %s71 = sphi 0, %s68
      %s72 = sphi 0, %s71
      %s88 = sphi 0, %s72
      %s94 = sphi 0, %s96
      %s97 = sphi 0, %s94
      %s98 = sphi 0, %s97
      %s114 = sphi 0, %s98
      %s122 = sphi 0, %s124
      %s125 = sphi 0, %s122
      %s126 = sphi 0, %s125
      %s142 = sphi 0, %s126
    $region4: #{lenet_forward.5} parent=1 // loop_header_branch
      %12 = sbr.rel (%p10) target = $region8
    $region5: #{lenet_forward.5} parent=1 // loop_body
      %s14 = ssub.s32 %s9, 1
      %s15 = ssub.s32 %s9, 2
      %s25 = sadd.s32 1, %s18
      %p26 = scmp.ge.s32.totalorder %s25, 1
      %s27 = scalar_select %p26, 0, %s25
      %s28 = sadd.s32 1, %s17
      %s29 = scalar_select %p26, %s28, %s17
      %p30 = scmp.ge.s32.totalorder %s29, 1
      %s31 = scalar_select %p30, 0, %s29
      %s32 = sadd.s32 1, %s16
      %s33 = scalar_select %p30, %s32, %s16
      %p34 = scmp.ge.s32.totalorder %s33, 6
      %s35 = scalar_select %p34, 0, %s33
      %s36 = ssub.s32 %s16, %s35
      %s37 = ssub.s32 %s18, %s27
      %s38 = sor.u32 %s36, %s37
      %p39 = scmp.eq.s32.totalorder %s38, 0
      %s41 = sadd.s32 %s40, 1
      %s42 = scalar_select %p39, %s40, %s41
      %p45 = pneg %p39
      %p46 = scmp.eq.s32.totalorder %s9, 5
      %p47 = por %p45, %p46
      %p48 = scmp.ne.s32.totalorder %s40, %s43
      %p49 = scmp.eq.s32.totalorder %s9, 0
      %p50 = por %p48, %p49
      %p51 = scmp.ne.s32.totalorder %s40, %s43
      %p52 = scmp.eq.s32.totalorder %s14, 5
      %p53 = por %p51, %p52
      %p54 = scmp.ne.s32.totalorder %s43, %s44
      %p55 = scmp.eq.s32.totalorder %s14, 0
      %p56 = por %p54, %p55
      %p57 = scmp.ne.s32.totalorder %s43, %s44
      %p58 = scmp.eq.s32.totalorder %s15, 5
      %p59 = por %p57, %p58
      %p61 = scmp.ne.s32.totalorder %s44, %s60
      %p62 = scmp.eq.s32.totalorder %s15, 0
      %p63 = por %p61, %p62
      %s64 = ssub.s32 %s18, %s27
      %s65 = ssub.s32 %s17, %s31
      %s66 = sor.u32 %s64, %s65
      %p67 = scmp.eq.s32.totalorder %s66, 0
      %s69 = sadd.s32 %s68, 1
      %s70 = scalar_select %p67, %s68, %s69
      %p73 = pneg %p67
      %p74 = scmp.eq.s32.totalorder %s9, 5
      %p75 = por %p73, %p74
      %p76 = scmp.ne.s32.totalorder %s68, %s71
      %p77 = scmp.eq.s32.totalorder %s9, 0
      %p78 = por %p76, %p77
      %p79 = scmp.ne.s32.totalorder %s68, %s71
      %p80 = scmp.eq.s32.totalorder %s14, 5
      %p81 = por %p79, %p80
      %p82 = scmp.ne.s32.totalorder %s71, %s72
      %p83 = scmp.eq.s32.totalorder %s14, 0
      %p84 = por %p82, %p83
      %p85 = scmp.ne.s32.totalorder %s71, %s72
      %p86 = scmp.eq.s32.totalorder %s15, 5
      %p87 = por %p85, %p86
      %p89 = scmp.ne.s32.totalorder %s72, %s88
      %p90 = scmp.eq.s32.totalorder %s15, 0
      %p91 = por %p89, %p90
      %s92 = ssub.s32 %s17, %s31
      %p93 = scmp.eq.s32.totalorder %s92, 0
      %s95 = sadd.s32 %s94, 1
      %s96 = scalar_select %p93, %s94, %s95
      %p99 = pneg %p93
      %p100 = scmp.eq.s32.totalorder %s9, 5
      %p101 = por %p99, %p100
      %p102 = scmp.ne.s32.totalorder %s94, %s97
      %p103 = scmp.eq.s32.totalorder %s9, 0
      %p104 = por %p102, %p103
      %p105 = scmp.ne.s32.totalorder %s94, %s97
      %p106 = scmp.eq.s32.totalorder %s14, 5
      %p107 = por %p105, %p106
      %p108 = scmp.ne.s32.totalorder %s97, %s98
      %p109 = scmp.eq.s32.totalorder %s14, 0
      %p110 = por %p108, %p109
      %p111 = scmp.ne.s32.totalorder %s97, %s98
      %p112 = scmp.eq.s32.totalorder %s15, 5
      %p113 = por %p111, %p112
      %p115 = scmp.ne.s32.totalorder %s98, %s114
      %p116 = scmp.eq.s32.totalorder %s15, 0
      %p117 = por %p115, %p116
      %s118 = ssub.s32 %s16, %s35
      %s119 = ssub.s32 %s17, %s31
      %s120 = sor.u32 %s118, %s119
      %p121 = scmp.eq.s32.totalorder %s120, 0
      %s123 = sadd.s32 %s122, 1
      %s124 = scalar_select %p121, %s122, %s123
      %p127 = pneg %p121
      %p128 = scmp.eq.s32.totalorder %s9, 5
      %p129 = por %p127, %p128
      %p130 = scmp.ne.s32.totalorder %s122, %s125
      %p131 = scmp.eq.s32.totalorder %s9, 0
      %p132 = por %p130, %p131
      %p133 = scmp.ne.s32.totalorder %s122, %s125
      %p134 = scmp.eq.s32.totalorder %s14, 5
      %p135 = por %p133, %p134
      %p136 = scmp.ne.s32.totalorder %s125, %s126
      %p137 = scmp.eq.s32.totalorder %s14, 0
      %p138 = por %p136, %p137
      %p139 = scmp.ne.s32.totalorder %s125, %s126
      %p140 = scmp.eq.s32.totalorder %s15, 5
      %p141 = por %p139, %p140
      %p143 = scmp.ne.s32.totalorder %s126, %s142
      %p144 = scmp.eq.s32.totalorder %s15, 0
      %p145 = por %p143, %p144
      %p146 = scmp.le.s32.totalorder 1, %s9
      %p147 = scmp.lt.s32.totalorder %s9, 7
      %p148 = pnand %p146, %p147
      %p149 = pneg %p148
      // Predicated region
      $region9: #{lenet_forward.5} parent=5 // pred_check
        _
      $region10: #{lenet_forward.5} parent=5 // pred_check_branch
        %151 = sbr.rel (%p148) target = $region12
      $region11: #{lenet_forward.5} parent=5 // pred_region
        %s152 = ssub.s32 %s9, 1
        // Predicated region
        $region13: #{lenet_forward.5} parent=11 // pred_check
          %p153 = pneg %p84
        $region14: #{lenet_forward.5} parent=11 // pred_check_branch
          %155 = sbr.rel (%p153) target = $region16
        $region15: #{lenet_forward.5} parent=11 // pred_region
          %s156 = smul.u32 4, %s21
          %p157 = scmp.lt.s32.totalorder %s156, 3
          %s158 = scalar_select %p157, %s156, 3
          %p159 = scmp.lt.s32.totalorder %s20, 0
          %s160 = scalar_select %p159, %s20, 0
          %s161 = sadd.s32 %s160, %s158
          %s162 = smul.addr %s161, 8
          %s163 = scalar_lea.vmem %s1, %s162
          %s164 = smul.u32 4, %s21
        $region16: #{lenet_forward.5} parent=11 // pred_fallthru
          _
        // Predicated region
        $region17: #{lenet_forward.5} parent=11 // pred_check
          %p165 = pneg %p110
        $region18: #{lenet_forward.5} parent=11 // pred_check_branch
          %167 = sbr.rel (%p165) target = $region20
        $region19: #{lenet_forward.5} parent=11 // pred_region
          %p168 = scmp.lt.s32.totalorder %s20, 0
          %s169 = scalar_select %p168, %s20, 0
          %s170 = scalar_lea.vmem %s2, %s169
        $region20: #{lenet_forward.5} parent=11 // pred_fallthru
          _
      $region12: #{lenet_forward.5} parent=5 // pred_fallthru
        _
      %p171 = scmp.lt.s32.totalorder %s9, 6
      // Predicated region
      $region21: #{lenet_forward.5} parent=5 // pred_check
        %p172 = pneg %p171
      $region22: #{lenet_forward.5} parent=5 // pred_check_branch
        %174 = sbr.rel (%p172) target = $region24
      $region23: #{lenet_forward.5} parent=5 // pred_region
        // Predicated region
        $region25: #{lenet_forward.5} parent=23 // pred_check
          %p175 = pneg %p50
        $region26: #{lenet_forward.5} parent=23 // pred_check_branch
          %177 = sbr.rel (%p175) target = $region28
        $region27: #{lenet_forward.5} parent=23 // pred_region
          %s178 = smul.u32 64, %s16
          %s179 = ssub.s32 324, %s178
          %p180 = scmp.lt.s32.totalorder %s179, 64
          %s181 = scalar_select %p180, %s179, 64
          %s182 = smul.u32 128, %s181
          %p183 = scmp.lt.s32.totalorder %s178, 323
          %s184 = scalar_select %p183, %s178, 323
          %p185 = scmp.lt.s32.totalorder %s18, 0
          %s186 = scalar_select %p185, %s18, 0
          %s187 = sadd.s32 %s186, %s184
          %s188 = smul.addr %s187, 8
          %s189 = scalar_lea.vmem %s0, %s188
          %s190 = smul.u32 64, %s16
          %s191 = ssub.s32 324, %s190
          %p192 = scmp.lt.s32.totalorder %s191, 64
          %s193 = scalar_select %p192, %s191, 64
          %s194 = smul.u32 128, %s193
        $region28: #{lenet_forward.5} parent=23 // pred_fallthru
          _
      $region24: #{lenet_forward.5} parent=5 // pred_fallthru
        _
      %p195 = scmp.le.s32.totalorder 1, %s9
      %p196 = scmp.lt.s32.totalorder %s9, 7
      %p197 = pnand %p195, %p196
      %p198 = pneg %p197
      // Predicated region
      $region29: #{lenet_forward.5} parent=5 // pred_check
        _
      $region30: #{lenet_forward.5} parent=5 // pred_check_branch
        %200 = sbr.rel (%p197) target = $region32
      $region31: #{lenet_forward.5} parent=5 // pred_region
        %s201 = ssub.s32 %s9, 1
        %s202 = smul.u32 64, %s19
        %s203 = ssub.s32 324, %s202
        %p204 = scmp.lt.s32.totalorder %s203, 64
        %s205 = scalar_select %p204, %s203, 64
        %s206 = smul.u32 128, %s205
        %p207 = scmp.lt.s32.totalorder %s202, 323
        %s208 = scalar_select %p207, %s202, 323
        %p209 = scmp.lt.s32.totalorder %s21, 0
        %s210 = scalar_select %p209, %s21, 0
        %s211 = sadd.s32 %s210, %s208
        %s212 = smul.addr %s211, 8
        %s213 = scalar_lea.vmem %s0, %s212
        %p214 = pneg %p56
        %p215 = pneg %p53
        %s216 = smul.u32 4, %s21
        %p217 = scmp.lt.s32.totalorder %s216, 3
        %s218 = scalar_select %p217, %s216, 3
        %p219 = scmp.lt.s32.totalorder %s20, 0
        %s220 = scalar_select %p219, %s20, 0
        %s221 = sadd.s32 %s220, %s218
        %s222 = smul.addr %s221, 8
        %s223 = scalar_lea.vmem %s1, %s222
        %p224 = pneg %p84
        %p225 = pneg %p81
        %p226 = scmp.lt.s32.totalorder %s20, 0
        %s227 = scalar_select %p226, %s20, 0
        %s228 = scalar_lea.vmem %s2, %s227
        %p229 = pneg %p110
        %p230 = pneg %p107
        %p231 = pneg %p138
        %p232 = pneg %p135
        %s233 = sand.u32 %s125, 1
        %s234 = sand.u32 %s125, 1
        %s235 = smul.addr %s234, 512
        %s236 = scalar_lea.vmem [#allocation3], %s235
        %s237 = smul.u32 64, %s19
        %s238 = ssub.s32 324, %s237
        %p239 = scmp.lt.s32.totalorder %s238, 64
        %s240 = scalar_select %p239, %s238, 64
        %s241 = smul.u32 128, %s240
        %p242 = scmp.lt.s32.totalorder %s237, 323
        %s243 = scalar_select %p242, %s237, 323
        %p244 = scmp.lt.s32.totalorder %s21, 0
        %s245 = scalar_select %p244, %s21, 0
        %s246 = sadd.s32 %s245, %s243
        %s247 = smul.addr %s246, 8
        %s248 = scalar_lea.vmem %s0, %s247
        %s249 = smul.u32 64, %s19
        %s250 = ssub.s32 324, %s249
        %p251 = scmp.lt.s32.totalorder %s250, 64
        %s252 = scalar_select %p251, %s250, 64
        %s253 = smul.u32 128, %s252
        %s254 = smul.u32 4, %s21
        %p255 = scmp.lt.s32.totalorder %s254, 3
        %s256 = scalar_select %p255, %s254, 3
        %p257 = scmp.lt.s32.totalorder %s20, 0
        %s258 = scalar_select %p257, %s20, 0
        %s259 = sadd.s32 %s258, %s256
        %s260 = smul.addr %s259, 8
        %s261 = scalar_lea.vmem %s1, %s260
        %s262 = smul.u32 4, %s21
        %p263 = scmp.lt.s32.totalorder %s20, 0
        %s264 = scalar_select %p263, %s20, 0
        %s265 = scalar_lea.vmem %s2, %s264
        %s266 = smul.u32 64, %s19
        %s267 = ssub.s32 324, %s266
        %p268 = scmp.lt.s32.totalorder %s267, 64
        %s269 = scalar_select %p268, %s267, 64
        %s270 = smul.u32 128, %s269
        %p271 = scmp.eq.s32.totalorder %s21, 0
        // Predicated region
        $region33: #{lenet_forward.5} parent=31 // pred_check
          %p272 = pneg %p271
        $region34: #{lenet_forward.5} parent=31 // pred_check_branch
          %274 = sbr.rel (%p272) target = $region36
        $region35: #{lenet_forward.5} parent=31 // pred_region
          %vm275 = vcmask 261120
          %276 = vst.msk [vmem:[#allocation2] sm:$0xff] %vm275, 0.0
          %277 = vst.msk [vmem:[#allocation2 + $0x8] sm:$0xff] %vm275, 0.0
          %278 = vst.msk [vmem:[#allocation2 + $0x10] sm:$0xff] %vm275, 0.0
          %279 = vst.msk [vmem:[#allocation2 + $0x18] sm:$0xff] %vm275, 0.0
          %280 = vst.msk [vmem:[#allocation2 + $0x20] sm:$0xff] %vm275, 0.0
          %281 = vst.msk [vmem:[#allocation2 + $0x28] sm:$0xff] %vm275, 0.0
          %282 = vst.msk [vmem:[#allocation2 + $0x30] sm:$0xff] %vm275, 0.0
          %283 = vst.msk [vmem:[#allocation2 + $0x38] sm:$0xff] %vm275, 0.0
          %284 = vst.msk [vmem:[#allocation2 + $0x40] sm:$0xff] %vm275, 0.0
          %285 = vst.msk [vmem:[#allocation2 + $0x48] sm:$0xff] %vm275, 0.0
          %286 = vst.msk [vmem:[#allocation2 + $0x50] sm:$0xff] %vm275, 0.0
          %287 = vst.msk [vmem:[#allocation2 + $0x58] sm:$0xff] %vm275, 0.0
          %288 = vst.msk [vmem:[#allocation2 + $0x60] sm:$0xff] %vm275, 0.0
          %289 = vst.msk [vmem:[#allocation2 + $0x68] sm:$0xff] %vm275, 0.0
          %290 = vst.msk [vmem:[#allocation2 + $0x70] sm:$0xff] %vm275, 0.0
          %291 = vst.msk [vmem:[#allocation2 + $0x78] sm:$0xff] %vm275, 0.0
          %292 = vst.msk [vmem:[#allocation2 + $0x80] sm:$0xff] %vm275, 0.0
          %293 = vst.msk [vmem:[#allocation2 + $0x88] sm:$0xff] %vm275, 0.0
          %294 = vst.msk [vmem:[#allocation2 + $0x90] sm:$0xff] %vm275, 0.0
          %295 = vst.msk [vmem:[#allocation2 + $0x98] sm:$0xff] %vm275, 0.0
          %296 = vst.msk [vmem:[#allocation2 + $0xa0] sm:$0xff] %vm275, 0.0
          %297 = vst.msk [vmem:[#allocation2 + $0xa8] sm:$0xff] %vm275, 0.0
          %298 = vst.msk [vmem:[#allocation2 + $0xb0] sm:$0xff] %vm275, 0.0
          %299 = vst.msk [vmem:[#allocation2 + $0xb8] sm:$0xff] %vm275, 0.0
          %300 = vst.msk [vmem:[#allocation2 + $0xc0] sm:$0xff] %vm275, 0.0
          %301 = vst.msk [vmem:[#allocation2 + $0xc8] sm:$0xff] %vm275, 0.0
          %302 = vst.msk [vmem:[#allocation2 + $0xd0] sm:$0xff] %vm275, 0.0
          %303 = vst.msk [vmem:[#allocation2 + $0xd8] sm:$0xff] %vm275, 0.0
          %304 = vst.msk [vmem:[#allocation2 + $0xe0] sm:$0xff] %vm275, 0.0
          %305 = vst.msk [vmem:[#allocation2 + $0xe8] sm:$0xff] %vm275, 0.0
          %306 = vst.msk [vmem:[#allocation2 + $0xf0] sm:$0xff] %vm275, 0.0
          %307 = vst.msk [vmem:[#allocation2 + $0xf8] sm:$0xff] %vm275, 0.0
          %308 = vst.msk [vmem:[#allocation2 + $0x100] sm:$0xff] %vm275, 0.0
          %309 = vst.msk [vmem:[#allocation2 + $0x108] sm:$0xff] %vm275, 0.0
          %310 = vst.msk [vmem:[#allocation2 + $0x110] sm:$0xff] %vm275, 0.0
          %311 = vst.msk [vmem:[#allocation2 + $0x118] sm:$0xff] %vm275, 0.0
          %312 = vst.msk [vmem:[#allocation2 + $0x120] sm:$0xff] %vm275, 0.0
          %313 = vst.msk [vmem:[#allocation2 + $0x128] sm:$0xff] %vm275, 0.0
          %314 = vst.msk [vmem:[#allocation2 + $0x130] sm:$0xff] %vm275, 0.0
          %315 = vst.msk [vmem:[#allocation2 + $0x138] sm:$0xff] %vm275, 0.0
          %316 = vst.msk [vmem:[#allocation2 + $0x140] sm:$0xff] %vm275, 0.0
          %317 = vst.msk [vmem:[#allocation2 + $0x148] sm:$0xff] %vm275, 0.0
          %318 = vst.msk [vmem:[#allocation2 + $0x150] sm:$0xff] %vm275, 0.0
          %319 = vst.msk [vmem:[#allocation2 + $0x158] sm:$0xff] %vm275, 0.0
          %320 = vst.msk [vmem:[#allocation2 + $0x160] sm:$0xff] %vm275, 0.0
          %321 = vst.msk [vmem:[#allocation2 + $0x168] sm:$0xff] %vm275, 0.0
          %322 = vst.msk [vmem:[#allocation2 + $0x170] sm:$0xff] %vm275, 0.0
          %323 = vst.msk [vmem:[#allocation2 + $0x178] sm:$0xff] %vm275, 0.0
          %324 = vst.msk [vmem:[#allocation2 + $0x180] sm:$0xff] %vm275, 0.0
          %325 = vst.msk [vmem:[#allocation2 + $0x188] sm:$0xff] %vm275, 0.0
          %326 = vst.msk [vmem:[#allocation2 + $0x190] sm:$0xff] %vm275, 0.0
          %327 = vst.msk [vmem:[#allocation2 + $0x198] sm:$0xff] %vm275, 0.0
          %328 = vst.msk [vmem:[#allocation2 + $0x1a0] sm:$0xff] %vm275, 0.0
          %329 = vst.msk [vmem:[#allocation2 + $0x1a8] sm:$0xff] %vm275, 0.0
          %330 = vst.msk [vmem:[#allocation2 + $0x1b0] sm:$0xff] %vm275, 0.0
          %331 = vst.msk [vmem:[#allocation2 + $0x1b8] sm:$0xff] %vm275, 0.0
          %332 = vst.msk [vmem:[#allocation2 + $0x1c0] sm:$0xff] %vm275, 0.0
          %333 = vst.msk [vmem:[#allocation2 + $0x1c8] sm:$0xff] %vm275, 0.0
          %334 = vst.msk [vmem:[#allocation2 + $0x1d0] sm:$0xff] %vm275, 0.0
          %335 = vst.msk [vmem:[#allocation2 + $0x1d8] sm:$0xff] %vm275, 0.0
          %336 = vst.msk [vmem:[#allocation2 + $0x1e0] sm:$0xff] %vm275, 0.0
          %337 = vst.msk [vmem:[#allocation2 + $0x1e8] sm:$0xff] %vm275, 0.0
          %338 = vst.msk [vmem:[#allocation2 + $0x1f0] sm:$0xff] %vm275, 0.0
          %339 = vst.msk [vmem:[#allocation2 + $0x1f8] sm:$0xff] %vm275, 0.0
        $region36: #{lenet_forward.5} parent=31 // pred_fallthru
          _
        %v340 = vld [vmem:[#allocation2] sm:$0xff]
        %v341 = vld [vmem:[#allocation2 + $0x8] sm:$0xff]
        %v342 = vld [vmem:[#allocation2 + $0x10] sm:$0xff]
        %v343 = vld [vmem:[#allocation2 + $0x18] sm:$0xff]
        %v344 = vld [vmem:[#allocation2 + $0x20] sm:$0xff]
        %v345 = vld [vmem:[#allocation2 + $0x28] sm:$0xff]
        %v346 = vld [vmem:[#allocation2 + $0x30] sm:$0xff]
        %v347 = vld [vmem:[#allocation2 + $0x38] sm:$0xff]
        %v348 = vld [vmem:[#allocation2 + $0x40] sm:$0xff]
        %v349 = vld [vmem:[#allocation2 + $0x48] sm:$0xff]
        %v350 = vld [vmem:[#allocation2 + $0x50] sm:$0xff]
        %v351 = vld [vmem:[#allocation2 + $0x58] sm:$0xff]
        %v352 = vld [vmem:[#allocation2 + $0x60] sm:$0xff]
        %v353 = vld [vmem:[#allocation2 + $0x68] sm:$0xff]
        %v354 = vld [vmem:[#allocation2 + $0x70] sm:$0xff]
        %v355 = vld [vmem:[#allocation2 + $0x78] sm:$0xff]
        %v356 = vld [vmem:[#allocation2 + $0x80] sm:$0xff]
        %v357 = vld [vmem:[#allocation2 + $0x88] sm:$0xff]
        %v358 = vld [vmem:[#allocation2 + $0x90] sm:$0xff]
        %v359 = vld [vmem:[#allocation2 + $0x98] sm:$0xff]
        %v360 = vld [vmem:[#allocation2 + $0xa0] sm:$0xff]
        %v361 = vld [vmem:[#allocation2 + $0xa8] sm:$0xff]
        %v362 = vld [vmem:[#allocation2 + $0xb0] sm:$0xff]
        %v363 = vld [vmem:[#allocation2 + $0xb8] sm:$0xff]
        %v364 = vld [vmem:[#allocation2 + $0xc0] sm:$0xff]
        %v365 = vld [vmem:[#allocation2 + $0xc8] sm:$0xff]
        %v366 = vld [vmem:[#allocation2 + $0xd0] sm:$0xff]
        %v367 = vld [vmem:[#allocation2 + $0xd8] sm:$0xff]
        %v368 = vld [vmem:[#allocation2 + $0xe0] sm:$0xff]
        %v369 = vld [vmem:[#allocation2 + $0xe8] sm:$0xff]
        %v370 = vld [vmem:[#allocation2 + $0xf0] sm:$0xff]
        %v371 = vld [vmem:[#allocation2 + $0xf8] sm:$0xff]
        %v372 = vld [vmem:[#allocation2 + $0x100] sm:$0xff]
        %v373 = vld [vmem:[#allocation2 + $0x108] sm:$0xff]
        %v374 = vld [vmem:[#allocation2 + $0x110] sm:$0xff]
        %v375 = vld [vmem:[#allocation2 + $0x118] sm:$0xff]
        %v376 = vld [vmem:[#allocation2 + $0x120] sm:$0xff]
        %v377 = vld [vmem:[#allocation2 + $0x128] sm:$0xff]
        %v378 = vld [vmem:[#allocation2 + $0x130] sm:$0xff]
        %v379 = vld [vmem:[#allocation2 + $0x138] sm:$0xff]
        %v380 = vld [vmem:[#allocation2 + $0x140] sm:$0xff]
        %v381 = vld [vmem:[#allocation2 + $0x148] sm:$0xff]
        %v382 = vld [vmem:[#allocation2 + $0x150] sm:$0xff]
        %v383 = vld [vmem:[#allocation2 + $0x158] sm:$0xff]
        %v384 = vld [vmem:[#allocation2 + $0x160] sm:$0xff]
        %v385 = vld [vmem:[#allocation2 + $0x168] sm:$0xff]
        %v386 = vld [vmem:[#allocation2 + $0x170] sm:$0xff]
        %v387 = vld [vmem:[#allocation2 + $0x178] sm:$0xff]
        %v388 = vld [vmem:[#allocation2 + $0x180] sm:$0xff]
        %v389 = vld [vmem:[#allocation2 + $0x188] sm:$0xff]
        %v390 = vld [vmem:[#allocation2 + $0x190] sm:$0xff]
        %v391 = vld [vmem:[#allocation2 + $0x198] sm:$0xff]
        %v392 = vld [vmem:[#allocation2 + $0x1a0] sm:$0xff]
        %v393 = vld [vmem:[#allocation2 + $0x1a8] sm:$0xff]
        %v394 = vld [vmem:[#allocation2 + $0x1b0] sm:$0xff]
        %v395 = vld [vmem:[#allocation2 + $0x1b8] sm:$0xff]
        %v396 = vld [vmem:[#allocation2 + $0x1c0] sm:$0xff]
        %v397 = vld [vmem:[#allocation2 + $0x1c8] sm:$0xff]
        %v398 = vld [vmem:[#allocation2 + $0x1d0] sm:$0xff]
        %v399 = vld [vmem:[#allocation2 + $0x1d8] sm:$0xff]
        %v400 = vld [vmem:[#allocation2 + $0x1e0] sm:$0xff]
        %v401 = vld [vmem:[#allocation2 + $0x1e8] sm:$0xff]
        %v402 = vld [vmem:[#allocation2 + $0x1f0] sm:$0xff]
        %v403 = vld [vmem:[#allocation2 + $0x1f8] sm:$0xff]
        %v404 = vld [vmem:[%s248] sm:$0xff]
        %v405 = vld [vmem:[%s248 + $0x8] sm:$0xff]
        %v406 = vld [vmem:[%s248 + $0x10] sm:$0xff]
        %v407 = vld [vmem:[%s248 + $0x18] sm:$0xff]
        %v408 = vld [vmem:[%s248 + $0x20] sm:$0xff]
        %v409 = vld [vmem:[%s248 + $0x28] sm:$0xff]
        %v410 = vld [vmem:[%s248 + $0x30] sm:$0xff]
        %v411 = vld [vmem:[%s248 + $0x38] sm:$0xff]
        %v412 = vld [vmem:[%s248 + $0x40] sm:$0xff]
        %v413 = vld [vmem:[%s248 + $0x48] sm:$0xff]
        %v414 = vld [vmem:[%s248 + $0x50] sm:$0xff]
        %v415 = vld [vmem:[%s248 + $0x58] sm:$0xff]
        %v416 = vld [vmem:[%s248 + $0x60] sm:$0xff]
        %v417 = vld [vmem:[%s248 + $0x68] sm:$0xff]
        %v418 = vld [vmem:[%s248 + $0x70] sm:$0xff]
        %v419 = vld [vmem:[%s248 + $0x78] sm:$0xff]
        %v420 = vld [vmem:[%s248 + $0x80] sm:$0xff]
        %v421 = vld [vmem:[%s248 + $0x88] sm:$0xff]
        %v422 = vld [vmem:[%s248 + $0x90] sm:$0xff]
        %v423 = vld [vmem:[%s248 + $0x98] sm:$0xff]
        %v424 = vld [vmem:[%s248 + $0xa0] sm:$0xff]
        %v425 = vld [vmem:[%s248 + $0xa8] sm:$0xff]
        %v426 = vld [vmem:[%s248 + $0xb0] sm:$0xff]
        %v427 = vld [vmem:[%s248 + $0xb8] sm:$0xff]
        %v428 = vld [vmem:[%s248 + $0xc0] sm:$0xff]
        %v429 = vld [vmem:[%s248 + $0xc8] sm:$0xff]
        %v430 = vld [vmem:[%s248 + $0xd0] sm:$0xff]
        %v431 = vld [vmem:[%s248 + $0xd8] sm:$0xff]
        %v432 = vld [vmem:[%s248 + $0xe0] sm:$0xff]
        %v433 = vld [vmem:[%s248 + $0xe8] sm:$0xff]
        %v434 = vld [vmem:[%s248 + $0xf0] sm:$0xff]
        %v435 = vld [vmem:[%s248 + $0xf8] sm:$0xff]
        %v436 = vld [vmem:[%s248 + $0x100] sm:$0xff]
        %v437 = vld [vmem:[%s248 + $0x108] sm:$0xff]
        %v438 = vld [vmem:[%s248 + $0x110] sm:$0xff]
        %v439 = vld [vmem:[%s248 + $0x118] sm:$0xff]
        %v440 = vld [vmem:[%s248 + $0x120] sm:$0xff]
        %v441 = vld [vmem:[%s248 + $0x128] sm:$0xff]
        %v442 = vld [vmem:[%s248 + $0x130] sm:$0xff]
        %v443 = vld [vmem:[%s248 + $0x138] sm:$0xff]
        %v444 = vld [vmem:[%s248 + $0x140] sm:$0xff]
        %v445 = vld [vmem:[%s248 + $0x148] sm:$0xff]
        %v446 = vld [vmem:[%s248 + $0x150] sm:$0xff]
        %v447 = vld [vmem:[%s248 + $0x158] sm:$0xff]
        %v448 = vld [vmem:[%s248 + $0x160] sm:$0xff]
        %v449 = vld [vmem:[%s248 + $0x168] sm:$0xff]
        %v450 = vld [vmem:[%s248 + $0x170] sm:$0xff]
        %v451 = vld [vmem:[%s248 + $0x178] sm:$0xff]
        %v452 = vld [vmem:[%s248 + $0x180] sm:$0xff]
        %v453 = vld [vmem:[%s248 + $0x188] sm:$0xff]
        %v454 = vld [vmem:[%s248 + $0x190] sm:$0xff]
        %v455 = vld [vmem:[%s248 + $0x198] sm:$0xff]
        %v456 = vld [vmem:[%s248 + $0x1a0] sm:$0xff]
        %v457 = vld [vmem:[%s248 + $0x1a8] sm:$0xff]
        %v458 = vld [vmem:[%s248 + $0x1b0] sm:$0xff]
        %v459 = vld [vmem:[%s248 + $0x1b8] sm:$0xff]
        %v460 = vld [vmem:[%s248 + $0x1c0] sm:$0xff]
        %v461 = vld [vmem:[%s248 + $0x1c8] sm:$0xff]
        %v462 = vld [vmem:[%s248 + $0x1d0] sm:$0xff]
        %v463 = vld [vmem:[%s248 + $0x1d8] sm:$0xff]
        %v464 = vld [vmem:[%s248 + $0x1e0] sm:$0xff]
        %v465 = vld [vmem:[%s248 + $0x1e8] sm:$0xff]
        %v466 = vld [vmem:[%s248 + $0x1f0] sm:$0xff]
        %v467 = vld [vmem:[%s248 + $0x1f8] sm:$0xff]
        %v468 = vld [vmem:[%s261] sm:$0xff]
        %v469 = vld [vmem:[%s261 + $0x8] sm:$0xff]
        %v470 = vld [vmem:[%s261 + $0x10] sm:$0xff]
        %v471 = vld [vmem:[%s261 + $0x18] sm:$0x1]
        %vm472 = vcmask 203776
        %v474 = vsel %vm472, %v404, 0
        %v477 = vsel %vm472, %v405, 0
        %v480 = vsel %vm472, %v406, 0
        %v483 = vsel %vm472, %v407, 0
        %v486 = vsel %vm472, %v408, 0
        %v489 = vsel %vm472, %v409, 0
        %v492 = vsel %vm472, %v410, 0
        %v495 = vsel %vm472, %v411, 0
        %v498 = vsel %vm472, %v412, 0
        %v501 = vsel %vm472, %v413, 0
        %v504 = vsel %vm472, %v414, 0
        %v507 = vsel %vm472, %v415, 0
        %v510 = vsel %vm472, %v416, 0
        %v513 = vsel %vm472, %v417, 0
        %v516 = vsel %vm472, %v418, 0
        %v519 = vsel %vm472, %v419, 0
        %v522 = vsel %vm472, %v420, 0
        %v525 = vsel %vm472, %v421, 0
        %v528 = vsel %vm472, %v422, 0
        %v531 = vsel %vm472, %v423, 0
        %v534 = vsel %vm472, %v424, 0
        %v537 = vsel %vm472, %v425, 0
        %v540 = vsel %vm472, %v426, 0
        %v543 = vsel %vm472, %v427, 0
        %v546 = vsel %vm472, %v428, 0
        %v549 = vsel %vm472, %v429, 0
        %v552 = vsel %vm472, %v430, 0
        %v555 = vsel %vm472, %v431, 0
        %v558 = vsel %vm472, %v432, 0
        %v561 = vsel %vm472, %v433, 0
        %v564 = vsel %vm472, %v434, 0
        %v567 = vsel %vm472, %v435, 0
        %v570 = vsel %vm472, %v436, 0
        %v573 = vsel %vm472, %v437, 0
        %v576 = vsel %vm472, %v438, 0
        %v579 = vsel %vm472, %v439, 0
        %v582 = vsel %vm472, %v440, 0
        %v585 = vsel %vm472, %v441, 0
        %v588 = vsel %vm472, %v442, 0
        %v591 = vsel %vm472, %v443, 0
        %v594 = vsel %vm472, %v444, 0
        %v597 = vsel %vm472, %v445, 0
        %v600 = vsel %vm472, %v446, 0
        %v603 = vsel %vm472, %v447, 0
        %v606 = vsel %vm472, %v448, 0
        %v609 = vsel %vm472, %v449, 0
        %v612 = vsel %vm472, %v450, 0
        %v615 = vsel %vm472, %v451, 0
        %v618 = vsel %vm472, %v452, 0
        %v621 = vsel %vm472, %v453, 0
        %v624 = vsel %vm472, %v454, 0
        %v627 = vsel %vm472, %v455, 0
        %v630 = vsel %vm472, %v456, 0
        %v633 = vsel %vm472, %v457, 0
        %v636 = vsel %vm472, %v458, 0
        %v639 = vsel %vm472, %v459, 0
        %v642 = vsel %vm472, %v460, 0
        %v645 = vsel %vm472, %v461, 0
        %v648 = vsel %vm472, %v462, 0
        %v651 = vsel %vm472, %v463, 0
        %v654 = vsel %vm472, %v464, 0
        %v657 = vsel %vm472, %v465, 0
        %v660 = vsel %vm472, %v466, 0
        %v663 = vsel %vm472, %v467, 0
        %vm665 = vcmask 1040384
        %v667 = vsel %vm665, %v471, 0
        %669 = vmatprep.subr.mxu0 0.0
        %670 = vmatpush1.msra.mxu0 %v468
        %671 = vmatprep.subr.mxu0 0.0
        %672 = vmatpush1.msra.mxu0 %v469
        %673 = vmatprep.subr.mxu0 0.0
        %674 = vmatpush1.msra.mxu0 %v470
        %675 = vmatprep.subr.mxu0 0.0
        %676 = vmatpush1.msra.mxu0 %v667
        %677 = vmatprep.subr.mxu0 0.0
        %678 = vmatpush1.msra.mxu0 0.0
        %679 = vmatprep.subr.mxu0 0.0
        %680 = vmatpush1.msra.mxu0 0.0
        %681 = vmatprep.subr.mxu0 0.0
        %682 = vmatpush1.msra.mxu0 0.0
        %683 = vmatprep.subr.mxu0 0.0
        %684 = vmatpush1.msra.mxu0 0.0
        %685 = vmatprep.subr.mxu0 0.0
        %686 = vmatpush1.msra.mxu0 0.0
        %687 = vmatprep.subr.mxu0 0.0
        %688 = vmatpush1.msra.mxu0 0.0
        %689 = vmatprep.subr.mxu0 0.0
        %690 = vmatpush1.msra.mxu0 0.0
        %691 = vmatprep.subr.mxu0 0.0
        %692 = vmatpush1.msra.mxu0 0.0
        %693 = vmatprep.subr.mxu0 0.0
        %694 = vmatpush1.msra.mxu0 0.0
        %695 = vmatprep.subr.mxu0 0.0
        %696 = vmatpush1.msra.mxu0 0.0
        %697 = vmatprep.subr.mxu0 0.0
        %698 = vmatpush1.msra.mxu0 0.0
        %699 = vmatprep.subr.mxu0 0.0
        %700 = vmatpush1.msra.mxu0 0.0
        %701 = vmatprep.subr.mxu0 0.0
        %702 = vmatpush1.msra.mxu0 0.0
        %703 = vmatprep.subr.mxu0 0.0
        %704 = vmatpush1.msra.mxu0 0.0
        %705 = vmatprep.subr.mxu0 0.0
        %706 = vmatpush1.msra.mxu0 0.0
        %707 = vmatprep.subr.mxu0 0.0
        %708 = vmatpush1.msra.mxu0 0.0
        %709 = vmatprep.subr.mxu0 0.0
        %710 = vmatpush1.msra.mxu0 0.0
        %711 = vmatprep.subr.mxu0 0.0
        %712 = vmatpush1.msra.mxu0 0.0
        %713 = vmatprep.subr.mxu0 0.0
        %714 = vmatpush1.msra.mxu0 0.0
        %715 = vmatprep.subr.mxu0 0.0
        %716 = vmatpush1.msra.mxu0 0.0
        %717 = vmatprep.subr.mxu0 0.0
        %718 = vmatpush1.msra.mxu0 0.0
        %719 = vmatprep.subr.mxu0 0.0
        %720 = vmatpush1.msra.mxu0 0.0
        %721 = vmatprep.subr.mxu0 0.0
        %722 = vmatpush1.msra.mxu0 0.0
        %723 = vmatprep.subr.mxu0 0.0
        %724 = vmatpush1.msra.mxu0 0.0
        %725 = vmatprep.subr.mxu0 0.0
        %726 = vmatpush1.msra.mxu0 0.0
        %727 = vmatprep.subr.mxu0 0.0
        %728 = vmatpush1.msra.mxu0 0.0
        %729 = vmatprep.subr.mxu0 0.0
        %730 = vmatpush1.msra.mxu0 0.0
        %731 = vmatprep.subr.mxu0 0.0
        %732 = vmatpush1.msra.mxu0 0.0
        %733 = vmatprep.mubr.f32.mxu0 0.0
        %734 = vmatmul.mubr.f32.gmra.mrb[0].mxu0 %v474
        %v735 = vpop.f32.mrb[0].mxu0
        %v736 = vadd.f32 0.0, %v735
        %v737 = vpop.f32.mrb[0].mxu0
        %738 = vmatprep.mubr.f32.mxu0 0.0
        %739 = vmatmul.mubr.f32.gmra.mrb[0].mxu0 %v477
        %v740 = vpop.f32.mrb[0].mxu0
        %v741 = vadd.f32 0.0, %v740
        %v742 = vpop.f32.mrb[0].mxu0
        %743 = vmatprep.mubr.f32.mxu0 0.0
        %744 = vmatmul.mubr.f32.gmra.mrb[0].mxu0 %v480
        %v745 = vpop.f32.mrb[0].mxu0
        %v746 = vadd.f32 0.0, %v745
        %v747 = vpop.f32.mrb[0].mxu0
        %748 = vmatprep.mubr.f32.mxu0 0.0
        %749 = vmatmul.mubr.f32.gmra.mrb[0].mxu0 %v483
        %v750 = vpop.f32.mrb[0].mxu0
        %v751 = vadd.f32 0.0, %v750
        %v752 = vpop.f32.mrb[0].mxu0
        %753 = vmatprep.mubr.f32.mxu0 0.0
        %754 = vmatmul.mubr.f32.gmra.mrb[0].mxu0 %v486
        %v755 = vpop.f32.mrb[0].mxu0
        %v756 = vadd.f32 0.0, %v755
        %v757 = vpop.f32.mrb[0].mxu0
        %758 = vmatprep.mubr.f32.mxu0 0.0
        %759 = vmatmul.mubr.f32.gmra.mrb[0].mxu0 %v489
        %v760 = vpop.f32.mrb[0].mxu0
        %v761 = vadd.f32 0.0, %v760
        %v762 = vpop.f32.mrb[0].mxu0
        %763 = vmatprep.mubr.f32.mxu0 0.0
        %764 = vmatmul.mubr.f32.gmra.mrb[0].mxu0 %v492
        %v765 = vpop.f32.mrb[0].mxu0
        %v766 = vadd.f32 0.0, %v765
        %v767 = vpop.f32.mrb[0].mxu0
        %768 = vmatprep.mubr.f32.mxu0 0.0
        %769 = vmatmul.mubr.f32.gmra.mrb[0].mxu0 %v495
        %v770 = vpop.f32.mrb[0].mxu0
        %v771 = vadd.f32 0.0, %v770
        %v772 = vpop.f32.mrb[0].mxu0
        %773 = vmatprep.mubr.f32.mxu0 0.0
        %774 = vmatmul.mubr.f32.gmra.mrb[0].mxu0 %v498
        %v775 = vpop.f32.mrb[0].mxu0
        %v776 = vadd.f32 0.0, %v775
        %v777 = vpop.f32.mrb[0].mxu0
        %778 = vmatprep.mubr.f32.mxu0 0.0
        %779 = vmatmul.mubr.f32.gmra.mrb[0].mxu0 %v501
        %v780 = vpop.f32.mrb[0].mxu0
        %v781 = vadd.f32 0.0, %v780
        %v782 = vpop.f32.mrb[0].mxu0
        %783 = vmatprep.mubr.f32.mxu0 0.0
        %784 = vmatmul.mubr.f32.gmra.mrb[0].mxu0 %v504
        %v785 = vpop.f32.mrb[0].mxu0
        %v786 = vadd.f32 0.0, %v785
        %v787 = vpop.f32.mrb[0].mxu0
        %788 = vmatprep.mubr.f32.mxu0 0.0
        %789 = vmatmul.mubr.f32.gmra.mrb[0].mxu0 %v507
        %v790 = vpop.f32.mrb[0].mxu0
        %v791 = vadd.f32 0.0, %v790
        %v792 = vpop.f32.mrb[0].mxu0
        %793 = vmatprep.mubr.f32.mxu0 0.0
        %794 = vmatmul.mubr.f32.gmra.mrb[0].mxu0 %v510
        %v795 = vpop.f32.mrb[0].mxu0
        %v796 = vadd.f32 0.0, %v795
        %v797 = vpop.f32.mrb[0].mxu0
        %798 = vmatprep.mubr.f32.mxu0 0.0
        %799 = vmatmul.mubr.f32.gmra.mrb[0].mxu0 %v513
        %v800 = vpop.f32.mrb[0].mxu0
        %v801 = vadd.f32 0.0, %v800
        %v802 = vpop.f32.mrb[0].mxu0
        %803 = vmatprep.mubr.f32.mxu0 0.0
        %804 = vmatmul.mubr.f32.gmra.mrb[0].mxu0 %v516
        %v805 = vpop.f32.mrb[0].mxu0
        %v806 = vadd.f32 0.0, %v805
        %v807 = vpop.f32.mrb[0].mxu0
        %808 = vmatprep.mubr.f32.mxu0 0.0
        %809 = vmatmul.mubr.f32.gmra.mrb[0].mxu0 %v519
        %v810 = vpop.f32.mrb[0].mxu0
        %v811 = vadd.f32 0.0, %v810
        %v812 = vpop.f32.mrb[0].mxu0
        %813 = vmatprep.mubr.f32.mxu0 0.0
        %814 = vmatmul.mubr.f32.gmra.mrb[0].mxu0 %v522
        %v815 = vpop.f32.mrb[0].mxu0
        %v816 = vadd.f32 0.0, %v815
        %v817 = vpop.f32.mrb[0].mxu0
        %818 = vmatprep.mubr.f32.mxu0 0.0
        %819 = vmatmul.mubr.f32.gmra.mrb[0].mxu0 %v525
        %v820 = vpop.f32.mrb[0].mxu0
        %v821 = vadd.f32 0.0, %v820
        %v822 = vpop.f32.mrb[0].mxu0
        %823 = vmatprep.mubr.f32.mxu0 0.0
        %824 = vmatmul.mubr.f32.gmra.mrb[0].mxu0 %v528
        %v825 = vpop.f32.mrb[0].mxu0
        %v826 = vadd.f32 0.0, %v825
        %v827 = vpop.f32.mrb[0].mxu0
        %828 = vmatprep.mubr.f32.mxu0 0.0
        %829 = vmatmul.mubr.f32.gmra.mrb[0].mxu0 %v531
        %v830 = vpop.f32.mrb[0].mxu0
        %v831 = vadd.f32 0.0, %v830
        %v832 = vpop.f32.mrb[0].mxu0
        %833 = vmatprep.mubr.f32.mxu0 0.0
        %834 = vmatmul.mubr.f32.gmra.mrb[0].mxu0 %v534
        %v835 = vpop.f32.mrb[0].mxu0
        %v836 = vadd.f32 0.0, %v835
        %v837 = vpop.f32.mrb[0].mxu0
        %838 = vmatprep.mubr.f32.mxu0 0.0
        %839 = vmatmul.mubr.f32.gmra.mrb[0].mxu0 %v537
        %v840 = vpop.f32.mrb[0].mxu0
        %v841 = vadd.f32 0.0, %v840
        %v842 = vpop.f32.mrb[0].mxu0
        %843 = vmatprep.mubr.f32.mxu0 0.0
        %844 = vmatmul.mubr.f32.gmra.mrb[0].mxu0 %v540
        %v845 = vpop.f32.mrb[0].mxu0
        %v846 = vadd.f32 0.0, %v845
        %v847 = vpop.f32.mrb[0].mxu0
        %848 = vmatprep.mubr.f32.mxu0 0.0
        %849 = vmatmul.mubr.f32.gmra.mrb[0].mxu0 %v543
        %v850 = vpop.f32.mrb[0].mxu0
        %v851 = vadd.f32 0.0, %v850
        %v852 = vpop.f32.mrb[0].mxu0
        %853 = vmatprep.mubr.f32.mxu0 0.0
        %854 = vmatmul.mubr.f32.gmra.mrb[0].mxu0 %v546
        %v855 = vpop.f32.mrb[0].mxu0
        %v856 = vadd.f32 0.0, %v855
        %v857 = vpop.f32.mrb[0].mxu0
        %858 = vmatprep.mubr.f32.mxu0 0.0
        %859 = vmatmul.mubr.f32.gmra.mrb[0].mxu0 %v549
        %v860 = vpop.f32.mrb[0].mxu0
        %v861 = vadd.f32 0.0, %v860
        %v862 = vpop.f32.mrb[0].mxu0
        %863 = vmatprep.mubr.f32.mxu0 0.0
        %864 = vmatmul.mubr.f32.gmra.mrb[0].mxu0 %v552
        %v865 = vpop.f32.mrb[0].mxu0
        %v866 = vadd.f32 0.0, %v865
        %v867 = vpop.f32.mrb[0].mxu0
        %868 = vmatprep.mubr.f32.mxu0 0.0
        %869 = vmatmul.mubr.f32.gmra.mrb[0].mxu0 %v555
        %v870 = vpop.f32.mrb[0].mxu0
        %v871 = vadd.f32 0.0, %v870
        %v872 = vpop.f32.mrb[0].mxu0
        %873 = vmatprep.mubr.f32.mxu0 0.0
        %874 = vmatmul.mubr.f32.gmra.mrb[0].mxu0 %v558
        %v875 = vpop.f32.mrb[0].mxu0
        %v876 = vadd.f32 0.0, %v875
        %v877 = vpop.f32.mrb[0].mxu0
        %878 = vmatprep.mubr.f32.mxu0 0.0
        %879 = vmatmul.mubr.f32.gmra.mrb[0].mxu0 %v561
        %v880 = vpop.f32.mrb[0].mxu0
        %v881 = vadd.f32 0.0, %v880
        %v882 = vpop.f32.mrb[0].mxu0
        %883 = vmatprep.mubr.f32.mxu0 0.0
        %884 = vmatmul.mubr.f32.gmra.mrb[0].mxu0 %v564
        %v885 = vpop.f32.mrb[0].mxu0
        %v886 = vadd.f32 0.0, %v885
        %v887 = vpop.f32.mrb[0].mxu0
        %888 = vmatprep.mubr.f32.mxu0 0.0
        %889 = vmatmul.mubr.f32.gmra.mrb[0].mxu0 %v567
        %v890 = vpop.f32.mrb[0].mxu0
        %v891 = vadd.f32 0.0, %v890
        %v892 = vpop.f32.mrb[0].mxu0
        %893 = vmatprep.mubr.f32.mxu0 0.0
        %894 = vmatmul.mubr.f32.gmra.mrb[0].mxu0 %v570
        %v895 = vpop.f32.mrb[0].mxu0
        %v896 = vadd.f32 0.0, %v895
        %v897 = vpop.f32.mrb[0].mxu0
        %898 = vmatprep.mubr.f32.mxu0 0.0
        %899 = vmatmul.mubr.f32.gmra.mrb[0].mxu0 %v573
        %v900 = vpop.f32.mrb[0].mxu0
        %v901 = vadd.f32 0.0, %v900
        %v902 = vpop.f32.mrb[0].mxu0
        %903 = vmatprep.mubr.f32.mxu0 0.0
        %904 = vmatmul.mubr.f32.gmra.mrb[0].mxu0 %v576
        %v905 = vpop.f32.mrb[0].mxu0
        %v906 = vadd.f32 0.0, %v905
        %v907 = vpop.f32.mrb[0].mxu0
        %908 = vmatprep.mubr.f32.mxu0 0.0
        %909 = vmatmul.mubr.f32.gmra.mrb[0].mxu0 %v579
        %v910 = vpop.f32.mrb[0].mxu0
        %v911 = vadd.f32 0.0, %v910
        %v912 = vpop.f32.mrb[0].mxu0
        %913 = vmatprep.mubr.f32.mxu0 0.0
        %914 = vmatmul.mubr.f32.gmra.mrb[0].mxu0 %v582
        %v915 = vpop.f32.mrb[0].mxu0
        %v916 = vadd.f32 0.0, %v915
        %v917 = vpop.f32.mrb[0].mxu0
        %918 = vmatprep.mubr.f32.mxu0 0.0
        %919 = vmatmul.mubr.f32.gmra.mrb[0].mxu0 %v585
        %v920 = vpop.f32.mrb[0].mxu0
        %v921 = vadd.f32 0.0, %v920
        %v922 = vpop.f32.mrb[0].mxu0
        %923 = vmatprep.mubr.f32.mxu0 0.0
        %924 = vmatmul.mubr.f32.gmra.mrb[0].mxu0 %v588
        %v925 = vpop.f32.mrb[0].mxu0
        %v926 = vadd.f32 0.0, %v925
        %v927 = vpop.f32.mrb[0].mxu0
        %928 = vmatprep.mubr.f32.mxu0 0.0
        %929 = vmatmul.mubr.f32.gmra.mrb[0].mxu0 %v591
        %v930 = vpop.f32.mrb[0].mxu0
        %v931 = vadd.f32 0.0, %v930
        %v932 = vpop.f32.mrb[0].mxu0
        %933 = vmatprep.mubr.f32.mxu0 0.0
        %934 = vmatmul.mubr.f32.gmra.mrb[0].mxu0 %v594
        %v935 = vpop.f32.mrb[0].mxu0
        %v936 = vadd.f32 0.0, %v935
        %v937 = vpop.f32.mrb[0].mxu0
        %938 = vmatprep.mubr.f32.mxu0 0.0
        %939 = vmatmul.mubr.f32.gmra.mrb[0].mxu0 %v597
        %v940 = vpop.f32.mrb[0].mxu0
        %v941 = vadd.f32 0.0, %v940
        %v942 = vpop.f32.mrb[0].mxu0
        %943 = vmatprep.mubr.f32.mxu0 0.0
        %944 = vmatmul.mubr.f32.gmra.mrb[0].mxu0 %v600
        %v945 = vpop.f32.mrb[0].mxu0
        %v946 = vadd.f32 0.0, %v945
        %v947 = vpop.f32.mrb[0].mxu0
        %948 = vmatprep.mubr.f32.mxu0 0.0
        %949 = vmatmul.mubr.f32.gmra.mrb[0].mxu0 %v603
        %v950 = vpop.f32.mrb[0].mxu0
        %v951 = vadd.f32 0.0, %v950
        %v952 = vpop.f32.mrb[0].mxu0
        %953 = vmatprep.mubr.f32.mxu0 0.0
        %954 = vmatmul.mubr.f32.gmra.mrb[0].mxu0 %v606
        %v955 = vpop.f32.mrb[0].mxu0
        %v956 = vadd.f32 0.0, %v955
        %v957 = vpop.f32.mrb[0].mxu0
        %958 = vmatprep.mubr.f32.mxu0 0.0
        %959 = vmatmul.mubr.f32.gmra.mrb[0].mxu0 %v609
        %v960 = vpop.f32.mrb[0].mxu0
        %v961 = vadd.f32 0.0, %v960
        %v962 = vpop.f32.mrb[0].mxu0
        %963 = vmatprep.mubr.f32.mxu0 0.0
        %964 = vmatmul.mubr.f32.gmra.mrb[0].mxu0 %v612
        %v965 = vpop.f32.mrb[0].mxu0
        %v966 = vadd.f32 0.0, %v965
        %v967 = vpop.f32.mrb[0].mxu0
        %968 = vmatprep.mubr.f32.mxu0 0.0
        %969 = vmatmul.mubr.f32.gmra.mrb[0].mxu0 %v615
        %v970 = vpop.f32.mrb[0].mxu0
        %v971 = vadd.f32 0.0, %v970
        %v972 = vpop.f32.mrb[0].mxu0
        %973 = vmatprep.mubr.f32.mxu0 0.0
        %974 = vmatmul.mubr.f32.gmra.mrb[0].mxu0 %v618
        %v975 = vpop.f32.mrb[0].mxu0
        %v976 = vadd.f32 0.0, %v975
        %v977 = vpop.f32.mrb[0].mxu0
        %978 = vmatprep.mubr.f32.mxu0 0.0
        %979 = vmatmul.mubr.f32.gmra.mrb[0].mxu0 %v621
        %v980 = vpop.f32.mrb[0].mxu0
        %v981 = vadd.f32 0.0, %v980
        %v982 = vpop.f32.mrb[0].mxu0
        %983 = vmatprep.mubr.f32.mxu0 0.0
        %984 = vmatmul.mubr.f32.gmra.mrb[0].mxu0 %v624
        %v985 = vpop.f32.mrb[0].mxu0
        %v986 = vadd.f32 0.0, %v985
        %v987 = vpop.f32.mrb[0].mxu0
        %988 = vmatprep.mubr.f32.mxu0 0.0
        %989 = vmatmul.mubr.f32.gmra.mrb[0].mxu0 %v627
        %v990 = vpop.f32.mrb[0].mxu0
        %v991 = vadd.f32 0.0, %v990
        %v992 = vpop.f32.mrb[0].mxu0
        %993 = vmatprep.mubr.f32.mxu0 0.0
        %994 = vmatmul.mubr.f32.gmra.mrb[0].mxu0 %v630
        %v995 = vpop.f32.mrb[0].mxu0
        %v996 = vadd.f32 0.0, %v995
        %v997 = vpop.f32.mrb[0].mxu0
        %998 = vmatprep.mubr.f32.mxu0 0.0
        %999 = vmatmul.mubr.f32.gmra.mrb[0].mxu0 %v633
        %v1000 = vpop.f32.mrb[0].mxu0
        %v1001 = vadd.f32 0.0, %v1000
        %v1002 = vpop.f32.mrb[0].mxu0
        %1003 = vmatprep.mubr.f32.mxu0 0.0
        %1004 = vmatmul.mubr.f32.gmra.mrb[0].mxu0 %v636
        %v1005 = vpop.f32.mrb[0].mxu0
        %v1006 = vadd.f32 0.0, %v1005
        %v1007 = vpop.f32.mrb[0].mxu0
        %1008 = vmatprep.mubr.f32.mxu0 0.0
        %1009 = vmatmul.mubr.f32.gmra.mrb[0].mxu0 %v639
        %v1010 = vpop.f32.mrb[0].mxu0
        %v1011 = vadd.f32 0.0, %v1010
        %v1012 = vpop.f32.mrb[0].mxu0
        %1013 = vmatprep.mubr.f32.mxu0 0.0
        %1014 = vmatmul.mubr.f32.gmra.mrb[0].mxu0 %v642
        %v1015 = vpop.f32.mrb[0].mxu0
        %v1016 = vadd.f32 0.0, %v1015
        %v1017 = vpop.f32.mrb[0].mxu0
        %1018 = vmatprep.mubr.f32.mxu0 0.0
        %1019 = vmatmul.mubr.f32.gmra.mrb[0].mxu0 %v645
        %v1020 = vpop.f32.mrb[0].mxu0
        %v1021 = vadd.f32 0.0, %v1020
        %v1022 = vpop.f32.mrb[0].mxu0
        %1023 = vmatprep.mubr.f32.mxu0 0.0
        %1024 = vmatmul.mubr.f32.gmra.mrb[0].mxu0 %v648
        %v1025 = vpop.f32.mrb[0].mxu0
        %v1026 = vadd.f32 0.0, %v1025
        %v1027 = vpop.f32.mrb[0].mxu0
        %1028 = vmatprep.mubr.f32.mxu0 0.0
        %1029 = vmatmul.mubr.f32.gmra.mrb[0].mxu0 %v651
        %v1030 = vpop.f32.mrb[0].mxu0
        %v1031 = vadd.f32 0.0, %v1030
        %v1032 = vpop.f32.mrb[0].mxu0
        %1033 = vmatprep.mubr.f32.mxu0 0.0
        %1034 = vmatmul.mubr.f32.gmra.mrb[0].mxu0 %v654
        %v1035 = vpop.f32.mrb[0].mxu0
        %v1036 = vadd.f32 0.0, %v1035
        %v1037 = vpop.f32.mrb[0].mxu0
        %1038 = vmatprep.mubr.f32.mxu0 0.0
        %1039 = vmatmul.mubr.f32.gmra.mrb[0].mxu0 %v657
        %v1040 = vpop.f32.mrb[0].mxu0
        %v1041 = vadd.f32 0.0, %v1040
        %v1042 = vpop.f32.mrb[0].mxu0
        %1043 = vmatprep.mubr.f32.mxu0 0.0
        %1044 = vmatmul.mubr.f32.gmra.mrb[0].mxu0 %v660
        %v1045 = vpop.f32.mrb[0].mxu0
        %v1046 = vadd.f32 0.0, %v1045
        %v1047 = vpop.f32.mrb[0].mxu0
        %1048 = vmatprep.mubr.f32.mxu0 0.0
        %1049 = vmatmul.mubr.f32.gmra.mrb[0].mxu0 %v663
        %v1050 = vpop.f32.mrb[0].mxu0
        %v1051 = vadd.f32 0.0, %v1050
        %v1052 = vpop.f32.mrb[0].mxu0
        %1053 = vdwg.mxu0
        %v1054 = vadd.f32 %v340, %v736
        %v1055 = vadd.f32 %v341, %v741
        %v1056 = vadd.f32 %v342, %v746
        %v1057 = vadd.f32 %v343, %v751
        %v1058 = vadd.f32 %v344, %v756
        %v1059 = vadd.f32 %v345, %v761
        %v1060 = vadd.f32 %v346, %v766
        %v1061 = vadd.f32 %v347, %v771
        %v1062 = vadd.f32 %v348, %v776
        %v1063 = vadd.f32 %v349, %v781
        %v1064 = vadd.f32 %v350, %v786
        %v1065 = vadd.f32 %v351, %v791
        %v1066 = vadd.f32 %v352, %v796
        %v1067 = vadd.f32 %v353, %v801
        %v1068 = vadd.f32 %v354, %v806
        %v1069 = vadd.f32 %v355, %v811
        %v1070 = vadd.f32 %v356, %v816
        %v1071 = vadd.f32 %v357, %v821
        %v1072 = vadd.f32 %v358, %v826
        %v1073 = vadd.f32 %v359, %v831
        %v1074 = vadd.f32 %v360, %v836
        %v1075 = vadd.f32 %v361, %v841
        %v1076 = vadd.f32 %v362, %v846
        %v1077 = vadd.f32 %v363, %v851
        %v1078 = vadd.f32 %v364, %v856
        %v1079 = vadd.f32 %v365, %v861
        %v1080 = vadd.f32 %v366, %v866
        %v1081 = vadd.f32 %v367, %v871
        %v1082 = vadd.f32 %v368, %v876
        %v1083 = vadd.f32 %v369, %v881
        %v1084 = vadd.f32 %v370, %v886
        %v1085 = vadd.f32 %v371, %v891
        %v1086 = vadd.f32 %v372, %v896
        %v1087 = vadd.f32 %v373, %v901
        %v1088 = vadd.f32 %v374, %v906
        %v1089 = vadd.f32 %v375, %v911
        %v1090 = vadd.f32 %v376, %v916
        %v1091 = vadd.f32 %v377, %v921
        %v1092 = vadd.f32 %v378, %v926
        %v1093 = vadd.f32 %v379, %v931
        %v1094 = vadd.f32 %v380, %v936
        %v1095 = vadd.f32 %v381, %v941
        %v1096 = vadd.f32 %v382, %v946
        %v1097 = vadd.f32 %v383, %v951
        %v1098 = vadd.f32 %v384, %v956
        %v1099 = vadd.f32 %v385, %v961
        %v1100 = vadd.f32 %v386, %v966
        %v1101 = vadd.f32 %v387, %v971
        %v1102 = vadd.f32 %v388, %v976
        %v1103 = vadd.f32 %v389, %v981
        %v1104 = vadd.f32 %v390, %v986
        %v1105 = vadd.f32 %v391, %v991
        %v1106 = vadd.f32 %v392, %v996
        %v1107 = vadd.f32 %v393, %v1001
        %v1108 = vadd.f32 %v394, %v1006
        %v1109 = vadd.f32 %v395, %v1011
        %v1110 = vadd.f32 %v396, %v1016
        %v1111 = vadd.f32 %v397, %v1021
        %v1112 = vadd.f32 %v398, %v1026
        %v1113 = vadd.f32 %v399, %v1031
        %v1114 = vadd.f32 %v400, %v1036
        %v1115 = vadd.f32 %v401, %v1041
        %v1116 = vadd.f32 %v402, %v1046
        %v1117 = vadd.f32 %v403, %v1051
        %vm1118 = vcmask 261120
        %1119 = vst.msk [vmem:[#allocation2] sm:$0xff] %vm1118, %v1054
        %1120 = vst.msk [vmem:[#allocation2 + $0x8] sm:$0xff] %vm1118, %v1055
        %1121 = vst.msk [vmem:[#allocation2 + $0x10] sm:$0xff] %vm1118, %v1056
        %1122 = vst.msk [vmem:[#allocation2 + $0x18] sm:$0xff] %vm1118, %v1057
        %1123 = vst.msk [vmem:[#allocation2 + $0x20] sm:$0xff] %vm1118, %v1058
        %1124 = vst.msk [vmem:[#allocation2 + $0x28] sm:$0xff] %vm1118, %v1059
        %1125 = vst.msk [vmem:[#allocation2 + $0x30] sm:$0xff] %vm1118, %v1060
        %1126 = vst.msk [vmem:[#allocation2 + $0x38] sm:$0xff] %vm1118, %v1061
        %1127 = vst.msk [vmem:[#allocation2 + $0x40] sm:$0xff] %vm1118, %v1062
        %1128 = vst.msk [vmem:[#allocation2 + $0x48] sm:$0xff] %vm1118, %v1063
        %1129 = vst.msk [vmem:[#allocation2 + $0x50] sm:$0xff] %vm1118, %v1064
        %1130 = vst.msk [vmem:[#allocation2 + $0x58] sm:$0xff] %vm1118, %v1065
        %1131 = vst.msk [vmem:[#allocation2 + $0x60] sm:$0xff] %vm1118, %v1066
        %1132 = vst.msk [vmem:[#allocation2 + $0x68] sm:$0xff] %vm1118, %v1067
        %1133 = vst.msk [vmem:[#allocation2 + $0x70] sm:$0xff] %vm1118, %v1068
        %1134 = vst.msk [vmem:[#allocation2 + $0x78] sm:$0xff] %vm1118, %v1069
        %1135 = vst.msk [vmem:[#allocation2 + $0x80] sm:$0xff] %vm1118, %v1070
        %1136 = vst.msk [vmem:[#allocation2 + $0x88] sm:$0xff] %vm1118, %v1071
        %1137 = vst.msk [vmem:[#allocation2 + $0x90] sm:$0xff] %vm1118, %v1072
        %1138 = vst.msk [vmem:[#allocation2 + $0x98] sm:$0xff] %vm1118, %v1073
        %1139 = vst.msk [vmem:[#allocation2 + $0xa0] sm:$0xff] %vm1118, %v1074
        %1140 = vst.msk [vmem:[#allocation2 + $0xa8] sm:$0xff] %vm1118, %v1075
        %1141 = vst.msk [vmem:[#allocation2 + $0xb0] sm:$0xff] %vm1118, %v1076
        %1142 = vst.msk [vmem:[#allocation2 + $0xb8] sm:$0xff] %vm1118, %v1077
        %1143 = vst.msk [vmem:[#allocation2 + $0xc0] sm:$0xff] %vm1118, %v1078
        %1144 = vst.msk [vmem:[#allocation2 + $0xc8] sm:$0xff] %vm1118, %v1079
        %1145 = vst.msk [vmem:[#allocation2 + $0xd0] sm:$0xff] %vm1118, %v1080
        %1146 = vst.msk [vmem:[#allocation2 + $0xd8] sm:$0xff] %vm1118, %v1081
        %1147 = vst.msk [vmem:[#allocation2 + $0xe0] sm:$0xff] %vm1118, %v1082
        %1148 = vst.msk [vmem:[#allocation2 + $0xe8] sm:$0xff] %vm1118, %v1083
        %1149 = vst.msk [vmem:[#allocation2 + $0xf0] sm:$0xff] %vm1118, %v1084
        %1150 = vst.msk [vmem:[#allocation2 + $0xf8] sm:$0xff] %vm1118, %v1085
        %1151 = vst.msk [vmem:[#allocation2 + $0x100] sm:$0xff] %vm1118, %v1086
        %1152 = vst.msk [vmem:[#allocation2 + $0x108] sm:$0xff] %vm1118, %v1087
        %1153 = vst.msk [vmem:[#allocation2 + $0x110] sm:$0xff] %vm1118, %v1088
        %1154 = vst.msk [vmem:[#allocation2 + $0x118] sm:$0xff] %vm1118, %v1089
        %1155 = vst.msk [vmem:[#allocation2 + $0x120] sm:$0xff] %vm1118, %v1090
        %1156 = vst.msk [vmem:[#allocation2 + $0x128] sm:$0xff] %vm1118, %v1091
        %1157 = vst.msk [vmem:[#allocation2 + $0x130] sm:$0xff] %vm1118, %v1092
        %1158 = vst.msk [vmem:[#allocation2 + $0x138] sm:$0xff] %vm1118, %v1093
        %1159 = vst.msk [vmem:[#allocation2 + $0x140] sm:$0xff] %vm1118, %v1094
        %1160 = vst.msk [vmem:[#allocation2 + $0x148] sm:$0xff] %vm1118, %v1095
        %1161 = vst.msk [vmem:[#allocation2 + $0x150] sm:$0xff] %vm1118, %v1096
        %1162 = vst.msk [vmem:[#allocation2 + $0x158] sm:$0xff] %vm1118, %v1097
        %1163 = vst.msk [vmem:[#allocation2 + $0x160] sm:$0xff] %vm1118, %v1098
        %1164 = vst.msk [vmem:[#allocation2 + $0x168] sm:$0xff] %vm1118, %v1099
        %1165 = vst.msk [vmem:[#allocation2 + $0x170] sm:$0xff] %vm1118, %v1100
        %1166 = vst.msk [vmem:[#allocation2 + $0x178] sm:$0xff] %vm1118, %v1101
        %1167 = vst.msk [vmem:[#allocation2 + $0x180] sm:$0xff] %vm1118, %v1102
        %1168 = vst.msk [vmem:[#allocation2 + $0x188] sm:$0xff] %vm1118, %v1103
        %1169 = vst.msk [vmem:[#allocation2 + $0x190] sm:$0xff] %vm1118, %v1104
        %1170 = vst.msk [vmem:[#allocation2 + $0x198] sm:$0xff] %vm1118, %v1105
        %1171 = vst.msk [vmem:[#allocation2 + $0x1a0] sm:$0xff] %vm1118, %v1106
        %1172 = vst.msk [vmem:[#allocation2 + $0x1a8] sm:$0xff] %vm1118, %v1107
        %1173 = vst.msk [vmem:[#allocation2 + $0x1b0] sm:$0xff] %vm1118, %v1108
        %1174 = vst.msk [vmem:[#allocation2 + $0x1b8] sm:$0xff] %vm1118, %v1109
        %1175 = vst.msk [vmem:[#allocation2 + $0x1c0] sm:$0xff] %vm1118, %v1110
        %1176 = vst.msk [vmem:[#allocation2 + $0x1c8] sm:$0xff] %vm1118, %v1111
        %1177 = vst.msk [vmem:[#allocation2 + $0x1d0] sm:$0xff] %vm1118, %v1112
        %1178 = vst.msk [vmem:[#allocation2 + $0x1d8] sm:$0xff] %vm1118, %v1113
        %1179 = vst.msk [vmem:[#allocation2 + $0x1e0] sm:$0xff] %vm1118, %v1114
        %1180 = vst.msk [vmem:[#allocation2 + $0x1e8] sm:$0xff] %vm1118, %v1115
        %1181 = vst.msk [vmem:[#allocation2 + $0x1f0] sm:$0xff] %vm1118, %v1116
        %1182 = vst.msk [vmem:[#allocation2 + $0x1f8] sm:$0xff] %vm1118, %v1117
        // Predicated region
        $region37: #{lenet_forward.5} parent=31 // pred_check
          %p1183 = pneg %p271
        $region38: #{lenet_forward.5} parent=31 // pred_check_branch
          %1185 = sbr.rel (%p1183) target = $region40
        $region39: #{lenet_forward.5} parent=31 // pred_region
          %v1186 = vld [vmem:[#allocation2] sm:$0xff]
          %v1187 = vld [vmem:[#allocation2 + $0x8] sm:$0xff]
          %v1188 = vld [vmem:[#allocation2 + $0x10] sm:$0xff]
          %v1189 = vld [vmem:[#allocation2 + $0x18] sm:$0xff]
          %v1190 = vld [vmem:[#allocation2 + $0x20] sm:$0xff]
          %v1191 = vld [vmem:[#allocation2 + $0x28] sm:$0xff]
          %v1192 = vld [vmem:[#allocation2 + $0x30] sm:$0xff]
          %v1193 = vld [vmem:[#allocation2 + $0x38] sm:$0xff]
          %v1194 = vld [vmem:[#allocation2 + $0x40] sm:$0xff]
          %v1195 = vld [vmem:[#allocation2 + $0x48] sm:$0xff]
          %v1196 = vld [vmem:[#allocation2 + $0x50] sm:$0xff]
          %v1197 = vld [vmem:[#allocation2 + $0x58] sm:$0xff]
          %v1198 = vld [vmem:[#allocation2 + $0x60] sm:$0xff]
          %v1199 = vld [vmem:[#allocation2 + $0x68] sm:$0xff]
          %v1200 = vld [vmem:[#allocation2 + $0x70] sm:$0xff]
          %v1201 = vld [vmem:[#allocation2 + $0x78] sm:$0xff]
          %v1202 = vld [vmem:[#allocation2 + $0x80] sm:$0xff]
          %v1203 = vld [vmem:[#allocation2 + $0x88] sm:$0xff]
          %v1204 = vld [vmem:[#allocation2 + $0x90] sm:$0xff]
          %v1205 = vld [vmem:[#allocation2 + $0x98] sm:$0xff]
          %v1206 = vld [vmem:[#allocation2 + $0xa0] sm:$0xff]
          %v1207 = vld [vmem:[#allocation2 + $0xa8] sm:$0xff]
          %v1208 = vld [vmem:[#allocation2 + $0xb0] sm:$0xff]
          %v1209 = vld [vmem:[#allocation2 + $0xb8] sm:$0xff]
          %v1210 = vld [vmem:[#allocation2 + $0xc0] sm:$0xff]
          %v1211 = vld [vmem:[#allocation2 + $0xc8] sm:$0xff]
          %v1212 = vld [vmem:[#allocation2 + $0xd0] sm:$0xff]
          %v1213 = vld [vmem:[#allocation2 + $0xd8] sm:$0xff]
          %v1214 = vld [vmem:[#allocation2 + $0xe0] sm:$0xff]
          %v1215 = vld [vmem:[#allocation2 + $0xe8] sm:$0xff]
          %v1216 = vld [vmem:[#allocation2 + $0xf0] sm:$0xff]
          %v1217 = vld [vmem:[#allocation2 + $0xf8] sm:$0xff]
          %v1218 = vld [vmem:[#allocation2 + $0x100] sm:$0xff]
          %v1219 = vld [vmem:[#allocation2 + $0x108] sm:$0xff]
          %v1220 = vld [vmem:[#allocation2 + $0x110] sm:$0xff]
          %v1221 = vld [vmem:[#allocation2 + $0x118] sm:$0xff]
          %v1222 = vld [vmem:[#allocation2 + $0x120] sm:$0xff]
          %v1223 = vld [vmem:[#allocation2 + $0x128] sm:$0xff]
          %v1224 = vld [vmem:[#allocation2 + $0x130] sm:$0xff]
          %v1225 = vld [vmem:[#allocation2 + $0x138] sm:$0xff]
          %v1226 = vld [vmem:[#allocation2 + $0x140] sm:$0xff]
          %v1227 = vld [vmem:[#allocation2 + $0x148] sm:$0xff]
          %v1228 = vld [vmem:[#allocation2 + $0x150] sm:$0xff]
          %v1229 = vld [vmem:[#allocation2 + $0x158] sm:$0xff]
          %v1230 = vld [vmem:[#allocation2 + $0x160] sm:$0xff]
          %v1231 = vld [vmem:[#allocation2 + $0x168] sm:$0xff]
          %v1232 = vld [vmem:[#allocation2 + $0x170] sm:$0xff]
          %v1233 = vld [vmem:[#allocation2 + $0x178] sm:$0xff]
          %v1234 = vld [vmem:[#allocation2 + $0x180] sm:$0xff]
          %v1235 = vld [vmem:[#allocation2 + $0x188] sm:$0xff]
          %v1236 = vld [vmem:[#allocation2 + $0x190] sm:$0xff]
          %v1237 = vld [vmem:[#allocation2 + $0x198] sm:$0xff]
          %v1238 = vld [vmem:[#allocation2 + $0x1a0] sm:$0xff]
          %v1239 = vld [vmem:[#allocation2 + $0x1a8] sm:$0xff]
          %v1240 = vld [vmem:[#allocation2 + $0x1b0] sm:$0xff]
          %v1241 = vld [vmem:[#allocation2 + $0x1b8] sm:$0xff]
          %v1242 = vld [vmem:[#allocation2 + $0x1c0] sm:$0xff]
          %v1243 = vld [vmem:[#allocation2 + $0x1c8] sm:$0xff]
          %v1244 = vld [vmem:[#allocation2 + $0x1d0] sm:$0xff]
          %v1245 = vld [vmem:[#allocation2 + $0x1d8] sm:$0xff]
          %v1246 = vld [vmem:[#allocation2 + $0x1e0] sm:$0xff]
          %v1247 = vld [vmem:[#allocation2 + $0x1e8] sm:$0xff]
          %v1248 = vld [vmem:[#allocation2 + $0x1f0] sm:$0xff]
          %v1249 = vld [vmem:[#allocation2 + $0x1f8] sm:$0xff]
          %v1250 = vld [vmem:[%s265] sm:$0x1]
          %v1252 = vlaneseq
          %v1253 = vshrl.u32 %v1252, 7
          %v1254 = vsub.s32 0, %v1253
          %v1255 = vrot.slane %v1250, %v1254
          %v1257 = vadd.f32 %v1186, %v1255
          %v1258 = vadd.f32 %v1187, %v1255
          %v1259 = vadd.f32 %v1188, %v1255
          %v1260 = vadd.f32 %v1189, %v1255
          %v1261 = vadd.f32 %v1190, %v1255
          %v1262 = vadd.f32 %v1191, %v1255
          %v1263 = vadd.f32 %v1192, %v1255
          %v1264 = vadd.f32 %v1193, %v1255
          %v1265 = vadd.f32 %v1194, %v1255
          %v1266 = vadd.f32 %v1195, %v1255
          %v1267 = vadd.f32 %v1196, %v1255
          %v1268 = vadd.f32 %v1197, %v1255
          %v1269 = vadd.f32 %v1198, %v1255
          %v1270 = vadd.f32 %v1199, %v1255
          %v1271 = vadd.f32 %v1200, %v1255
          %v1272 = vadd.f32 %v1201, %v1255
          %v1273 = vadd.f32 %v1202, %v1255
          %v1274 = vadd.f32 %v1203, %v1255
          %v1275 = vadd.f32 %v1204, %v1255
          %v1276 = vadd.f32 %v1205, %v1255
          %v1277 = vadd.f32 %v1206, %v1255
          %v1278 = vadd.f32 %v1207, %v1255
          %v1279 = vadd.f32 %v1208, %v1255
          %v1280 = vadd.f32 %v1209, %v1255
          %v1281 = vadd.f32 %v1210, %v1255
          %v1282 = vadd.f32 %v1211, %v1255
          %v1283 = vadd.f32 %v1212, %v1255
          %v1284 = vadd.f32 %v1213, %v1255
          %v1285 = vadd.f32 %v1214, %v1255
          %v1286 = vadd.f32 %v1215, %v1255
          %v1287 = vadd.f32 %v1216, %v1255
          %v1288 = vadd.f32 %v1217, %v1255
          %v1289 = vadd.f32 %v1218, %v1255
          %v1290 = vadd.f32 %v1219, %v1255
          %v1291 = vadd.f32 %v1220, %v1255
          %v1292 = vadd.f32 %v1221, %v1255
          %v1293 = vadd.f32 %v1222, %v1255
          %v1294 = vadd.f32 %v1223, %v1255
          %v1295 = vadd.f32 %v1224, %v1255
          %v1296 = vadd.f32 %v1225, %v1255
          %v1297 = vadd.f32 %v1226, %v1255
          %v1298 = vadd.f32 %v1227, %v1255
          %v1299 = vadd.f32 %v1228, %v1255
          %v1300 = vadd.f32 %v1229, %v1255
          %v1301 = vadd.f32 %v1230, %v1255
          %v1302 = vadd.f32 %v1231, %v1255
          %v1303 = vadd.f32 %v1232, %v1255
          %v1304 = vadd.f32 %v1233, %v1255
          %v1305 = vadd.f32 %v1234, %v1255
          %v1306 = vadd.f32 %v1235, %v1255
          %v1307 = vadd.f32 %v1236, %v1255
          %v1308 = vadd.f32 %v1237, %v1255
          %v1309 = vadd.f32 %v1238, %v1255
          %v1310 = vadd.f32 %v1239, %v1255
          %v1311 = vadd.f32 %v1240, %v1255
          %v1312 = vadd.f32 %v1241, %v1255
          %v1313 = vadd.f32 %v1242, %v1255
          %v1314 = vadd.f32 %v1243, %v1255
          %v1315 = vadd.f32 %v1244, %v1255
          %v1316 = vadd.f32 %v1245, %v1255
          %v1317 = vadd.f32 %v1246, %v1255
          %v1318 = vadd.f32 %v1247, %v1255
          %v1319 = vadd.f32 %v1248, %v1255
          %v1320 = vadd.f32 %v1249, %v1255
          %1321 = vst.msk [vmem:[%s236] sm:$0xff] %vm1118, %v1257
          %1322 = vst.msk [vmem:[%s236 + $0x8] sm:$0xff] %vm1118, %v1258
          %1323 = vst.msk [vmem:[%s236 + $0x10] sm:$0xff] %vm1118, %v1259
          %1324 = vst.msk [vmem:[%s236 + $0x18] sm:$0xff] %vm1118, %v1260
          %1325 = vst.msk [vmem:[%s236 + $0x20] sm:$0xff] %vm1118, %v1261
          %1326 = vst.msk [vmem:[%s236 + $0x28] sm:$0xff] %vm1118, %v1262
          %1327 = vst.msk [vmem:[%s236 + $0x30] sm:$0xff] %vm1118, %v1263
          %1328 = vst.msk [vmem:[%s236 + $0x38] sm:$0xff] %vm1118, %v1264
          %1329 = vst.msk [vmem:[%s236 + $0x40] sm:$0xff] %vm1118, %v1265
          %1330 = vst.msk [vmem:[%s236 + $0x48] sm:$0xff] %vm1118, %v1266
          %1331 = vst.msk [vmem:[%s236 + $0x50] sm:$0xff] %vm1118, %v1267
          %1332 = vst.msk [vmem:[%s236 + $0x58] sm:$0xff] %vm1118, %v1268
          %1333 = vst.msk [vmem:[%s236 + $0x60] sm:$0xff] %vm1118, %v1269
          %1334 = vst.msk [vmem:[%s236 + $0x68] sm:$0xff] %vm1118, %v1270
          %1335 = vst.msk [vmem:[%s236 + $0x70] sm:$0xff] %vm1118, %v1271
          %1336 = vst.msk [vmem:[%s236 + $0x78] sm:$0xff] %vm1118, %v1272
          %1337 = vst.msk [vmem:[%s236 + $0x80] sm:$0xff] %vm1118, %v1273
          %1338 = vst.msk [vmem:[%s236 + $0x88] sm:$0xff] %vm1118, %v1274
          %1339 = vst.msk [vmem:[%s236 + $0x90] sm:$0xff] %vm1118, %v1275
          %1340 = vst.msk [vmem:[%s236 + $0x98] sm:$0xff] %vm1118, %v1276
          %1341 = vst.msk [vmem:[%s236 + $0xa0] sm:$0xff] %vm1118, %v1277
          %1342 = vst.msk [vmem:[%s236 + $0xa8] sm:$0xff] %vm1118, %v1278
          %1343 = vst.msk [vmem:[%s236 + $0xb0] sm:$0xff] %vm1118, %v1279
          %1344 = vst.msk [vmem:[%s236 + $0xb8] sm:$0xff] %vm1118, %v1280
          %1345 = vst.msk [vmem:[%s236 + $0xc0] sm:$0xff] %vm1118, %v1281
          %1346 = vst.msk [vmem:[%s236 + $0xc8] sm:$0xff] %vm1118, %v1282
          %1347 = vst.msk [vmem:[%s236 + $0xd0] sm:$0xff] %vm1118, %v1283
          %1348 = vst.msk [vmem:[%s236 + $0xd8] sm:$0xff] %vm1118, %v1284
          %1349 = vst.msk [vmem:[%s236 + $0xe0] sm:$0xff] %vm1118, %v1285
          %1350 = vst.msk [vmem:[%s236 + $0xe8] sm:$0xff] %vm1118, %v1286
          %1351 = vst.msk [vmem:[%s236 + $0xf0] sm:$0xff] %vm1118, %v1287
          %1352 = vst.msk [vmem:[%s236 + $0xf8] sm:$0xff] %vm1118, %v1288
          %1353 = vst.msk [vmem:[%s236 + $0x100] sm:$0xff] %vm1118, %v1289
          %1354 = vst.msk [vmem:[%s236 + $0x108] sm:$0xff] %vm1118, %v1290
          %1355 = vst.msk [vmem:[%s236 + $0x110] sm:$0xff] %vm1118, %v1291
          %1356 = vst.msk [vmem:[%s236 + $0x118] sm:$0xff] %vm1118, %v1292
          %1357 = vst.msk [vmem:[%s236 + $0x120] sm:$0xff] %vm1118, %v1293
          %1358 = vst.msk [vmem:[%s236 + $0x128] sm:$0xff] %vm1118, %v1294
          %1359 = vst.msk [vmem:[%s236 + $0x130] sm:$0xff] %vm1118, %v1295
          %1360 = vst.msk [vmem:[%s236 + $0x138] sm:$0xff] %vm1118, %v1296
          %1361 = vst.msk [vmem:[%s236 + $0x140] sm:$0xff] %vm1118, %v1297
          %1362 = vst.msk [vmem:[%s236 + $0x148] sm:$0xff] %vm1118, %v1298
          %1363 = vst.msk [vmem:[%s236 + $0x150] sm:$0xff] %vm1118, %v1299
          %1364 = vst.msk [vmem:[%s236 + $0x158] sm:$0xff] %vm1118, %v1300
          %1365 = vst.msk [vmem:[%s236 + $0x160] sm:$0xff] %vm1118, %v1301
          %1366 = vst.msk [vmem:[%s236 + $0x168] sm:$0xff] %vm1118, %v1302
          %1367 = vst.msk [vmem:[%s236 + $0x170] sm:$0xff] %vm1118, %v1303
          %1368 = vst.msk [vmem:[%s236 + $0x178] sm:$0xff] %vm1118, %v1304
          %1369 = vst.msk [vmem:[%s236 + $0x180] sm:$0xff] %vm1118, %v1305
          %1370 = vst.msk [vmem:[%s236 + $0x188] sm:$0xff] %vm1118, %v1306
          %1371 = vst.msk [vmem:[%s236 + $0x190] sm:$0xff] %vm1118, %v1307
          %1372 = vst.msk [vmem:[%s236 + $0x198] sm:$0xff] %vm1118, %v1308
          %1373 = vst.msk [vmem:[%s236 + $0x1a0] sm:$0xff] %vm1118, %v1309
          %1374 = vst.msk [vmem:[%s236 + $0x1a8] sm:$0xff] %vm1118, %v1310
          %1375 = vst.msk [vmem:[%s236 + $0x1b0] sm:$0xff] %vm1118, %v1311
          %1376 = vst.msk [vmem:[%s236 + $0x1b8] sm:$0xff] %vm1118, %v1312
          %1377 = vst.msk [vmem:[%s236 + $0x1c0] sm:$0xff] %vm1118, %v1313
          %1378 = vst.msk [vmem:[%s236 + $0x1c8] sm:$0xff] %vm1118, %v1314
          %1379 = vst.msk [vmem:[%s236 + $0x1d0] sm:$0xff] %vm1118, %v1315
          %1380 = vst.msk [vmem:[%s236 + $0x1d8] sm:$0xff] %vm1118, %v1316
          %1381 = vst.msk [vmem:[%s236 + $0x1e0] sm:$0xff] %vm1118, %v1317
          %1382 = vst.msk [vmem:[%s236 + $0x1e8] sm:$0xff] %vm1118, %v1318
          %1383 = vst.msk [vmem:[%s236 + $0x1f0] sm:$0xff] %vm1118, %v1319
          %1384 = vst.msk [vmem:[%s236 + $0x1f8] sm:$0xff] %vm1118, %v1320
        $region40: #{lenet_forward.5} parent=31 // pred_fallthru
          _
        %s1385 = sand.u32 %s125, 1
        %s1386 = sand.u32 %s125, 1
        %s1387 = smul.addr %s1386, 512
        %s1388 = scalar_lea.vmem [#allocation3], %s1387
        // Predicated region
        $region41: #{lenet_forward.5} parent=31 // pred_check
          %p1389 = pneg %p135
        $region42: #{lenet_forward.5} parent=31 // pred_check_branch
          %1391 = sbr.rel (%p1389) target = $region44
        $region43: #{lenet_forward.5} parent=31 // pred_region
          %s1392 = smul.u32 64, %s19
          %s1393 = ssub.s32 324, %s1392
          %p1394 = scmp.lt.s32.totalorder %s1393, 64
          %s1395 = scalar_select %p1394, %s1393, 64
          %s1396 = smul.u32 128, %s1395
          %p1397 = scmp.ne.s32.totalorder 0, %s1396
          %s1398 = sadd.s32 %s20, %s1392
          %s1399 = smul.addr %s1398, 8
          %s1400 = scalar_lea.vmem %s3, %s1399
          // Predicated region
          $region45: #{lenet_forward.5} parent=43 // pred_check
            %p1401 = pneg %p1397
          $region46: #{lenet_forward.5} parent=43 // pred_check_branch
            %1403 = sbr.rel (%p1401) target = $region48
          $region47: #{lenet_forward.5} parent=43 // pred_region
            // Predicated region
            $region49: #{lenet_forward.5} parent=47 // pred_check
              _
            $region50: #{lenet_forward.5} parent=47 // pred_check_branch
              %1405 = sbr.rel (0) target = $region52
            $region51: #{lenet_forward.5} parent=47 // pred_region
              // Predicated region
              $region71: #{lenet_forward.5} parent=51 // pred_check
                _
              $region72: #{lenet_forward.5} parent=51 // pred_check_branch
                %1580 = sbr.rel (0) target = $region74
              $region73: #{lenet_forward.5} parent=51 // pred_region
                %s1581 = sshrl.u32 %s1395, 6
                // While loop
                $region75: #{lenet_forward.5} parent=73 // loop_pre_header
                  _
                $region76: #{lenet_forward.5} parent=73 // loop_header
                  %s1583 = sphi 0, %s1585
                  %p1584 = scmp.ge.s32.totalorder %s1583, %s1581
                  %s1588 = sphi 0, %s1721
                  %s1589 = sphi %s1388, %s1724
                  %s1590 = sphi %s1400, %s1725
                $region77: #{lenet_forward.5} parent=73 // loop_header_branch
                  %1587 = sbr.rel (%p1584) target = $region81
                $region78: #{lenet_forward.5} parent=73 // loop_body
                  %v1591 = vld [vmem:[%s1589] sm:$0xff]
                  %1592 = vst [vmem:[%s1590] sm:$0xff] %v1591
                  %v1593 = vld [vmem:[%s1589 + $0x8] sm:$0xff]
                  %1594 = vst [vmem:[%s1590 + $0x8] sm:$0xff] %v1593
                  %v1595 = vld [vmem:[%s1589 + $0x10] sm:$0xff]
                  %1596 = vst [vmem:[%s1590 + $0x10] sm:$0xff] %v1595
                  %v1597 = vld [vmem:[%s1589 + $0x18] sm:$0xff]
                  %1598 = vst [vmem:[%s1590 + $0x18] sm:$0xff] %v1597
                  %v1599 = vld [vmem:[%s1589 + $0x20] sm:$0xff]
                  %1600 = vst [vmem:[%s1590 + $0x20] sm:$0xff] %v1599
                  %v1601 = vld [vmem:[%s1589 + $0x28] sm:$0xff]
                  %1602 = vst [vmem:[%s1590 + $0x28] sm:$0xff] %v1601
                  %v1603 = vld [vmem:[%s1589 + $0x30] sm:$0xff]
                  %1604 = vst [vmem:[%s1590 + $0x30] sm:$0xff] %v1603
                  %v1605 = vld [vmem:[%s1589 + $0x38] sm:$0xff]
                  %1606 = vst [vmem:[%s1590 + $0x38] sm:$0xff] %v1605
                  %v1607 = vld [vmem:[%s1589 + $0x40] sm:$0xff]
                  %1608 = vst [vmem:[%s1590 + $0x40] sm:$0xff] %v1607
                  %v1609 = vld [vmem:[%s1589 + $0x48] sm:$0xff]
                  %1610 = vst [vmem:[%s1590 + $0x48] sm:$0xff] %v1609
                  %v1611 = vld [vmem:[%s1589 + $0x50] sm:$0xff]
                  %1612 = vst [vmem:[%s1590 + $0x50] sm:$0xff] %v1611
                  %v1613 = vld [vmem:[%s1589 + $0x58] sm:$0xff]
                  %1614 = vst [vmem:[%s1590 + $0x58] sm:$0xff] %v1613
                  %v1615 = vld [vmem:[%s1589 + $0x60] sm:$0xff]
                  %1616 = vst [vmem:[%s1590 + $0x60] sm:$0xff] %v1615
                  %v1617 = vld [vmem:[%s1589 + $0x68] sm:$0xff]
                  %1618 = vst [vmem:[%s1590 + $0x68] sm:$0xff] %v1617
                  %v1619 = vld [vmem:[%s1589 + $0x70] sm:$0xff]
                  %1620 = vst [vmem:[%s1590 + $0x70] sm:$0xff] %v1619
                  %v1621 = vld [vmem:[%s1589 + $0x78] sm:$0xff]
                  %1622 = vst [vmem:[%s1590 + $0x78] sm:$0xff] %v1621
                  %v1623 = vld [vmem:[%s1589 + $0x80] sm:$0xff]
                  %1624 = vst [vmem:[%s1590 + $0x80] sm:$0xff] %v1623
                  %v1625 = vld [vmem:[%s1589 + $0x88] sm:$0xff]
                  %1626 = vst [vmem:[%s1590 + $0x88] sm:$0xff] %v1625
                  %v1627 = vld [vmem:[%s1589 + $0x90] sm:$0xff]
                  %1628 = vst [vmem:[%s1590 + $0x90] sm:$0xff] %v1627
                  %v1629 = vld [vmem:[%s1589 + $0x98] sm:$0xff]
                  %1630 = vst [vmem:[%s1590 + $0x98] sm:$0xff] %v1629
                  %v1631 = vld [vmem:[%s1589 + $0xa0] sm:$0xff]
                  %1632 = vst [vmem:[%s1590 + $0xa0] sm:$0xff] %v1631
                  %v1633 = vld [vmem:[%s1589 + $0xa8] sm:$0xff]
                  %1634 = vst [vmem:[%s1590 + $0xa8] sm:$0xff] %v1633
                  %v1635 = vld [vmem:[%s1589 + $0xb0] sm:$0xff]
                  %1636 = vst [vmem:[%s1590 + $0xb0] sm:$0xff] %v1635
                  %v1637 = vld [vmem:[%s1589 + $0xb8] sm:$0xff]
                  %1638 = vst [vmem:[%s1590 + $0xb8] sm:$0xff] %v1637
                  %v1639 = vld [vmem:[%s1589 + $0xc0] sm:$0xff]
                  %1640 = vst [vmem:[%s1590 + $0xc0] sm:$0xff] %v1639
                  %v1641 = vld [vmem:[%s1589 + $0xc8] sm:$0xff]
                  %1642 = vst [vmem:[%s1590 + $0xc8] sm:$0xff] %v1641
                  %v1643 = vld [vmem:[%s1589 + $0xd0] sm:$0xff]
                  %1644 = vst [vmem:[%s1590 + $0xd0] sm:$0xff] %v1643
                  %v1645 = vld [vmem:[%s1589 + $0xd8] sm:$0xff]
                  %1646 = vst [vmem:[%s1590 + $0xd8] sm:$0xff] %v1645
                  %v1647 = vld [vmem:[%s1589 + $0xe0] sm:$0xff]
                  %1648 = vst [vmem:[%s1590 + $0xe0] sm:$0xff] %v1647
                  %v1649 = vld [vmem:[%s1589 + $0xe8] sm:$0xff]
                  %1650 = vst [vmem:[%s1590 + $0xe8] sm:$0xff] %v1649
                  %v1651 = vld [vmem:[%s1589 + $0xf0] sm:$0xff]
                  %1652 = vst [vmem:[%s1590 + $0xf0] sm:$0xff] %v1651
                  %v1653 = vld [vmem:[%s1589 + $0xf8] sm:$0xff]
                  %1654 = vst [vmem:[%s1590 + $0xf8] sm:$0xff] %v1653
                  %v1655 = vld [vmem:[%s1589 + $0x100] sm:$0xff]
                  %1656 = vst [vmem:[%s1590 + $0x100] sm:$0xff] %v1655
                  %v1657 = vld [vmem:[%s1589 + $0x108] sm:$0xff]
                  %1658 = vst [vmem:[%s1590 + $0x108] sm:$0xff] %v1657
                  %v1659 = vld [vmem:[%s1589 + $0x110] sm:$0xff]
                  %1660 = vst [vmem:[%s1590 + $0x110] sm:$0xff] %v1659
                  %v1661 = vld [vmem:[%s1589 + $0x118] sm:$0xff]
                  %1662 = vst [vmem:[%s1590 + $0x118] sm:$0xff] %v1661
                  %v1663 = vld [vmem:[%s1589 + $0x120] sm:$0xff]
                  %1664 = vst [vmem:[%s1590 + $0x120] sm:$0xff] %v1663
                  %v1665 = vld [vmem:[%s1589 + $0x128] sm:$0xff]
                  %1666 = vst [vmem:[%s1590 + $0x128] sm:$0xff] %v1665
                  %v1667 = vld [vmem:[%s1589 + $0x130] sm:$0xff]
                  %1668 = vst [vmem:[%s1590 + $0x130] sm:$0xff] %v1667
                  %v1669 = vld [vmem:[%s1589 + $0x138] sm:$0xff]
                  %1670 = vst [vmem:[%s1590 + $0x138] sm:$0xff] %v1669
                  %v1671 = vld [vmem:[%s1589 + $0x140] sm:$0xff]
                  %1672 = vst [vmem:[%s1590 + $0x140] sm:$0xff] %v1671
                  %v1673 = vld [vmem:[%s1589 + $0x148] sm:$0xff]
                  %1674 = vst [vmem:[%s1590 + $0x148] sm:$0xff] %v1673
                  %v1675 = vld [vmem:[%s1589 + $0x150] sm:$0xff]
                  %1676 = vst [vmem:[%s1590 + $0x150] sm:$0xff] %v1675
                  %v1677 = vld [vmem:[%s1589 + $0x158] sm:$0xff]
                  %1678 = vst [vmem:[%s1590 + $0x158] sm:$0xff] %v1677
                  %v1679 = vld [vmem:[%s1589 + $0x160] sm:$0xff]
                  %1680 = vst [vmem:[%s1590 + $0x160] sm:$0xff] %v1679
                  %v1681 = vld [vmem:[%s1589 + $0x168] sm:$0xff]
                  %1682 = vst [vmem:[%s1590 + $0x168] sm:$0xff] %v1681
                  %v1683 = vld [vmem:[%s1589 + $0x170] sm:$0xff]
                  %1684 = vst [vmem:[%s1590 + $0x170] sm:$0xff] %v1683
                  %v1685 = vld [vmem:[%s1589 + $0x178] sm:$0xff]
                  %1686 = vst [vmem:[%s1590 + $0x178] sm:$0xff] %v1685
                  %v1687 = vld [vmem:[%s1589 + $0x180] sm:$0xff]
                  %1688 = vst [vmem:[%s1590 + $0x180] sm:$0xff] %v1687
                  %v1689 = vld [vmem:[%s1589 + $0x188] sm:$0xff]
                  %1690 = vst [vmem:[%s1590 + $0x188] sm:$0xff] %v1689
                  %v1691 = vld [vmem:[%s1589 + $0x190] sm:$0xff]
                  %1692 = vst [vmem:[%s1590 + $0x190] sm:$0xff] %v1691
                  %v1693 = vld [vmem:[%s1589 + $0x198] sm:$0xff]
                  %1694 = vst [vmem:[%s1590 + $0x198] sm:$0xff] %v1693
                  %v1695 = vld [vmem:[%s1589 + $0x1a0] sm:$0xff]
                  %1696 = vst [vmem:[%s1590 + $0x1a0] sm:$0xff] %v1695
                  %v1697 = vld [vmem:[%s1589 + $0x1a8] sm:$0xff]
                  %1698 = vst [vmem:[%s1590 + $0x1a8] sm:$0xff] %v1697
                  %v1699 = vld [vmem:[%s1589 + $0x1b0] sm:$0xff]
                  %1700 = vst [vmem:[%s1590 + $0x1b0] sm:$0xff] %v1699
                  %v1701 = vld [vmem:[%s1589 + $0x1b8] sm:$0xff]
                  %1702 = vst [vmem:[%s1590 + $0x1b8] sm:$0xff] %v1701
                  %v1703 = vld [vmem:[%s1589 + $0x1c0] sm:$0xff]
                  %1704 = vst [vmem:[%s1590 + $0x1c0] sm:$0xff] %v1703
                  %v1705 = vld [vmem:[%s1589 + $0x1c8] sm:$0xff]
                  %1706 = vst [vmem:[%s1590 + $0x1c8] sm:$0xff] %v1705
                  %v1707 = vld [vmem:[%s1589 + $0x1d0] sm:$0xff]
                  %1708 = vst [vmem:[%s1590 + $0x1d0] sm:$0xff] %v1707
                  %v1709 = vld [vmem:[%s1589 + $0x1d8] sm:$0xff]
                  %1710 = vst [vmem:[%s1590 + $0x1d8] sm:$0xff] %v1709
                  %v1711 = vld [vmem:[%s1589 + $0x1e0] sm:$0xff]
                  %1712 = vst [vmem:[%s1590 + $0x1e0] sm:$0xff] %v1711
                  %v1713 = vld [vmem:[%s1589 + $0x1e8] sm:$0xff]
                  %1714 = vst [vmem:[%s1590 + $0x1e8] sm:$0xff] %v1713
                  %v1715 = vld [vmem:[%s1589 + $0x1f0] sm:$0xff]
                  %1716 = vst [vmem:[%s1590 + $0x1f0] sm:$0xff] %v1715
                  %v1717 = vld [vmem:[%s1589 + $0x1f8] sm:$0xff]
                  %1718 = vst [vmem:[%s1590 + $0x1f8] sm:$0xff] %v1717
                  %s1719 = sadd.s32 1, %s1588
                  %p1720 = scmp.ge.s32.totalorder %s1719, %s1581
                  %s1721 = scalar_select %p1720, 0, %s1719
                  %s1722 = smul.u32 %s1721, 512
                  %s1723 = smul.u32 %s1721, 512
                  %s1724 = scalar_lea.vmem %s1388, %s1722 [#allocation3]
                  %s1725 = scalar_lea.vmem %s1400, %s1723
                $region79: #{lenet_forward.5} parent=73 // loop_footer
                  %s1585 = sadd.s32 %s1583, 1
                $region80: #{lenet_forward.5} parent=73 // loop_footer_branch
                  %1582 = sbr.rel target = $region76
                $region81: #{lenet_forward.5} parent=73 // loop_exit
                  _
                %s1726 = sshrl.u32 %s1395, 6
                %s1727 = sand.u32 %s1395, 63
                %s1728 = smul.u32 %s1726, 64
                %s1729 = smul.u32 8, %s1728
                %s1730 = scalar_lea.vmem %s1388, %s1729 [#allocation3]
                %s1731 = smul.u32 8, %s1728
                %s1732 = scalar_lea.vmem %s1400, %s1731
                // While loop
                $region82: #{lenet_forward.5} parent=73 // loop_pre_header
                  _
                $region83: #{lenet_forward.5} parent=73 // loop_header
                  %s1734 = sphi 0, %s1736
                  %p1735 = scmp.ge.s32.totalorder %s1734, %s1727
                  %s1739 = sphi 0, %s1746
                  %s1740 = sphi %s1730, %s1749
                  %s1741 = sphi %s1732, %s1750
                $region84: #{lenet_forward.5} parent=73 // loop_header_branch
                  %1738 = sbr.rel (%p1735) target = $region88
                $region85: #{lenet_forward.5} parent=73 // loop_body
                  %v1742 = vld [vmem:[%s1740] sm:$0xff]
                  %1743 = vst [vmem:[%s1741] sm:$0xff] %v1742
                  %s1744 = sadd.s32 1, %s1739
                  %p1745 = scmp.ge.s32.totalorder %s1744, %s1727
                  %s1746 = scalar_select %p1745, 0, %s1744
                  %s1747 = smul.u32 %s1746, 8
                  %s1748 = smul.u32 %s1746, 8
                  %s1749 = scalar_lea.vmem %s1730, %s1747 [#allocation3]
                  %s1750 = scalar_lea.vmem %s1732, %s1748
                $region86: #{lenet_forward.5} parent=73 // loop_footer
                  %s1736 = sadd.s32 %s1734, 1
                $region87: #{lenet_forward.5} parent=73 // loop_footer_branch
                  %1733 = sbr.rel target = $region83
                $region88: #{lenet_forward.5} parent=73 // loop_exit
                  _
              $region74: #{lenet_forward.5} parent=51 // pred_fallthru
                _
              // Predicated region
              $region89: #{lenet_forward.5} parent=51 // pred_check
                _
              $region90: #{lenet_forward.5} parent=51 // pred_check_branch
                %1752 = sbr.rel target = $region92
              $region91: #{lenet_forward.5} parent=51 // pred_region
                _
              $region92: #{lenet_forward.5} parent=51 // pred_fallthru
                _
            $region52: #{lenet_forward.5} parent=47 // pred_fallthru
              _
            // Predicated region
            $region53: #{lenet_forward.5} parent=47 // pred_check
              _
            $region54: #{lenet_forward.5} parent=47 // pred_check_branch
              %1407 = sbr.rel target = $region56
            $region55: #{lenet_forward.5} parent=47 // pred_region
              %s1409 = sshrl.u32 %s1395, 6
              // While loop
              $region57: #{lenet_forward.5} parent=55 // loop_pre_header
                _
              $region58: #{lenet_forward.5} parent=55 // loop_header
                %s1411 = sphi 0, %s1413
                %p1412 = scmp.ge.s32.totalorder %s1411, %s1409
                %s1416 = sphi 0, %s1549
                %s1417 = sphi %s1388, %s1552
                %s1418 = sphi %s1400, %s1553
              $region59: #{lenet_forward.5} parent=55 // loop_header_branch
                %1415 = sbr.rel (%p1412) target = $region63
              $region60: #{lenet_forward.5} parent=55 // loop_body
                %v1419 = vld [vmem:[%s1417] sm:$0xff]
                %1420 = vst [vmem:[%s1418] sm:$0xff] %v1419
                %v1421 = vld [vmem:[%s1417 + $0x8] sm:$0xff]
                %1422 = vst [vmem:[%s1418 + $0x8] sm:$0xff] %v1421
                %v1423 = vld [vmem:[%s1417 + $0x10] sm:$0xff]
                %1424 = vst [vmem:[%s1418 + $0x10] sm:$0xff] %v1423
                %v1425 = vld [vmem:[%s1417 + $0x18] sm:$0xff]
                %1426 = vst [vmem:[%s1418 + $0x18] sm:$0xff] %v1425
                %v1427 = vld [vmem:[%s1417 + $0x20] sm:$0xff]
                %1428 = vst [vmem:[%s1418 + $0x20] sm:$0xff] %v1427
                %v1429 = vld [vmem:[%s1417 + $0x28] sm:$0xff]
                %1430 = vst [vmem:[%s1418 + $0x28] sm:$0xff] %v1429
                %v1431 = vld [vmem:[%s1417 + $0x30] sm:$0xff]
                %1432 = vst [vmem:[%s1418 + $0x30] sm:$0xff] %v1431
                %v1433 = vld [vmem:[%s1417 + $0x38] sm:$0xff]
                %1434 = vst [vmem:[%s1418 + $0x38] sm:$0xff] %v1433
                %v1435 = vld [vmem:[%s1417 + $0x40] sm:$0xff]
                %1436 = vst [vmem:[%s1418 + $0x40] sm:$0xff] %v1435
                %v1437 = vld [vmem:[%s1417 + $0x48] sm:$0xff]
                %1438 = vst [vmem:[%s1418 + $0x48] sm:$0xff] %v1437
                %v1439 = vld [vmem:[%s1417 + $0x50] sm:$0xff]
                %1440 = vst [vmem:[%s1418 + $0x50] sm:$0xff] %v1439
                %v1441 = vld [vmem:[%s1417 + $0x58] sm:$0xff]
                %1442 = vst [vmem:[%s1418 + $0x58] sm:$0xff] %v1441
                %v1443 = vld [vmem:[%s1417 + $0x60] sm:$0xff]
                %1444 = vst [vmem:[%s1418 + $0x60] sm:$0xff] %v1443
                %v1445 = vld [vmem:[%s1417 + $0x68] sm:$0xff]
                %1446 = vst [vmem:[%s1418 + $0x68] sm:$0xff] %v1445
                %v1447 = vld [vmem:[%s1417 + $0x70] sm:$0xff]
                %1448 = vst [vmem:[%s1418 + $0x70] sm:$0xff] %v1447
                %v1449 = vld [vmem:[%s1417 + $0x78] sm:$0xff]
                %1450 = vst [vmem:[%s1418 + $0x78] sm:$0xff] %v1449
                %v1451 = vld [vmem:[%s1417 + $0x80] sm:$0xff]
                %1452 = vst [vmem:[%s1418 + $0x80] sm:$0xff] %v1451
                %v1453 = vld [vmem:[%s1417 + $0x88] sm:$0xff]
                %1454 = vst [vmem:[%s1418 + $0x88] sm:$0xff] %v1453
                %v1455 = vld [vmem:[%s1417 + $0x90] sm:$0xff]
                %1456 = vst [vmem:[%s1418 + $0x90] sm:$0xff] %v1455
                %v1457 = vld [vmem:[%s1417 + $0x98] sm:$0xff]
                %1458 = vst [vmem:[%s1418 + $0x98] sm:$0xff] %v1457
                %v1459 = vld [vmem:[%s1417 + $0xa0] sm:$0xff]
                %1460 = vst [vmem:[%s1418 + $0xa0] sm:$0xff] %v1459
                %v1461 = vld [vmem:[%s1417 + $0xa8] sm:$0xff]
                %1462 = vst [vmem:[%s1418 + $0xa8] sm:$0xff] %v1461
                %v1463 = vld [vmem:[%s1417 + $0xb0] sm:$0xff]
                %1464 = vst [vmem:[%s1418 + $0xb0] sm:$0xff] %v1463
                %v1465 = vld [vmem:[%s1417 + $0xb8] sm:$0xff]
                %1466 = vst [vmem:[%s1418 + $0xb8] sm:$0xff] %v1465
                %v1467 = vld [vmem:[%s1417 + $0xc0] sm:$0xff]
                %1468 = vst [vmem:[%s1418 + $0xc0] sm:$0xff] %v1467
                %v1469 = vld [vmem:[%s1417 + $0xc8] sm:$0xff]
                %1470 = vst [vmem:[%s1418 + $0xc8] sm:$0xff] %v1469
                %v1471 = vld [vmem:[%s1417 + $0xd0] sm:$0xff]
                %1472 = vst [vmem:[%s1418 + $0xd0] sm:$0xff] %v1471
                %v1473 = vld [vmem:[%s1417 + $0xd8] sm:$0xff]
                %1474 = vst [vmem:[%s1418 + $0xd8] sm:$0xff] %v1473
                %v1475 = vld [vmem:[%s1417 + $0xe0] sm:$0xff]
                %1476 = vst [vmem:[%s1418 + $0xe0] sm:$0xff] %v1475
                %v1477 = vld [vmem:[%s1417 + $0xe8] sm:$0xff]
                %1478 = vst [vmem:[%s1418 + $0xe8] sm:$0xff] %v1477
                %v1479 = vld [vmem:[%s1417 + $0xf0] sm:$0xff]
                %1480 = vst [vmem:[%s1418 + $0xf0] sm:$0xff] %v1479
                %v1481 = vld [vmem:[%s1417 + $0xf8] sm:$0xff]
                %1482 = vst [vmem:[%s1418 + $0xf8] sm:$0xff] %v1481
                %v1483 = vld [vmem:[%s1417 + $0x100] sm:$0xff]
                %1484 = vst [vmem:[%s1418 + $0x100] sm:$0xff] %v1483
                %v1485 = vld [vmem:[%s1417 + $0x108] sm:$0xff]
                %1486 = vst [vmem:[%s1418 + $0x108] sm:$0xff] %v1485
                %v1487 = vld [vmem:[%s1417 + $0x110] sm:$0xff]
                %1488 = vst [vmem:[%s1418 + $0x110] sm:$0xff] %v1487
                %v1489 = vld [vmem:[%s1417 + $0x118] sm:$0xff]
                %1490 = vst [vmem:[%s1418 + $0x118] sm:$0xff] %v1489
                %v1491 = vld [vmem:[%s1417 + $0x120] sm:$0xff]
                %1492 = vst [vmem:[%s1418 + $0x120] sm:$0xff] %v1491
                %v1493 = vld [vmem:[%s1417 + $0x128] sm:$0xff]
                %1494 = vst [vmem:[%s1418 + $0x128] sm:$0xff] %v1493
                %v1495 = vld [vmem:[%s1417 + $0x130] sm:$0xff]
                %1496 = vst [vmem:[%s1418 + $0x130] sm:$0xff] %v1495
                %v1497 = vld [vmem:[%s1417 + $0x138] sm:$0xff]
                %1498 = vst [vmem:[%s1418 + $0x138] sm:$0xff] %v1497
                %v1499 = vld [vmem:[%s1417 + $0x140] sm:$0xff]
                %1500 = vst [vmem:[%s1418 + $0x140] sm:$0xff] %v1499
                %v1501 = vld [vmem:[%s1417 + $0x148] sm:$0xff]
                %1502 = vst [vmem:[%s1418 + $0x148] sm:$0xff] %v1501
                %v1503 = vld [vmem:[%s1417 + $0x150] sm:$0xff]
                %1504 = vst [vmem:[%s1418 + $0x150] sm:$0xff] %v1503
                %v1505 = vld [vmem:[%s1417 + $0x158] sm:$0xff]
                %1506 = vst [vmem:[%s1418 + $0x158] sm:$0xff] %v1505
                %v1507 = vld [vmem:[%s1417 + $0x160] sm:$0xff]
                %1508 = vst [vmem:[%s1418 + $0x160] sm:$0xff] %v1507
                %v1509 = vld [vmem:[%s1417 + $0x168] sm:$0xff]
                %1510 = vst [vmem:[%s1418 + $0x168] sm:$0xff] %v1509
                %v1511 = vld [vmem:[%s1417 + $0x170] sm:$0xff]
                %1512 = vst [vmem:[%s1418 + $0x170] sm:$0xff] %v1511
                %v1513 = vld [vmem:[%s1417 + $0x178] sm:$0xff]
                %1514 = vst [vmem:[%s1418 + $0x178] sm:$0xff] %v1513
                %v1515 = vld [vmem:[%s1417 + $0x180] sm:$0xff]
                %1516 = vst [vmem:[%s1418 + $0x180] sm:$0xff] %v1515
                %v1517 = vld [vmem:[%s1417 + $0x188] sm:$0xff]
                %1518 = vst [vmem:[%s1418 + $0x188] sm:$0xff] %v1517
                %v1519 = vld [vmem:[%s1417 + $0x190] sm:$0xff]
                %1520 = vst [vmem:[%s1418 + $0x190] sm:$0xff] %v1519
                %v1521 = vld [vmem:[%s1417 + $0x198] sm:$0xff]
                %1522 = vst [vmem:[%s1418 + $0x198] sm:$0xff] %v1521
                %v1523 = vld [vmem:[%s1417 + $0x1a0] sm:$0xff]
                %1524 = vst [vmem:[%s1418 + $0x1a0] sm:$0xff] %v1523
                %v1525 = vld [vmem:[%s1417 + $0x1a8] sm:$0xff]
                %1526 = vst [vmem:[%s1418 + $0x1a8] sm:$0xff] %v1525
                %v1527 = vld [vmem:[%s1417 + $0x1b0] sm:$0xff]
                %1528 = vst [vmem:[%s1418 + $0x1b0] sm:$0xff] %v1527
                %v1529 = vld [vmem:[%s1417 + $0x1b8] sm:$0xff]
                %1530 = vst [vmem:[%s1418 + $0x1b8] sm:$0xff] %v1529
                %v1531 = vld [vmem:[%s1417 + $0x1c0] sm:$0xff]
                %1532 = vst [vmem:[%s1418 + $0x1c0] sm:$0xff] %v1531
                %v1533 = vld [vmem:[%s1417 + $0x1c8] sm:$0xff]
                %1534 = vst [vmem:[%s1418 + $0x1c8] sm:$0xff] %v1533
                %v1535 = vld [vmem:[%s1417 + $0x1d0] sm:$0xff]
                %1536 = vst [vmem:[%s1418 + $0x1d0] sm:$0xff] %v1535
                %v1537 = vld [vmem:[%s1417 + $0x1d8] sm:$0xff]
                %1538 = vst [vmem:[%s1418 + $0x1d8] sm:$0xff] %v1537
                %v1539 = vld [vmem:[%s1417 + $0x1e0] sm:$0xff]
                %1540 = vst [vmem:[%s1418 + $0x1e0] sm:$0xff] %v1539
                %v1541 = vld [vmem:[%s1417 + $0x1e8] sm:$0xff]
                %1542 = vst [vmem:[%s1418 + $0x1e8] sm:$0xff] %v1541
                %v1543 = vld [vmem:[%s1417 + $0x1f0] sm:$0xff]
                %1544 = vst [vmem:[%s1418 + $0x1f0] sm:$0xff] %v1543
                %v1545 = vld [vmem:[%s1417 + $0x1f8] sm:$0xff]
                %1546 = vst [vmem:[%s1418 + $0x1f8] sm:$0xff] %v1545
                %s1547 = sadd.s32 1, %s1416
                %p1548 = scmp.ge.s32.totalorder %s1547, %s1409
                %s1549 = scalar_select %p1548, 0, %s1547
                %s1550 = smul.u32 %s1549, 512
                %s1551 = smul.u32 %s1549, 512
                %s1552 = scalar_lea.vmem %s1388, %s1550 [#allocation3]
                %s1553 = scalar_lea.vmem %s1400, %s1551
              $region61: #{lenet_forward.5} parent=55 // loop_footer
                %s1413 = sadd.s32 %s1411, 1
              $region62: #{lenet_forward.5} parent=55 // loop_footer_branch
                %1410 = sbr.rel target = $region58
              $region63: #{lenet_forward.5} parent=55 // loop_exit
                _
              %s1554 = sshrl.u32 %s1395, 6
              %s1555 = sand.u32 %s1395, 63
              %s1556 = smul.u32 %s1554, 64
              %s1557 = smul.u32 8, %s1556
              %s1558 = scalar_lea.vmem %s1388, %s1557 [#allocation3]
              %s1559 = smul.u32 8, %s1556
              %s1560 = scalar_lea.vmem %s1400, %s1559
              // While loop
              $region64: #{lenet_forward.5} parent=55 // loop_pre_header
                _
              $region65: #{lenet_forward.5} parent=55 // loop_header
                %s1562 = sphi 0, %s1564
                %p1563 = scmp.ge.s32.totalorder %s1562, %s1555
                %s1567 = sphi 0, %s1574
                %s1568 = sphi %s1558, %s1577
                %s1569 = sphi %s1560, %s1578
              $region66: #{lenet_forward.5} parent=55 // loop_header_branch
                %1566 = sbr.rel (%p1563) target = $region70
              $region67: #{lenet_forward.5} parent=55 // loop_body
                %v1570 = vld [vmem:[%s1568] sm:$0xff]
                %1571 = vst [vmem:[%s1569] sm:$0xff] %v1570
                %s1572 = sadd.s32 1, %s1567
                %p1573 = scmp.ge.s32.totalorder %s1572, %s1555
                %s1574 = scalar_select %p1573, 0, %s1572
                %s1575 = smul.u32 %s1574, 8
                %s1576 = smul.u32 %s1574, 8
                %s1577 = scalar_lea.vmem %s1558, %s1575 [#allocation3]
                %s1578 = scalar_lea.vmem %s1560, %s1576
              $region68: #{lenet_forward.5} parent=55 // loop_footer
                %s1564 = sadd.s32 %s1562, 1
              $region69: #{lenet_forward.5} parent=55 // loop_footer_branch
                %1561 = sbr.rel target = $region65
              $region70: #{lenet_forward.5} parent=55 // loop_exit
                _
            $region56: #{lenet_forward.5} parent=47 // pred_fallthru
              _
          $region48: #{lenet_forward.5} parent=43 // pred_fallthru
            _
          %1753 = vnop
        $region44: #{lenet_forward.5} parent=31 // pred_fallthru
          _
      $region32: #{lenet_forward.5} parent=5 // pred_fallthru
        _
      %p1754 = scmp.le.s32.totalorder 2, %s9
      // Predicated region
      $region93: #{lenet_forward.5} parent=5 // pred_check
        %p1755 = pneg %p1754
      $region94: #{lenet_forward.5} parent=5 // pred_check_branch
        %1757 = sbr.rel (%p1755) target = $region96
      $region95: #{lenet_forward.5} parent=5 // pred_region
        %s1758 = ssub.s32 %s9, 2
        // Predicated region
        $region97: #{lenet_forward.5} parent=95 // pred_check
          %p1759 = pneg %p141
        $region98: #{lenet_forward.5} parent=95 // pred_check_branch
          %1761 = sbr.rel (%p1759) target = $region100
        $region99: #{lenet_forward.5} parent=95 // pred_region
          %s1762 = sand.u32 %s126, 1
          %s1763 = sand.u32 %s126, 1
          %s1764 = smul.addr %s1763, 512
          %s1765 = scalar_lea.vmem [#allocation3], %s1764
        $region100: #{lenet_forward.5} parent=95 // pred_fallthru
          _
      $region96: #{lenet_forward.5} parent=5 // pred_fallthru
        _
    $region6: #{lenet_forward.5} parent=1 // loop_footer
      %s13 = sadd.s32 1, %s9
    $region7: #{lenet_forward.5} parent=1 // loop_footer_branch
      %8 = sbr.rel target = $region3
    $region8: #{lenet_forward.5} parent=1 // loop_exit
      _

// kernel: lenet_forward.6
$region0: #{lenet_forward.6}
  #allocation0 [shape = 'u32[]', space=smem, size = 0x4, offset = 0x4, fixed_abs, tag = 'smem constant byte address 0x4 - core index']
  #allocation1 [shape = 'u32[144,128]{1,0:T(1,128)}', space=vmem, size = 0x12000, scoped, tag = 'internal scratch']
  %s0 = inlined_call_operand.vmem [shape: f32[4,162,128], index: 0, kind: input, shape index: {}]
  %s1 = inlined_call_operand.vmem [shape: f32[162,128], index: 1, kind: output, shape index: {}]
  %s2 = sld [smem:[#allocation0]]
  $region14: #{lenet_forward.6} parent=0
    _
  %s4 = ssub.s32 1, %s2
  %s5 = scalar_select 0, %s4, %s2
  // Predicated region
  $region2: #{lenet_forward.6} parent=0 // pred_check
    _
  $region3: #{lenet_forward.6} parent=0 // pred_check_branch
    %7 = sbr.rel (0) target = $region5
  $region4: #{lenet_forward.6} parent=0 // pred_region
    _
  $region5: #{lenet_forward.6} parent=0 // pred_fallthru
    _
  %v8 = vld [vmem:[%s0] sm:$0xff]
  %v9 = vld [vmem:[%s0 + $0x8] sm:$0xff]
  %v10 = vld [vmem:[%s0 + $0x10] sm:$0xff]
  %v11 = vld [vmem:[%s0 + $0x18] sm:$0xff]
  %v12 = vld [vmem:[%s0 + $0x20] sm:$0xff]
  %v13 = vld [vmem:[%s0 + $0x28] sm:$0xff]
  %v14 = vld [vmem:[%s0 + $0x30] sm:$0xff]
  %v15 = vld [vmem:[%s0 + $0x38] sm:$0xff]
  %v16 = vld [vmem:[%s0 + $0x40] sm:$0xff]
  %v17 = vld [vmem:[%s0 + $0x48] sm:$0xff]
  %v18 = vld [vmem:[%s0 + $0x50] sm:$0xff]
  %v19 = vld [vmem:[%s0 + $0x58] sm:$0xff]
  %v20 = vld [vmem:[%s0 + $0x60] sm:$0xff]
  %v21 = vld [vmem:[%s0 + $0x68] sm:$0xff]
  %v22 = vld [vmem:[%s0 + $0x70] sm:$0xff]
  %v23 = vld [vmem:[%s0 + $0x78] sm:$0xff]
  %v24 = vld [vmem:[%s0 + $0x80] sm:$0xff]
  %v25 = vld [vmem:[%s0 + $0x88] sm:$0xff]
  %v26 = vld [vmem:[%s0 + $0x90] sm:$0xff]
  %v27 = vld [vmem:[%s0 + $0x98] sm:$0xff]
  %v28 = vld [vmem:[%s0 + $0xa0] sm:$0x3]
  %s29 = scalar_lea.vmem %s0, 168
  %v30 = vld [vmem:[%s29] sm:$0xff]
  %v31 = vld [vmem:[%s29 + $0x8] sm:$0xff]
  %v32 = vld [vmem:[%s29 + $0x10] sm:$0xff]
  %v33 = vld [vmem:[%s29 + $0x18] sm:$0xff]
  %v34 = vld [vmem:[%s29 + $0x20] sm:$0xff]
  %v35 = vld [vmem:[%s29 + $0x28] sm:$0xff]
  %v36 = vld [vmem:[%s29 + $0x30] sm:$0xff]
  %v37 = vld [vmem:[%s29 + $0x38] sm:$0xff]
  %v38 = vld [vmem:[%s29 + $0x40] sm:$0xff]
  %v39 = vld [vmem:[%s29 + $0x48] sm:$0xff]
  %v40 = vld [vmem:[%s29 + $0x50] sm:$0xff]
  %v41 = vld [vmem:[%s29 + $0x58] sm:$0xff]
  %v42 = vld [vmem:[%s29 + $0x60] sm:$0xff]
  %v43 = vld [vmem:[%s29 + $0x68] sm:$0xff]
  %v44 = vld [vmem:[%s29 + $0x70] sm:$0xff]
  %v45 = vld [vmem:[%s29 + $0x78] sm:$0xff]
  %v46 = vld [vmem:[%s29 + $0x80] sm:$0xff]
  %v47 = vld [vmem:[%s29 + $0x88] sm:$0xff]
  %v48 = vld [vmem:[%s29 + $0x90] sm:$0xff]
  %v49 = vld [vmem:[%s29 + $0x98] sm:$0xff]
  %v50 = vld [vmem:[%s29 + $0xa0] sm:$0x3]
  %v51 = vmax.f32 %v8, %v30
  %v52 = vmax.f32 %v9, %v31
  %v53 = vmax.f32 %v10, %v32
  %v54 = vmax.f32 %v11, %v33
  %v55 = vmax.f32 %v12, %v34
  %v56 = vmax.f32 %v13, %v35
  %v57 = vmax.f32 %v14, %v36
  %v58 = vmax.f32 %v15, %v37
  %v59 = vmax.f32 %v16, %v38
  %v60 = vmax.f32 %v17, %v39
  %v61 = vmax.f32 %v18, %v40
  %v62 = vmax.f32 %v19, %v41
  %v63 = vmax.f32 %v20, %v42
  %v64 = vmax.f32 %v21, %v43
  %v65 = vmax.f32 %v22, %v44
  %v66 = vmax.f32 %v23, %v45
  %v67 = vmax.f32 %v24, %v46
  %v68 = vmax.f32 %v25, %v47
  %v69 = vmax.f32 %v26, %v48
  %v70 = vmax.f32 %v27, %v49
  %v71 = vmax.f32 %v28, %v50
  %s72 = scalar_lea.vmem %s0, 336
  %v73 = vld [vmem:[%s72] sm:$0xff]
  %v74 = vld [vmem:[%s72 + $0x8] sm:$0xff]
  %v75 = vld [vmem:[%s72 + $0x10] sm:$0xff]
  %v76 = vld [vmem:[%s72 + $0x18] sm:$0xff]
  %v77 = vld [vmem:[%s72 + $0x20] sm:$0xff]
  %v78 = vld [vmem:[%s72 + $0x28] sm:$0xff]
  %v79 = vld [vmem:[%s72 + $0x30] sm:$0xff]
  %v80 = vld [vmem:[%s72 + $0x38] sm:$0xff]
  %v81 = vld [vmem:[%s72 + $0x40] sm:$0xff]
  %v82 = vld [vmem:[%s72 + $0x48] sm:$0xff]
  %v83 = vld [vmem:[%s72 + $0x50] sm:$0xff]
  %v84 = vld [vmem:[%s72 + $0x58] sm:$0xff]
  %v85 = vld [vmem:[%s72 + $0x60] sm:$0xff]
  %v86 = vld [vmem:[%s72 + $0x68] sm:$0xff]
  %v87 = vld [vmem:[%s72 + $0x70] sm:$0xff]
  %v88 = vld [vmem:[%s72 + $0x78] sm:$0xff]
  %v89 = vld [vmem:[%s72 + $0x80] sm:$0xff]
  %v90 = vld [vmem:[%s72 + $0x88] sm:$0xff]
  %v91 = vld [vmem:[%s72 + $0x90] sm:$0xff]
  %v92 = vld [vmem:[%s72 + $0x98] sm:$0xff]
  %v93 = vld [vmem:[%s72 + $0xa0] sm:$0x3]
  %s94 = scalar_lea.vmem %s0, 504
  %v95 = vld [vmem:[%s94] sm:$0xff]
  %v96 = vld [vmem:[%s94 + $0x8] sm:$0xff]
  %v97 = vld [vmem:[%s94 + $0x10] sm:$0xff]
  %v98 = vld [vmem:[%s94 + $0x18] sm:$0xff]
  %v99 = vld [vmem:[%s94 + $0x20] sm:$0xff]
  %v100 = vld [vmem:[%s94 + $0x28] sm:$0xff]
  %v101 = vld [vmem:[%s94 + $0x30] sm:$0xff]
  %v102 = vld [vmem:[%s94 + $0x38] sm:$0xff]
  %v103 = vld [vmem:[%s94 + $0x40] sm:$0xff]
  %v104 = vld [vmem:[%s94 + $0x48] sm:$0xff]
  %v105 = vld [vmem:[%s94 + $0x50] sm:$0xff]
  %v106 = vld [vmem:[%s94 + $0x58] sm:$0xff]
  %v107 = vld [vmem:[%s94 + $0x60] sm:$0xff]
  %v108 = vld [vmem:[%s94 + $0x68] sm:$0xff]
  %v109 = vld [vmem:[%s94 + $0x70] sm:$0xff]
  %v110 = vld [vmem:[%s94 + $0x78] sm:$0xff]
  %v111 = vld [vmem:[%s94 + $0x80] sm:$0xff]
  %v112 = vld [vmem:[%s94 + $0x88] sm:$0xff]
  %v113 = vld [vmem:[%s94 + $0x90] sm:$0xff]
  %v114 = vld [vmem:[%s94 + $0x98] sm:$0xff]
  %v115 = vld [vmem:[%s94 + $0xa0] sm:$0x3]
  %v116 = vmax.f32 %v73, %v95
  %v117 = vmax.f32 %v74, %v96
  %v118 = vmax.f32 %v75, %v97
  %v119 = vmax.f32 %v76, %v98
  %v120 = vmax.f32 %v77, %v99
  %v121 = vmax.f32 %v78, %v100
  %v122 = vmax.f32 %v79, %v101
  %v123 = vmax.f32 %v80, %v102
  %v124 = vmax.f32 %v81, %v103
  %v125 = vmax.f32 %v82, %v104
  %v126 = vmax.f32 %v83, %v105
  %v127 = vmax.f32 %v84, %v106
  %v128 = vmax.f32 %v85, %v107
  %v129 = vmax.f32 %v86, %v108
  %v130 = vmax.f32 %v87, %v109
  %v131 = vmax.f32 %v88, %v110
  %v132 = vmax.f32 %v89, %v111
  %v133 = vmax.f32 %v90, %v112
  %v134 = vmax.f32 %v91, %v113
  %v135 = vmax.f32 %v92, %v114
  %v136 = vmax.f32 %v93, %v115
  %v137 = vmax.f32 %v51, %v116
  %v138 = vmax.f32 %v52, %v117
  %v139 = vmax.f32 %v53, %v118
  %v140 = vmax.f32 %v54, %v119
  %v141 = vmax.f32 %v55, %v120
  %v142 = vmax.f32 %v56, %v121
  %v143 = vmax.f32 %v57, %v122
  %v144 = vmax.f32 %v58, %v123
  %v145 = vmax.f32 %v59, %v124
  %v146 = vmax.f32 %v60, %v125
  %v147 = vmax.f32 %v61, %v126
  %v148 = vmax.f32 %v62, %v127
  %v149 = vmax.f32 %v63, %v128
  %v150 = vmax.f32 %v64, %v129
  %v151 = vmax.f32 %v65, %v130
  %v152 = vmax.f32 %v66, %v131
  %v153 = vmax.f32 %v67, %v132
  %v154 = vmax.f32 %v68, %v133
  %v155 = vmax.f32 %v69, %v134
  %v156 = vmax.f32 %v70, %v135
  %v157 = vmax.f32 %v71, %v136
  %158 = vst [vmem:[%s1] sm:$0xff] %v137
  %159 = vst [vmem:[%s1 + $0x8] sm:$0xff] %v138
  %160 = vst [vmem:[%s1 + $0x10] sm:$0xff] %v139
  %161 = vst [vmem:[%s1 + $0x18] sm:$0xff] %v140
  %162 = vst [vmem:[%s1 + $0x20] sm:$0xff] %v141
  %163 = vst [vmem:[%s1 + $0x28] sm:$0xff] %v142
  %164 = vst [vmem:[%s1 + $0x30] sm:$0xff] %v143
  %165 = vst [vmem:[%s1 + $0x38] sm:$0xff] %v144
  %166 = vst [vmem:[%s1 + $0x40] sm:$0xff] %v145
  %167 = vst [vmem:[%s1 + $0x48] sm:$0xff] %v146
  %168 = vst [vmem:[%s1 + $0x50] sm:$0xff] %v147
  %169 = vst [vmem:[%s1 + $0x58] sm:$0xff] %v148
  %170 = vst [vmem:[%s1 + $0x60] sm:$0xff] %v149
  %171 = vst [vmem:[%s1 + $0x68] sm:$0xff] %v150
  %172 = vst [vmem:[%s1 + $0x70] sm:$0xff] %v151
  %173 = vst [vmem:[%s1 + $0x78] sm:$0xff] %v152
  %174 = vst [vmem:[%s1 + $0x80] sm:$0xff] %v153
  %175 = vst [vmem:[%s1 + $0x88] sm:$0xff] %v154
  %176 = vst [vmem:[%s1 + $0x90] sm:$0xff] %v155
  %177 = vst [vmem:[%s1 + $0x98] sm:$0xff] %v156
  %178 = vst [vmem:[%s1 + $0xa0] sm:$0x3] %v157
  // Predicated region
  $region6: #{lenet_forward.6} parent=0 // pred_check
    _
  $region7: #{lenet_forward.6} parent=0 // pred_check_branch
    %180 = sbr.rel (0) target = $region9
  $region8: #{lenet_forward.6} parent=0 // pred_region
    _
  $region9: #{lenet_forward.6} parent=0 // pred_fallthru
    _
  // Predicated region
  $region10: #{lenet_forward.6} parent=0 // pred_check
    _
  $region11: #{lenet_forward.6} parent=0 // pred_check_branch
    %182 = sbr.rel (0) target = $region13
  $region12: #{lenet_forward.6} parent=0 // pred_region
    _
  $region13: #{lenet_forward.6} parent=0 // pred_fallthru
    _

// kernel: lenet_forward.7
$region0: #{lenet_forward.7}
  #allocation0 [shape = 'u32[]', space=smem, size = 0x4, offset = 0x4, fixed_abs, tag = 'smem constant byte address 0x4 - core index']
  #allocation1 [shape = 'u32[144,128]{1,0:T(1,128)}', space=vmem, size = 0x12000, scoped, tag = 'internal scratch']
  #allocation2 [shape = 'f32[512,64]{1,0:T(8,128)}', space=vmem, size = 0x40000, scoped, tag = 'scratch operand']
  %s0 = inlined_call_operand.vmem [shape: f32[512,288], index: 0, kind: input, shape index: {}]
  %s1 = inlined_call_operand.vmem [shape: f32[288,64], index: 1, kind: input, shape index: {}]
  %s2 = inlined_call_operand.vmem [shape: f32[1,64], index: 2, kind: input, shape index: {}]
  %s3 = inlined_call_operand.vmem [shape: f32[512,64], index: 3, kind: output, shape index: {}]
  %s4 = sld [smem:[#allocation0]]
  $region30: #{lenet_forward.7} parent=0
    _
  %s6 = ssub.s32 1, %s4
  %s7 = scalar_select 0, %s6, %s4
  // Predicated region
  $region2: #{lenet_forward.7} parent=0 // pred_check
    _
  $region3: #{lenet_forward.7} parent=0 // pred_check_branch
    %9 = sbr.rel (0) target = $region5
  $region4: #{lenet_forward.7} parent=0 // pred_region
    _
  $region5: #{lenet_forward.7} parent=0 // pred_fallthru
    _
  // Predicated region
  $region6: #{lenet_forward.7} parent=0 // pred_check
    _
  $region7: #{lenet_forward.7} parent=0 // pred_check_branch
    %11 = sbr.rel (0) target = $region9
  $region8: #{lenet_forward.7} parent=0 // pred_region
    _
  $region9: #{lenet_forward.7} parent=0 // pred_fallthru
    _
  // Predicated region
  $region10: #{lenet_forward.7} parent=0 // pred_check
    _
  $region11: #{lenet_forward.7} parent=0 // pred_check_branch
    %13 = sbr.rel (0) target = $region13
  $region12: #{lenet_forward.7} parent=0 // pred_region
    _
  $region13: #{lenet_forward.7} parent=0 // pred_fallthru
    _
  %p14 = scmp.eq.s32.totalorder 0, 0
  // Predicated region
  $region14: #{lenet_forward.7} parent=0 // pred_check
    %p15 = pneg %p14
  $region15: #{lenet_forward.7} parent=0 // pred_check_branch
    %17 = sbr.rel (%p15) target = $region17
  $region16: #{lenet_forward.7} parent=0 // pred_region
    %vm18 = vcmask 523264
    %19 = vst.msk [vmem:[#allocation2] sm:$0xff] %vm18, 0.0
    %20 = vst.msk [vmem:[#allocation2 + $0x8] sm:$0xff] %vm18, 0.0
    %21 = vst.msk [vmem:[#allocation2 + $0x10] sm:$0xff] %vm18, 0.0
    %22 = vst.msk [vmem:[#allocation2 + $0x18] sm:$0xff] %vm18, 0.0
    %23 = vst.msk [vmem:[#allocation2 + $0x20] sm:$0xff] %vm18, 0.0
    %24 = vst.msk [vmem:[#allocation2 + $0x28] sm:$0xff] %vm18, 0.0
    %25 = vst.msk [vmem:[#allocation2 + $0x30] sm:$0xff] %vm18, 0.0
    %26 = vst.msk [vmem:[#allocation2 + $0x38] sm:$0xff] %vm18, 0.0
    %27 = vst.msk [vmem:[#allocation2 + $0x40] sm:$0xff] %vm18, 0.0
    %28 = vst.msk [vmem:[#allocation2 + $0x48] sm:$0xff] %vm18, 0.0
    %29 = vst.msk [vmem:[#allocation2 + $0x50] sm:$0xff] %vm18, 0.0
    %30 = vst.msk [vmem:[#allocation2 + $0x58] sm:$0xff] %vm18, 0.0
    %31 = vst.msk [vmem:[#allocation2 + $0x60] sm:$0xff] %vm18, 0.0
    %32 = vst.msk [vmem:[#allocation2 + $0x68] sm:$0xff] %vm18, 0.0
    %33 = vst.msk [vmem:[#allocation2 + $0x70] sm:$0xff] %vm18, 0.0
    %34 = vst.msk [vmem:[#allocation2 + $0x78] sm:$0xff] %vm18, 0.0
    %35 = vst.msk [vmem:[#allocation2 + $0x80] sm:$0xff] %vm18, 0.0
    %36 = vst.msk [vmem:[#allocation2 + $0x88] sm:$0xff] %vm18, 0.0
    %37 = vst.msk [vmem:[#allocation2 + $0x90] sm:$0xff] %vm18, 0.0
    %38 = vst.msk [vmem:[#allocation2 + $0x98] sm:$0xff] %vm18, 0.0
    %39 = vst.msk [vmem:[#allocation2 + $0xa0] sm:$0xff] %vm18, 0.0
    %40 = vst.msk [vmem:[#allocation2 + $0xa8] sm:$0xff] %vm18, 0.0
    %41 = vst.msk [vmem:[#allocation2 + $0xb0] sm:$0xff] %vm18, 0.0
    %42 = vst.msk [vmem:[#allocation2 + $0xb8] sm:$0xff] %vm18, 0.0
    %43 = vst.msk [vmem:[#allocation2 + $0xc0] sm:$0xff] %vm18, 0.0
    %44 = vst.msk [vmem:[#allocation2 + $0xc8] sm:$0xff] %vm18, 0.0
    %45 = vst.msk [vmem:[#allocation2 + $0xd0] sm:$0xff] %vm18, 0.0
    %46 = vst.msk [vmem:[#allocation2 + $0xd8] sm:$0xff] %vm18, 0.0
    %47 = vst.msk [vmem:[#allocation2 + $0xe0] sm:$0xff] %vm18, 0.0
    %48 = vst.msk [vmem:[#allocation2 + $0xe8] sm:$0xff] %vm18, 0.0
    %49 = vst.msk [vmem:[#allocation2 + $0xf0] sm:$0xff] %vm18, 0.0
    %50 = vst.msk [vmem:[#allocation2 + $0xf8] sm:$0xff] %vm18, 0.0
    %51 = vst.msk [vmem:[#allocation2 + $0x100] sm:$0xff] %vm18, 0.0
    %52 = vst.msk [vmem:[#allocation2 + $0x108] sm:$0xff] %vm18, 0.0
    %53 = vst.msk [vmem:[#allocation2 + $0x110] sm:$0xff] %vm18, 0.0
    %54 = vst.msk [vmem:[#allocation2 + $0x118] sm:$0xff] %vm18, 0.0
    %55 = vst.msk [vmem:[#allocation2 + $0x120] sm:$0xff] %vm18, 0.0
    %56 = vst.msk [vmem:[#allocation2 + $0x128] sm:$0xff] %vm18, 0.0
    %57 = vst.msk [vmem:[#allocation2 + $0x130] sm:$0xff] %vm18, 0.0
    %58 = vst.msk [vmem:[#allocation2 + $0x138] sm:$0xff] %vm18, 0.0
    %59 = vst.msk [vmem:[#allocation2 + $0x140] sm:$0xff] %vm18, 0.0
    %60 = vst.msk [vmem:[#allocation2 + $0x148] sm:$0xff] %vm18, 0.0
    %61 = vst.msk [vmem:[#allocation2 + $0x150] sm:$0xff] %vm18, 0.0
    %62 = vst.msk [vmem:[#allocation2 + $0x158] sm:$0xff] %vm18, 0.0
    %63 = vst.msk [vmem:[#allocation2 + $0x160] sm:$0xff] %vm18, 0.0
    %64 = vst.msk [vmem:[#allocation2 + $0x168] sm:$0xff] %vm18, 0.0
    %65 = vst.msk [vmem:[#allocation2 + $0x170] sm:$0xff] %vm18, 0.0
    %66 = vst.msk [vmem:[#allocation2 + $0x178] sm:$0xff] %vm18, 0.0
    %67 = vst.msk [vmem:[#allocation2 + $0x180] sm:$0xff] %vm18, 0.0
    %68 = vst.msk [vmem:[#allocation2 + $0x188] sm:$0xff] %vm18, 0.0
    %69 = vst.msk [vmem:[#allocation2 + $0x190] sm:$0xff] %vm18, 0.0
    %70 = vst.msk [vmem:[#allocation2 + $0x198] sm:$0xff] %vm18, 0.0
    %71 = vst.msk [vmem:[#allocation2 + $0x1a0] sm:$0xff] %vm18, 0.0
    %72 = vst.msk [vmem:[#allocation2 + $0x1a8] sm:$0xff] %vm18, 0.0
    %73 = vst.msk [vmem:[#allocation2 + $0x1b0] sm:$0xff] %vm18, 0.0
    %74 = vst.msk [vmem:[#allocation2 + $0x1b8] sm:$0xff] %vm18, 0.0
    %75 = vst.msk [vmem:[#allocation2 + $0x1c0] sm:$0xff] %vm18, 0.0
    %76 = vst.msk [vmem:[#allocation2 + $0x1c8] sm:$0xff] %vm18, 0.0
    %77 = vst.msk [vmem:[#allocation2 + $0x1d0] sm:$0xff] %vm18, 0.0
    %78 = vst.msk [vmem:[#allocation2 + $0x1d8] sm:$0xff] %vm18, 0.0
    %79 = vst.msk [vmem:[#allocation2 + $0x1e0] sm:$0xff] %vm18, 0.0
    %80 = vst.msk [vmem:[#allocation2 + $0x1e8] sm:$0xff] %vm18, 0.0
    %81 = vst.msk [vmem:[#allocation2 + $0x1f0] sm:$0xff] %vm18, 0.0
    %82 = vst.msk [vmem:[#allocation2 + $0x1f8] sm:$0xff] %vm18, 0.0
  $region17: #{lenet_forward.7} parent=0 // pred_fallthru
    _
  %v83 = vld [vmem:[#allocation2] sm:$0xff]
  %v84 = vld [vmem:[#allocation2 + $0x8] sm:$0xff]
  %v85 = vld [vmem:[#allocation2 + $0x10] sm:$0xff]
  %v86 = vld [vmem:[#allocation2 + $0x18] sm:$0xff]
  %v87 = vld [vmem:[#allocation2 + $0x20] sm:$0xff]
  %v88 = vld [vmem:[#allocation2 + $0x28] sm:$0xff]
  %v89 = vld [vmem:[#allocation2 + $0x30] sm:$0xff]
  %v90 = vld [vmem:[#allocation2 + $0x38] sm:$0xff]
  %v91 = vld [vmem:[#allocation2 + $0x40] sm:$0xff]
  %v92 = vld [vmem:[#allocation2 + $0x48] sm:$0xff]
  %v93 = vld [vmem:[#allocation2 + $0x50] sm:$0xff]
  %v94 = vld [vmem:[#allocation2 + $0x58] sm:$0xff]
  %v95 = vld [vmem:[#allocation2 + $0x60] sm:$0xff]
  %v96 = vld [vmem:[#allocation2 + $0x68] sm:$0xff]
  %v97 = vld [vmem:[#allocation2 + $0x70] sm:$0xff]
  %v98 = vld [vmem:[#allocation2 + $0x78] sm:$0xff]
  %v99 = vld [vmem:[#allocation2 + $0x80] sm:$0xff]
  %v100 = vld [vmem:[#allocation2 + $0x88] sm:$0xff]
  %v101 = vld [vmem:[#allocation2 + $0x90] sm:$0xff]
  %v102 = vld [vmem:[#allocation2 + $0x98] sm:$0xff]
  %v103 = vld [vmem:[#allocation2 + $0xa0] sm:$0xff]
  %v104 = vld [vmem:[#allocation2 + $0xa8] sm:$0xff]
  %v105 = vld [vmem:[#allocation2 + $0xb0] sm:$0xff]
  %v106 = vld [vmem:[#allocation2 + $0xb8] sm:$0xff]
  %v107 = vld [vmem:[#allocation2 + $0xc0] sm:$0xff]
  %v108 = vld [vmem:[#allocation2 + $0xc8] sm:$0xff]
  %v109 = vld [vmem:[#allocation2 + $0xd0] sm:$0xff]
  %v110 = vld [vmem:[#allocation2 + $0xd8] sm:$0xff]
  %v111 = vld [vmem:[#allocation2 + $0xe0] sm:$0xff]
  %v112 = vld [vmem:[#allocation2 + $0xe8] sm:$0xff]
  %v113 = vld [vmem:[#allocation2 + $0xf0] sm:$0xff]
  %v114 = vld [vmem:[#allocation2 + $0xf8] sm:$0xff]
  %v115 = vld [vmem:[#allocation2 + $0x100] sm:$0xff]
  %v116 = vld [vmem:[#allocation2 + $0x108] sm:$0xff]
  %v117 = vld [vmem:[#allocation2 + $0x110] sm:$0xff]
  %v118 = vld [vmem:[#allocation2 + $0x118] sm:$0xff]
  %v119 = vld [vmem:[#allocation2 + $0x120] sm:$0xff]
  %v120 = vld [vmem:[#allocation2 + $0x128] sm:$0xff]
  %v121 = vld [vmem:[#allocation2 + $0x130] sm:$0xff]
  %v122 = vld [vmem:[#allocation2 + $0x138] sm:$0xff]
  %v123 = vld [vmem:[#allocation2 + $0x140] sm:$0xff]
  %v124 = vld [vmem:[#allocation2 + $0x148] sm:$0xff]
  %v125 = vld [vmem:[#allocation2 + $0x150] sm:$0xff]
  %v126 = vld [vmem:[#allocation2 + $0x158] sm:$0xff]
  %v127 = vld [vmem:[#allocation2 + $0x160] sm:$0xff]
  %v128 = vld [vmem:[#allocation2 + $0x168] sm:$0xff]
  %v129 = vld [vmem:[#allocation2 + $0x170] sm:$0xff]
  %v130 = vld [vmem:[#allocation2 + $0x178] sm:$0xff]
  %v131 = vld [vmem:[#allocation2 + $0x180] sm:$0xff]
  %v132 = vld [vmem:[#allocation2 + $0x188] sm:$0xff]
  %v133 = vld [vmem:[#allocation2 + $0x190] sm:$0xff]
  %v134 = vld [vmem:[#allocation2 + $0x198] sm:$0xff]
  %v135 = vld [vmem:[#allocation2 + $0x1a0] sm:$0xff]
  %v136 = vld [vmem:[#allocation2 + $0x1a8] sm:$0xff]
  %v137 = vld [vmem:[#allocation2 + $0x1b0] sm:$0xff]
  %v138 = vld [vmem:[#allocation2 + $0x1b8] sm:$0xff]
  %v139 = vld [vmem:[#allocation2 + $0x1c0] sm:$0xff]
  %v140 = vld [vmem:[#allocation2 + $0x1c8] sm:$0xff]
  %v141 = vld [vmem:[#allocation2 + $0x1d0] sm:$0xff]
  %v142 = vld [vmem:[#allocation2 + $0x1d8] sm:$0xff]
  %v143 = vld [vmem:[#allocation2 + $0x1e0] sm:$0xff]
  %v144 = vld [vmem:[#allocation2 + $0x1e8] sm:$0xff]
  %v145 = vld [vmem:[#allocation2 + $0x1f0] sm:$0xff]
  %v146 = vld [vmem:[#allocation2 + $0x1f8] sm:$0xff]
  %v147 = vld [vmem:[%s0] sm:$0xff]
  %v148 = vld [vmem:[%s0 + $0x8] sm:$0xff]
  %v149 = vld [vmem:[%s0 + $0x10] sm:$0xff]
  %v150 = vld [vmem:[%s0 + $0x18] sm:$0xff]
  %v151 = vld [vmem:[%s0 + $0x20] sm:$0xff]
  %v152 = vld [vmem:[%s0 + $0x28] sm:$0xff]
  %v153 = vld [vmem:[%s0 + $0x30] sm:$0xff]
  %v154 = vld [vmem:[%s0 + $0x38] sm:$0xff]
  %v155 = vld [vmem:[%s0 + $0x40] sm:$0xff]
  %v156 = vld [vmem:[%s0 + $0x48] sm:$0xff]
  %v157 = vld [vmem:[%s0 + $0x50] sm:$0xff]
  %v158 = vld [vmem:[%s0 + $0x58] sm:$0xff]
  %v159 = vld [vmem:[%s0 + $0x60] sm:$0xff]
  %v160 = vld [vmem:[%s0 + $0x68] sm:$0xff]
  %v161 = vld [vmem:[%s0 + $0x70] sm:$0xff]
  %v162 = vld [vmem:[%s0 + $0x78] sm:$0xff]
  %v163 = vld [vmem:[%s0 + $0x80] sm:$0xff]
  %v164 = vld [vmem:[%s0 + $0x88] sm:$0xff]
  %v165 = vld [vmem:[%s0 + $0x90] sm:$0xff]
  %v166 = vld [vmem:[%s0 + $0x98] sm:$0xff]
  %v167 = vld [vmem:[%s0 + $0xa0] sm:$0xff]
  %v168 = vld [vmem:[%s0 + $0xa8] sm:$0xff]
  %v169 = vld [vmem:[%s0 + $0xb0] sm:$0xff]
  %v170 = vld [vmem:[%s0 + $0xb8] sm:$0xff]
  %v171 = vld [vmem:[%s0 + $0xc0] sm:$0xff]
  %v172 = vld [vmem:[%s0 + $0xc8] sm:$0xff]
  %v173 = vld [vmem:[%s0 + $0xd0] sm:$0xff]
  %v174 = vld [vmem:[%s0 + $0xd8] sm:$0xff]
  %v175 = vld [vmem:[%s0 + $0xe0] sm:$0xff]
  %v176 = vld [vmem:[%s0 + $0xe8] sm:$0xff]
  %v177 = vld [vmem:[%s0 + $0xf0] sm:$0xff]
  %v178 = vld [vmem:[%s0 + $0xf8] sm:$0xff]
  %v179 = vld [vmem:[%s0 + $0x100] sm:$0xff]
  %v180 = vld [vmem:[%s0 + $0x108] sm:$0xff]
  %v181 = vld [vmem:[%s0 + $0x110] sm:$0xff]
  %v182 = vld [vmem:[%s0 + $0x118] sm:$0xff]
  %v183 = vld [vmem:[%s0 + $0x120] sm:$0xff]
  %v184 = vld [vmem:[%s0 + $0x128] sm:$0xff]
  %v185 = vld [vmem:[%s0 + $0x130] sm:$0xff]
  %v186 = vld [vmem:[%s0 + $0x138] sm:$0xff]
  %v187 = vld [vmem:[%s0 + $0x140] sm:$0xff]
  %v188 = vld [vmem:[%s0 + $0x148] sm:$0xff]
  %v189 = vld [vmem:[%s0 + $0x150] sm:$0xff]
  %v190 = vld [vmem:[%s0 + $0x158] sm:$0xff]
  %v191 = vld [vmem:[%s0 + $0x160] sm:$0xff]
  %v192 = vld [vmem:[%s0 + $0x168] sm:$0xff]
  %v193 = vld [vmem:[%s0 + $0x170] sm:$0xff]
  %v194 = vld [vmem:[%s0 + $0x178] sm:$0xff]
  %v195 = vld [vmem:[%s0 + $0x180] sm:$0xff]
  %v196 = vld [vmem:[%s0 + $0x188] sm:$0xff]
  %v197 = vld [vmem:[%s0 + $0x190] sm:$0xff]
  %v198 = vld [vmem:[%s0 + $0x198] sm:$0xff]
  %v199 = vld [vmem:[%s0 + $0x1a0] sm:$0xff]
  %v200 = vld [vmem:[%s0 + $0x1a8] sm:$0xff]
  %v201 = vld [vmem:[%s0 + $0x1b0] sm:$0xff]
  %v202 = vld [vmem:[%s0 + $0x1b8] sm:$0xff]
  %v203 = vld [vmem:[%s0 + $0x1c0] sm:$0xff]
  %v204 = vld [vmem:[%s0 + $0x1c8] sm:$0xff]
  %v205 = vld [vmem:[%s0 + $0x1d0] sm:$0xff]
  %v206 = vld [vmem:[%s0 + $0x1d8] sm:$0xff]
  %v207 = vld [vmem:[%s0 + $0x1e0] sm:$0xff]
  %v208 = vld [vmem:[%s0 + $0x1e8] sm:$0xff]
  %v209 = vld [vmem:[%s0 + $0x1f0] sm:$0xff]
  %v210 = vld [vmem:[%s0 + $0x1f8] sm:$0xff]
  %v211 = vld [vmem:[%s0 + $0x200] sm:$0xff]
  %v212 = vld [vmem:[%s0 + $0x208] sm:$0xff]
  %v213 = vld [vmem:[%s0 + $0x210] sm:$0xff]
  %v214 = vld [vmem:[%s0 + $0x218] sm:$0xff]
  %v215 = vld [vmem:[%s0 + $0x220] sm:$0xff]
  %v216 = vld [vmem:[%s0 + $0x228] sm:$0xff]
  %v217 = vld [vmem:[%s0 + $0x230] sm:$0xff]
  %v218 = vld [vmem:[%s0 + $0x238] sm:$0xff]
  %v219 = vld [vmem:[%s0 + $0x240] sm:$0xff]
  %v220 = vld [vmem:[%s0 + $0x248] sm:$0xff]
  %v221 = vld [vmem:[%s0 + $0x250] sm:$0xff]
  %v222 = vld [vmem:[%s0 + $0x258] sm:$0xff]
  %v223 = vld [vmem:[%s0 + $0x260] sm:$0xff]
  %v224 = vld [vmem:[%s0 + $0x268] sm:$0xff]
  %v225 = vld [vmem:[%s0 + $0x270] sm:$0xff]
  %v226 = vld [vmem:[%s0 + $0x278] sm:$0xff]
  %v227 = vld [vmem:[%s0 + $0x280] sm:$0xff]
  %v228 = vld [vmem:[%s0 + $0x288] sm:$0xff]
  %v229 = vld [vmem:[%s0 + $0x290] sm:$0xff]
  %v230 = vld [vmem:[%s0 + $0x298] sm:$0xff]
  %v231 = vld [vmem:[%s0 + $0x2a0] sm:$0xff]
  %v232 = vld [vmem:[%s0 + $0x2a8] sm:$0xff]
  %v233 = vld [vmem:[%s0 + $0x2b0] sm:$0xff]
  %v234 = vld [vmem:[%s0 + $0x2b8] sm:$0xff]
  %v235 = vld [vmem:[%s0 + $0x2c0] sm:$0xff]
  %v236 = vld [vmem:[%s0 + $0x2c8] sm:$0xff]
  %v237 = vld [vmem:[%s0 + $0x2d0] sm:$0xff]
  %v238 = vld [vmem:[%s0 + $0x2d8] sm:$0xff]
  %v239 = vld [vmem:[%s0 + $0x2e0] sm:$0xff]
  %v240 = vld [vmem:[%s0 + $0x2e8] sm:$0xff]
  %v241 = vld [vmem:[%s0 + $0x2f0] sm:$0xff]
  %v242 = vld [vmem:[%s0 + $0x2f8] sm:$0xff]
  %v243 = vld [vmem:[%s0 + $0x300] sm:$0xff]
  %v244 = vld [vmem:[%s0 + $0x308] sm:$0xff]
  %v245 = vld [vmem:[%s0 + $0x310] sm:$0xff]
  %v246 = vld [vmem:[%s0 + $0x318] sm:$0xff]
  %v247 = vld [vmem:[%s0 + $0x320] sm:$0xff]
  %v248 = vld [vmem:[%s0 + $0x328] sm:$0xff]
  %v249 = vld [vmem:[%s0 + $0x330] sm:$0xff]
  %v250 = vld [vmem:[%s0 + $0x338] sm:$0xff]
  %v251 = vld [vmem:[%s0 + $0x340] sm:$0xff]
  %v252 = vld [vmem:[%s0 + $0x348] sm:$0xff]
  %v253 = vld [vmem:[%s0 + $0x350] sm:$0xff]
  %v254 = vld [vmem:[%s0 + $0x358] sm:$0xff]
  %v255 = vld [vmem:[%s0 + $0x360] sm:$0xff]
  %v256 = vld [vmem:[%s0 + $0x368] sm:$0xff]
  %v257 = vld [vmem:[%s0 + $0x370] sm:$0xff]
  %v258 = vld [vmem:[%s0 + $0x378] sm:$0xff]
  %v259 = vld [vmem:[%s0 + $0x380] sm:$0xff]
  %v260 = vld [vmem:[%s0 + $0x388] sm:$0xff]
  %v261 = vld [vmem:[%s0 + $0x390] sm:$0xff]
  %v262 = vld [vmem:[%s0 + $0x398] sm:$0xff]
  %v263 = vld [vmem:[%s0 + $0x3a0] sm:$0xff]
  %v264 = vld [vmem:[%s0 + $0x3a8] sm:$0xff]
  %v265 = vld [vmem:[%s0 + $0x3b0] sm:$0xff]
  %v266 = vld [vmem:[%s0 + $0x3b8] sm:$0xff]
  %v267 = vld [vmem:[%s0 + $0x3c0] sm:$0xff]
  %v268 = vld [vmem:[%s0 + $0x3c8] sm:$0xff]
  %v269 = vld [vmem:[%s0 + $0x3d0] sm:$0xff]
  %v270 = vld [vmem:[%s0 + $0x3d8] sm:$0xff]
  %v271 = vld [vmem:[%s0 + $0x3e0] sm:$0xff]
  %v272 = vld [vmem:[%s0 + $0x3e8] sm:$0xff]
  %v273 = vld [vmem:[%s0 + $0x3f0] sm:$0xff]
  %v274 = vld [vmem:[%s0 + $0x3f8] sm:$0xff]
  %v275 = vld [vmem:[%s0 + $0x400] sm:$0xff]
  %v276 = vld [vmem:[%s0 + $0x408] sm:$0xff]
  %v277 = vld [vmem:[%s0 + $0x410] sm:$0xff]
  %v278 = vld [vmem:[%s0 + $0x418] sm:$0xff]
  %v279 = vld [vmem:[%s0 + $0x420] sm:$0xff]
  %v280 = vld [vmem:[%s0 + $0x428] sm:$0xff]
  %v281 = vld [vmem:[%s0 + $0x430] sm:$0xff]
  %v282 = vld [vmem:[%s0 + $0x438] sm:$0xff]
  %v283 = vld [vmem:[%s0 + $0x440] sm:$0xff]
  %v284 = vld [vmem:[%s0 + $0x448] sm:$0xff]
  %v285 = vld [vmem:[%s0 + $0x450] sm:$0xff]
  %v286 = vld [vmem:[%s0 + $0x458] sm:$0xff]
  %v287 = vld [vmem:[%s0 + $0x460] sm:$0xff]
  %v288 = vld [vmem:[%s0 + $0x468] sm:$0xff]
  %v289 = vld [vmem:[%s0 + $0x470] sm:$0xff]
  %v290 = vld [vmem:[%s0 + $0x478] sm:$0xff]
  %v291 = vld [vmem:[%s0 + $0x480] sm:$0xff]
  %v292 = vld [vmem:[%s0 + $0x488] sm:$0xff]
  %v293 = vld [vmem:[%s0 + $0x490] sm:$0xff]
  %v294 = vld [vmem:[%s0 + $0x498] sm:$0xff]
  %v295 = vld [vmem:[%s0 + $0x4a0] sm:$0xff]
  %v296 = vld [vmem:[%s0 + $0x4a8] sm:$0xff]
  %v297 = vld [vmem:[%s0 + $0x4b0] sm:$0xff]
  %v298 = vld [vmem:[%s0 + $0x4b8] sm:$0xff]
  %v299 = vld [vmem:[%s0 + $0x4c0] sm:$0xff]
  %v300 = vld [vmem:[%s0 + $0x4c8] sm:$0xff]
  %v301 = vld [vmem:[%s0 + $0x4d0] sm:$0xff]
  %v302 = vld [vmem:[%s0 + $0x4d8] sm:$0xff]
  %v303 = vld [vmem:[%s0 + $0x4e0] sm:$0xff]
  %v304 = vld [vmem:[%s0 + $0x4e8] sm:$0xff]
  %v305 = vld [vmem:[%s0 + $0x4f0] sm:$0xff]
  %v306 = vld [vmem:[%s0 + $0x4f8] sm:$0xff]
  %v307 = vld [vmem:[%s0 + $0x500] sm:$0xff]
  %v308 = vld [vmem:[%s0 + $0x508] sm:$0xff]
  %v309 = vld [vmem:[%s0 + $0x510] sm:$0xff]
  %v310 = vld [vmem:[%s0 + $0x518] sm:$0xff]
  %v311 = vld [vmem:[%s0 + $0x520] sm:$0xff]
  %v312 = vld [vmem:[%s0 + $0x528] sm:$0xff]
  %v313 = vld [vmem:[%s0 + $0x530] sm:$0xff]
  %v314 = vld [vmem:[%s0 + $0x538] sm:$0xff]
  %v315 = vld [vmem:[%s0 + $0x540] sm:$0xff]
  %v316 = vld [vmem:[%s0 + $0x548] sm:$0xff]
  %v317 = vld [vmem:[%s0 + $0x550] sm:$0xff]
  %v318 = vld [vmem:[%s0 + $0x558] sm:$0xff]
  %v319 = vld [vmem:[%s0 + $0x560] sm:$0xff]
  %v320 = vld [vmem:[%s0 + $0x568] sm:$0xff]
  %v321 = vld [vmem:[%s0 + $0x570] sm:$0xff]
  %v322 = vld [vmem:[%s0 + $0x578] sm:$0xff]
  %v323 = vld [vmem:[%s0 + $0x580] sm:$0xff]
  %v324 = vld [vmem:[%s0 + $0x588] sm:$0xff]
  %v325 = vld [vmem:[%s0 + $0x590] sm:$0xff]
  %v326 = vld [vmem:[%s0 + $0x598] sm:$0xff]
  %v327 = vld [vmem:[%s0 + $0x5a0] sm:$0xff]
  %v328 = vld [vmem:[%s0 + $0x5a8] sm:$0xff]
  %v329 = vld [vmem:[%s0 + $0x5b0] sm:$0xff]
  %v330 = vld [vmem:[%s0 + $0x5b8] sm:$0xff]
  %v331 = vld [vmem:[%s0 + $0x5c0] sm:$0xff]
  %v332 = vld [vmem:[%s0 + $0x5c8] sm:$0xff]
  %v333 = vld [vmem:[%s0 + $0x5d0] sm:$0xff]
  %v334 = vld [vmem:[%s0 + $0x5d8] sm:$0xff]
  %v335 = vld [vmem:[%s0 + $0x5e0] sm:$0xff]
  %v336 = vld [vmem:[%s0 + $0x5e8] sm:$0xff]
  %v337 = vld [vmem:[%s0 + $0x5f0] sm:$0xff]
  %v338 = vld [vmem:[%s0 + $0x5f8] sm:$0xff]
  %v339 = vld [vmem:[%s1] sm:$0xff]
  %v340 = vld [vmem:[%s1 + $0x8] sm:$0xff]
  %v341 = vld [vmem:[%s1 + $0x10] sm:$0xff]
  %v342 = vld [vmem:[%s1 + $0x18] sm:$0xff]
  %v343 = vld [vmem:[%s1 + $0x20] sm:$0xff]
  %v344 = vld [vmem:[%s1 + $0x28] sm:$0xff]
  %v345 = vld [vmem:[%s1 + $0x30] sm:$0xff]
  %v346 = vld [vmem:[%s1 + $0x38] sm:$0xff]
  %v347 = vld [vmem:[%s1 + $0x40] sm:$0xff]
  %v348 = vld [vmem:[%s1 + $0x48] sm:$0xff]
  %v349 = vld [vmem:[%s1 + $0x50] sm:$0xff]
  %v350 = vld [vmem:[%s1 + $0x58] sm:$0xff]
  %v351 = vld [vmem:[%s1 + $0x60] sm:$0xff]
  %v352 = vld [vmem:[%s1 + $0x68] sm:$0xff]
  %v353 = vld [vmem:[%s1 + $0x70] sm:$0xff]
  %v354 = vld [vmem:[%s1 + $0x78] sm:$0xff]
  %v355 = vld [vmem:[%s1 + $0x80] sm:$0xff]
  %v356 = vld [vmem:[%s1 + $0x88] sm:$0xff]
  %v357 = vld [vmem:[%s1 + $0x90] sm:$0xff]
  %v358 = vld [vmem:[%s1 + $0x98] sm:$0xff]
  %v359 = vld [vmem:[%s1 + $0xa0] sm:$0xff]
  %v360 = vld [vmem:[%s1 + $0xa8] sm:$0xff]
  %v361 = vld [vmem:[%s1 + $0xb0] sm:$0xff]
  %v362 = vld [vmem:[%s1 + $0xb8] sm:$0xff]
  %v363 = vld [vmem:[%s1 + $0xc0] sm:$0xff]
  %v364 = vld [vmem:[%s1 + $0xc8] sm:$0xff]
  %v365 = vld [vmem:[%s1 + $0xd0] sm:$0xff]
  %v366 = vld [vmem:[%s1 + $0xd8] sm:$0xff]
  %v367 = vld [vmem:[%s1 + $0xe0] sm:$0xff]
  %v368 = vld [vmem:[%s1 + $0xe8] sm:$0xff]
  %v369 = vld [vmem:[%s1 + $0xf0] sm:$0xff]
  %v370 = vld [vmem:[%s1 + $0xf8] sm:$0xff]
  %v371 = vld [vmem:[%s1 + $0x100] sm:$0xff]
  %v372 = vld [vmem:[%s1 + $0x108] sm:$0xff]
  %v373 = vld [vmem:[%s1 + $0x110] sm:$0xff]
  %v374 = vld [vmem:[%s1 + $0x118] sm:$0xff]
  %vm375 = vcmask 261120
  %v377 = vsel %vm375, %v149, 0
  %v380 = vsel %vm375, %v152, 0
  %v383 = vsel %vm375, %v155, 0
  %v386 = vsel %vm375, %v158, 0
  %v389 = vsel %vm375, %v161, 0
  %v392 = vsel %vm375, %v164, 0
  %v395 = vsel %vm375, %v167, 0
  %v398 = vsel %vm375, %v170, 0
  %v401 = vsel %vm375, %v173, 0
  %v404 = vsel %vm375, %v176, 0
  %v407 = vsel %vm375, %v179, 0
  %v410 = vsel %vm375, %v182, 0
  %v413 = vsel %vm375, %v185, 0
  %v416 = vsel %vm375, %v188, 0
  %v419 = vsel %vm375, %v191, 0
  %v422 = vsel %vm375, %v194, 0
  %v425 = vsel %vm375, %v197, 0
  %v428 = vsel %vm375, %v200, 0
  %v431 = vsel %vm375, %v203, 0
  %v434 = vsel %vm375, %v206, 0
  %v437 = vsel %vm375, %v209, 0
  %v440 = vsel %vm375, %v212, 0
  %v443 = vsel %vm375, %v215, 0
  %v446 = vsel %vm375, %v218, 0
  %v449 = vsel %vm375, %v221, 0
  %v452 = vsel %vm375, %v224, 0
  %v455 = vsel %vm375, %v227, 0
  %v458 = vsel %vm375, %v230, 0
  %v461 = vsel %vm375, %v233, 0
  %v464 = vsel %vm375, %v236, 0
  %v467 = vsel %vm375, %v239, 0
  %v470 = vsel %vm375, %v242, 0
  %v473 = vsel %vm375, %v245, 0
  %v476 = vsel %vm375, %v248, 0
  %v479 = vsel %vm375, %v251, 0
  %v482 = vsel %vm375, %v254, 0
  %v485 = vsel %vm375, %v257, 0
  %v488 = vsel %vm375, %v260, 0
  %v491 = vsel %vm375, %v263, 0
  %v494 = vsel %vm375, %v266, 0
  %v497 = vsel %vm375, %v269, 0
  %v500 = vsel %vm375, %v272, 0
  %v503 = vsel %vm375, %v275, 0
  %v506 = vsel %vm375, %v278, 0
  %v509 = vsel %vm375, %v281, 0
  %v512 = vsel %vm375, %v284, 0
  %v515 = vsel %vm375, %v287, 0
  %v518 = vsel %vm375, %v290, 0
  %v521 = vsel %vm375, %v293, 0
  %v524 = vsel %vm375, %v296, 0
  %v527 = vsel %vm375, %v299, 0
  %v530 = vsel %vm375, %v302, 0
  %v533 = vsel %vm375, %v305, 0
  %v536 = vsel %vm375, %v308, 0
  %v539 = vsel %vm375, %v311, 0
  %v542 = vsel %vm375, %v314, 0
  %v545 = vsel %vm375, %v317, 0
  %v548 = vsel %vm375, %v320, 0
  %v551 = vsel %vm375, %v323, 0
  %v554 = vsel %vm375, %v326, 0
  %v557 = vsel %vm375, %v329, 0
  %v560 = vsel %vm375, %v332, 0
  %v563 = vsel %vm375, %v335, 0
  %v566 = vsel %vm375, %v338, 0
  %568 = vmatprep.subr.mxu0 0.0
  %569 = vmatpush1.msra.mxu0 %v339
  %570 = vmatprep.subr.mxu0 0.0
  %571 = vmatpush1.msra.mxu0 %v340
  %572 = vmatprep.subr.mxu0 0.0
  %573 = vmatpush1.msra.mxu0 %v341
  %574 = vmatprep.subr.mxu0 0.0
  %575 = vmatpush1.msra.mxu0 %v342
  %576 = vmatprep.subr.mxu0 0.0
  %577 = vmatpush1.msra.mxu0 %v343
  %578 = vmatprep.subr.mxu0 0.0
  %579 = vmatpush1.msra.mxu0 %v344
  %580 = vmatprep.subr.mxu0 0.0
  %581 = vmatpush1.msra.mxu0 %v345
  %582 = vmatprep.subr.mxu0 0.0
  %583 = vmatpush1.msra.mxu0 %v346
  %584 = vmatprep.subr.mxu0 0.0
  %585 = vmatpush1.msra.mxu0 %v347
  %586 = vmatprep.subr.mxu0 0.0
  %587 = vmatpush1.msra.mxu0 %v348
  %588 = vmatprep.subr.mxu0 0.0
  %589 = vmatpush1.msra.mxu0 %v349
  %590 = vmatprep.subr.mxu0 0.0
  %591 = vmatpush1.msra.mxu0 %v350
  %592 = vmatprep.subr.mxu0 0.0
  %593 = vmatpush1.msra.mxu0 %v351
  %594 = vmatprep.subr.mxu0 0.0
  %595 = vmatpush1.msra.mxu0 %v352
  %596 = vmatprep.subr.mxu0 0.0
  %597 = vmatpush1.msra.mxu0 %v353
  %598 = vmatprep.subr.mxu0 0.0
  %599 = vmatpush1.msra.mxu0 %v354
  %600 = vmatprep.subr.mxu0 0.0
  %601 = vmatpush1.msra.mxu0 %v355
  %602 = vmatprep.subr.mxu0 0.0
  %603 = vmatpush1.msra.mxu0 %v356
  %604 = vmatprep.subr.mxu0 0.0
  %605 = vmatpush1.msra.mxu0 %v357
  %606 = vmatprep.subr.mxu0 0.0
  %607 = vmatpush1.msra.mxu0 %v358
  %608 = vmatprep.subr.mxu0 0.0
  %609 = vmatpush1.msra.mxu0 %v359
  %610 = vmatprep.subr.mxu0 0.0
  %611 = vmatpush1.msra.mxu0 %v360
  %612 = vmatprep.subr.mxu0 0.0
  %613 = vmatpush1.msra.mxu0 %v361
  %614 = vmatprep.subr.mxu0 0.0
  %615 = vmatpush1.msra.mxu0 %v362
  %616 = vmatprep.subr.mxu0 0.0
  %617 = vmatpush1.msra.mxu0 %v363
  %618 = vmatprep.subr.mxu0 0.0
  %619 = vmatpush1.msra.mxu0 %v364
  %620 = vmatprep.subr.mxu0 0.0
  %621 = vmatpush1.msra.mxu0 %v365
  %622 = vmatprep.subr.mxu0 0.0
  %623 = vmatpush1.msra.mxu0 %v366
  %624 = vmatprep.subr.mxu0 0.0
  %625 = vmatpush1.msra.mxu0 %v367
  %626 = vmatprep.subr.mxu0 0.0
  %627 = vmatpush1.msra.mxu0 %v368
  %628 = vmatprep.subr.mxu0 0.0
  %629 = vmatpush1.msra.mxu0 %v369
  %630 = vmatprep.subr.mxu0 0.0
  %631 = vmatpush1.msra.mxu0 %v370
  %632 = vmatprep.mubr.f32.mxu0 %v148
  %633 = vmatmul.mubr.f32.gmra.mrb[0].mxu0 %v147
  %v634 = vpop.f32.mrb[0].mxu0
  %v635 = vadd.f32 0.0, %v634
  %v636 = vpop.f32.mrb[0].mxu0
  %637 = vmatprep.mubr.f32.mxu0 %v151
  %638 = vmatmul.mubr.f32.gmra.mrb[0].mxu0 %v150
  %v639 = vpop.f32.mrb[0].mxu0
  %v640 = vadd.f32 0.0, %v639
  %v641 = vpop.f32.mrb[0].mxu0
  %642 = vmatprep.mubr.f32.mxu0 %v154
  %643 = vmatmul.mubr.f32.gmra.mrb[0].mxu0 %v153
  %v644 = vpop.f32.mrb[0].mxu0
  %v645 = vadd.f32 0.0, %v644
  %v646 = vpop.f32.mrb[0].mxu0
  %647 = vmatprep.mubr.f32.mxu0 %v157
  %648 = vmatmul.mubr.f32.gmra.mrb[0].mxu0 %v156
  %v649 = vpop.f32.mrb[0].mxu0
  %v650 = vadd.f32 0.0, %v649
  %v651 = vpop.f32.mrb[0].mxu0
  %652 = vmatprep.mubr.f32.mxu0 %v160
  %653 = vmatmul.mubr.f32.gmra.mrb[0].mxu0 %v159
  %v654 = vpop.f32.mrb[0].mxu0
  %v655 = vadd.f32 0.0, %v654
  %v656 = vpop.f32.mrb[0].mxu0
  %657 = vmatprep.mubr.f32.mxu0 %v163
  %658 = vmatmul.mubr.f32.gmra.mrb[0].mxu0 %v162
  %v659 = vpop.f32.mrb[0].mxu0
  %v660 = vadd.f32 0.0, %v659
  %v661 = vpop.f32.mrb[0].mxu0
  %662 = vmatprep.mubr.f32.mxu0 %v166
  %663 = vmatmul.mubr.f32.gmra.mrb[0].mxu0 %v165
  %v664 = vpop.f32.mrb[0].mxu0
  %v665 = vadd.f32 0.0, %v664
  %v666 = vpop.f32.mrb[0].mxu0
  %667 = vmatprep.mubr.f32.mxu0 %v169
  %668 = vmatmul.mubr.f32.gmra.mrb[0].mxu0 %v168
  %v669 = vpop.f32.mrb[0].mxu0
  %v670 = vadd.f32 0.0, %v669
  %v671 = vpop.f32.mrb[0].mxu0
  %672 = vmatprep.mubr.f32.mxu0 %v172
  %673 = vmatmul.mubr.f32.gmra.mrb[0].mxu0 %v171
  %v674 = vpop.f32.mrb[0].mxu0
  %v675 = vadd.f32 0.0, %v674
  %v676 = vpop.f32.mrb[0].mxu0
  %677 = vmatprep.mubr.f32.mxu0 %v175
  %678 = vmatmul.mubr.f32.gmra.mrb[0].mxu0 %v174
  %v679 = vpop.f32.mrb[0].mxu0
  %v680 = vadd.f32 0.0, %v679
  %v681 = vpop.f32.mrb[0].mxu0
  %682 = vmatprep.mubr.f32.mxu0 %v178
  %683 = vmatmul.mubr.f32.gmra.mrb[0].mxu0 %v177
  %v684 = vpop.f32.mrb[0].mxu0
  %v685 = vadd.f32 0.0, %v684
  %v686 = vpop.f32.mrb[0].mxu0
  %687 = vmatprep.mubr.f32.mxu0 %v181
  %688 = vmatmul.mubr.f32.gmra.mrb[0].mxu0 %v180
  %v689 = vpop.f32.mrb[0].mxu0
  %v690 = vadd.f32 0.0, %v689
  %v691 = vpop.f32.mrb[0].mxu0
  %692 = vmatprep.mubr.f32.mxu0 %v184
  %693 = vmatmul.mubr.f32.gmra.mrb[0].mxu0 %v183
  %v694 = vpop.f32.mrb[0].mxu0
  %v695 = vadd.f32 0.0, %v694
  %v696 = vpop.f32.mrb[0].mxu0
  %697 = vmatprep.mubr.f32.mxu0 %v187
  %698 = vmatmul.mubr.f32.gmra.mrb[0].mxu0 %v186
  %v699 = vpop.f32.mrb[0].mxu0
  %v700 = vadd.f32 0.0, %v699
  %v701 = vpop.f32.mrb[0].mxu0
  %702 = vmatprep.mubr.f32.mxu0 %v190
  %703 = vmatmul.mubr.f32.gmra.mrb[0].mxu0 %v189
  %v704 = vpop.f32.mrb[0].mxu0
  %v705 = vadd.f32 0.0, %v704
  %v706 = vpop.f32.mrb[0].mxu0
  %707 = vmatprep.mubr.f32.mxu0 %v193
  %708 = vmatmul.mubr.f32.gmra.mrb[0].mxu0 %v192
  %v709 = vpop.f32.mrb[0].mxu0
  %v710 = vadd.f32 0.0, %v709
  %v711 = vpop.f32.mrb[0].mxu0
  %712 = vmatprep.mubr.f32.mxu0 %v196
  %713 = vmatmul.mubr.f32.gmra.mrb[0].mxu0 %v195
  %v714 = vpop.f32.mrb[0].mxu0
  %v715 = vadd.f32 0.0, %v714
  %v716 = vpop.f32.mrb[0].mxu0
  %717 = vmatprep.mubr.f32.mxu0 %v199
  %718 = vmatmul.mubr.f32.gmra.mrb[0].mxu0 %v198
  %v719 = vpop.f32.mrb[0].mxu0
  %v720 = vadd.f32 0.0, %v719
  %v721 = vpop.f32.mrb[0].mxu0
  %722 = vmatprep.mubr.f32.mxu0 %v202
  %723 = vmatmul.mubr.f32.gmra.mrb[0].mxu0 %v201
  %v724 = vpop.f32.mrb[0].mxu0
  %v725 = vadd.f32 0.0, %v724
  %v726 = vpop.f32.mrb[0].mxu0
  %727 = vmatprep.mubr.f32.mxu0 %v205
  %728 = vmatmul.mubr.f32.gmra.mrb[0].mxu0 %v204
  %v729 = vpop.f32.mrb[0].mxu0
  %v730 = vadd.f32 0.0, %v729
  %v731 = vpop.f32.mrb[0].mxu0
  %732 = vmatprep.mubr.f32.mxu0 %v208
  %733 = vmatmul.mubr.f32.gmra.mrb[0].mxu0 %v207
  %v734 = vpop.f32.mrb[0].mxu0
  %v735 = vadd.f32 0.0, %v734
  %v736 = vpop.f32.mrb[0].mxu0
  %737 = vmatprep.mubr.f32.mxu0 %v211
  %738 = vmatmul.mubr.f32.gmra.mrb[0].mxu0 %v210
  %v739 = vpop.f32.mrb[0].mxu0
  %v740 = vadd.f32 0.0, %v739
  %v741 = vpop.f32.mrb[0].mxu0
  %742 = vmatprep.mubr.f32.mxu0 %v214
  %743 = vmatmul.mubr.f32.gmra.mrb[0].mxu0 %v213
  %v744 = vpop.f32.mrb[0].mxu0
  %v745 = vadd.f32 0.0, %v744
  %v746 = vpop.f32.mrb[0].mxu0
  %747 = vmatprep.mubr.f32.mxu0 %v217
  %748 = vmatmul.mubr.f32.gmra.mrb[0].mxu0 %v216
  %v749 = vpop.f32.mrb[0].mxu0
  %v750 = vadd.f32 0.0, %v749
  %v751 = vpop.f32.mrb[0].mxu0
  %752 = vmatprep.mubr.f32.mxu0 %v220
  %753 = vmatmul.mubr.f32.gmra.mrb[0].mxu0 %v219
  %v754 = vpop.f32.mrb[0].mxu0
  %v755 = vadd.f32 0.0, %v754
  %v756 = vpop.f32.mrb[0].mxu0
  %757 = vmatprep.mubr.f32.mxu0 %v223
  %758 = vmatmul.mubr.f32.gmra.mrb[0].mxu0 %v222
  %v759 = vpop.f32.mrb[0].mxu0
  %v760 = vadd.f32 0.0, %v759
  %v761 = vpop.f32.mrb[0].mxu0
  %762 = vmatprep.mubr.f32.mxu0 %v226
  %763 = vmatmul.mubr.f32.gmra.mrb[0].mxu0 %v225
  %v764 = vpop.f32.mrb[0].mxu0
  %v765 = vadd.f32 0.0, %v764
  %v766 = vpop.f32.mrb[0].mxu0
  %767 = vmatprep.mubr.f32.mxu0 %v229
  %768 = vmatmul.mubr.f32.gmra.mrb[0].mxu0 %v228
  %v769 = vpop.f32.mrb[0].mxu0
  %v770 = vadd.f32 0.0, %v769
  %v771 = vpop.f32.mrb[0].mxu0
  %772 = vmatprep.mubr.f32.mxu0 %v232
  %773 = vmatmul.mubr.f32.gmra.mrb[0].mxu0 %v231
  %v774 = vpop.f32.mrb[0].mxu0
  %v775 = vadd.f32 0.0, %v774
  %v776 = vpop.f32.mrb[0].mxu0
  %777 = vmatprep.mubr.f32.mxu0 %v235
  %778 = vmatmul.mubr.f32.gmra.mrb[0].mxu0 %v234
  %v779 = vpop.f32.mrb[0].mxu0
  %v780 = vadd.f32 0.0, %v779
  %v781 = vpop.f32.mrb[0].mxu0
  %782 = vmatprep.mubr.f32.mxu0 %v238
  %783 = vmatmul.mubr.f32.gmra.mrb[0].mxu0 %v237
  %v784 = vpop.f32.mrb[0].mxu0
  %v785 = vadd.f32 0.0, %v784
  %v786 = vpop.f32.mrb[0].mxu0
  %787 = vmatprep.mubr.f32.mxu0 %v241
  %788 = vmatmul.mubr.f32.gmra.mrb[0].mxu0 %v240
  %v789 = vpop.f32.mrb[0].mxu0
  %v790 = vadd.f32 0.0, %v789
  %v791 = vpop.f32.mrb[0].mxu0
  %792 = vmatprep.mubr.f32.mxu0 %v244
  %793 = vmatmul.mubr.f32.gmra.mrb[0].mxu0 %v243
  %v794 = vpop.f32.mrb[0].mxu0
  %v795 = vadd.f32 0.0, %v794
  %v796 = vpop.f32.mrb[0].mxu0
  %797 = vmatprep.mubr.f32.mxu0 %v247
  %798 = vmatmul.mubr.f32.gmra.mrb[0].mxu0 %v246
  %v799 = vpop.f32.mrb[0].mxu0
  %v800 = vadd.f32 0.0, %v799
  %v801 = vpop.f32.mrb[0].mxu0
  %802 = vmatprep.mubr.f32.mxu0 %v250
  %803 = vmatmul.mubr.f32.gmra.mrb[0].mxu0 %v249
  %v804 = vpop.f32.mrb[0].mxu0
  %v805 = vadd.f32 0.0, %v804
  %v806 = vpop.f32.mrb[0].mxu0
  %807 = vmatprep.mubr.f32.mxu0 %v253
  %808 = vmatmul.mubr.f32.gmra.mrb[0].mxu0 %v252
  %v809 = vpop.f32.mrb[0].mxu0
  %v810 = vadd.f32 0.0, %v809
  %v811 = vpop.f32.mrb[0].mxu0
  %812 = vmatprep.mubr.f32.mxu0 %v256
  %813 = vmatmul.mubr.f32.gmra.mrb[0].mxu0 %v255
  %v814 = vpop.f32.mrb[0].mxu0
  %v815 = vadd.f32 0.0, %v814
  %v816 = vpop.f32.mrb[0].mxu0
  %817 = vmatprep.mubr.f32.mxu0 %v259
  %818 = vmatmul.mubr.f32.gmra.mrb[0].mxu0 %v258
  %v819 = vpop.f32.mrb[0].mxu0
  %v820 = vadd.f32 0.0, %v819
  %v821 = vpop.f32.mrb[0].mxu0
  %822 = vmatprep.mubr.f32.mxu0 %v262
  %823 = vmatmul.mubr.f32.gmra.mrb[0].mxu0 %v261
  %v824 = vpop.f32.mrb[0].mxu0
  %v825 = vadd.f32 0.0, %v824
  %v826 = vpop.f32.mrb[0].mxu0
  %827 = vmatprep.mubr.f32.mxu0 %v265
  %828 = vmatmul.mubr.f32.gmra.mrb[0].mxu0 %v264
  %v829 = vpop.f32.mrb[0].mxu0
  %v830 = vadd.f32 0.0, %v829
  %v831 = vpop.f32.mrb[0].mxu0
  %832 = vmatprep.mubr.f32.mxu0 %v268
  %833 = vmatmul.mubr.f32.gmra.mrb[0].mxu0 %v267
  %v834 = vpop.f32.mrb[0].mxu0
  %v835 = vadd.f32 0.0, %v834
  %v836 = vpop.f32.mrb[0].mxu0
  %837 = vmatprep.mubr.f32.mxu0 %v271
  %838 = vmatmul.mubr.f32.gmra.mrb[0].mxu0 %v270
  %v839 = vpop.f32.mrb[0].mxu0
  %v840 = vadd.f32 0.0, %v839
  %v841 = vpop.f32.mrb[0].mxu0
  %842 = vmatprep.mubr.f32.mxu0 %v274
  %843 = vmatmul.mubr.f32.gmra.mrb[0].mxu0 %v273
  %v844 = vpop.f32.mrb[0].mxu0
  %v845 = vadd.f32 0.0, %v844
  %v846 = vpop.f32.mrb[0].mxu0
  %847 = vmatprep.mubr.f32.mxu0 %v277
  %848 = vmatmul.mubr.f32.gmra.mrb[0].mxu0 %v276
  %v849 = vpop.f32.mrb[0].mxu0
  %v850 = vadd.f32 0.0, %v849
  %v851 = vpop.f32.mrb[0].mxu0
  %852 = vmatprep.mubr.f32.mxu0 %v280
  %853 = vmatmul.mubr.f32.gmra.mrb[0].mxu0 %v279
  %v854 = vpop.f32.mrb[0].mxu0
  %v855 = vadd.f32 0.0, %v854
  %v856 = vpop.f32.mrb[0].mxu0
  %857 = vmatprep.mubr.f32.mxu0 %v283
  %858 = vmatmul.mubr.f32.gmra.mrb[0].mxu0 %v282
  %v859 = vpop.f32.mrb[0].mxu0
  %v860 = vadd.f32 0.0, %v859
  %v861 = vpop.f32.mrb[0].mxu0
  %862 = vmatprep.mubr.f32.mxu0 %v286
  %863 = vmatmul.mubr.f32.gmra.mrb[0].mxu0 %v285
  %v864 = vpop.f32.mrb[0].mxu0
  %v865 = vadd.f32 0.0, %v864
  %v866 = vpop.f32.mrb[0].mxu0
  %867 = vmatprep.mubr.f32.mxu0 %v289
  %868 = vmatmul.mubr.f32.gmra.mrb[0].mxu0 %v288
  %v869 = vpop.f32.mrb[0].mxu0
  %v870 = vadd.f32 0.0, %v869
  %v871 = vpop.f32.mrb[0].mxu0
  %872 = vmatprep.mubr.f32.mxu0 %v292
  %873 = vmatmul.mubr.f32.gmra.mrb[0].mxu0 %v291
  %v874 = vpop.f32.mrb[0].mxu0
  %v875 = vadd.f32 0.0, %v874
  %v876 = vpop.f32.mrb[0].mxu0
  %877 = vmatprep.mubr.f32.mxu0 %v295
  %878 = vmatmul.mubr.f32.gmra.mrb[0].mxu0 %v294
  %v879 = vpop.f32.mrb[0].mxu0
  %v880 = vadd.f32 0.0, %v879
  %v881 = vpop.f32.mrb[0].mxu0
  %882 = vmatprep.mubr.f32.mxu0 %v298
  %883 = vmatmul.mubr.f32.gmra.mrb[0].mxu0 %v297
  %v884 = vpop.f32.mrb[0].mxu0
  %v885 = vadd.f32 0.0, %v884
  %v886 = vpop.f32.mrb[0].mxu0
  %887 = vmatprep.mubr.f32.mxu0 %v301
  %888 = vmatmul.mubr.f32.gmra.mrb[0].mxu0 %v300
  %v889 = vpop.f32.mrb[0].mxu0
  %v890 = vadd.f32 0.0, %v889
  %v891 = vpop.f32.mrb[0].mxu0
  %892 = vmatprep.mubr.f32.mxu0 %v304
  %893 = vmatmul.mubr.f32.gmra.mrb[0].mxu0 %v303
  %v894 = vpop.f32.mrb[0].mxu0
  %v895 = vadd.f32 0.0, %v894
  %v896 = vpop.f32.mrb[0].mxu0
  %897 = vmatprep.mubr.f32.mxu0 %v307
  %898 = vmatmul.mubr.f32.gmra.mrb[0].mxu0 %v306
  %v899 = vpop.f32.mrb[0].mxu0
  %v900 = vadd.f32 0.0, %v899
  %v901 = vpop.f32.mrb[0].mxu0
  %902 = vmatprep.mubr.f32.mxu0 %v310
  %903 = vmatmul.mubr.f32.gmra.mrb[0].mxu0 %v309
  %v904 = vpop.f32.mrb[0].mxu0
  %v905 = vadd.f32 0.0, %v904
  %v906 = vpop.f32.mrb[0].mxu0
  %907 = vmatprep.mubr.f32.mxu0 %v313
  %908 = vmatmul.mubr.f32.gmra.mrb[0].mxu0 %v312
  %v909 = vpop.f32.mrb[0].mxu0
  %v910 = vadd.f32 0.0, %v909
  %v911 = vpop.f32.mrb[0].mxu0
  %912 = vmatprep.mubr.f32.mxu0 %v316
  %913 = vmatmul.mubr.f32.gmra.mrb[0].mxu0 %v315
  %v914 = vpop.f32.mrb[0].mxu0
  %v915 = vadd.f32 0.0, %v914
  %v916 = vpop.f32.mrb[0].mxu0
  %917 = vmatprep.mubr.f32.mxu0 %v319
  %918 = vmatmul.mubr.f32.gmra.mrb[0].mxu0 %v318
  %v919 = vpop.f32.mrb[0].mxu0
  %v920 = vadd.f32 0.0, %v919
  %v921 = vpop.f32.mrb[0].mxu0
  %922 = vmatprep.mubr.f32.mxu0 %v322
  %923 = vmatmul.mubr.f32.gmra.mrb[0].mxu0 %v321
  %v924 = vpop.f32.mrb[0].mxu0
  %v925 = vadd.f32 0.0, %v924
  %v926 = vpop.f32.mrb[0].mxu0
  %927 = vmatprep.mubr.f32.mxu0 %v325
  %928 = vmatmul.mubr.f32.gmra.mrb[0].mxu0 %v324
  %v929 = vpop.f32.mrb[0].mxu0
  %v930 = vadd.f32 0.0, %v929
  %v931 = vpop.f32.mrb[0].mxu0
  %932 = vmatprep.mubr.f32.mxu0 %v328
  %933 = vmatmul.mubr.f32.gmra.mrb[0].mxu0 %v327
  %v934 = vpop.f32.mrb[0].mxu0
  %v935 = vadd.f32 0.0, %v934
  %v936 = vpop.f32.mrb[0].mxu0
  %937 = vmatprep.mubr.f32.mxu0 %v331
  %938 = vmatmul.mubr.f32.gmra.mrb[0].mxu0 %v330
  %v939 = vpop.f32.mrb[0].mxu0
  %v940 = vadd.f32 0.0, %v939
  %v941 = vpop.f32.mrb[0].mxu0
  %942 = vmatprep.mubr.f32.mxu0 %v334
  %943 = vmatmul.mubr.f32.gmra.mrb[0].mxu0 %v333
  %v944 = vpop.f32.mrb[0].mxu0
  %v945 = vadd.f32 0.0, %v944
  %v946 = vpop.f32.mrb[0].mxu0
  %947 = vmatprep.mubr.f32.mxu0 %v337
  %948 = vmatmul.mubr.f32.gmra.mrb[0].mxu0 %v336
  %v949 = vpop.f32.mrb[0].mxu0
  %v950 = vadd.f32 0.0, %v949
  %v951 = vpop.f32.mrb[0].mxu0
  %952 = vdwg.mxu0
  %953 = vmatprep.subr.mxu0 0.0
  %954 = vmatpush1.msra.mxu0 %v371
  %955 = vmatprep.subr.mxu0 0.0
  %956 = vmatpush1.msra.mxu0 %v372
  %957 = vmatprep.subr.mxu0 0.0
  %958 = vmatpush1.msra.mxu0 %v373
  %959 = vmatprep.subr.mxu0 0.0
  %960 = vmatpush1.msra.mxu0 %v374
  %961 = vmatprep.subr.mxu0 0.0
  %962 = vmatpush1.msra.mxu0 0.0
  %963 = vmatprep.subr.mxu0 0.0
  %964 = vmatpush1.msra.mxu0 0.0
  %965 = vmatprep.subr.mxu0 0.0
  %966 = vmatpush1.msra.mxu0 0.0
  %967 = vmatprep.subr.mxu0 0.0
  %968 = vmatpush1.msra.mxu0 0.0
  %969 = vmatprep.subr.mxu0 0.0
  %970 = vmatpush1.msra.mxu0 0.0
  %971 = vmatprep.subr.mxu0 0.0
  %972 = vmatpush1.msra.mxu0 0.0
  %973 = vmatprep.subr.mxu0 0.0
  %974 = vmatpush1.msra.mxu0 0.0
  %975 = vmatprep.subr.mxu0 0.0
  %976 = vmatpush1.msra.mxu0 0.0
  %977 = vmatprep.subr.mxu0 0.0
  %978 = vmatpush1.msra.mxu0 0.0
  %979 = vmatprep.subr.mxu0 0.0
  %980 = vmatpush1.msra.mxu0 0.0
  %981 = vmatprep.subr.mxu0 0.0
  %982 = vmatpush1.msra.mxu0 0.0
  %983 = vmatprep.subr.mxu0 0.0
  %984 = vmatpush1.msra.mxu0 0.0
  %985 = vmatprep.subr.mxu0 0.0
  %986 = vmatpush1.msra.mxu0 0.0
  %987 = vmatprep.subr.mxu0 0.0
  %988 = vmatpush1.msra.mxu0 0.0
  %989 = vmatprep.subr.mxu0 0.0
  %990 = vmatpush1.msra.mxu0 0.0
  %991 = vmatprep.subr.mxu0 0.0
  %992 = vmatpush1.msra.mxu0 0.0
  %993 = vmatprep.subr.mxu0 0.0
  %994 = vmatpush1.msra.mxu0 0.0
  %995 = vmatprep.subr.mxu0 0.0
  %996 = vmatpush1.msra.mxu0 0.0
  %997 = vmatprep.subr.mxu0 0.0
  %998 = vmatpush1.msra.mxu0 0.0
  %999 = vmatprep.subr.mxu0 0.0
  %1000 = vmatpush1.msra.mxu0 0.0
  %1001 = vmatprep.subr.mxu0 0.0
  %1002 = vmatpush1.msra.mxu0 0.0
  %1003 = vmatprep.subr.mxu0 0.0
  %1004 = vmatpush1.msra.mxu0 0.0
  %1005 = vmatprep.subr.mxu0 0.0
  %1006 = vmatpush1.msra.mxu0 0.0
  %1007 = vmatprep.subr.mxu0 0.0
  %1008 = vmatpush1.msra.mxu0 0.0
  %1009 = vmatprep.subr.mxu0 0.0
  %1010 = vmatpush1.msra.mxu0 0.0
  %1011 = vmatprep.subr.mxu0 0.0
  %1012 = vmatpush1.msra.mxu0 0.0
  %1013 = vmatprep.subr.mxu0 0.0
  %1014 = vmatpush1.msra.mxu0 0.0
  %1015 = vmatprep.subr.mxu0 0.0
  %1016 = vmatpush1.msra.mxu0 0.0
  %1017 = vmatprep.mubr.f32.mxu0 0.0
  %1018 = vmatmul.mubr.f32.gmra.mrb[0].mxu0 %v377
  %v1019 = vpop.f32.mrb[0].mxu0
  %v1020 = vadd.f32 %v635, %v1019
  %v1021 = vpop.f32.mrb[0].mxu0
  %1022 = vmatprep.mubr.f32.mxu0 0.0
  %1023 = vmatmul.mubr.f32.gmra.mrb[0].mxu0 %v380
  %v1024 = vpop.f32.mrb[0].mxu0
  %v1025 = vadd.f32 %v640, %v1024
  %v1026 = vpop.f32.mrb[0].mxu0
  %1027 = vmatprep.mubr.f32.mxu0 0.0
  %1028 = vmatmul.mubr.f32.gmra.mrb[0].mxu0 %v383
  %v1029 = vpop.f32.mrb[0].mxu0
  %v1030 = vadd.f32 %v645, %v1029
  %v1031 = vpop.f32.mrb[0].mxu0
  %1032 = vmatprep.mubr.f32.mxu0 0.0
  %1033 = vmatmul.mubr.f32.gmra.mrb[0].mxu0 %v386
  %v1034 = vpop.f32.mrb[0].mxu0
  %v1035 = vadd.f32 %v650, %v1034
  %v1036 = vpop.f32.mrb[0].mxu0
  %1037 = vmatprep.mubr.f32.mxu0 0.0
  %1038 = vmatmul.mubr.f32.gmra.mrb[0].mxu0 %v389
  %v1039 = vpop.f32.mrb[0].mxu0
  %v1040 = vadd.f32 %v655, %v1039
  %v1041 = vpop.f32.mrb[0].mxu0
  %1042 = vmatprep.mubr.f32.mxu0 0.0
  %1043 = vmatmul.mubr.f32.gmra.mrb[0].mxu0 %v392
  %v1044 = vpop.f32.mrb[0].mxu0
  %v1045 = vadd.f32 %v660, %v1044
  %v1046 = vpop.f32.mrb[0].mxu0
  %1047 = vmatprep.mubr.f32.mxu0 0.0
  %1048 = vmatmul.mubr.f32.gmra.mrb[0].mxu0 %v395
  %v1049 = vpop.f32.mrb[0].mxu0
  %v1050 = vadd.f32 %v665, %v1049
  %v1051 = vpop.f32.mrb[0].mxu0
  %1052 = vmatprep.mubr.f32.mxu0 0.0
  %1053 = vmatmul.mubr.f32.gmra.mrb[0].mxu0 %v398
  %v1054 = vpop.f32.mrb[0].mxu0
  %v1055 = vadd.f32 %v670, %v1054
  %v1056 = vpop.f32.mrb[0].mxu0
  %1057 = vmatprep.mubr.f32.mxu0 0.0
  %1058 = vmatmul.mubr.f32.gmra.mrb[0].mxu0 %v401
  %v1059 = vpop.f32.mrb[0].mxu0
  %v1060 = vadd.f32 %v675, %v1059
  %v1061 = vpop.f32.mrb[0].mxu0
  %1062 = vmatprep.mubr.f32.mxu0 0.0
  %1063 = vmatmul.mubr.f32.gmra.mrb[0].mxu0 %v404
  %v1064 = vpop.f32.mrb[0].mxu0
  %v1065 = vadd.f32 %v680, %v1064
  %v1066 = vpop.f32.mrb[0].mxu0
  %1067 = vmatprep.mubr.f32.mxu0 0.0
  %1068 = vmatmul.mubr.f32.gmra.mrb[0].mxu0 %v407
  %v1069 = vpop.f32.mrb[0].mxu0
  %v1070 = vadd.f32 %v685, %v1069
  %v1071 = vpop.f32.mrb[0].mxu0
  %1072 = vmatprep.mubr.f32.mxu0 0.0
  %1073 = vmatmul.mubr.f32.gmra.mrb[0].mxu0 %v410
  %v1074 = vpop.f32.mrb[0].mxu0
  %v1075 = vadd.f32 %v690, %v1074
  %v1076 = vpop.f32.mrb[0].mxu0
  %1077 = vmatprep.mubr.f32.mxu0 0.0
  %1078 = vmatmul.mubr.f32.gmra.mrb[0].mxu0 %v413
  %v1079 = vpop.f32.mrb[0].mxu0
  %v1080 = vadd.f32 %v695, %v1079
  %v1081 = vpop.f32.mrb[0].mxu0
  %1082 = vmatprep.mubr.f32.mxu0 0.0
  %1083 = vmatmul.mubr.f32.gmra.mrb[0].mxu0 %v416
  %v1084 = vpop.f32.mrb[0].mxu0
  %v1085 = vadd.f32 %v700, %v1084
  %v1086 = vpop.f32.mrb[0].mxu0
  %1087 = vmatprep.mubr.f32.mxu0 0.0
  %1088 = vmatmul.mubr.f32.gmra.mrb[0].mxu0 %v419
  %v1089 = vpop.f32.mrb[0].mxu0
  %v1090 = vadd.f32 %v705, %v1089
  %v1091 = vpop.f32.mrb[0].mxu0
  %1092 = vmatprep.mubr.f32.mxu0 0.0
  %1093 = vmatmul.mubr.f32.gmra.mrb[0].mxu0 %v422
  %v1094 = vpop.f32.mrb[0].mxu0
  %v1095 = vadd.f32 %v710, %v1094
  %v1096 = vpop.f32.mrb[0].mxu0
  %1097 = vmatprep.mubr.f32.mxu0 0.0
  %1098 = vmatmul.mubr.f32.gmra.mrb[0].mxu0 %v425
  %v1099 = vpop.f32.mrb[0].mxu0
  %v1100 = vadd.f32 %v715, %v1099
  %v1101 = vpop.f32.mrb[0].mxu0
  %1102 = vmatprep.mubr.f32.mxu0 0.0
  %1103 = vmatmul.mubr.f32.gmra.mrb[0].mxu0 %v428
  %v1104 = vpop.f32.mrb[0].mxu0
  %v1105 = vadd.f32 %v720, %v1104
  %v1106 = vpop.f32.mrb[0].mxu0
  %1107 = vmatprep.mubr.f32.mxu0 0.0
  %1108 = vmatmul.mubr.f32.gmra.mrb[0].mxu0 %v431
  %v1109 = vpop.f32.mrb[0].mxu0
  %v1110 = vadd.f32 %v725, %v1109
  %v1111 = vpop.f32.mrb[0].mxu0
  %1112 = vmatprep.mubr.f32.mxu0 0.0
  %1113 = vmatmul.mubr.f32.gmra.mrb[0].mxu0 %v434
  %v1114 = vpop.f32.mrb[0].mxu0
  %v1115 = vadd.f32 %v730, %v1114
  %v1116 = vpop.f32.mrb[0].mxu0
  %1117 = vmatprep.mubr.f32.mxu0 0.0
  %1118 = vmatmul.mubr.f32.gmra.mrb[0].mxu0 %v437
  %v1119 = vpop.f32.mrb[0].mxu0
  %v1120 = vadd.f32 %v735, %v1119
  %v1121 = vpop.f32.mrb[0].mxu0
  %1122 = vmatprep.mubr.f32.mxu0 0.0
  %1123 = vmatmul.mubr.f32.gmra.mrb[0].mxu0 %v440
  %v1124 = vpop.f32.mrb[0].mxu0
  %v1125 = vadd.f32 %v740, %v1124
  %v1126 = vpop.f32.mrb[0].mxu0
  %1127 = vmatprep.mubr.f32.mxu0 0.0
  %1128 = vmatmul.mubr.f32.gmra.mrb[0].mxu0 %v443
  %v1129 = vpop.f32.mrb[0].mxu0
  %v1130 = vadd.f32 %v745, %v1129
  %v1131 = vpop.f32.mrb[0].mxu0
  %1132 = vmatprep.mubr.f32.mxu0 0.0
  %1133 = vmatmul.mubr.f32.gmra.mrb[0].mxu0 %v446
  %v1134 = vpop.f32.mrb[0].mxu0
  %v1135 = vadd.f32 %v750, %v1134
  %v1136 = vpop.f32.mrb[0].mxu0
  %1137 = vmatprep.mubr.f32.mxu0 0.0
  %1138 = vmatmul.mubr.f32.gmra.mrb[0].mxu0 %v449
  %v1139 = vpop.f32.mrb[0].mxu0
  %v1140 = vadd.f32 %v755, %v1139
  %v1141 = vpop.f32.mrb[0].mxu0
  %1142 = vmatprep.mubr.f32.mxu0 0.0
  %1143 = vmatmul.mubr.f32.gmra.mrb[0].mxu0 %v452
  %v1144 = vpop.f32.mrb[0].mxu0
  %v1145 = vadd.f32 %v760, %v1144
  %v1146 = vpop.f32.mrb[0].mxu0
  %1147 = vmatprep.mubr.f32.mxu0 0.0
  %1148 = vmatmul.mubr.f32.gmra.mrb[0].mxu0 %v455
  %v1149 = vpop.f32.mrb[0].mxu0
  %v1150 = vadd.f32 %v765, %v1149
  %v1151 = vpop.f32.mrb[0].mxu0
  %1152 = vmatprep.mubr.f32.mxu0 0.0
  %1153 = vmatmul.mubr.f32.gmra.mrb[0].mxu0 %v458
  %v1154 = vpop.f32.mrb[0].mxu0
  %v1155 = vadd.f32 %v770, %v1154
  %v1156 = vpop.f32.mrb[0].mxu0
  %1157 = vmatprep.mubr.f32.mxu0 0.0
  %1158 = vmatmul.mubr.f32.gmra.mrb[0].mxu0 %v461
  %v1159 = vpop.f32.mrb[0].mxu0
  %v1160 = vadd.f32 %v775, %v1159
  %v1161 = vpop.f32.mrb[0].mxu0
  %1162 = vmatprep.mubr.f32.mxu0 0.0
  %1163 = vmatmul.mubr.f32.gmra.mrb[0].mxu0 %v464
  %v1164 = vpop.f32.mrb[0].mxu0
  %v1165 = vadd.f32 %v780, %v1164
  %v1166 = vpop.f32.mrb[0].mxu0
  %1167 = vmatprep.mubr.f32.mxu0 0.0
  %1168 = vmatmul.mubr.f32.gmra.mrb[0].mxu0 %v467
  %v1169 = vpop.f32.mrb[0].mxu0
  %v1170 = vadd.f32 %v785, %v1169
  %v1171 = vpop.f32.mrb[0].mxu0
  %1172 = vmatprep.mubr.f32.mxu0 0.0
  %1173 = vmatmul.mubr.f32.gmra.mrb[0].mxu0 %v470
  %v1174 = vpop.f32.mrb[0].mxu0
  %v1175 = vadd.f32 %v790, %v1174
  %v1176 = vpop.f32.mrb[0].mxu0
  %1177 = vmatprep.mubr.f32.mxu0 0.0
  %1178 = vmatmul.mubr.f32.gmra.mrb[0].mxu0 %v473
  %v1179 = vpop.f32.mrb[0].mxu0
  %v1180 = vadd.f32 %v795, %v1179
  %v1181 = vpop.f32.mrb[0].mxu0
  %1182 = vmatprep.mubr.f32.mxu0 0.0
  %1183 = vmatmul.mubr.f32.gmra.mrb[0].mxu0 %v476
  %v1184 = vpop.f32.mrb[0].mxu0
  %v1185 = vadd.f32 %v800, %v1184
  %v1186 = vpop.f32.mrb[0].mxu0
  %1187 = vmatprep.mubr.f32.mxu0 0.0
  %1188 = vmatmul.mubr.f32.gmra.mrb[0].mxu0 %v479
  %v1189 = vpop.f32.mrb[0].mxu0
  %v1190 = vadd.f32 %v805, %v1189
  %v1191 = vpop.f32.mrb[0].mxu0
  %1192 = vmatprep.mubr.f32.mxu0 0.0
  %1193 = vmatmul.mubr.f32.gmra.mrb[0].mxu0 %v482
  %v1194 = vpop.f32.mrb[0].mxu0
  %v1195 = vadd.f32 %v810, %v1194
  %v1196 = vpop.f32.mrb[0].mxu0
  %1197 = vmatprep.mubr.f32.mxu0 0.0
  %1198 = vmatmul.mubr.f32.gmra.mrb[0].mxu0 %v485
  %v1199 = vpop.f32.mrb[0].mxu0
  %v1200 = vadd.f32 %v815, %v1199
  %v1201 = vpop.f32.mrb[0].mxu0
  %1202 = vmatprep.mubr.f32.mxu0 0.0
  %1203 = vmatmul.mubr.f32.gmra.mrb[0].mxu0 %v488
  %v1204 = vpop.f32.mrb[0].mxu0
  %v1205 = vadd.f32 %v820, %v1204
  %v1206 = vpop.f32.mrb[0].mxu0
  %1207 = vmatprep.mubr.f32.mxu0 0.0
  %1208 = vmatmul.mubr.f32.gmra.mrb[0].mxu0 %v491
  %v1209 = vpop.f32.mrb[0].mxu0
  %v1210 = vadd.f32 %v825, %v1209
  %v1211 = vpop.f32.mrb[0].mxu0
  %1212 = vmatprep.mubr.f32.mxu0 0.0
  %1213 = vmatmul.mubr.f32.gmra.mrb[0].mxu0 %v494
  %v1214 = vpop.f32.mrb[0].mxu0
  %v1215 = vadd.f32 %v830, %v1214
  %v1216 = vpop.f32.mrb[0].mxu0
  %1217 = vmatprep.mubr.f32.mxu0 0.0
  %1218 = vmatmul.mubr.f32.gmra.mrb[0].mxu0 %v497
  %v1219 = vpop.f32.mrb[0].mxu0
  %v1220 = vadd.f32 %v835, %v1219
  %v1221 = vpop.f32.mrb[0].mxu0
  %1222 = vmatprep.mubr.f32.mxu0 0.0
  %1223 = vmatmul.mubr.f32.gmra.mrb[0].mxu0 %v500
  %v1224 = vpop.f32.mrb[0].mxu0
  %v1225 = vadd.f32 %v840, %v1224
  %v1226 = vpop.f32.mrb[0].mxu0
  %1227 = vmatprep.mubr.f32.mxu0 0.0
  %1228 = vmatmul.mubr.f32.gmra.mrb[0].mxu0 %v503
  %v1229 = vpop.f32.mrb[0].mxu0
  %v1230 = vadd.f32 %v845, %v1229
  %v1231 = vpop.f32.mrb[0].mxu0
  %1232 = vmatprep.mubr.f32.mxu0 0.0
  %1233 = vmatmul.mubr.f32.gmra.mrb[0].mxu0 %v506
  %v1234 = vpop.f32.mrb[0].mxu0
  %v1235 = vadd.f32 %v850, %v1234
  %v1236 = vpop.f32.mrb[0].mxu0
  %1237 = vmatprep.mubr.f32.mxu0 0.0
  %1238 = vmatmul.mubr.f32.gmra.mrb[0].mxu0 %v509
  %v1239 = vpop.f32.mrb[0].mxu0
  %v1240 = vadd.f32 %v855, %v1239
  %v1241 = vpop.f32.mrb[0].mxu0
  %1242 = vmatprep.mubr.f32.mxu0 0.0
  %1243 = vmatmul.mubr.f32.gmra.mrb[0].mxu0 %v512
  %v1244 = vpop.f32.mrb[0].mxu0
  %v1245 = vadd.f32 %v860, %v1244
  %v1246 = vpop.f32.mrb[0].mxu0
  %1247 = vmatprep.mubr.f32.mxu0 0.0
  %1248 = vmatmul.mubr.f32.gmra.mrb[0].mxu0 %v515
  %v1249 = vpop.f32.mrb[0].mxu0
  %v1250 = vadd.f32 %v865, %v1249
  %v1251 = vpop.f32.mrb[0].mxu0
  %1252 = vmatprep.mubr.f32.mxu0 0.0
  %1253 = vmatmul.mubr.f32.gmra.mrb[0].mxu0 %v518
  %v1254 = vpop.f32.mrb[0].mxu0
  %v1255 = vadd.f32 %v870, %v1254
  %v1256 = vpop.f32.mrb[0].mxu0
  %1257 = vmatprep.mubr.f32.mxu0 0.0
  %1258 = vmatmul.mubr.f32.gmra.mrb[0].mxu0 %v521
  %v1259 = vpop.f32.mrb[0].mxu0
  %v1260 = vadd.f32 %v875, %v1259
  %v1261 = vpop.f32.mrb[0].mxu0
  %1262 = vmatprep.mubr.f32.mxu0 0.0
  %1263 = vmatmul.mubr.f32.gmra.mrb[0].mxu0 %v524
  %v1264 = vpop.f32.mrb[0].mxu0
  %v1265 = vadd.f32 %v880, %v1264
  %v1266 = vpop.f32.mrb[0].mxu0
  %1267 = vmatprep.mubr.f32.mxu0 0.0
  %1268 = vmatmul.mubr.f32.gmra.mrb[0].mxu0 %v527
  %v1269 = vpop.f32.mrb[0].mxu0
  %v1270 = vadd.f32 %v885, %v1269
  %v1271 = vpop.f32.mrb[0].mxu0
  %1272 = vmatprep.mubr.f32.mxu0 0.0
  %1273 = vmatmul.mubr.f32.gmra.mrb[0].mxu0 %v530
  %v1274 = vpop.f32.mrb[0].mxu0
  %v1275 = vadd.f32 %v890, %v1274
  %v1276 = vpop.f32.mrb[0].mxu0
  %1277 = vmatprep.mubr.f32.mxu0 0.0
  %1278 = vmatmul.mubr.f32.gmra.mrb[0].mxu0 %v533
  %v1279 = vpop.f32.mrb[0].mxu0
  %v1280 = vadd.f32 %v895, %v1279
  %v1281 = vpop.f32.mrb[0].mxu0
  %1282 = vmatprep.mubr.f32.mxu0 0.0
  %1283 = vmatmul.mubr.f32.gmra.mrb[0].mxu0 %v536
  %v1284 = vpop.f32.mrb[0].mxu0
  %v1285 = vadd.f32 %v900, %v1284
  %v1286 = vpop.f32.mrb[0].mxu0
  %1287 = vmatprep.mubr.f32.mxu0 0.0
  %1288 = vmatmul.mubr.f32.gmra.mrb[0].mxu0 %v539
  %v1289 = vpop.f32.mrb[0].mxu0
  %v1290 = vadd.f32 %v905, %v1289
  %v1291 = vpop.f32.mrb[0].mxu0
  %1292 = vmatprep.mubr.f32.mxu0 0.0
  %1293 = vmatmul.mubr.f32.gmra.mrb[0].mxu0 %v542
  %v1294 = vpop.f32.mrb[0].mxu0
  %v1295 = vadd.f32 %v910, %v1294
  %v1296 = vpop.f32.mrb[0].mxu0
  %1297 = vmatprep.mubr.f32.mxu0 0.0
  %1298 = vmatmul.mubr.f32.gmra.mrb[0].mxu0 %v545
  %v1299 = vpop.f32.mrb[0].mxu0
  %v1300 = vadd.f32 %v915, %v1299
  %v1301 = vpop.f32.mrb[0].mxu0
  %1302 = vmatprep.mubr.f32.mxu0 0.0
  %1303 = vmatmul.mubr.f32.gmra.mrb[0].mxu0 %v548
  %v1304 = vpop.f32.mrb[0].mxu0
  %v1305 = vadd.f32 %v920, %v1304
  %v1306 = vpop.f32.mrb[0].mxu0
  %1307 = vmatprep.mubr.f32.mxu0 0.0
  %1308 = vmatmul.mubr.f32.gmra.mrb[0].mxu0 %v551
  %v1309 = vpop.f32.mrb[0].mxu0
  %v1310 = vadd.f32 %v925, %v1309
  %v1311 = vpop.f32.mrb[0].mxu0
  %1312 = vmatprep.mubr.f32.mxu0 0.0
  %1313 = vmatmul.mubr.f32.gmra.mrb[0].mxu0 %v554
  %v1314 = vpop.f32.mrb[0].mxu0
  %v1315 = vadd.f32 %v930, %v1314
  %v1316 = vpop.f32.mrb[0].mxu0
  %1317 = vmatprep.mubr.f32.mxu0 0.0
  %1318 = vmatmul.mubr.f32.gmra.mrb[0].mxu0 %v557
  %v1319 = vpop.f32.mrb[0].mxu0
  %v1320 = vadd.f32 %v935, %v1319
  %v1321 = vpop.f32.mrb[0].mxu0
  %1322 = vmatprep.mubr.f32.mxu0 0.0
  %1323 = vmatmul.mubr.f32.gmra.mrb[0].mxu0 %v560
  %v1324 = vpop.f32.mrb[0].mxu0
  %v1325 = vadd.f32 %v940, %v1324
  %v1326 = vpop.f32.mrb[0].mxu0
  %1327 = vmatprep.mubr.f32.mxu0 0.0
  %1328 = vmatmul.mubr.f32.gmra.mrb[0].mxu0 %v563
  %v1329 = vpop.f32.mrb[0].mxu0
  %v1330 = vadd.f32 %v945, %v1329
  %v1331 = vpop.f32.mrb[0].mxu0
  %1332 = vmatprep.mubr.f32.mxu0 0.0
  %1333 = vmatmul.mubr.f32.gmra.mrb[0].mxu0 %v566
  %v1334 = vpop.f32.mrb[0].mxu0
  %v1335 = vadd.f32 %v950, %v1334
  %v1336 = vpop.f32.mrb[0].mxu0
  %1337 = vdwg.mxu0
  %v1338 = vadd.f32 %v83, %v1020
  %v1339 = vadd.f32 %v84, %v1025
  %v1340 = vadd.f32 %v85, %v1030
  %v1341 = vadd.f32 %v86, %v1035
  %v1342 = vadd.f32 %v87, %v1040
  %v1343 = vadd.f32 %v88, %v1045
  %v1344 = vadd.f32 %v89, %v1050
  %v1345 = vadd.f32 %v90, %v1055
  %v1346 = vadd.f32 %v91, %v1060
  %v1347 = vadd.f32 %v92, %v1065
  %v1348 = vadd.f32 %v93, %v1070
  %v1349 = vadd.f32 %v94, %v1075
  %v1350 = vadd.f32 %v95, %v1080
  %v1351 = vadd.f32 %v96, %v1085
  %v1352 = vadd.f32 %v97, %v1090
  %v1353 = vadd.f32 %v98, %v1095
  %v1354 = vadd.f32 %v99, %v1100
  %v1355 = vadd.f32 %v100, %v1105
  %v1356 = vadd.f32 %v101, %v1110
  %v1357 = vadd.f32 %v102, %v1115
  %v1358 = vadd.f32 %v103, %v1120
  %v1359 = vadd.f32 %v104, %v1125
  %v1360 = vadd.f32 %v105, %v1130
  %v1361 = vadd.f32 %v106, %v1135
  %v1362 = vadd.f32 %v107, %v1140
  %v1363 = vadd.f32 %v108, %v1145
  %v1364 = vadd.f32 %v109, %v1150
  %v1365 = vadd.f32 %v110, %v1155
  %v1366 = vadd.f32 %v111, %v1160
  %v1367 = vadd.f32 %v112, %v1165
  %v1368 = vadd.f32 %v113, %v1170
  %v1369 = vadd.f32 %v114, %v1175
  %v1370 = vadd.f32 %v115, %v1180
  %v1371 = vadd.f32 %v116, %v1185
  %v1372 = vadd.f32 %v117, %v1190
  %v1373 = vadd.f32 %v118, %v1195
  %v1374 = vadd.f32 %v119, %v1200
  %v1375 = vadd.f32 %v120, %v1205
  %v1376 = vadd.f32 %v121, %v1210
  %v1377 = vadd.f32 %v122, %v1215
  %v1378 = vadd.f32 %v123, %v1220
  %v1379 = vadd.f32 %v124, %v1225
  %v1380 = vadd.f32 %v125, %v1230
  %v1381 = vadd.f32 %v126, %v1235
  %v1382 = vadd.f32 %v127, %v1240
  %v1383 = vadd.f32 %v128, %v1245
  %v1384 = vadd.f32 %v129, %v1250
  %v1385 = vadd.f32 %v130, %v1255
  %v1386 = vadd.f32 %v131, %v1260
  %v1387 = vadd.f32 %v132, %v1265
  %v1388 = vadd.f32 %v133, %v1270
  %v1389 = vadd.f32 %v134, %v1275
  %v1390 = vadd.f32 %v135, %v1280
  %v1391 = vadd.f32 %v136, %v1285
  %v1392 = vadd.f32 %v137, %v1290
  %v1393 = vadd.f32 %v138, %v1295
  %v1394 = vadd.f32 %v139, %v1300
  %v1395 = vadd.f32 %v140, %v1305
  %v1396 = vadd.f32 %v141, %v1310
  %v1397 = vadd.f32 %v142, %v1315
  %v1398 = vadd.f32 %v143, %v1320
  %v1399 = vadd.f32 %v144, %v1325
  %v1400 = vadd.f32 %v145, %v1330
  %v1401 = vadd.f32 %v146, %v1335
  %vm1402 = vcmask 523264
  %1403 = vst.msk [vmem:[#allocation2] sm:$0xff] %vm1402, %v1338
  %1404 = vst.msk [vmem:[#allocation2 + $0x8] sm:$0xff] %vm1402, %v1339
  %1405 = vst.msk [vmem:[#allocation2 + $0x10] sm:$0xff] %vm1402, %v1340
  %1406 = vst.msk [vmem:[#allocation2 + $0x18] sm:$0xff] %vm1402, %v1341
  %1407 = vst.msk [vmem:[#allocation2 + $0x20] sm:$0xff] %vm1402, %v1342
  %1408 = vst.msk [vmem:[#allocation2 + $0x28] sm:$0xff] %vm1402, %v1343
  %1409 = vst.msk [vmem:[#allocation2 + $0x30] sm:$0xff] %vm1402, %v1344
  %1410 = vst.msk [vmem:[#allocation2 + $0x38] sm:$0xff] %vm1402, %v1345
  %1411 = vst.msk [vmem:[#allocation2 + $0x40] sm:$0xff] %vm1402, %v1346
  %1412 = vst.msk [vmem:[#allocation2 + $0x48] sm:$0xff] %vm1402, %v1347
  %1413 = vst.msk [vmem:[#allocation2 + $0x50] sm:$0xff] %vm1402, %v1348
  %1414 = vst.msk [vmem:[#allocation2 + $0x58] sm:$0xff] %vm1402, %v1349
  %1415 = vst.msk [vmem:[#allocation2 + $0x60] sm:$0xff] %vm1402, %v1350
  %1416 = vst.msk [vmem:[#allocation2 + $0x68] sm:$0xff] %vm1402, %v1351
  %1417 = vst.msk [vmem:[#allocation2 + $0x70] sm:$0xff] %vm1402, %v1352
  %1418 = vst.msk [vmem:[#allocation2 + $0x78] sm:$0xff] %vm1402, %v1353
  %1419 = vst.msk [vmem:[#allocation2 + $0x80] sm:$0xff] %vm1402, %v1354
  %1420 = vst.msk [vmem:[#allocation2 + $0x88] sm:$0xff] %vm1402, %v1355
  %1421 = vst.msk [vmem:[#allocation2 + $0x90] sm:$0xff] %vm1402, %v1356
  %1422 = vst.msk [vmem:[#allocation2 + $0x98] sm:$0xff] %vm1402, %v1357
  %1423 = vst.msk [vmem:[#allocation2 + $0xa0] sm:$0xff] %vm1402, %v1358
  %1424 = vst.msk [vmem:[#allocation2 + $0xa8] sm:$0xff] %vm1402, %v1359
  %1425 = vst.msk [vmem:[#allocation2 + $0xb0] sm:$0xff] %vm1402, %v1360
  %1426 = vst.msk [vmem:[#allocation2 + $0xb8] sm:$0xff] %vm1402, %v1361
  %1427 = vst.msk [vmem:[#allocation2 + $0xc0] sm:$0xff] %vm1402, %v1362
  %1428 = vst.msk [vmem:[#allocation2 + $0xc8] sm:$0xff] %vm1402, %v1363
  %1429 = vst.msk [vmem:[#allocation2 + $0xd0] sm:$0xff] %vm1402, %v1364
  %1430 = vst.msk [vmem:[#allocation2 + $0xd8] sm:$0xff] %vm1402, %v1365
  %1431 = vst.msk [vmem:[#allocation2 + $0xe0] sm:$0xff] %vm1402, %v1366
  %1432 = vst.msk [vmem:[#allocation2 + $0xe8] sm:$0xff] %vm1402, %v1367
  %1433 = vst.msk [vmem:[#allocation2 + $0xf0] sm:$0xff] %vm1402, %v1368
  %1434 = vst.msk [vmem:[#allocation2 + $0xf8] sm:$0xff] %vm1402, %v1369
  %1435 = vst.msk [vmem:[#allocation2 + $0x100] sm:$0xff] %vm1402, %v1370
  %1436 = vst.msk [vmem:[#allocation2 + $0x108] sm:$0xff] %vm1402, %v1371
  %1437 = vst.msk [vmem:[#allocation2 + $0x110] sm:$0xff] %vm1402, %v1372
  %1438 = vst.msk [vmem:[#allocation2 + $0x118] sm:$0xff] %vm1402, %v1373
  %1439 = vst.msk [vmem:[#allocation2 + $0x120] sm:$0xff] %vm1402, %v1374
  %1440 = vst.msk [vmem:[#allocation2 + $0x128] sm:$0xff] %vm1402, %v1375
  %1441 = vst.msk [vmem:[#allocation2 + $0x130] sm:$0xff] %vm1402, %v1376
  %1442 = vst.msk [vmem:[#allocation2 + $0x138] sm:$0xff] %vm1402, %v1377
  %1443 = vst.msk [vmem:[#allocation2 + $0x140] sm:$0xff] %vm1402, %v1378
  %1444 = vst.msk [vmem:[#allocation2 + $0x148] sm:$0xff] %vm1402, %v1379
  %1445 = vst.msk [vmem:[#allocation2 + $0x150] sm:$0xff] %vm1402, %v1380
  %1446 = vst.msk [vmem:[#allocation2 + $0x158] sm:$0xff] %vm1402, %v1381
  %1447 = vst.msk [vmem:[#allocation2 + $0x160] sm:$0xff] %vm1402, %v1382
  %1448 = vst.msk [vmem:[#allocation2 + $0x168] sm:$0xff] %vm1402, %v1383
  %1449 = vst.msk [vmem:[#allocation2 + $0x170] sm:$0xff] %vm1402, %v1384
  %1450 = vst.msk [vmem:[#allocation2 + $0x178] sm:$0xff] %vm1402, %v1385
  %1451 = vst.msk [vmem:[#allocation2 + $0x180] sm:$0xff] %vm1402, %v1386
  %1452 = vst.msk [vmem:[#allocation2 + $0x188] sm:$0xff] %vm1402, %v1387
  %1453 = vst.msk [vmem:[#allocation2 + $0x190] sm:$0xff] %vm1402, %v1388
  %1454 = vst.msk [vmem:[#allocation2 + $0x198] sm:$0xff] %vm1402, %v1389
  %1455 = vst.msk [vmem:[#allocation2 + $0x1a0] sm:$0xff] %vm1402, %v1390
  %1456 = vst.msk [vmem:[#allocation2 + $0x1a8] sm:$0xff] %vm1402, %v1391
  %1457 = vst.msk [vmem:[#allocation2 + $0x1b0] sm:$0xff] %vm1402, %v1392
  %1458 = vst.msk [vmem:[#allocation2 + $0x1b8] sm:$0xff] %vm1402, %v1393
  %1459 = vst.msk [vmem:[#allocation2 + $0x1c0] sm:$0xff] %vm1402, %v1394
  %1460 = vst.msk [vmem:[#allocation2 + $0x1c8] sm:$0xff] %vm1402, %v1395
  %1461 = vst.msk [vmem:[#allocation2 + $0x1d0] sm:$0xff] %vm1402, %v1396
  %1462 = vst.msk [vmem:[#allocation2 + $0x1d8] sm:$0xff] %vm1402, %v1397
  %1463 = vst.msk [vmem:[#allocation2 + $0x1e0] sm:$0xff] %vm1402, %v1398
  %1464 = vst.msk [vmem:[#allocation2 + $0x1e8] sm:$0xff] %vm1402, %v1399
  %1465 = vst.msk [vmem:[#allocation2 + $0x1f0] sm:$0xff] %vm1402, %v1400
  %1466 = vst.msk [vmem:[#allocation2 + $0x1f8] sm:$0xff] %vm1402, %v1401
  // Predicated region
  $region18: #{lenet_forward.7} parent=0 // pred_check
    %p1467 = pneg %p14
  $region19: #{lenet_forward.7} parent=0 // pred_check_branch
    %1469 = sbr.rel (%p1467) target = $region21
  $region20: #{lenet_forward.7} parent=0 // pred_region
    %v1470 = vld [vmem:[#allocation2] sm:$0xff]
    %v1471 = vld [vmem:[#allocation2 + $0x8] sm:$0xff]
    %v1472 = vld [vmem:[#allocation2 + $0x10] sm:$0xff]
    %v1473 = vld [vmem:[#allocation2 + $0x18] sm:$0xff]
    %v1474 = vld [vmem:[#allocation2 + $0x20] sm:$0xff]
    %v1475 = vld [vmem:[#allocation2 + $0x28] sm:$0xff]
    %v1476 = vld [vmem:[#allocation2 + $0x30] sm:$0xff]
    %v1477 = vld [vmem:[#allocation2 + $0x38] sm:$0xff]
    %v1478 = vld [vmem:[#allocation2 + $0x40] sm:$0xff]
    %v1479 = vld [vmem:[#allocation2 + $0x48] sm:$0xff]
    %v1480 = vld [vmem:[#allocation2 + $0x50] sm:$0xff]
    %v1481 = vld [vmem:[#allocation2 + $0x58] sm:$0xff]
    %v1482 = vld [vmem:[#allocation2 + $0x60] sm:$0xff]
    %v1483 = vld [vmem:[#allocation2 + $0x68] sm:$0xff]
    %v1484 = vld [vmem:[#allocation2 + $0x70] sm:$0xff]
    %v1485 = vld [vmem:[#allocation2 + $0x78] sm:$0xff]
    %v1486 = vld [vmem:[#allocation2 + $0x80] sm:$0xff]
    %v1487 = vld [vmem:[#allocation2 + $0x88] sm:$0xff]
    %v1488 = vld [vmem:[#allocation2 + $0x90] sm:$0xff]
    %v1489 = vld [vmem:[#allocation2 + $0x98] sm:$0xff]
    %v1490 = vld [vmem:[#allocation2 + $0xa0] sm:$0xff]
    %v1491 = vld [vmem:[#allocation2 + $0xa8] sm:$0xff]
    %v1492 = vld [vmem:[#allocation2 + $0xb0] sm:$0xff]
    %v1493 = vld [vmem:[#allocation2 + $0xb8] sm:$0xff]
    %v1494 = vld [vmem:[#allocation2 + $0xc0] sm:$0xff]
    %v1495 = vld [vmem:[#allocation2 + $0xc8] sm:$0xff]
    %v1496 = vld [vmem:[#allocation2 + $0xd0] sm:$0xff]
    %v1497 = vld [vmem:[#allocation2 + $0xd8] sm:$0xff]
    %v1498 = vld [vmem:[#allocation2 + $0xe0] sm:$0xff]
    %v1499 = vld [vmem:[#allocation2 + $0xe8] sm:$0xff]
    %v1500 = vld [vmem:[#allocation2 + $0xf0] sm:$0xff]
    %v1501 = vld [vmem:[#allocation2 + $0xf8] sm:$0xff]
    %v1502 = vld [vmem:[#allocation2 + $0x100] sm:$0xff]
    %v1503 = vld [vmem:[#allocation2 + $0x108] sm:$0xff]
    %v1504 = vld [vmem:[#allocation2 + $0x110] sm:$0xff]
    %v1505 = vld [vmem:[#allocation2 + $0x118] sm:$0xff]
    %v1506 = vld [vmem:[#allocation2 + $0x120] sm:$0xff]
    %v1507 = vld [vmem:[#allocation2 + $0x128] sm:$0xff]
    %v1508 = vld [vmem:[#allocation2 + $0x130] sm:$0xff]
    %v1509 = vld [vmem:[#allocation2 + $0x138] sm:$0xff]
    %v1510 = vld [vmem:[#allocation2 + $0x140] sm:$0xff]
    %v1511 = vld [vmem:[#allocation2 + $0x148] sm:$0xff]
    %v1512 = vld [vmem:[#allocation2 + $0x150] sm:$0xff]
    %v1513 = vld [vmem:[#allocation2 + $0x158] sm:$0xff]
    %v1514 = vld [vmem:[#allocation2 + $0x160] sm:$0xff]
    %v1515 = vld [vmem:[#allocation2 + $0x168] sm:$0xff]
    %v1516 = vld [vmem:[#allocation2 + $0x170] sm:$0xff]
    %v1517 = vld [vmem:[#allocation2 + $0x178] sm:$0xff]
    %v1518 = vld [vmem:[#allocation2 + $0x180] sm:$0xff]
    %v1519 = vld [vmem:[#allocation2 + $0x188] sm:$0xff]
    %v1520 = vld [vmem:[#allocation2 + $0x190] sm:$0xff]
    %v1521 = vld [vmem:[#allocation2 + $0x198] sm:$0xff]
    %v1522 = vld [vmem:[#allocation2 + $0x1a0] sm:$0xff]
    %v1523 = vld [vmem:[#allocation2 + $0x1a8] sm:$0xff]
    %v1524 = vld [vmem:[#allocation2 + $0x1b0] sm:$0xff]
    %v1525 = vld [vmem:[#allocation2 + $0x1b8] sm:$0xff]
    %v1526 = vld [vmem:[#allocation2 + $0x1c0] sm:$0xff]
    %v1527 = vld [vmem:[#allocation2 + $0x1c8] sm:$0xff]
    %v1528 = vld [vmem:[#allocation2 + $0x1d0] sm:$0xff]
    %v1529 = vld [vmem:[#allocation2 + $0x1d8] sm:$0xff]
    %v1530 = vld [vmem:[#allocation2 + $0x1e0] sm:$0xff]
    %v1531 = vld [vmem:[#allocation2 + $0x1e8] sm:$0xff]
    %v1532 = vld [vmem:[#allocation2 + $0x1f0] sm:$0xff]
    %v1533 = vld [vmem:[#allocation2 + $0x1f8] sm:$0xff]
    %v1534 = vld [vmem:[%s2] sm:$0x1]
    %v1536 = vlaneseq
    %v1537 = vshrl.u32 %v1536, 7
    %v1538 = vsub.s32 0, %v1537
    %v1539 = vrot.slane %v1534, %v1538
    %v1541 = vadd.f32 %v1470, %v1539
    %v1542 = vadd.f32 %v1471, %v1539
    %v1543 = vadd.f32 %v1472, %v1539
    %v1544 = vadd.f32 %v1473, %v1539
    %v1545 = vadd.f32 %v1474, %v1539
    %v1546 = vadd.f32 %v1475, %v1539
    %v1547 = vadd.f32 %v1476, %v1539
    %v1548 = vadd.f32 %v1477, %v1539
    %v1549 = vadd.f32 %v1478, %v1539
    %v1550 = vadd.f32 %v1479, %v1539
    %v1551 = vadd.f32 %v1480, %v1539
    %v1552 = vadd.f32 %v1481, %v1539
    %v1553 = vadd.f32 %v1482, %v1539
    %v1554 = vadd.f32 %v1483, %v1539
    %v1555 = vadd.f32 %v1484, %v1539
    %v1556 = vadd.f32 %v1485, %v1539
    %v1557 = vadd.f32 %v1486, %v1539
    %v1558 = vadd.f32 %v1487, %v1539
    %v1559 = vadd.f32 %v1488, %v1539
    %v1560 = vadd.f32 %v1489, %v1539
    %v1561 = vadd.f32 %v1490, %v1539
    %v1562 = vadd.f32 %v1491, %v1539
    %v1563 = vadd.f32 %v1492, %v1539
    %v1564 = vadd.f32 %v1493, %v1539
    %v1565 = vadd.f32 %v1494, %v1539
    %v1566 = vadd.f32 %v1495, %v1539
    %v1567 = vadd.f32 %v1496, %v1539
    %v1568 = vadd.f32 %v1497, %v1539
    %v1569 = vadd.f32 %v1498, %v1539
    %v1570 = vadd.f32 %v1499, %v1539
    %v1571 = vadd.f32 %v1500, %v1539
    %v1572 = vadd.f32 %v1501, %v1539
    %v1573 = vadd.f32 %v1502, %v1539
    %v1574 = vadd.f32 %v1503, %v1539
    %v1575 = vadd.f32 %v1504, %v1539
    %v1576 = vadd.f32 %v1505, %v1539
    %v1577 = vadd.f32 %v1506, %v1539
    %v1578 = vadd.f32 %v1507, %v1539
    %v1579 = vadd.f32 %v1508, %v1539
    %v1580 = vadd.f32 %v1509, %v1539
    %v1581 = vadd.f32 %v1510, %v1539
    %v1582 = vadd.f32 %v1511, %v1539
    %v1583 = vadd.f32 %v1512, %v1539
    %v1584 = vadd.f32 %v1513, %v1539
    %v1585 = vadd.f32 %v1514, %v1539
    %v1586 = vadd.f32 %v1515, %v1539
    %v1587 = vadd.f32 %v1516, %v1539
    %v1588 = vadd.f32 %v1517, %v1539
    %v1589 = vadd.f32 %v1518, %v1539
    %v1590 = vadd.f32 %v1519, %v1539
    %v1591 = vadd.f32 %v1520, %v1539
    %v1592 = vadd.f32 %v1521, %v1539
    %v1593 = vadd.f32 %v1522, %v1539
    %v1594 = vadd.f32 %v1523, %v1539
    %v1595 = vadd.f32 %v1524, %v1539
    %v1596 = vadd.f32 %v1525, %v1539
    %v1597 = vadd.f32 %v1526, %v1539
    %v1598 = vadd.f32 %v1527, %v1539
    %v1599 = vadd.f32 %v1528, %v1539
    %v1600 = vadd.f32 %v1529, %v1539
    %v1601 = vadd.f32 %v1530, %v1539
    %v1602 = vadd.f32 %v1531, %v1539
    %v1603 = vadd.f32 %v1532, %v1539
    %v1604 = vadd.f32 %v1533, %v1539
    %v1605 = vmax.f32 %v1541, 0.0
    %v1606 = vmax.f32 %v1542, 0.0
    %v1607 = vmax.f32 %v1543, 0.0
    %v1608 = vmax.f32 %v1544, 0.0
    %v1609 = vmax.f32 %v1545, 0.0
    %v1610 = vmax.f32 %v1546, 0.0
    %v1611 = vmax.f32 %v1547, 0.0
    %v1612 = vmax.f32 %v1548, 0.0
    %v1613 = vmax.f32 %v1549, 0.0
    %v1614 = vmax.f32 %v1550, 0.0
    %v1615 = vmax.f32 %v1551, 0.0
    %v1616 = vmax.f32 %v1552, 0.0
    %v1617 = vmax.f32 %v1553, 0.0
    %v1618 = vmax.f32 %v1554, 0.0
    %v1619 = vmax.f32 %v1555, 0.0
    %v1620 = vmax.f32 %v1556, 0.0
    %v1621 = vmax.f32 %v1557, 0.0
    %v1622 = vmax.f32 %v1558, 0.0
    %v1623 = vmax.f32 %v1559, 0.0
    %v1624 = vmax.f32 %v1560, 0.0
    %v1625 = vmax.f32 %v1561, 0.0
    %v1626 = vmax.f32 %v1562, 0.0
    %v1627 = vmax.f32 %v1563, 0.0
    %v1628 = vmax.f32 %v1564, 0.0
    %v1629 = vmax.f32 %v1565, 0.0
    %v1630 = vmax.f32 %v1566, 0.0
    %v1631 = vmax.f32 %v1567, 0.0
    %v1632 = vmax.f32 %v1568, 0.0
    %v1633 = vmax.f32 %v1569, 0.0
    %v1634 = vmax.f32 %v1570, 0.0
    %v1635 = vmax.f32 %v1571, 0.0
    %v1636 = vmax.f32 %v1572, 0.0
    %v1637 = vmax.f32 %v1573, 0.0
    %v1638 = vmax.f32 %v1574, 0.0
    %v1639 = vmax.f32 %v1575, 0.0
    %v1640 = vmax.f32 %v1576, 0.0
    %v1641 = vmax.f32 %v1577, 0.0
    %v1642 = vmax.f32 %v1578, 0.0
    %v1643 = vmax.f32 %v1579, 0.0
    %v1644 = vmax.f32 %v1580, 0.0
    %v1645 = vmax.f32 %v1581, 0.0
    %v1646 = vmax.f32 %v1582, 0.0
    %v1647 = vmax.f32 %v1583, 0.0
    %v1648 = vmax.f32 %v1584, 0.0
    %v1649 = vmax.f32 %v1585, 0.0
    %v1650 = vmax.f32 %v1586, 0.0
    %v1651 = vmax.f32 %v1587, 0.0
    %v1652 = vmax.f32 %v1588, 0.0
    %v1653 = vmax.f32 %v1589, 0.0
    %v1654 = vmax.f32 %v1590, 0.0
    %v1655 = vmax.f32 %v1591, 0.0
    %v1656 = vmax.f32 %v1592, 0.0
    %v1657 = vmax.f32 %v1593, 0.0
    %v1658 = vmax.f32 %v1594, 0.0
    %v1659 = vmax.f32 %v1595, 0.0
    %v1660 = vmax.f32 %v1596, 0.0
    %v1661 = vmax.f32 %v1597, 0.0
    %v1662 = vmax.f32 %v1598, 0.0
    %v1663 = vmax.f32 %v1599, 0.0
    %v1664 = vmax.f32 %v1600, 0.0
    %v1665 = vmax.f32 %v1601, 0.0
    %v1666 = vmax.f32 %v1602, 0.0
    %v1667 = vmax.f32 %v1603, 0.0
    %v1668 = vmax.f32 %v1604, 0.0
    %1669 = vst.msk [vmem:[%s3] sm:$0xff] %vm1402, %v1605
    %1670 = vst.msk [vmem:[%s3 + $0x8] sm:$0xff] %vm1402, %v1606
    %1671 = vst.msk [vmem:[%s3 + $0x10] sm:$0xff] %vm1402, %v1607
    %1672 = vst.msk [vmem:[%s3 + $0x18] sm:$0xff] %vm1402, %v1608
    %1673 = vst.msk [vmem:[%s3 + $0x20] sm:$0xff] %vm1402, %v1609
    %1674 = vst.msk [vmem:[%s3 + $0x28] sm:$0xff] %vm1402, %v1610
    %1675 = vst.msk [vmem:[%s3 + $0x30] sm:$0xff] %vm1402, %v1611
    %1676 = vst.msk [vmem:[%s3 + $0x38] sm:$0xff] %vm1402, %v1612
    %1677 = vst.msk [vmem:[%s3 + $0x40] sm:$0xff] %vm1402, %v1613
    %1678 = vst.msk [vmem:[%s3 + $0x48] sm:$0xff] %vm1402, %v1614
    %1679 = vst.msk [vmem:[%s3 + $0x50] sm:$0xff] %vm1402, %v1615
    %1680 = vst.msk [vmem:[%s3 + $0x58] sm:$0xff] %vm1402, %v1616
    %1681 = vst.msk [vmem:[%s3 + $0x60] sm:$0xff] %vm1402, %v1617
    %1682 = vst.msk [vmem:[%s3 + $0x68] sm:$0xff] %vm1402, %v1618
    %1683 = vst.msk [vmem:[%s3 + $0x70] sm:$0xff] %vm1402, %v1619
    %1684 = vst.msk [vmem:[%s3 + $0x78] sm:$0xff] %vm1402, %v1620
    %1685 = vst.msk [vmem:[%s3 + $0x80] sm:$0xff] %vm1402, %v1621
    %1686 = vst.msk [vmem:[%s3 + $0x88] sm:$0xff] %vm1402, %v1622
    %1687 = vst.msk [vmem:[%s3 + $0x90] sm:$0xff] %vm1402, %v1623
    %1688 = vst.msk [vmem:[%s3 + $0x98] sm:$0xff] %vm1402, %v1624
    %1689 = vst.msk [vmem:[%s3 + $0xa0] sm:$0xff] %vm1402, %v1625
    %1690 = vst.msk [vmem:[%s3 + $0xa8] sm:$0xff] %vm1402, %v1626
    %1691 = vst.msk [vmem:[%s3 + $0xb0] sm:$0xff] %vm1402, %v1627
    %1692 = vst.msk [vmem:[%s3 + $0xb8] sm:$0xff] %vm1402, %v1628
    %1693 = vst.msk [vmem:[%s3 + $0xc0] sm:$0xff] %vm1402, %v1629
    %1694 = vst.msk [vmem:[%s3 + $0xc8] sm:$0xff] %vm1402, %v1630
    %1695 = vst.msk [vmem:[%s3 + $0xd0] sm:$0xff] %vm1402, %v1631
    %1696 = vst.msk [vmem:[%s3 + $0xd8] sm:$0xff] %vm1402, %v1632
    %1697 = vst.msk [vmem:[%s3 + $0xe0] sm:$0xff] %vm1402, %v1633
    %1698 = vst.msk [vmem:[%s3 + $0xe8] sm:$0xff] %vm1402, %v1634
    %1699 = vst.msk [vmem:[%s3 + $0xf0] sm:$0xff] %vm1402, %v1635
    %1700 = vst.msk [vmem:[%s3 + $0xf8] sm:$0xff] %vm1402, %v1636
    %1701 = vst.msk [vmem:[%s3 + $0x100] sm:$0xff] %vm1402, %v1637
    %1702 = vst.msk [vmem:[%s3 + $0x108] sm:$0xff] %vm1402, %v1638
    %1703 = vst.msk [vmem:[%s3 + $0x110] sm:$0xff] %vm1402, %v1639
    %1704 = vst.msk [vmem:[%s3 + $0x118] sm:$0xff] %vm1402, %v1640
    %1705 = vst.msk [vmem:[%s3 + $0x120] sm:$0xff] %vm1402, %v1641
    %1706 = vst.msk [vmem:[%s3 + $0x128] sm:$0xff] %vm1402, %v1642
    %1707 = vst.msk [vmem:[%s3 + $0x130] sm:$0xff] %vm1402, %v1643
    %1708 = vst.msk [vmem:[%s3 + $0x138] sm:$0xff] %vm1402, %v1644
    %1709 = vst.msk [vmem:[%s3 + $0x140] sm:$0xff] %vm1402, %v1645
    %1710 = vst.msk [vmem:[%s3 + $0x148] sm:$0xff] %vm1402, %v1646
    %1711 = vst.msk [vmem:[%s3 + $0x150] sm:$0xff] %vm1402, %v1647
    %1712 = vst.msk [vmem:[%s3 + $0x158] sm:$0xff] %vm1402, %v1648
    %1713 = vst.msk [vmem:[%s3 + $0x160] sm:$0xff] %vm1402, %v1649
    %1714 = vst.msk [vmem:[%s3 + $0x168] sm:$0xff] %vm1402, %v1650
    %1715 = vst.msk [vmem:[%s3 + $0x170] sm:$0xff] %vm1402, %v1651
    %1716 = vst.msk [vmem:[%s3 + $0x178] sm:$0xff] %vm1402, %v1652
    %1717 = vst.msk [vmem:[%s3 + $0x180] sm:$0xff] %vm1402, %v1653
    %1718 = vst.msk [vmem:[%s3 + $0x188] sm:$0xff] %vm1402, %v1654
    %1719 = vst.msk [vmem:[%s3 + $0x190] sm:$0xff] %vm1402, %v1655
    %1720 = vst.msk [vmem:[%s3 + $0x198] sm:$0xff] %vm1402, %v1656
    %1721 = vst.msk [vmem:[%s3 + $0x1a0] sm:$0xff] %vm1402, %v1657
    %1722 = vst.msk [vmem:[%s3 + $0x1a8] sm:$0xff] %vm1402, %v1658
    %1723 = vst.msk [vmem:[%s3 + $0x1b0] sm:$0xff] %vm1402, %v1659
    %1724 = vst.msk [vmem:[%s3 + $0x1b8] sm:$0xff] %vm1402, %v1660
    %1725 = vst.msk [vmem:[%s3 + $0x1c0] sm:$0xff] %vm1402, %v1661
    %1726 = vst.msk [vmem:[%s3 + $0x1c8] sm:$0xff] %vm1402, %v1662
    %1727 = vst.msk [vmem:[%s3 + $0x1d0] sm:$0xff] %vm1402, %v1663
    %1728 = vst.msk [vmem:[%s3 + $0x1d8] sm:$0xff] %vm1402, %v1664
    %1729 = vst.msk [vmem:[%s3 + $0x1e0] sm:$0xff] %vm1402, %v1665
    %1730 = vst.msk [vmem:[%s3 + $0x1e8] sm:$0xff] %vm1402, %v1666
    %1731 = vst.msk [vmem:[%s3 + $0x1f0] sm:$0xff] %vm1402, %v1667
    %1732 = vst.msk [vmem:[%s3 + $0x1f8] sm:$0xff] %vm1402, %v1668
  $region21: #{lenet_forward.7} parent=0 // pred_fallthru
    _
  // Predicated region
  $region22: #{lenet_forward.7} parent=0 // pred_check
    _
  $region23: #{lenet_forward.7} parent=0 // pred_check_branch
    %1734 = sbr.rel (0) target = $region25
  $region24: #{lenet_forward.7} parent=0 // pred_region
    _
  $region25: #{lenet_forward.7} parent=0 // pred_fallthru
    _
  // Predicated region
  $region26: #{lenet_forward.7} parent=0 // pred_check
    _
  $region27: #{lenet_forward.7} parent=0 // pred_check_branch
    %1736 = sbr.rel (0) target = $region29
  $region28: #{lenet_forward.7} parent=0 // pred_region
    _
  $region29: #{lenet_forward.7} parent=0 // pred_fallthru
    _

// kernel: lenet_forward.8
$region0: #{lenet_forward.8}
  #allocation0 [shape = 'u32[]', space=smem, size = 0x4, offset = 0x4, fixed_abs, tag = 'smem constant byte address 0x4 - core index']
  #allocation1 [shape = 'u32[144,128]{1,0:T(1,128)}', space=vmem, size = 0x12000, scoped, tag = 'internal scratch']
  %s0 = inlined_call_operand.vmem [shape: f32[4,64,128], index: 0, kind: input, shape index: {}]
  %s1 = inlined_call_operand.vmem [shape: f32[64,128], index: 1, kind: output, shape index: {}]
  %s2 = sld [smem:[#allocation0]]
  $region14: #{lenet_forward.8} parent=0
    _
  %s4 = ssub.s32 1, %s2
  %s5 = scalar_select 0, %s4, %s2
  // Predicated region
  $region2: #{lenet_forward.8} parent=0 // pred_check
    _
  $region3: #{lenet_forward.8} parent=0 // pred_check_branch
    %7 = sbr.rel (0) target = $region5
  $region4: #{lenet_forward.8} parent=0 // pred_region
    _
  $region5: #{lenet_forward.8} parent=0 // pred_fallthru
    _
  %v8 = vld [vmem:[%s0] sm:$0xff]
  %v9 = vld [vmem:[%s0 + $0x8] sm:$0xff]
  %v10 = vld [vmem:[%s0 + $0x10] sm:$0xff]
  %v11 = vld [vmem:[%s0 + $0x18] sm:$0xff]
  %v12 = vld [vmem:[%s0 + $0x20] sm:$0xff]
  %v13 = vld [vmem:[%s0 + $0x28] sm:$0xff]
  %v14 = vld [vmem:[%s0 + $0x30] sm:$0xff]
  %v15 = vld [vmem:[%s0 + $0x38] sm:$0xff]
  %s16 = scalar_lea.vmem %s0, 64
  %v17 = vld [vmem:[%s16] sm:$0xff]
  %v18 = vld [vmem:[%s16 + $0x8] sm:$0xff]
  %v19 = vld [vmem:[%s16 + $0x10] sm:$0xff]
  %v20 = vld [vmem:[%s16 + $0x18] sm:$0xff]
  %v21 = vld [vmem:[%s16 + $0x20] sm:$0xff]
  %v22 = vld [vmem:[%s16 + $0x28] sm:$0xff]
  %v23 = vld [vmem:[%s16 + $0x30] sm:$0xff]
  %v24 = vld [vmem:[%s16 + $0x38] sm:$0xff]
  %v25 = vmax.f32 %v8, %v17
  %v26 = vmax.f32 %v9, %v18
  %v27 = vmax.f32 %v10, %v19
  %v28 = vmax.f32 %v11, %v20
  %v29 = vmax.f32 %v12, %v21
  %v30 = vmax.f32 %v13, %v22
  %v31 = vmax.f32 %v14, %v23
  %v32 = vmax.f32 %v15, %v24
  %s33 = scalar_lea.vmem %s0, 128
  %v34 = vld [vmem:[%s33] sm:$0xff]
  %v35 = vld [vmem:[%s33 + $0x8] sm:$0xff]
  %v36 = vld [vmem:[%s33 + $0x10] sm:$0xff]
  %v37 = vld [vmem:[%s33 + $0x18] sm:$0xff]
  %v38 = vld [vmem:[%s33 + $0x20] sm:$0xff]
  %v39 = vld [vmem:[%s33 + $0x28] sm:$0xff]
  %v40 = vld [vmem:[%s33 + $0x30] sm:$0xff]
  %v41 = vld [vmem:[%s33 + $0x38] sm:$0xff]
  %s42 = scalar_lea.vmem %s0, 192
  %v43 = vld [vmem:[%s42] sm:$0xff]
  %v44 = vld [vmem:[%s42 + $0x8] sm:$0xff]
  %v45 = vld [vmem:[%s42 + $0x10] sm:$0xff]
  %v46 = vld [vmem:[%s42 + $0x18] sm:$0xff]
  %v47 = vld [vmem:[%s42 + $0x20] sm:$0xff]
  %v48 = vld [vmem:[%s42 + $0x28] sm:$0xff]
  %v49 = vld [vmem:[%s42 + $0x30] sm:$0xff]
  %v50 = vld [vmem:[%s42 + $0x38] sm:$0xff]
  %v51 = vmax.f32 %v34, %v43
  %v52 = vmax.f32 %v35, %v44
  %v53 = vmax.f32 %v36, %v45
  %v54 = vmax.f32 %v37, %v46
  %v55 = vmax.f32 %v38, %v47
  %v56 = vmax.f32 %v39, %v48
  %v57 = vmax.f32 %v40, %v49
  %v58 = vmax.f32 %v41, %v50
  %v59 = vmax.f32 %v25, %v51
  %v60 = vmax.f32 %v26, %v52
  %v61 = vmax.f32 %v27, %v53
  %v62 = vmax.f32 %v28, %v54
  %v63 = vmax.f32 %v29, %v55
  %v64 = vmax.f32 %v30, %v56
  %v65 = vmax.f32 %v31, %v57
  %v66 = vmax.f32 %v32, %v58
  %67 = vst [vmem:[%s1] sm:$0xff] %v59
  %68 = vst [vmem:[%s1 + $0x8] sm:$0xff] %v60
  %69 = vst [vmem:[%s1 + $0x10] sm:$0xff] %v61
  %70 = vst [vmem:[%s1 + $0x18] sm:$0xff] %v62
  %71 = vst [vmem:[%s1 + $0x20] sm:$0xff] %v63
  %72 = vst [vmem:[%s1 + $0x28] sm:$0xff] %v64
  %73 = vst [vmem:[%s1 + $0x30] sm:$0xff] %v65
  %74 = vst [vmem:[%s1 + $0x38] sm:$0xff] %v66
  // Predicated region
  $region6: #{lenet_forward.8} parent=0 // pred_check
    _
  $region7: #{lenet_forward.8} parent=0 // pred_check_branch
    %76 = sbr.rel (0) target = $region9
  $region8: #{lenet_forward.8} parent=0 // pred_region
    _
  $region9: #{lenet_forward.8} parent=0 // pred_fallthru
    _
  // Predicated region
  $region10: #{lenet_forward.8} parent=0 // pred_check
    _
  $region11: #{lenet_forward.8} parent=0 // pred_check_branch
    %78 = sbr.rel (0) target = $region13
  $region12: #{lenet_forward.8} parent=0 // pred_region
    _
  $region13: #{lenet_forward.8} parent=0 // pred_fallthru
    _

// kernel: lenet_forward.9
$region0: #{lenet_forward.9}
  #allocation0 [shape = 'u32[]', space=smem, size = 0x4, offset = 0x4, fixed_abs, tag = 'smem constant byte address 0x4 - core index']
  #allocation1 [shape = 'u32[144,128]{1,0:T(1,128)}', space=vmem, size = 0x12000, scoped, tag = 'internal scratch']
  #allocation2 [shape = 'f32[2,512]{1,0:T(2,128)}', space=vmem, size = 0x1000, scoped, tag = 'scratch operand']
  %s0 = inlined_call_operand.vmem [shape: bf16[2,4096], index: 0, kind: input, shape index: {}]
  %s1 = inlined_call_operand.vmem [shape: bf16[4096,1600], index: 1, kind: input, shape index: {}]
  %s2 = inlined_call_operand.vmem [shape: f32[1,1600], index: 2, kind: input, shape index: {}]
  %s3 = inlined_call_operand.vmem [shape: f32[2,1600], index: 3, kind: input, shape index: {}]
  %s4 = inlined_call_operand.hbm [shape: f32[2,1600], index: 4, kind: output, shape index: {}]
  %s5 = sld [smem:[#allocation0]]
  $region109: #{lenet_forward.9} parent=0
    _
  %s7 = ssub.s32 1, %s5
  %s8 = scalar_select 0, %s7, %s5
  $region1: #{lenet_forward.9} parent=0
    #allocation3 [shape = 'u8[2097152]{0}', space=vmem, size = 0x200000, scoped, tag = 'input window, operand 1']
    #allocation4 [shape = 'u8[8192]{0}', space=vmem, size = 0x2000, scoped, tag = 'output window, operand 0']
    #allocation5 [shape = 's32[2]{0}', space=sflag, size = 0x8, scoped, tag = 'scoped memory for lenet_forward.9']
    %9 = vsyncpa [#allocation5], 0
    %s10 = scalar_lea.sflag [#allocation5], 1
    %11 = vsyncpa %s10, 0
    loop: start=0, step=1, limit=18
    $region2: #{lenet_forward.9} parent=1 // loop_pre_header
      _
    $region3: #{lenet_forward.9} parent=1 // loop_header
      %s13 = sphi 0, %s17
      %p14 = scmp.ge.s32.totalorder %s13, 18
      %s20 = sphi 0, %s39
      %s21 = sphi 0, %s35
      %s22 = sphi 0, %s31
      %s23 = sphi 0, %s20
      %s24 = sphi 0, %s21
      %s25 = sphi 0, %s22
      %s26 = sphi 0, %s23
      %s27 = sphi 0, %s24
      %s28 = sphi 0, %s25
      %s44 = sphi 0, %s46
      %s47 = sphi 0, %s44
      %s48 = sphi 0, %s47
      %s64 = sphi 0, %s48
      %s72 = sphi 0, %s74
      %s75 = sphi 0, %s72
      %s76 = sphi 0, %s75
      %s92 = sphi 0, %s76
      %s98 = sphi 0, %s100
      %s101 = sphi 0, %s98
      %s102 = sphi 0, %s101
      %s118 = sphi 0, %s102
      %s126 = sphi 0, %s128
      %s129 = sphi 0, %s126
      %s130 = sphi 0, %s129
      %s146 = sphi 0, %s130
      %s154 = sphi 0, %s156
      %s157 = sphi 0, %s154
      %s158 = sphi 0, %s157
      %s174 = sphi 0, %s158
    $region4: #{lenet_forward.9} parent=1 // loop_header_branch
      %16 = sbr.rel (%p14) target = $region8
    $region5: #{lenet_forward.9} parent=1 // loop_body
      %s18 = ssub.s32 %s13, 1
      %s19 = ssub.s32 %s13, 2
      %s29 = sadd.s32 1, %s22
      %p30 = scmp.ge.s32.totalorder %s29, 4
      %s31 = scalar_select %p30, 0, %s29
      %s32 = sadd.s32 1, %s21
      %s33 = scalar_select %p30, %s32, %s21
      %p34 = scmp.ge.s32.totalorder %s33, 4
      %s35 = scalar_select %p34, 0, %s33
      %s36 = sadd.s32 1, %s20
      %s37 = scalar_select %p34, %s36, %s20
      %p38 = scmp.ge.s32.totalorder %s37, 1
      %s39 = scalar_select %p38, 0, %s37
      %s40 = ssub.s32 %s20, %s39
      %s41 = ssub.s32 %s22, %s31
      %s42 = sor.u32 %s40, %s41
      %p43 = scmp.eq.s32.totalorder %s42, 0
      %s45 = sadd.s32 %s44, 1
      %s46 = scalar_select %p43, %s44, %s45
      %p49 = pneg %p43
      %p50 = scmp.eq.s32.totalorder %s13, 15
      %p51 = por %p49, %p50
      %p52 = scmp.ne.s32.totalorder %s44, %s47
      %p53 = scmp.eq.s32.totalorder %s13, 0
      %p54 = por %p52, %p53
      %p55 = scmp.ne.s32.totalorder %s44, %s47
      %p56 = scmp.eq.s32.totalorder %s18, 15
      %p57 = por %p55, %p56
      %p58 = scmp.ne.s32.totalorder %s47, %s48
      %p59 = scmp.eq.s32.totalorder %s18, 0
      %p60 = por %p58, %p59
      %p61 = scmp.ne.s32.totalorder %s47, %s48
      %p62 = scmp.eq.s32.totalorder %s19, 15
      %p63 = por %p61, %p62
      %p65 = scmp.ne.s32.totalorder %s48, %s64
      %p66 = scmp.eq.s32.totalorder %s19, 0
      %p67 = por %p65, %p66
      %s68 = ssub.s32 %s22, %s31
      %s69 = ssub.s32 %s21, %s35
      %s70 = sor.u32 %s68, %s69
      %p71 = scmp.eq.s32.totalorder %s70, 0
      %s73 = sadd.s32 %s72, 1
      %s74 = scalar_select %p71, %s72, %s73
      %p77 = pneg %p71
      %p78 = scmp.eq.s32.totalorder %s13, 15
      %p79 = por %p77, %p78
      %p80 = scmp.ne.s32.totalorder %s72, %s75
      %p81 = scmp.eq.s32.totalorder %s13, 0
      %p82 = por %p80, %p81
      %p83 = scmp.ne.s32.totalorder %s72, %s75
      %p84 = scmp.eq.s32.totalorder %s18, 15
      %p85 = por %p83, %p84
      %p86 = scmp.ne.s32.totalorder %s75, %s76
      %p87 = scmp.eq.s32.totalorder %s18, 0
      %p88 = por %p86, %p87
      %p89 = scmp.ne.s32.totalorder %s75, %s76
      %p90 = scmp.eq.s32.totalorder %s19, 15
      %p91 = por %p89, %p90
      %p93 = scmp.ne.s32.totalorder %s76, %s92
      %p94 = scmp.eq.s32.totalorder %s19, 0
      %p95 = por %p93, %p94
      %s96 = ssub.s32 %s21, %s35
      %p97 = scmp.eq.s32.totalorder %s96, 0
      %s99 = sadd.s32 %s98, 1
      %s100 = scalar_select %p97, %s98, %s99
      %p103 = pneg %p97
      %p104 = scmp.eq.s32.totalorder %s13, 15
      %p105 = por %p103, %p104
      %p106 = scmp.ne.s32.totalorder %s98, %s101
      %p107 = scmp.eq.s32.totalorder %s13, 0
      %p108 = por %p106, %p107
      %p109 = scmp.ne.s32.totalorder %s98, %s101
      %p110 = scmp.eq.s32.totalorder %s18, 15
      %p111 = por %p109, %p110
      %p112 = scmp.ne.s32.totalorder %s101, %s102
      %p113 = scmp.eq.s32.totalorder %s18, 0
      %p114 = por %p112, %p113
      %p115 = scmp.ne.s32.totalorder %s101, %s102
      %p116 = scmp.eq.s32.totalorder %s19, 15
      %p117 = por %p115, %p116
      %p119 = scmp.ne.s32.totalorder %s102, %s118
      %p120 = scmp.eq.s32.totalorder %s19, 0
      %p121 = por %p119, %p120
      %s122 = ssub.s32 %s20, %s39
      %s123 = ssub.s32 %s21, %s35
      %s124 = sor.u32 %s122, %s123
      %p125 = scmp.eq.s32.totalorder %s124, 0
      %s127 = sadd.s32 %s126, 1
      %s128 = scalar_select %p125, %s126, %s127
      %p131 = pneg %p125
      %p132 = scmp.eq.s32.totalorder %s13, 15
      %p133 = por %p131, %p132
      %p134 = scmp.ne.s32.totalorder %s126, %s129
      %p135 = scmp.eq.s32.totalorder %s13, 0
      %p136 = por %p134, %p135
      %p137 = scmp.ne.s32.totalorder %s126, %s129
      %p138 = scmp.eq.s32.totalorder %s18, 15
      %p139 = por %p137, %p138
      %p140 = scmp.ne.s32.totalorder %s129, %s130
      %p141 = scmp.eq.s32.totalorder %s18, 0
      %p142 = por %p140, %p141
      %p143 = scmp.ne.s32.totalorder %s129, %s130
      %p144 = scmp.eq.s32.totalorder %s19, 15
      %p145 = por %p143, %p144
      %p147 = scmp.ne.s32.totalorder %s130, %s146
      %p148 = scmp.eq.s32.totalorder %s19, 0
      %p149 = por %p147, %p148
      %s150 = ssub.s32 %s20, %s39
      %s151 = ssub.s32 %s21, %s35
      %s152 = sor.u32 %s150, %s151
      %p153 = scmp.eq.s32.totalorder %s152, 0
      %s155 = sadd.s32 %s154, 1
      %s156 = scalar_select %p153, %s154, %s155
      %p159 = pneg %p153
      %p160 = scmp.eq.s32.totalorder %s13, 15
      %p161 = por %p159, %p160
      %p162 = scmp.ne.s32.totalorder %s154, %s157
      %p163 = scmp.eq.s32.totalorder %s13, 0
      %p164 = por %p162, %p163
      %p165 = scmp.ne.s32.totalorder %s154, %s157
      %p166 = scmp.eq.s32.totalorder %s18, 15
      %p167 = por %p165, %p166
      %p168 = scmp.ne.s32.totalorder %s157, %s158
      %p169 = scmp.eq.s32.totalorder %s18, 0
      %p170 = por %p168, %p169
      %p171 = scmp.ne.s32.totalorder %s157, %s158
      %p172 = scmp.eq.s32.totalorder %s19, 15
      %p173 = por %p171, %p172
      %p175 = scmp.ne.s32.totalorder %s158, %s174
      %p176 = scmp.eq.s32.totalorder %s19, 0
      %p177 = por %p175, %p176
      %p178 = scmp.le.s32.totalorder 1, %s13
      %p179 = scmp.lt.s32.totalorder %s13, 17
      %p180 = pnand %p178, %p179
      %p181 = pneg %p180
      // Predicated region
      $region9: #{lenet_forward.9} parent=5 // pred_check
        _
      $region10: #{lenet_forward.9} parent=5 // pred_check_branch
        %183 = sbr.rel (%p180) target = $region12
      $region11: #{lenet_forward.9} parent=5 // pred_region
        %s184 = ssub.s32 %s13, 1
      $region12: #{lenet_forward.9} parent=5 // pred_fallthru
        _
      %p185 = scmp.lt.s32.totalorder %s13, 16
      // Predicated region
      $region13: #{lenet_forward.9} parent=5 // pred_check
        %p186 = pneg %p185
      $region14: #{lenet_forward.9} parent=5 // pred_check_branch
        %188 = sbr.rel (%p186) target = $region16
      $region15: #{lenet_forward.9} parent=5 // pred_region
        // Predicated region
        $region17: #{lenet_forward.9} parent=15 // pred_check
          %p189 = pneg %p54
        $region18: #{lenet_forward.9} parent=15 // pred_check_branch
          %191 = sbr.rel (%p189) target = $region20
        $region19: #{lenet_forward.9} parent=15 // pred_region
          %s192 = smul.u32 8, %s22
          %p193 = scmp.lt.s32.totalorder %s20, 0
          %s194 = scalar_select %p193, %s20, 0
          %p195 = scmp.lt.s32.totalorder %s192, 31
          %s196 = scalar_select %p195, %s192, 31
          %s197 = smul.addr %s194, 32
          %s198 = sadd.s32 %s196, %s197
          %s199 = scalar_lea.vmem %s0, %s198
          %s200 = smul.u32 8, %s22
        $region20: #{lenet_forward.9} parent=15 // pred_fallthru
          _
        // Predicated region
        $region21: #{lenet_forward.9} parent=15 // pred_check
          %p201 = pneg %p82
        $region22: #{lenet_forward.9} parent=15 // pred_check_branch
          %203 = sbr.rel (%p201) target = $region24
        $region23: #{lenet_forward.9} parent=15 // pred_region
          %s204 = sand.u32 %s72, 1
          %s205 = sand.u32 %s72, 1
          %s206 = smul.addr %s205, 2048
          %s207 = scalar_lea.vmem [#allocation3], %s206
          %s208 = smul.u32 128, %s22
          %s209 = smul.u32 4, %s21
          %s210 = ssub.s32 13, %s209
          %p211 = scmp.lt.s32.totalorder %s210, 4
          %s212 = scalar_select %p211, %s210, 4
          %s213 = smul.u32 8192, %s212
          %p214 = scmp.ne.s32.totalorder 0, %s213
          %s215 = smul.addr %s208, 13
          %s216 = sadd.s32 %s209, %s215
          %s217 = smul.addr %s216, 4
          %s218 = scalar_lea.vmem %s1, %s217
          %s219 = smul.u32 %s212, 4
          // Predicated region
          $region25: #{lenet_forward.9} parent=23 // pred_check
            %p220 = pneg %p214
          $region26: #{lenet_forward.9} parent=23 // pred_check_branch
            %222 = sbr.rel (%p220) target = $region28
          $region27: #{lenet_forward.9} parent=23 // pred_region
            %p223 = scmp.lt.u32.totalorder %s219, 8
            %p224 = pneg %p223
            // Predicated region
            $region29: #{lenet_forward.9} parent=27 // pred_check
              _
            $region30: #{lenet_forward.9} parent=27 // pred_check_branch
              %226 = sbr.rel (%p223) target = $region32
            $region31: #{lenet_forward.9} parent=27 // pred_region
              %s495 = sand.u32 %s219, 7
              %p496 = scmp.eq.s32.totalorder %s495, 0
              // Predicated region
              $region44: #{lenet_forward.9} parent=31 // pred_check
                %p497 = pneg %p496
              $region45: #{lenet_forward.9} parent=31 // pred_check_branch
                %499 = sbr.rel (%p497) target = $region47
              $region46: #{lenet_forward.9} parent=31 // pred_region
                %s500 = sshrl.u32 %s219, 3
                // While loop
                $region48: #{lenet_forward.9} parent=46 // loop_pre_header
                  _
                $region49: #{lenet_forward.9} parent=46 // loop_header
                  %s504 = sphi 0, %s506
                  %p505 = scmp.ge.s32.totalorder %s504, %s500
                  %s509 = sphi 0, %s770
                  %s510 = sphi %s218, %s773
                  %s511 = sphi %s207, %s774
                $region50: #{lenet_forward.9} parent=46 // loop_header_branch
                  %508 = sbr.rel (%p505) target = $region54
                $region51: #{lenet_forward.9} parent=46 // loop_body
                  %v512 = vld [vmem:[%s510] sm:$0xff]
                  %513 = vst [vmem:[%s511] sm:$0xff] %v512
                  %v514 = vld [vmem:[%s510 + $0x34] sm:$0xff]
                  %515 = vst [vmem:[%s511 + $0x10] sm:$0xff] %v514
                  %v516 = vld [vmem:[%s510 + $0x68] sm:$0xff]
                  %517 = vst [vmem:[%s511 + $0x20] sm:$0xff] %v516
                  %v518 = vld [vmem:[%s510 + $0x9c] sm:$0xff]
                  %519 = vst [vmem:[%s511 + $0x30] sm:$0xff] %v518
                  %v520 = vld [vmem:[%s510 + $0xd0] sm:$0xff]
                  %521 = vst [vmem:[%s511 + $0x40] sm:$0xff] %v520
                  %v522 = vld [vmem:[%s510 + $0x104] sm:$0xff]
                  %523 = vst [vmem:[%s511 + $0x50] sm:$0xff] %v522
                  %v524 = vld [vmem:[%s510 + $0x138] sm:$0xff]
                  %525 = vst [vmem:[%s511 + $0x60] sm:$0xff] %v524
                  %v526 = vld [vmem:[%s510 + $0x16c] sm:$0xff]
                  %527 = vst [vmem:[%s511 + $0x70] sm:$0xff] %v526
                  %v528 = vld [vmem:[%s510 + $0x1a0] sm:$0xff]
                  %529 = vst [vmem:[%s511 + $0x80] sm:$0xff] %v528
                  %v530 = vld [vmem:[%s510 + $0x1d4] sm:$0xff]
                  %531 = vst [vmem:[%s511 + $0x90] sm:$0xff] %v530
                  %v532 = vld [vmem:[%s510 + $0x208] sm:$0xff]
                  %533 = vst [vmem:[%s511 + $0xa0] sm:$0xff] %v532
                  %v534 = vld [vmem:[%s510 + $0x23c] sm:$0xff]
                  %535 = vst [vmem:[%s511 + $0xb0] sm:$0xff] %v534
                  %v536 = vld [vmem:[%s510 + $0x270] sm:$0xff]
                  %537 = vst [vmem:[%s511 + $0xc0] sm:$0xff] %v536
                  %v538 = vld [vmem:[%s510 + $0x2a4] sm:$0xff]
                  %539 = vst [vmem:[%s511 + $0xd0] sm:$0xff] %v538
                  %v540 = vld [vmem:[%s510 + $0x2d8] sm:$0xff]
                  %541 = vst [vmem:[%s511 + $0xe0] sm:$0xff] %v540
                  %v542 = vld [vmem:[%s510 + $0x30c] sm:$0xff]
                  %543 = vst [vmem:[%s511 + $0xf0] sm:$0xff] %v542
                  %v544 = vld [vmem:[%s510 + $0x340] sm:$0xff]
                  %545 = vst [vmem:[%s511 + $0x100] sm:$0xff] %v544
                  %v546 = vld [vmem:[%s510 + $0x374] sm:$0xff]
                  %547 = vst [vmem:[%s511 + $0x110] sm:$0xff] %v546
                  %v548 = vld [vmem:[%s510 + $0x3a8] sm:$0xff]
                  %549 = vst [vmem:[%s511 + $0x120] sm:$0xff] %v548
                  %v550 = vld [vmem:[%s510 + $0x3dc] sm:$0xff]
                  %551 = vst [vmem:[%s511 + $0x130] sm:$0xff] %v550
                  %v552 = vld [vmem:[%s510 + $0x410] sm:$0xff]
                  %553 = vst [vmem:[%s511 + $0x140] sm:$0xff] %v552
                  %v554 = vld [vmem:[%s510 + $0x444] sm:$0xff]
                  %555 = vst [vmem:[%s511 + $0x150] sm:$0xff] %v554
                  %v556 = vld [vmem:[%s510 + $0x478] sm:$0xff]
                  %557 = vst [vmem:[%s511 + $0x160] sm:$0xff] %v556
                  %v558 = vld [vmem:[%s510 + $0x4ac] sm:$0xff]
                  %559 = vst [vmem:[%s511 + $0x170] sm:$0xff] %v558
                  %v560 = vld [vmem:[%s510 + $0x4e0] sm:$0xff]
                  %561 = vst [vmem:[%s511 + $0x180] sm:$0xff] %v560
                  %v562 = vld [vmem:[%s510 + $0x514] sm:$0xff]
                  %563 = vst [vmem:[%s511 + $0x190] sm:$0xff] %v562
                  %v564 = vld [vmem:[%s510 + $0x548] sm:$0xff]
                  %565 = vst [vmem:[%s511 + $0x1a0] sm:$0xff] %v564
                  %v566 = vld [vmem:[%s510 + $0x57c] sm:$0xff]
                  %567 = vst [vmem:[%s511 + $0x1b0] sm:$0xff] %v566
                  %v568 = vld [vmem:[%s510 + $0x5b0] sm:$0xff]
                  %569 = vst [vmem:[%s511 + $0x1c0] sm:$0xff] %v568
                  %v570 = vld [vmem:[%s510 + $0x5e4] sm:$0xff]
                  %571 = vst [vmem:[%s511 + $0x1d0] sm:$0xff] %v570
                  %v572 = vld [vmem:[%s510 + $0x618] sm:$0xff]
                  %573 = vst [vmem:[%s511 + $0x1e0] sm:$0xff] %v572
                  %v574 = vld [vmem:[%s510 + $0x64c] sm:$0xff]
                  %575 = vst [vmem:[%s511 + $0x1f0] sm:$0xff] %v574
                  %v576 = vld [vmem:[%s510 + $0x680] sm:$0xff]
                  %577 = vst [vmem:[%s511 + $0x200] sm:$0xff] %v576
                  %v578 = vld [vmem:[%s510 + $0x6b4] sm:$0xff]
                  %579 = vst [vmem:[%s511 + $0x210] sm:$0xff] %v578
                  %v580 = vld [vmem:[%s510 + $0x6e8] sm:$0xff]
                  %581 = vst [vmem:[%s511 + $0x220] sm:$0xff] %v580
                  %v582 = vld [vmem:[%s510 + $0x71c] sm:$0xff]
                  %583 = vst [vmem:[%s511 + $0x230] sm:$0xff] %v582
                  %v584 = vld [vmem:[%s510 + $0x750] sm:$0xff]
                  %585 = vst [vmem:[%s511 + $0x240] sm:$0xff] %v584
                  %v586 = vld [vmem:[%s510 + $0x784] sm:$0xff]
                  %587 = vst [vmem:[%s511 + $0x250] sm:$0xff] %v586
                  %v588 = vld [vmem:[%s510 + $0x7b8] sm:$0xff]
                  %589 = vst [vmem:[%s511 + $0x260] sm:$0xff] %v588
                  %v590 = vld [vmem:[%s510 + $0x7ec] sm:$0xff]
                  %591 = vst [vmem:[%s511 + $0x270] sm:$0xff] %v590
                  %v592 = vld [vmem:[%s510 + $0x820] sm:$0xff]
                  %593 = vst [vmem:[%s511 + $0x280] sm:$0xff] %v592
                  %v594 = vld [vmem:[%s510 + $0x854] sm:$0xff]
                  %595 = vst [vmem:[%s511 + $0x290] sm:$0xff] %v594
                  %v596 = vld [vmem:[%s510 + $0x888] sm:$0xff]
                  %597 = vst [vmem:[%s511 + $0x2a0] sm:$0xff] %v596
                  %v598 = vld [vmem:[%s510 + $0x8bc] sm:$0xff]
                  %599 = vst [vmem:[%s511 + $0x2b0] sm:$0xff] %v598
                  %v600 = vld [vmem:[%s510 + $0x8f0] sm:$0xff]
                  %601 = vst [vmem:[%s511 + $0x2c0] sm:$0xff] %v600
                  %v602 = vld [vmem:[%s510 + $0x924] sm:$0xff]
                  %603 = vst [vmem:[%s511 + $0x2d0] sm:$0xff] %v602
                  %v604 = vld [vmem:[%s510 + $0x958] sm:$0xff]
                  %605 = vst [vmem:[%s511 + $0x2e0] sm:$0xff] %v604
                  %v606 = vld [vmem:[%s510 + $0x98c] sm:$0xff]
                  %607 = vst [vmem:[%s511 + $0x2f0] sm:$0xff] %v606
                  %v608 = vld [vmem:[%s510 + $0x9c0] sm:$0xff]
                  %609 = vst [vmem:[%s511 + $0x300] sm:$0xff] %v608
                  %v610 = vld [vmem:[%s510 + $0x9f4] sm:$0xff]
                  %611 = vst [vmem:[%s511 + $0x310] sm:$0xff] %v610
                  %v612 = vld [vmem:[%s510 + $0xa28] sm:$0xff]
                  %613 = vst [vmem:[%s511 + $0x320] sm:$0xff] %v612
                  %v614 = vld [vmem:[%s510 + $0xa5c] sm:$0xff]
                  %615 = vst [vmem:[%s511 + $0x330] sm:$0xff] %v614
                  %v616 = vld [vmem:[%s510 + $0xa90] sm:$0xff]
                  %617 = vst [vmem:[%s511 + $0x340] sm:$0xff] %v616
                  %v618 = vld [vmem:[%s510 + $0xac4] sm:$0xff]
                  %619 = vst [vmem:[%s511 + $0x350] sm:$0xff] %v618
                  %v620 = vld [vmem:[%s510 + $0xaf8] sm:$0xff]
                  %621 = vst [vmem:[%s511 + $0x360] sm:$0xff] %v620
                  %v622 = vld [vmem:[%s510 + $0xb2c] sm:$0xff]
                  %623 = vst [vmem:[%s511 + $0x370] sm:$0xff] %v622
                  %v624 = vld [vmem:[%s510 + $0xb60] sm:$0xff]
                  %625 = vst [vmem:[%s511 + $0x380] sm:$0xff] %v624
                  %v626 = vld [vmem:[%s510 + $0xb94] sm:$0xff]
                  %627 = vst [vmem:[%s511 + $0x390] sm:$0xff] %v626
                  %v628 = vld [vmem:[%s510 + $0xbc8] sm:$0xff]
                  %629 = vst [vmem:[%s511 + $0x3a0] sm:$0xff] %v628
                  %v630 = vld [vmem:[%s510 + $0xbfc] sm:$0xff]
                  %631 = vst [vmem:[%s511 + $0x3b0] sm:$0xff] %v630
                  %v632 = vld [vmem:[%s510 + $0xc30] sm:$0xff]
                  %633 = vst [vmem:[%s511 + $0x3c0] sm:$0xff] %v632
                  %v634 = vld [vmem:[%s510 + $0xc64] sm:$0xff]
                  %635 = vst [vmem:[%s511 + $0x3d0] sm:$0xff] %v634
                  %v636 = vld [vmem:[%s510 + $0xc98] sm:$0xff]
                  %637 = vst [vmem:[%s511 + $0x3e0] sm:$0xff] %v636
                  %v638 = vld [vmem:[%s510 + $0xccc] sm:$0xff]
                  %639 = vst [vmem:[%s511 + $0x3f0] sm:$0xff] %v638
                  %v640 = vld [vmem:[%s510 + $0xd00] sm:$0xff]
                  %641 = vst [vmem:[%s511 + $0x400] sm:$0xff] %v640
                  %v642 = vld [vmem:[%s510 + $0xd34] sm:$0xff]
                  %643 = vst [vmem:[%s511 + $0x410] sm:$0xff] %v642
                  %v644 = vld [vmem:[%s510 + $0xd68] sm:$0xff]
                  %645 = vst [vmem:[%s511 + $0x420] sm:$0xff] %v644
                  %v646 = vld [vmem:[%s510 + $0xd9c] sm:$0xff]
                  %647 = vst [vmem:[%s511 + $0x430] sm:$0xff] %v646
                  %v648 = vld [vmem:[%s510 + $0xdd0] sm:$0xff]
                  %649 = vst [vmem:[%s511 + $0x440] sm:$0xff] %v648
                  %v650 = vld [vmem:[%s510 + $0xe04] sm:$0xff]
                  %651 = vst [vmem:[%s511 + $0x450] sm:$0xff] %v650
                  %v652 = vld [vmem:[%s510 + $0xe38] sm:$0xff]
                  %653 = vst [vmem:[%s511 + $0x460] sm:$0xff] %v652
                  %v654 = vld [vmem:[%s510 + $0xe6c] sm:$0xff]
                  %655 = vst [vmem:[%s511 + $0x470] sm:$0xff] %v654
                  %v656 = vld [vmem:[%s510 + $0xea0] sm:$0xff]
                  %657 = vst [vmem:[%s511 + $0x480] sm:$0xff] %v656
                  %v658 = vld [vmem:[%s510 + $0xed4] sm:$0xff]
                  %659 = vst [vmem:[%s511 + $0x490] sm:$0xff] %v658
                  %v660 = vld [vmem:[%s510 + $0xf08] sm:$0xff]
                  %661 = vst [vmem:[%s511 + $0x4a0] sm:$0xff] %v660
                  %v662 = vld [vmem:[%s510 + $0xf3c] sm:$0xff]
                  %663 = vst [vmem:[%s511 + $0x4b0] sm:$0xff] %v662
                  %v664 = vld [vmem:[%s510 + $0xf70] sm:$0xff]
                  %665 = vst [vmem:[%s511 + $0x4c0] sm:$0xff] %v664
                  %v666 = vld [vmem:[%s510 + $0xfa4] sm:$0xff]
                  %667 = vst [vmem:[%s511 + $0x4d0] sm:$0xff] %v666
                  %v668 = vld [vmem:[%s510 + $0xfd8] sm:$0xff]
                  %669 = vst [vmem:[%s511 + $0x4e0] sm:$0xff] %v668
                  %v670 = vld [vmem:[%s510 + $0x100c] sm:$0xff]
                  %671 = vst [vmem:[%s511 + $0x4f0] sm:$0xff] %v670
                  %v672 = vld [vmem:[%s510 + $0x1040] sm:$0xff]
                  %673 = vst [vmem:[%s511 + $0x500] sm:$0xff] %v672
                  %v674 = vld [vmem:[%s510 + $0x1074] sm:$0xff]
                  %675 = vst [vmem:[%s511 + $0x510] sm:$0xff] %v674
                  %v676 = vld [vmem:[%s510 + $0x10a8] sm:$0xff]
                  %677 = vst [vmem:[%s511 + $0x520] sm:$0xff] %v676
                  %v678 = vld [vmem:[%s510 + $0x10dc] sm:$0xff]
                  %679 = vst [vmem:[%s511 + $0x530] sm:$0xff] %v678
                  %v680 = vld [vmem:[%s510 + $0x1110] sm:$0xff]
                  %681 = vst [vmem:[%s511 + $0x540] sm:$0xff] %v680
                  %v682 = vld [vmem:[%s510 + $0x1144] sm:$0xff]
                  %683 = vst [vmem:[%s511 + $0x550] sm:$0xff] %v682
                  %v684 = vld [vmem:[%s510 + $0x1178] sm:$0xff]
                  %685 = vst [vmem:[%s511 + $0x560] sm:$0xff] %v684
                  %v686 = vld [vmem:[%s510 + $0x11ac] sm:$0xff]
                  %687 = vst [vmem:[%s511 + $0x570] sm:$0xff] %v686
                  %v688 = vld [vmem:[%s510 + $0x11e0] sm:$0xff]
                  %689 = vst [vmem:[%s511 + $0x580] sm:$0xff] %v688
                  %v690 = vld [vmem:[%s510 + $0x1214] sm:$0xff]
                  %691 = vst [vmem:[%s511 + $0x590] sm:$0xff] %v690
                  %v692 = vld [vmem:[%s510 + $0x1248] sm:$0xff]
                  %693 = vst [vmem:[%s511 + $0x5a0] sm:$0xff] %v692
                  %v694 = vld [vmem:[%s510 + $0x127c] sm:$0xff]
                  %695 = vst [vmem:[%s511 + $0x5b0] sm:$0xff] %v694
                  %v696 = vld [vmem:[%s510 + $0x12b0] sm:$0xff]
                  %697 = vst [vmem:[%s511 + $0x5c0] sm:$0xff] %v696
                  %v698 = vld [vmem:[%s510 + $0x12e4] sm:$0xff]
                  %699 = vst [vmem:[%s511 + $0x5d0] sm:$0xff] %v698
                  %v700 = vld [vmem:[%s510 + $0x1318] sm:$0xff]
                  %701 = vst [vmem:[%s511 + $0x5e0] sm:$0xff] %v700
                  %v702 = vld [vmem:[%s510 + $0x134c] sm:$0xff]
                  %703 = vst [vmem:[%s511 + $0x5f0] sm:$0xff] %v702
                  %v704 = vld [vmem:[%s510 + $0x1380] sm:$0xff]
                  %705 = vst [vmem:[%s511 + $0x600] sm:$0xff] %v704
                  %v706 = vld [vmem:[%s510 + $0x13b4] sm:$0xff]
                  %707 = vst [vmem:[%s511 + $0x610] sm:$0xff] %v706
                  %v708 = vld [vmem:[%s510 + $0x13e8] sm:$0xff]
                  %709 = vst [vmem:[%s511 + $0x620] sm:$0xff] %v708
                  %v710 = vld [vmem:[%s510 + $0x141c] sm:$0xff]
                  %711 = vst [vmem:[%s511 + $0x630] sm:$0xff] %v710
                  %v712 = vld [vmem:[%s510 + $0x1450] sm:$0xff]
                  %713 = vst [vmem:[%s511 + $0x640] sm:$0xff] %v712
                  %v714 = vld [vmem:[%s510 + $0x1484] sm:$0xff]
                  %715 = vst [vmem:[%s511 + $0x650] sm:$0xff] %v714
                  %v716 = vld [vmem:[%s510 + $0x14b8] sm:$0xff]
                  %717 = vst [vmem:[%s511 + $0x660] sm:$0xff] %v716
                  %v718 = vld [vmem:[%s510 + $0x14ec] sm:$0xff]
                  %719 = vst [vmem:[%s511 + $0x670] sm:$0xff] %v718
                  %v720 = vld [vmem:[%s510 + $0x1520] sm:$0xff]
                  %721 = vst [vmem:[%s511 + $0x680] sm:$0xff] %v720
                  %v722 = vld [vmem:[%s510 + $0x1554] sm:$0xff]
                  %723 = vst [vmem:[%s511 + $0x690] sm:$0xff] %v722
                  %v724 = vld [vmem:[%s510 + $0x1588] sm:$0xff]
                  %725 = vst [vmem:[%s511 + $0x6a0] sm:$0xff] %v724
                  %v726 = vld [vmem:[%s510 + $0x15bc] sm:$0xff]
                  %727 = vst [vmem:[%s511 + $0x6b0] sm:$0xff] %v726
                  %v728 = vld [vmem:[%s510 + $0x15f0] sm:$0xff]
                  %729 = vst [vmem:[%s511 + $0x6c0] sm:$0xff] %v728
                  %v730 = vld [vmem:[%s510 + $0x1624] sm:$0xff]
                  %731 = vst [vmem:[%s511 + $0x6d0] sm:$0xff] %v730
                  %v732 = vld [vmem:[%s510 + $0x1658] sm:$0xff]
                  %733 = vst [vmem:[%s511 + $0x6e0] sm:$0xff] %v732
                  %v734 = vld [vmem:[%s510 + $0x168c] sm:$0xff]
                  %735 = vst [vmem:[%s511 + $0x6f0] sm:$0xff] %v734
                  %v736 = vld [vmem:[%s510 + $0x16c0] sm:$0xff]
                  %737 = vst [vmem:[%s511 + $0x700] sm:$0xff] %v736
                  %v738 = vld [vmem:[%s510 + $0x16f4] sm:$0xff]
                  %739 = vst [vmem:[%s511 + $0x710] sm:$0xff] %v738
                  %v740 = vld [vmem:[%s510 + $0x1728] sm:$0xff]
                  %741 = vst [vmem:[%s511 + $0x720] sm:$0xff] %v740
                  %v742 = vld [vmem:[%s510 + $0x175c] sm:$0xff]
                  %743 = vst [vmem:[%s511 + $0x730] sm:$0xff] %v742
                  %v744 = vld [vmem:[%s510 + $0x1790] sm:$0xff]
                  %745 = vst [vmem:[%s511 + $0x740] sm:$0xff] %v744
                  %v746 = vld [vmem:[%s510 + $0x17c4] sm:$0xff]
                  %747 = vst [vmem:[%s511 + $0x750] sm:$0xff] %v746
                  %v748 = vld [vmem:[%s510 + $0x17f8] sm:$0xff]
                  %749 = vst [vmem:[%s511 + $0x760] sm:$0xff] %v748
                  %v750 = vld [vmem:[%s510 + $0x182c] sm:$0xff]
                  %751 = vst [vmem:[%s511 + $0x770] sm:$0xff] %v750
                  %v752 = vld [vmem:[%s510 + $0x1860] sm:$0xff]
                  %753 = vst [vmem:[%s511 + $0x780] sm:$0xff] %v752
                  %v754 = vld [vmem:[%s510 + $0x1894] sm:$0xff]
                  %755 = vst [vmem:[%s511 + $0x790] sm:$0xff] %v754
                  %v756 = vld [vmem:[%s510 + $0x18c8] sm:$0xff]
                  %757 = vst [vmem:[%s511 + $0x7a0] sm:$0xff] %v756
                  %v758 = vld [vmem:[%s510 + $0x18fc] sm:$0xff]
                  %759 = vst [vmem:[%s511 + $0x7b0] sm:$0xff] %v758
                  %v760 = vld [vmem:[%s510 + $0x1930] sm:$0xff]
                  %761 = vst [vmem:[%s511 + $0x7c0] sm:$0xff] %v760
                  %v762 = vld [vmem:[%s510 + $0x1964] sm:$0xff]
                  %763 = vst [vmem:[%s511 + $0x7d0] sm:$0xff] %v762
                  %v764 = vld [vmem:[%s510 + $0x1998] sm:$0xff]
                  %765 = vst [vmem:[%s511 + $0x7e0] sm:$0xff] %v764
                  %v766 = vld [vmem:[%s510 + $0x19cc] sm:$0xff]
                  %767 = vst [vmem:[%s511 + $0x7f0] sm:$0xff] %v766
                  %s768 = sadd.s32 1, %s509
                  %p769 = scmp.ge.s32.totalorder %s768, %s500
                  %s770 = scalar_select %p769, 0, %s768
                  %s771 = smul.u32 %s770, 8
                  %s772 = smul.u32 %s770, 8
                  %s773 = scalar_lea.vmem %s218, %s771
                  %s774 = scalar_lea.vmem %s207, %s772 [#allocation3]
                $region52: #{lenet_forward.9} parent=46 // loop_footer
                  %s506 = sadd.s32 %s504, 1
                $region53: #{lenet_forward.9} parent=46 // loop_footer_branch
                  %503 = sbr.rel target = $region49
                $region54: #{lenet_forward.9} parent=46 // loop_exit
                  _
              $region47: #{lenet_forward.9} parent=31 // pred_fallthru
                _
              %p775 = pneg %p496
              // Predicated region
              $region55: #{lenet_forward.9} parent=31 // pred_check
                _
              $region56: #{lenet_forward.9} parent=31 // pred_check_branch
                %777 = sbr.rel (%p496) target = $region58
              $region57: #{lenet_forward.9} parent=31 // pred_region
                %s778 = sand.u32 %s219, 7
                %s779 = ssub.s32 %s219, %s778
                %s780 = scalar_lea.vmem %s218, %s779
                %s781 = ssub.s32 %s219, %s778
                %s782 = scalar_lea.vmem %s207, %s781 [#allocation3]
                %s783 = sshrl.u32 %s219, 3
                // While loop
                $region59: #{lenet_forward.9} parent=57 // loop_pre_header
                  _
                $region60: #{lenet_forward.9} parent=57 // loop_header
                  %s787 = sphi 0, %s789
                  %p788 = scmp.ge.s32.totalorder %s787, %s783
                  %s792 = sphi 0, %s1053
                  %s793 = sphi %s218, %s1056
                  %s794 = sphi %s207, %s1057
                $region61: #{lenet_forward.9} parent=57 // loop_header_branch
                  %791 = sbr.rel (%p788) target = $region65
                $region62: #{lenet_forward.9} parent=57 // loop_body
                  %v795 = vld [vmem:[%s793] sm:$0xff]
                  %796 = vst [vmem:[%s794] sm:$0xff] %v795
                  %v797 = vld [vmem:[%s793 + $0x34] sm:$0xff]
                  %798 = vst [vmem:[%s794 + $0x10] sm:$0xff] %v797
                  %v799 = vld [vmem:[%s793 + $0x68] sm:$0xff]
                  %800 = vst [vmem:[%s794 + $0x20] sm:$0xff] %v799
                  %v801 = vld [vmem:[%s793 + $0x9c] sm:$0xff]
                  %802 = vst [vmem:[%s794 + $0x30] sm:$0xff] %v801
                  %v803 = vld [vmem:[%s793 + $0xd0] sm:$0xff]
                  %804 = vst [vmem:[%s794 + $0x40] sm:$0xff] %v803
                  %v805 = vld [vmem:[%s793 + $0x104] sm:$0xff]
                  %806 = vst [vmem:[%s794 + $0x50] sm:$0xff] %v805
                  %v807 = vld [vmem:[%s793 + $0x138] sm:$0xff]
                  %808 = vst [vmem:[%s794 + $0x60] sm:$0xff] %v807
                  %v809 = vld [vmem:[%s793 + $0x16c] sm:$0xff]
                  %810 = vst [vmem:[%s794 + $0x70] sm:$0xff] %v809
                  %v811 = vld [vmem:[%s793 + $0x1a0] sm:$0xff]
                  %812 = vst [vmem:[%s794 + $0x80] sm:$0xff] %v811
                  %v813 = vld [vmem:[%s793 + $0x1d4] sm:$0xff]
                  %814 = vst [vmem:[%s794 + $0x90] sm:$0xff] %v813
                  %v815 = vld [vmem:[%s793 + $0x208] sm:$0xff]
                  %816 = vst [vmem:[%s794 + $0xa0] sm:$0xff] %v815
                  %v817 = vld [vmem:[%s793 + $0x23c] sm:$0xff]
                  %818 = vst [vmem:[%s794 + $0xb0] sm:$0xff] %v817
                  %v819 = vld [vmem:[%s793 + $0x270] sm:$0xff]
                  %820 = vst [vmem:[%s794 + $0xc0] sm:$0xff] %v819
                  %v821 = vld [vmem:[%s793 + $0x2a4] sm:$0xff]
                  %822 = vst [vmem:[%s794 + $0xd0] sm:$0xff] %v821
                  %v823 = vld [vmem:[%s793 + $0x2d8] sm:$0xff]
                  %824 = vst [vmem:[%s794 + $0xe0] sm:$0xff] %v823
                  %v825 = vld [vmem:[%s793 + $0x30c] sm:$0xff]
                  %826 = vst [vmem:[%s794 + $0xf0] sm:$0xff] %v825
                  %v827 = vld [vmem:[%s793 + $0x340] sm:$0xff]
                  %828 = vst [vmem:[%s794 + $0x100] sm:$0xff] %v827
                  %v829 = vld [vmem:[%s793 + $0x374] sm:$0xff]
                  %830 = vst [vmem:[%s794 + $0x110] sm:$0xff] %v829
                  %v831 = vld [vmem:[%s793 + $0x3a8] sm:$0xff]
                  %832 = vst [vmem:[%s794 + $0x120] sm:$0xff] %v831
                  %v833 = vld [vmem:[%s793 + $0x3dc] sm:$0xff]
                  %834 = vst [vmem:[%s794 + $0x130] sm:$0xff] %v833
                  %v835 = vld [vmem:[%s793 + $0x410] sm:$0xff]
                  %836 = vst [vmem:[%s794 + $0x140] sm:$0xff] %v835
                  %v837 = vld [vmem:[%s793 + $0x444] sm:$0xff]
                  %838 = vst [vmem:[%s794 + $0x150] sm:$0xff] %v837
                  %v839 = vld [vmem:[%s793 + $0x478] sm:$0xff]
                  %840 = vst [vmem:[%s794 + $0x160] sm:$0xff] %v839
                  %v841 = vld [vmem:[%s793 + $0x4ac] sm:$0xff]
                  %842 = vst [vmem:[%s794 + $0x170] sm:$0xff] %v841
                  %v843 = vld [vmem:[%s793 + $0x4e0] sm:$0xff]
                  %844 = vst [vmem:[%s794 + $0x180] sm:$0xff] %v843
                  %v845 = vld [vmem:[%s793 + $0x514] sm:$0xff]
                  %846 = vst [vmem:[%s794 + $0x190] sm:$0xff] %v845
                  %v847 = vld [vmem:[%s793 + $0x548] sm:$0xff]
                  %848 = vst [vmem:[%s794 + $0x1a0] sm:$0xff] %v847
                  %v849 = vld [vmem:[%s793 + $0x57c] sm:$0xff]
                  %850 = vst [vmem:[%s794 + $0x1b0] sm:$0xff] %v849
                  %v851 = vld [vmem:[%s793 + $0x5b0] sm:$0xff]
                  %852 = vst [vmem:[%s794 + $0x1c0] sm:$0xff] %v851
                  %v853 = vld [vmem:[%s793 + $0x5e4] sm:$0xff]
                  %854 = vst [vmem:[%s794 + $0x1d0] sm:$0xff] %v853
                  %v855 = vld [vmem:[%s793 + $0x618] sm:$0xff]
                  %856 = vst [vmem:[%s794 + $0x1e0] sm:$0xff] %v855
                  %v857 = vld [vmem:[%s793 + $0x64c] sm:$0xff]
                  %858 = vst [vmem:[%s794 + $0x1f0] sm:$0xff] %v857
                  %v859 = vld [vmem:[%s793 + $0x680] sm:$0xff]
                  %860 = vst [vmem:[%s794 + $0x200] sm:$0xff] %v859
                  %v861 = vld [vmem:[%s793 + $0x6b4] sm:$0xff]
                  %862 = vst [vmem:[%s794 + $0x210] sm:$0xff] %v861
                  %v863 = vld [vmem:[%s793 + $0x6e8] sm:$0xff]
                  %864 = vst [vmem:[%s794 + $0x220] sm:$0xff] %v863
                  %v865 = vld [vmem:[%s793 + $0x71c] sm:$0xff]
                  %866 = vst [vmem:[%s794 + $0x230] sm:$0xff] %v865
                  %v867 = vld [vmem:[%s793 + $0x750] sm:$0xff]
                  %868 = vst [vmem:[%s794 + $0x240] sm:$0xff] %v867
                  %v869 = vld [vmem:[%s793 + $0x784] sm:$0xff]
                  %870 = vst [vmem:[%s794 + $0x250] sm:$0xff] %v869
                  %v871 = vld [vmem:[%s793 + $0x7b8] sm:$0xff]
                  %872 = vst [vmem:[%s794 + $0x260] sm:$0xff] %v871
                  %v873 = vld [vmem:[%s793 + $0x7ec] sm:$0xff]
                  %874 = vst [vmem:[%s794 + $0x270] sm:$0xff] %v873
                  %v875 = vld [vmem:[%s793 + $0x820] sm:$0xff]
                  %876 = vst [vmem:[%s794 + $0x280] sm:$0xff] %v875
                  %v877 = vld [vmem:[%s793 + $0x854] sm:$0xff]
                  %878 = vst [vmem:[%s794 + $0x290] sm:$0xff] %v877
                  %v879 = vld [vmem:[%s793 + $0x888] sm:$0xff]
                  %880 = vst [vmem:[%s794 + $0x2a0] sm:$0xff] %v879
                  %v881 = vld [vmem:[%s793 + $0x8bc] sm:$0xff]
                  %882 = vst [vmem:[%s794 + $0x2b0] sm:$0xff] %v881
                  %v883 = vld [vmem:[%s793 + $0x8f0] sm:$0xff]
                  %884 = vst [vmem:[%s794 + $0x2c0] sm:$0xff] %v883
                  %v885 = vld [vmem:[%s793 + $0x924] sm:$0xff]
                  %886 = vst [vmem:[%s794 + $0x2d0] sm:$0xff] %v885
                  %v887 = vld [vmem:[%s793 + $0x958] sm:$0xff]
                  %888 = vst [vmem:[%s794 + $0x2e0] sm:$0xff] %v887
                  %v889 = vld [vmem:[%s793 + $0x98c] sm:$0xff]
                  %890 = vst [vmem:[%s794 + $0x2f0] sm:$0xff] %v889
                  %v891 = vld [vmem:[%s793 + $0x9c0] sm:$0xff]
                  %892 = vst [vmem:[%s794 + $0x300] sm:$0xff] %v891
                  %v893 = vld [vmem:[%s793 + $0x9f4] sm:$0xff]
                  %894 = vst [vmem:[%s794 + $0x310] sm:$0xff] %v893
                  %v895 = vld [vmem:[%s793 + $0xa28] sm:$0xff]
                  %896 = vst [vmem:[%s794 + $0x320] sm:$0xff] %v895
                  %v897 = vld [vmem:[%s793 + $0xa5c] sm:$0xff]
                  %898 = vst [vmem:[%s794 + $0x330] sm:$0xff] %v897
                  %v899 = vld [vmem:[%s793 + $0xa90] sm:$0xff]
                  %900 = vst [vmem:[%s794 + $0x340] sm:$0xff] %v899
                  %v901 = vld [vmem:[%s793 + $0xac4] sm:$0xff]
                  %902 = vst [vmem:[%s794 + $0x350] sm:$0xff] %v901
                  %v903 = vld [vmem:[%s793 + $0xaf8] sm:$0xff]
                  %904 = vst [vmem:[%s794 + $0x360] sm:$0xff] %v903
                  %v905 = vld [vmem:[%s793 + $0xb2c] sm:$0xff]
                  %906 = vst [vmem:[%s794 + $0x370] sm:$0xff] %v905
                  %v907 = vld [vmem:[%s793 + $0xb60] sm:$0xff]
                  %908 = vst [vmem:[%s794 + $0x380] sm:$0xff] %v907
                  %v909 = vld [vmem:[%s793 + $0xb94] sm:$0xff]
                  %910 = vst [vmem:[%s794 + $0x390] sm:$0xff] %v909
                  %v911 = vld [vmem:[%s793 + $0xbc8] sm:$0xff]
                  %912 = vst [vmem:[%s794 + $0x3a0] sm:$0xff] %v911
                  %v913 = vld [vmem:[%s793 + $0xbfc] sm:$0xff]
                  %914 = vst [vmem:[%s794 + $0x3b0] sm:$0xff] %v913
                  %v915 = vld [vmem:[%s793 + $0xc30] sm:$0xff]
                  %916 = vst [vmem:[%s794 + $0x3c0] sm:$0xff] %v915
                  %v917 = vld [vmem:[%s793 + $0xc64] sm:$0xff]
                  %918 = vst [vmem:[%s794 + $0x3d0] sm:$0xff] %v917
                  %v919 = vld [vmem:[%s793 + $0xc98] sm:$0xff]
                  %920 = vst [vmem:[%s794 + $0x3e0] sm:$0xff] %v919
                  %v921 = vld [vmem:[%s793 + $0xccc] sm:$0xff]
                  %922 = vst [vmem:[%s794 + $0x3f0] sm:$0xff] %v921
                  %v923 = vld [vmem:[%s793 + $0xd00] sm:$0xff]
                  %924 = vst [vmem:[%s794 + $0x400] sm:$0xff] %v923
                  %v925 = vld [vmem:[%s793 + $0xd34] sm:$0xff]
                  %926 = vst [vmem:[%s794 + $0x410] sm:$0xff] %v925
                  %v927 = vld [vmem:[%s793 + $0xd68] sm:$0xff]
                  %928 = vst [vmem:[%s794 + $0x420] sm:$0xff] %v927
                  %v929 = vld [vmem:[%s793 + $0xd9c] sm:$0xff]
                  %930 = vst [vmem:[%s794 + $0x430] sm:$0xff] %v929
                  %v931 = vld [vmem:[%s793 + $0xdd0] sm:$0xff]
                  %932 = vst [vmem:[%s794 + $0x440] sm:$0xff] %v931
                  %v933 = vld [vmem:[%s793 + $0xe04] sm:$0xff]
                  %934 = vst [vmem:[%s794 + $0x450] sm:$0xff] %v933
                  %v935 = vld [vmem:[%s793 + $0xe38] sm:$0xff]
                  %936 = vst [vmem:[%s794 + $0x460] sm:$0xff] %v935
                  %v937 = vld [vmem:[%s793 + $0xe6c] sm:$0xff]
                  %938 = vst [vmem:[%s794 + $0x470] sm:$0xff] %v937
                  %v939 = vld [vmem:[%s793 + $0xea0] sm:$0xff]
                  %940 = vst [vmem:[%s794 + $0x480] sm:$0xff] %v939
                  %v941 = vld [vmem:[%s793 + $0xed4] sm:$0xff]
                  %942 = vst [vmem:[%s794 + $0x490] sm:$0xff] %v941
                  %v943 = vld [vmem:[%s793 + $0xf08] sm:$0xff]
                  %944 = vst [vmem:[%s794 + $0x4a0] sm:$0xff] %v943
                  %v945 = vld [vmem:[%s793 + $0xf3c] sm:$0xff]
                  %946 = vst [vmem:[%s794 + $0x4b0] sm:$0xff] %v945
                  %v947 = vld [vmem:[%s793 + $0xf70] sm:$0xff]
                  %948 = vst [vmem:[%s794 + $0x4c0] sm:$0xff] %v947
                  %v949 = vld [vmem:[%s793 + $0xfa4] sm:$0xff]
                  %950 = vst [vmem:[%s794 + $0x4d0] sm:$0xff] %v949
                  %v951 = vld [vmem:[%s793 + $0xfd8] sm:$0xff]
                  %952 = vst [vmem:[%s794 + $0x4e0] sm:$0xff] %v951
                  %v953 = vld [vmem:[%s793 + $0x100c] sm:$0xff]
                  %954 = vst [vmem:[%s794 + $0x4f0] sm:$0xff] %v953
                  %v955 = vld [vmem:[%s793 + $0x1040] sm:$0xff]
                  %956 = vst [vmem:[%s794 + $0x500] sm:$0xff] %v955
                  %v957 = vld [vmem:[%s793 + $0x1074] sm:$0xff]
                  %958 = vst [vmem:[%s794 + $0x510] sm:$0xff] %v957
                  %v959 = vld [vmem:[%s793 + $0x10a8] sm:$0xff]
                  %960 = vst [vmem:[%s794 + $0x520] sm:$0xff] %v959
                  %v961 = vld [vmem:[%s793 + $0x10dc] sm:$0xff]
                  %962 = vst [vmem:[%s794 + $0x530] sm:$0xff] %v961
                  %v963 = vld [vmem:[%s793 + $0x1110] sm:$0xff]
                  %964 = vst [vmem:[%s794 + $0x540] sm:$0xff] %v963
                  %v965 = vld [vmem:[%s793 + $0x1144] sm:$0xff]
                  %966 = vst [vmem:[%s794 + $0x550] sm:$0xff] %v965
                  %v967 = vld [vmem:[%s793 + $0x1178] sm:$0xff]
                  %968 = vst [vmem:[%s794 + $0x560] sm:$0xff] %v967
                  %v969 = vld [vmem:[%s793 + $0x11ac] sm:$0xff]
                  %970 = vst [vmem:[%s794 + $0x570] sm:$0xff] %v969
                  %v971 = vld [vmem:[%s793 + $0x11e0] sm:$0xff]
                  %972 = vst [vmem:[%s794 + $0x580] sm:$0xff] %v971
                  %v973 = vld [vmem:[%s793 + $0x1214] sm:$0xff]
                  %974 = vst [vmem:[%s794 + $0x590] sm:$0xff] %v973
                  %v975 = vld [vmem:[%s793 + $0x1248] sm:$0xff]
                  %976 = vst [vmem:[%s794 + $0x5a0] sm:$0xff] %v975
                  %v977 = vld [vmem:[%s793 + $0x127c] sm:$0xff]
                  %978 = vst [vmem:[%s794 + $0x5b0] sm:$0xff] %v977
                  %v979 = vld [vmem:[%s793 + $0x12b0] sm:$0xff]
                  %980 = vst [vmem:[%s794 + $0x5c0] sm:$0xff] %v979
                  %v981 = vld [vmem:[%s793 + $0x12e4] sm:$0xff]
                  %982 = vst [vmem:[%s794 + $0x5d0] sm:$0xff] %v981
                  %v983 = vld [vmem:[%s793 + $0x1318] sm:$0xff]
                  %984 = vst [vmem:[%s794 + $0x5e0] sm:$0xff] %v983
                  %v985 = vld [vmem:[%s793 + $0x134c] sm:$0xff]
                  %986 = vst [vmem:[%s794 + $0x5f0] sm:$0xff] %v985
                  %v987 = vld [vmem:[%s793 + $0x1380] sm:$0xff]
                  %988 = vst [vmem:[%s794 + $0x600] sm:$0xff] %v987
                  %v989 = vld [vmem:[%s793 + $0x13b4] sm:$0xff]
                  %990 = vst [vmem:[%s794 + $0x610] sm:$0xff] %v989
                  %v991 = vld [vmem:[%s793 + $0x13e8] sm:$0xff]
                  %992 = vst [vmem:[%s794 + $0x620] sm:$0xff] %v991
                  %v993 = vld [vmem:[%s793 + $0x141c] sm:$0xff]
                  %994 = vst [vmem:[%s794 + $0x630] sm:$0xff] %v993
                  %v995 = vld [vmem:[%s793 + $0x1450] sm:$0xff]
                  %996 = vst [vmem:[%s794 + $0x640] sm:$0xff] %v995
                  %v997 = vld [vmem:[%s793 + $0x1484] sm:$0xff]
                  %998 = vst [vmem:[%s794 + $0x650] sm:$0xff] %v997
                  %v999 = vld [vmem:[%s793 + $0x14b8] sm:$0xff]
                  %1000 = vst [vmem:[%s794 + $0x660] sm:$0xff] %v999
                  %v1001 = vld [vmem:[%s793 + $0x14ec] sm:$0xff]
                  %1002 = vst [vmem:[%s794 + $0x670] sm:$0xff] %v1001
                  %v1003 = vld [vmem:[%s793 + $0x1520] sm:$0xff]
                  %1004 = vst [vmem:[%s794 + $0x680] sm:$0xff] %v1003
                  %v1005 = vld [vmem:[%s793 + $0x1554] sm:$0xff]
                  %1006 = vst [vmem:[%s794 + $0x690] sm:$0xff] %v1005
                  %v1007 = vld [vmem:[%s793 + $0x1588] sm:$0xff]
                  %1008 = vst [vmem:[%s794 + $0x6a0] sm:$0xff] %v1007
                  %v1009 = vld [vmem:[%s793 + $0x15bc] sm:$0xff]
                  %1010 = vst [vmem:[%s794 + $0x6b0] sm:$0xff] %v1009
                  %v1011 = vld [vmem:[%s793 + $0x15f0] sm:$0xff]
                  %1012 = vst [vmem:[%s794 + $0x6c0] sm:$0xff] %v1011
                  %v1013 = vld [vmem:[%s793 + $0x1624] sm:$0xff]
                  %1014 = vst [vmem:[%s794 + $0x6d0] sm:$0xff] %v1013
                  %v1015 = vld [vmem:[%s793 + $0x1658] sm:$0xff]
                  %1016 = vst [vmem:[%s794 + $0x6e0] sm:$0xff] %v1015
                  %v1017 = vld [vmem:[%s793 + $0x168c] sm:$0xff]
                  %1018 = vst [vmem:[%s794 + $0x6f0] sm:$0xff] %v1017
                  %v1019 = vld [vmem:[%s793 + $0x16c0] sm:$0xff]
                  %1020 = vst [vmem:[%s794 + $0x700] sm:$0xff] %v1019
                  %v1021 = vld [vmem:[%s793 + $0x16f4] sm:$0xff]
                  %1022 = vst [vmem:[%s794 + $0x710] sm:$0xff] %v1021
                  %v1023 = vld [vmem:[%s793 + $0x1728] sm:$0xff]
                  %1024 = vst [vmem:[%s794 + $0x720] sm:$0xff] %v1023
                  %v1025 = vld [vmem:[%s793 + $0x175c] sm:$0xff]
                  %1026 = vst [vmem:[%s794 + $0x730] sm:$0xff] %v1025
                  %v1027 = vld [vmem:[%s793 + $0x1790] sm:$0xff]
                  %1028 = vst [vmem:[%s794 + $0x740] sm:$0xff] %v1027
                  %v1029 = vld [vmem:[%s793 + $0x17c4] sm:$0xff]
                  %1030 = vst [vmem:[%s794 + $0x750] sm:$0xff] %v1029
                  %v1031 = vld [vmem:[%s793 + $0x17f8] sm:$0xff]
                  %1032 = vst [vmem:[%s794 + $0x760] sm:$0xff] %v1031
                  %v1033 = vld [vmem:[%s793 + $0x182c] sm:$0xff]
                  %1034 = vst [vmem:[%s794 + $0x770] sm:$0xff] %v1033
                  %v1035 = vld [vmem:[%s793 + $0x1860] sm:$0xff]
                  %1036 = vst [vmem:[%s794 + $0x780] sm:$0xff] %v1035
                  %v1037 = vld [vmem:[%s793 + $0x1894] sm:$0xff]
                  %1038 = vst [vmem:[%s794 + $0x790] sm:$0xff] %v1037
                  %v1039 = vld [vmem:[%s793 + $0x18c8] sm:$0xff]
                  %1040 = vst [vmem:[%s794 + $0x7a0] sm:$0xff] %v1039
                  %v1041 = vld [vmem:[%s793 + $0x18fc] sm:$0xff]
                  %1042 = vst [vmem:[%s794 + $0x7b0] sm:$0xff] %v1041
                  %v1043 = vld [vmem:[%s793 + $0x1930] sm:$0xff]
                  %1044 = vst [vmem:[%s794 + $0x7c0] sm:$0xff] %v1043
                  %v1045 = vld [vmem:[%s793 + $0x1964] sm:$0xff]
                  %1046 = vst [vmem:[%s794 + $0x7d0] sm:$0xff] %v1045
                  %v1047 = vld [vmem:[%s793 + $0x1998] sm:$0xff]
                  %1048 = vst [vmem:[%s794 + $0x7e0] sm:$0xff] %v1047
                  %v1049 = vld [vmem:[%s793 + $0x19cc] sm:$0xff]
                  %1050 = vst [vmem:[%s794 + $0x7f0] sm:$0xff] %v1049
                  %s1051 = sadd.s32 1, %s792
                  %p1052 = scmp.ge.s32.totalorder %s1051, %s783
                  %s1053 = scalar_select %p1052, 0, %s1051
                  %s1054 = smul.u32 %s1053, 8
                  %s1055 = smul.u32 %s1053, 8
                  %s1056 = scalar_lea.vmem %s218, %s1054
                  %s1057 = scalar_lea.vmem %s207, %s1055 [#allocation3]
                $region63: #{lenet_forward.9} parent=57 // loop_footer
                  %s789 = sadd.s32 %s787, 1
                $region64: #{lenet_forward.9} parent=57 // loop_footer_branch
                  %786 = sbr.rel target = $region60
                $region65: #{lenet_forward.9} parent=57 // loop_exit
                  _
                %s1058 = sshllo.u32 0, %s778
                loop: start=0, step=1, limit=1
                $region66: #{lenet_forward.9} parent=57 // loop_pre_header
                  _
                $region67: #{lenet_forward.9} parent=57 // loop_header
                  %s1060 = sphi 0, %s1064
                  %p1061 = scmp.ge.s32.totalorder %s1060, 1
                  %s1065 = sphi %s780, %s780
                  %s1066 = sphi %s782, %s782
                $region68: #{lenet_forward.9} parent=57 // loop_header_branch
                  %1063 = sbr.rel (%p1061) target = $region72
                $region69: #{lenet_forward.9} parent=57 // loop_body
                  %v1067 = vld [vmem:[%s1065] sm:%s1058]
                  %1068 = vst [vmem:[%s1066] sm:%s1058] %v1067
                  %v1069 = vld [vmem:[%s1065 + $0x34] sm:%s1058]
                  %1070 = vst [vmem:[%s1066 + $0x10] sm:%s1058] %v1069
                  %v1071 = vld [vmem:[%s1065 + $0x68] sm:%s1058]
                  %1072 = vst [vmem:[%s1066 + $0x20] sm:%s1058] %v1071
                  %v1073 = vld [vmem:[%s1065 + $0x9c] sm:%s1058]
                  %1074 = vst [vmem:[%s1066 + $0x30] sm:%s1058] %v1073
                  %v1075 = vld [vmem:[%s1065 + $0xd0] sm:%s1058]
                  %1076 = vst [vmem:[%s1066 + $0x40] sm:%s1058] %v1075
                  %v1077 = vld [vmem:[%s1065 + $0x104] sm:%s1058]
                  %1078 = vst [vmem:[%s1066 + $0x50] sm:%s1058] %v1077
                  %v1079 = vld [vmem:[%s1065 + $0x138] sm:%s1058]
                  %1080 = vst [vmem:[%s1066 + $0x60] sm:%s1058] %v1079
                  %v1081 = vld [vmem:[%s1065 + $0x16c] sm:%s1058]
                  %1082 = vst [vmem:[%s1066 + $0x70] sm:%s1058] %v1081
                  %v1083 = vld [vmem:[%s1065 + $0x1a0] sm:%s1058]
                  %1084 = vst [vmem:[%s1066 + $0x80] sm:%s1058] %v1083
                  %v1085 = vld [vmem:[%s1065 + $0x1d4] sm:%s1058]
                  %1086 = vst [vmem:[%s1066 + $0x90] sm:%s1058] %v1085
                  %v1087 = vld [vmem:[%s1065 + $0x208] sm:%s1058]
                  %1088 = vst [vmem:[%s1066 + $0xa0] sm:%s1058] %v1087
                  %v1089 = vld [vmem:[%s1065 + $0x23c] sm:%s1058]
                  %1090 = vst [vmem:[%s1066 + $0xb0] sm:%s1058] %v1089
                  %v1091 = vld [vmem:[%s1065 + $0x270] sm:%s1058]
                  %1092 = vst [vmem:[%s1066 + $0xc0] sm:%s1058] %v1091
                  %v1093 = vld [vmem:[%s1065 + $0x2a4] sm:%s1058]
                  %1094 = vst [vmem:[%s1066 + $0xd0] sm:%s1058] %v1093
                  %v1095 = vld [vmem:[%s1065 + $0x2d8] sm:%s1058]
                  %1096 = vst [vmem:[%s1066 + $0xe0] sm:%s1058] %v1095
                  %v1097 = vld [vmem:[%s1065 + $0x30c] sm:%s1058]
                  %1098 = vst [vmem:[%s1066 + $0xf0] sm:%s1058] %v1097
                  %v1099 = vld [vmem:[%s1065 + $0x340] sm:%s1058]
                  %1100 = vst [vmem:[%s1066 + $0x100] sm:%s1058] %v1099
                  %v1101 = vld [vmem:[%s1065 + $0x374] sm:%s1058]
                  %1102 = vst [vmem:[%s1066 + $0x110] sm:%s1058] %v1101
                  %v1103 = vld [vmem:[%s1065 + $0x3a8] sm:%s1058]
                  %1104 = vst [vmem:[%s1066 + $0x120] sm:%s1058] %v1103
                  %v1105 = vld [vmem:[%s1065 + $0x3dc] sm:%s1058]
                  %1106 = vst [vmem:[%s1066 + $0x130] sm:%s1058] %v1105
                  %v1107 = vld [vmem:[%s1065 + $0x410] sm:%s1058]
                  %1108 = vst [vmem:[%s1066 + $0x140] sm:%s1058] %v1107
                  %v1109 = vld [vmem:[%s1065 + $0x444] sm:%s1058]
                  %1110 = vst [vmem:[%s1066 + $0x150] sm:%s1058] %v1109
                  %v1111 = vld [vmem:[%s1065 + $0x478] sm:%s1058]
                  %1112 = vst [vmem:[%s1066 + $0x160] sm:%s1058] %v1111
                  %v1113 = vld [vmem:[%s1065 + $0x4ac] sm:%s1058]
                  %1114 = vst [vmem:[%s1066 + $0x170] sm:%s1058] %v1113
                  %v1115 = vld [vmem:[%s1065 + $0x4e0] sm:%s1058]
                  %1116 = vst [vmem:[%s1066 + $0x180] sm:%s1058] %v1115
                  %v1117 = vld [vmem:[%s1065 + $0x514] sm:%s1058]
                  %1118 = vst [vmem:[%s1066 + $0x190] sm:%s1058] %v1117
                  %v1119 = vld [vmem:[%s1065 + $0x548] sm:%s1058]
                  %1120 = vst [vmem:[%s1066 + $0x1a0] sm:%s1058] %v1119
                  %v1121 = vld [vmem:[%s1065 + $0x57c] sm:%s1058]
                  %1122 = vst [vmem:[%s1066 + $0x1b0] sm:%s1058] %v1121
                  %v1123 = vld [vmem:[%s1065 + $0x5b0] sm:%s1058]
                  %1124 = vst [vmem:[%s1066 + $0x1c0] sm:%s1058] %v1123
                  %v1125 = vld [vmem:[%s1065 + $0x5e4] sm:%s1058]
                  %1126 = vst [vmem:[%s1066 + $0x1d0] sm:%s1058] %v1125
                  %v1127 = vld [vmem:[%s1065 + $0x618] sm:%s1058]
                  %1128 = vst [vmem:[%s1066 + $0x1e0] sm:%s1058] %v1127
                  %v1129 = vld [vmem:[%s1065 + $0x64c] sm:%s1058]
                  %1130 = vst [vmem:[%s1066 + $0x1f0] sm:%s1058] %v1129
                  %v1131 = vld [vmem:[%s1065 + $0x680] sm:%s1058]
                  %1132 = vst [vmem:[%s1066 + $0x200] sm:%s1058] %v1131
                  %v1133 = vld [vmem:[%s1065 + $0x6b4] sm:%s1058]
                  %1134 = vst [vmem:[%s1066 + $0x210] sm:%s1058] %v1133
                  %v1135 = vld [vmem:[%s1065 + $0x6e8] sm:%s1058]
                  %1136 = vst [vmem:[%s1066 + $0x220] sm:%s1058] %v1135
                  %v1137 = vld [vmem:[%s1065 + $0x71c] sm:%s1058]
                  %1138 = vst [vmem:[%s1066 + $0x230] sm:%s1058] %v1137
                  %v1139 = vld [vmem:[%s1065 + $0x750] sm:%s1058]
                  %1140 = vst [vmem:[%s1066 + $0x240] sm:%s1058] %v1139
                  %v1141 = vld [vmem:[%s1065 + $0x784] sm:%s1058]
                  %1142 = vst [vmem:[%s1066 + $0x250] sm:%s1058] %v1141
                  %v1143 = vld [vmem:[%s1065 + $0x7b8] sm:%s1058]
                  %1144 = vst [vmem:[%s1066 + $0x260] sm:%s1058] %v1143
                  %v1145 = vld [vmem:[%s1065 + $0x7ec] sm:%s1058]
                  %1146 = vst [vmem:[%s1066 + $0x270] sm:%s1058] %v1145
                  %v1147 = vld [vmem:[%s1065 + $0x820] sm:%s1058]
                  %1148 = vst [vmem:[%s1066 + $0x280] sm:%s1058] %v1147
                  %v1149 = vld [vmem:[%s1065 + $0x854] sm:%s1058]
                  %1150 = vst [vmem:[%s1066 + $0x290] sm:%s1058] %v1149
                  %v1151 = vld [vmem:[%s1065 + $0x888] sm:%s1058]
                  %1152 = vst [vmem:[%s1066 + $0x2a0] sm:%s1058] %v1151
                  %v1153 = vld [vmem:[%s1065 + $0x8bc] sm:%s1058]
                  %1154 = vst [vmem:[%s1066 + $0x2b0] sm:%s1058] %v1153
                  %v1155 = vld [vmem:[%s1065 + $0x8f0] sm:%s1058]
                  %1156 = vst [vmem:[%s1066 + $0x2c0] sm:%s1058] %v1155
                  %v1157 = vld [vmem:[%s1065 + $0x924] sm:%s1058]
                  %1158 = vst [vmem:[%s1066 + $0x2d0] sm:%s1058] %v1157
                  %v1159 = vld [vmem:[%s1065 + $0x958] sm:%s1058]
                  %1160 = vst [vmem:[%s1066 + $0x2e0] sm:%s1058] %v1159
                  %v1161 = vld [vmem:[%s1065 + $0x98c] sm:%s1058]
                  %1162 = vst [vmem:[%s1066 + $0x2f0] sm:%s1058] %v1161
                  %v1163 = vld [vmem:[%s1065 + $0x9c0] sm:%s1058]
                  %1164 = vst [vmem:[%s1066 + $0x300] sm:%s1058] %v1163
                  %v1165 = vld [vmem:[%s1065 + $0x9f4] sm:%s1058]
                  %1166 = vst [vmem:[%s1066 + $0x310] sm:%s1058] %v1165
                  %v1167 = vld [vmem:[%s1065 + $0xa28] sm:%s1058]
                  %1168 = vst [vmem:[%s1066 + $0x320] sm:%s1058] %v1167
                  %v1169 = vld [vmem:[%s1065 + $0xa5c] sm:%s1058]
                  %1170 = vst [vmem:[%s1066 + $0x330] sm:%s1058] %v1169
                  %v1171 = vld [vmem:[%s1065 + $0xa90] sm:%s1058]
                  %1172 = vst [vmem:[%s1066 + $0x340] sm:%s1058] %v1171
                  %v1173 = vld [vmem:[%s1065 + $0xac4] sm:%s1058]
                  %1174 = vst [vmem:[%s1066 + $0x350] sm:%s1058] %v1173
                  %v1175 = vld [vmem:[%s1065 + $0xaf8] sm:%s1058]
                  %1176 = vst [vmem:[%s1066 + $0x360] sm:%s1058] %v1175
                  %v1177 = vld [vmem:[%s1065 + $0xb2c] sm:%s1058]
                  %1178 = vst [vmem:[%s1066 + $0x370] sm:%s1058] %v1177
                  %v1179 = vld [vmem:[%s1065 + $0xb60] sm:%s1058]
                  %1180 = vst [vmem:[%s1066 + $0x380] sm:%s1058] %v1179
                  %v1181 = vld [vmem:[%s1065 + $0xb94] sm:%s1058]
                  %1182 = vst [vmem:[%s1066 + $0x390] sm:%s1058] %v1181
                  %v1183 = vld [vmem:[%s1065 + $0xbc8] sm:%s1058]
                  %1184 = vst [vmem:[%s1066 + $0x3a0] sm:%s1058] %v1183
                  %v1185 = vld [vmem:[%s1065 + $0xbfc] sm:%s1058]
                  %1186 = vst [vmem:[%s1066 + $0x3b0] sm:%s1058] %v1185
                  %v1187 = vld [vmem:[%s1065 + $0xc30] sm:%s1058]
                  %1188 = vst [vmem:[%s1066 + $0x3c0] sm:%s1058] %v1187
                  %v1189 = vld [vmem:[%s1065 + $0xc64] sm:%s1058]
                  %1190 = vst [vmem:[%s1066 + $0x3d0] sm:%s1058] %v1189
                  %v1191 = vld [vmem:[%s1065 + $0xc98] sm:%s1058]
                  %1192 = vst [vmem:[%s1066 + $0x3e0] sm:%s1058] %v1191
                  %v1193 = vld [vmem:[%s1065 + $0xccc] sm:%s1058]
                  %1194 = vst [vmem:[%s1066 + $0x3f0] sm:%s1058] %v1193
                  %v1195 = vld [vmem:[%s1065 + $0xd00] sm:%s1058]
                  %1196 = vst [vmem:[%s1066 + $0x400] sm:%s1058] %v1195
                  %v1197 = vld [vmem:[%s1065 + $0xd34] sm:%s1058]
                  %1198 = vst [vmem:[%s1066 + $0x410] sm:%s1058] %v1197
                  %v1199 = vld [vmem:[%s1065 + $0xd68] sm:%s1058]
                  %1200 = vst [vmem:[%s1066 + $0x420] sm:%s1058] %v1199
                  %v1201 = vld [vmem:[%s1065 + $0xd9c] sm:%s1058]
                  %1202 = vst [vmem:[%s1066 + $0x430] sm:%s1058] %v1201
                  %v1203 = vld [vmem:[%s1065 + $0xdd0] sm:%s1058]
                  %1204 = vst [vmem:[%s1066 + $0x440] sm:%s1058] %v1203
                  %v1205 = vld [vmem:[%s1065 + $0xe04] sm:%s1058]
                  %1206 = vst [vmem:[%s1066 + $0x450] sm:%s1058] %v1205
                  %v1207 = vld [vmem:[%s1065 + $0xe38] sm:%s1058]
                  %1208 = vst [vmem:[%s1066 + $0x460] sm:%s1058] %v1207
                  %v1209 = vld [vmem:[%s1065 + $0xe6c] sm:%s1058]
                  %1210 = vst [vmem:[%s1066 + $0x470] sm:%s1058] %v1209
                  %v1211 = vld [vmem:[%s1065 + $0xea0] sm:%s1058]
                  %1212 = vst [vmem:[%s1066 + $0x480] sm:%s1058] %v1211
                  %v1213 = vld [vmem:[%s1065 + $0xed4] sm:%s1058]
                  %1214 = vst [vmem:[%s1066 + $0x490] sm:%s1058] %v1213
                  %v1215 = vld [vmem:[%s1065 + $0xf08] sm:%s1058]
                  %1216 = vst [vmem:[%s1066 + $0x4a0] sm:%s1058] %v1215
                  %v1217 = vld [vmem:[%s1065 + $0xf3c] sm:%s1058]
                  %1218 = vst [vmem:[%s1066 + $0x4b0] sm:%s1058] %v1217
                  %v1219 = vld [vmem:[%s1065 + $0xf70] sm:%s1058]
                  %1220 = vst [vmem:[%s1066 + $0x4c0] sm:%s1058] %v1219
                  %v1221 = vld [vmem:[%s1065 + $0xfa4] sm:%s1058]
                  %1222 = vst [vmem:[%s1066 + $0x4d0] sm:%s1058] %v1221
                  %v1223 = vld [vmem:[%s1065 + $0xfd8] sm:%s1058]
                  %1224 = vst [vmem:[%s1066 + $0x4e0] sm:%s1058] %v1223
                  %v1225 = vld [vmem:[%s1065 + $0x100c] sm:%s1058]
                  %1226 = vst [vmem:[%s1066 + $0x4f0] sm:%s1058] %v1225
                  %v1227 = vld [vmem:[%s1065 + $0x1040] sm:%s1058]
                  %1228 = vst [vmem:[%s1066 + $0x500] sm:%s1058] %v1227
                  %v1229 = vld [vmem:[%s1065 + $0x1074] sm:%s1058]
                  %1230 = vst [vmem:[%s1066 + $0x510] sm:%s1058] %v1229
                  %v1231 = vld [vmem:[%s1065 + $0x10a8] sm:%s1058]
                  %1232 = vst [vmem:[%s1066 + $0x520] sm:%s1058] %v1231
                  %v1233 = vld [vmem:[%s1065 + $0x10dc] sm:%s1058]
                  %1234 = vst [vmem:[%s1066 + $0x530] sm:%s1058] %v1233
                  %v1235 = vld [vmem:[%s1065 + $0x1110] sm:%s1058]
                  %1236 = vst [vmem:[%s1066 + $0x540] sm:%s1058] %v1235
                  %v1237 = vld [vmem:[%s1065 + $0x1144] sm:%s1058]
                  %1238 = vst [vmem:[%s1066 + $0x550] sm:%s1058] %v1237
                  %v1239 = vld [vmem:[%s1065 + $0x1178] sm:%s1058]
                  %1240 = vst [vmem:[%s1066 + $0x560] sm:%s1058] %v1239
                  %v1241 = vld [vmem:[%s1065 + $0x11ac] sm:%s1058]
                  %1242 = vst [vmem:[%s1066 + $0x570] sm:%s1058] %v1241
                  %v1243 = vld [vmem:[%s1065 + $0x11e0] sm:%s1058]
                  %1244 = vst [vmem:[%s1066 + $0x580] sm:%s1058] %v1243
                  %v1245 = vld [vmem:[%s1065 + $0x1214] sm:%s1058]
                  %1246 = vst [vmem:[%s1066 + $0x590] sm:%s1058] %v1245
                  %v1247 = vld [vmem:[%s1065 + $0x1248] sm:%s1058]
                  %1248 = vst [vmem:[%s1066 + $0x5a0] sm:%s1058] %v1247
                  %v1249 = vld [vmem:[%s1065 + $0x127c] sm:%s1058]
                  %1250 = vst [vmem:[%s1066 + $0x5b0] sm:%s1058] %v1249
                  %v1251 = vld [vmem:[%s1065 + $0x12b0] sm:%s1058]
                  %1252 = vst [vmem:[%s1066 + $0x5c0] sm:%s1058] %v1251
                  %v1253 = vld [vmem:[%s1065 + $0x12e4] sm:%s1058]
                  %1254 = vst [vmem:[%s1066 + $0x5d0] sm:%s1058] %v1253
                  %v1255 = vld [vmem:[%s1065 + $0x1318] sm:%s1058]
                  %1256 = vst [vmem:[%s1066 + $0x5e0] sm:%s1058] %v1255
                  %v1257 = vld [vmem:[%s1065 + $0x134c] sm:%s1058]
                  %1258 = vst [vmem:[%s1066 + $0x5f0] sm:%s1058] %v1257
                  %v1259 = vld [vmem:[%s1065 + $0x1380] sm:%s1058]
                  %1260 = vst [vmem:[%s1066 + $0x600] sm:%s1058] %v1259
                  %v1261 = vld [vmem:[%s1065 + $0x13b4] sm:%s1058]
                  %1262 = vst [vmem:[%s1066 + $0x610] sm:%s1058] %v1261
                  %v1263 = vld [vmem:[%s1065 + $0x13e8] sm:%s1058]
                  %1264 = vst [vmem:[%s1066 + $0x620] sm:%s1058] %v1263
                  %v1265 = vld [vmem:[%s1065 + $0x141c] sm:%s1058]
                  %1266 = vst [vmem:[%s1066 + $0x630] sm:%s1058] %v1265
                  %v1267 = vld [vmem:[%s1065 + $0x1450] sm:%s1058]
                  %1268 = vst [vmem:[%s1066 + $0x640] sm:%s1058] %v1267
                  %v1269 = vld [vmem:[%s1065 + $0x1484] sm:%s1058]
                  %1270 = vst [vmem:[%s1066 + $0x650] sm:%s1058] %v1269
                  %v1271 = vld [vmem:[%s1065 + $0x14b8] sm:%s1058]
                  %1272 = vst [vmem:[%s1066 + $0x660] sm:%s1058] %v1271
                  %v1273 = vld [vmem:[%s1065 + $0x14ec] sm:%s1058]
                  %1274 = vst [vmem:[%s1066 + $0x670] sm:%s1058] %v1273
                  %v1275 = vld [vmem:[%s1065 + $0x1520] sm:%s1058]
                  %1276 = vst [vmem:[%s1066 + $0x680] sm:%s1058] %v1275
                  %v1277 = vld [vmem:[%s1065 + $0x1554] sm:%s1058]
                  %1278 = vst [vmem:[%s1066 + $0x690] sm:%s1058] %v1277
                  %v1279 = vld [vmem:[%s1065 + $0x1588] sm:%s1058]
                  %1280 = vst [vmem:[%s1066 + $0x6a0] sm:%s1058] %v1279
                  %v1281 = vld [vmem:[%s1065 + $0x15bc] sm:%s1058]
                  %1282 = vst [vmem:[%s1066 + $0x6b0] sm:%s1058] %v1281
                  %v1283 = vld [vmem:[%s1065 + $0x15f0] sm:%s1058]
                  %1284 = vst [vmem:[%s1066 + $0x6c0] sm:%s1058] %v1283
                  %v1285 = vld [vmem:[%s1065 + $0x1624] sm:%s1058]
                  %1286 = vst [vmem:[%s1066 + $0x6d0] sm:%s1058] %v1285
                  %v1287 = vld [vmem:[%s1065 + $0x1658] sm:%s1058]
                  %1288 = vst [vmem:[%s1066 + $0x6e0] sm:%s1058] %v1287
                  %v1289 = vld [vmem:[%s1065 + $0x168c] sm:%s1058]
                  %1290 = vst [vmem:[%s1066 + $0x6f0] sm:%s1058] %v1289
                  %v1291 = vld [vmem:[%s1065 + $0x16c0] sm:%s1058]
                  %1292 = vst [vmem:[%s1066 + $0x700] sm:%s1058] %v1291
                  %v1293 = vld [vmem:[%s1065 + $0x16f4] sm:%s1058]
                  %1294 = vst [vmem:[%s1066 + $0x710] sm:%s1058] %v1293
                  %v1295 = vld [vmem:[%s1065 + $0x1728] sm:%s1058]
                  %1296 = vst [vmem:[%s1066 + $0x720] sm:%s1058] %v1295
                  %v1297 = vld [vmem:[%s1065 + $0x175c] sm:%s1058]
                  %1298 = vst [vmem:[%s1066 + $0x730] sm:%s1058] %v1297
                  %v1299 = vld [vmem:[%s1065 + $0x1790] sm:%s1058]
                  %1300 = vst [vmem:[%s1066 + $0x740] sm:%s1058] %v1299
                  %v1301 = vld [vmem:[%s1065 + $0x17c4] sm:%s1058]
                  %1302 = vst [vmem:[%s1066 + $0x750] sm:%s1058] %v1301
                  %v1303 = vld [vmem:[%s1065 + $0x17f8] sm:%s1058]
                  %1304 = vst [vmem:[%s1066 + $0x760] sm:%s1058] %v1303
                  %v1305 = vld [vmem:[%s1065 + $0x182c] sm:%s1058]
                  %1306 = vst [vmem:[%s1066 + $0x770] sm:%s1058] %v1305
                  %v1307 = vld [vmem:[%s1065 + $0x1860] sm:%s1058]
                  %1308 = vst [vmem:[%s1066 + $0x780] sm:%s1058] %v1307
                  %v1309 = vld [vmem:[%s1065 + $0x1894] sm:%s1058]
                  %1310 = vst [vmem:[%s1066 + $0x790] sm:%s1058] %v1309
                  %v1311 = vld [vmem:[%s1065 + $0x18c8] sm:%s1058]
                  %1312 = vst [vmem:[%s1066 + $0x7a0] sm:%s1058] %v1311
                  %v1313 = vld [vmem:[%s1065 + $0x18fc] sm:%s1058]
                  %1314 = vst [vmem:[%s1066 + $0x7b0] sm:%s1058] %v1313
                  %v1315 = vld [vmem:[%s1065 + $0x1930] sm:%s1058]
                  %1316 = vst [vmem:[%s1066 + $0x7c0] sm:%s1058] %v1315
                  %v1317 = vld [vmem:[%s1065 + $0x1964] sm:%s1058]
                  %1318 = vst [vmem:[%s1066 + $0x7d0] sm:%s1058] %v1317
                  %v1319 = vld [vmem:[%s1065 + $0x1998] sm:%s1058]
                  %1320 = vst [vmem:[%s1066 + $0x7e0] sm:%s1058] %v1319
                  %v1321 = vld [vmem:[%s1065 + $0x19cc] sm:%s1058]
                  %1322 = vst [vmem:[%s1066 + $0x7f0] sm:%s1058] %v1321
                $region70: #{lenet_forward.9} parent=57 // loop_footer
                  %s1064 = sadd.s32 1, %s1060
                $region71: #{lenet_forward.9} parent=57 // loop_footer_branch
                  %1059 = sbr.rel target = $region67
                $region72: #{lenet_forward.9} parent=57 // loop_exit
                  _
              $region58: #{lenet_forward.9} parent=31 // pred_fallthru
                _
            $region32: #{lenet_forward.9} parent=27 // pred_fallthru
              _
            // Predicated region
            $region33: #{lenet_forward.9} parent=27 // pred_check
              %p227 = pneg %p223
            $region34: #{lenet_forward.9} parent=27 // pred_check_branch
              %229 = sbr.rel (%p227) target = $region36
            $region35: #{lenet_forward.9} parent=27 // pred_region
              %s230 = sshllo.u32 0, %s219
              loop: start=0, step=1, limit=1
              $region37: #{lenet_forward.9} parent=35 // loop_pre_header
                _
              $region38: #{lenet_forward.9} parent=35 // loop_header
                %s232 = sphi 0, %s236
                %p233 = scmp.ge.s32.totalorder %s232, 1
                %s237 = sphi %s218, %s218
                %s238 = sphi %s207, %s207
              $region39: #{lenet_forward.9} parent=35 // loop_header_branch
                %235 = sbr.rel (%p233) target = $region43
              $region40: #{lenet_forward.9} parent=35 // loop_body
                %v239 = vld [vmem:[%s237] sm:%s230]
                %240 = vst [vmem:[%s238] sm:%s230] %v239
                %v241 = vld [vmem:[%s237 + $0x34] sm:%s230]
                %242 = vst [vmem:[%s238 + $0x10] sm:%s230] %v241
                %v243 = vld [vmem:[%s237 + $0x68] sm:%s230]
                %244 = vst [vmem:[%s238 + $0x20] sm:%s230] %v243
                %v245 = vld [vmem:[%s237 + $0x9c] sm:%s230]
                %246 = vst [vmem:[%s238 + $0x30] sm:%s230] %v245
                %v247 = vld [vmem:[%s237 + $0xd0] sm:%s230]
                %248 = vst [vmem:[%s238 + $0x40] sm:%s230] %v247
                %v249 = vld [vmem:[%s237 + $0x104] sm:%s230]
                %250 = vst [vmem:[%s238 + $0x50] sm:%s230] %v249
                %v251 = vld [vmem:[%s237 + $0x138] sm:%s230]
                %252 = vst [vmem:[%s238 + $0x60] sm:%s230] %v251
                %v253 = vld [vmem:[%s237 + $0x16c] sm:%s230]
                %254 = vst [vmem:[%s238 + $0x70] sm:%s230] %v253
                %v255 = vld [vmem:[%s237 + $0x1a0] sm:%s230]
                %256 = vst [vmem:[%s238 + $0x80] sm:%s230] %v255
                %v257 = vld [vmem:[%s237 + $0x1d4] sm:%s230]
                %258 = vst [vmem:[%s238 + $0x90] sm:%s230] %v257
                %v259 = vld [vmem:[%s237 + $0x208] sm:%s230]
                %260 = vst [vmem:[%s238 + $0xa0] sm:%s230] %v259
                %v261 = vld [vmem:[%s237 + $0x23c] sm:%s230]
                %262 = vst [vmem:[%s238 + $0xb0] sm:%s230] %v261
                %v263 = vld [vmem:[%s237 + $0x270] sm:%s230]
                %264 = vst [vmem:[%s238 + $0xc0] sm:%s230] %v263
                %v265 = vld [vmem:[%s237 + $0x2a4] sm:%s230]
                %266 = vst [vmem:[%s238 + $0xd0] sm:%s230] %v265
                %v267 = vld [vmem:[%s237 + $0x2d8] sm:%s230]
                %268 = vst [vmem:[%s238 + $0xe0] sm:%s230] %v267
                %v269 = vld [vmem:[%s237 + $0x30c] sm:%s230]
                %270 = vst [vmem:[%s238 + $0xf0] sm:%s230] %v269
                %v271 = vld [vmem:[%s237 + $0x340] sm:%s230]
                %272 = vst [vmem:[%s238 + $0x100] sm:%s230] %v271
                %v273 = vld [vmem:[%s237 + $0x374] sm:%s230]
                %274 = vst [vmem:[%s238 + $0x110] sm:%s230] %v273
                %v275 = vld [vmem:[%s237 + $0x3a8] sm:%s230]
                %276 = vst [vmem:[%s238 + $0x120] sm:%s230] %v275
                %v277 = vld [vmem:[%s237 + $0x3dc] sm:%s230]
                %278 = vst [vmem:[%s238 + $0x130] sm:%s230] %v277
                %v279 = vld [vmem:[%s237 + $0x410] sm:%s230]
                %280 = vst [vmem:[%s238 + $0x140] sm:%s230] %v279
                %v281 = vld [vmem:[%s237 + $0x444] sm:%s230]
                %282 = vst [vmem:[%s238 + $0x150] sm:%s230] %v281
                %v283 = vld [vmem:[%s237 + $0x478] sm:%s230]
                %284 = vst [vmem:[%s238 + $0x160] sm:%s230] %v283
                %v285 = vld [vmem:[%s237 + $0x4ac] sm:%s230]
                %286 = vst [vmem:[%s238 + $0x170] sm:%s230] %v285
                %v287 = vld [vmem:[%s237 + $0x4e0] sm:%s230]
                %288 = vst [vmem:[%s238 + $0x180] sm:%s230] %v287
                %v289 = vld [vmem:[%s237 + $0x514] sm:%s230]
                %290 = vst [vmem:[%s238 + $0x190] sm:%s230] %v289
                %v291 = vld [vmem:[%s237 + $0x548] sm:%s230]
                %292 = vst [vmem:[%s238 + $0x1a0] sm:%s230] %v291
                %v293 = vld [vmem:[%s237 + $0x57c] sm:%s230]
                %294 = vst [vmem:[%s238 + $0x1b0] sm:%s230] %v293
                %v295 = vld [vmem:[%s237 + $0x5b0] sm:%s230]
                %296 = vst [vmem:[%s238 + $0x1c0] sm:%s230] %v295
                %v297 = vld [vmem:[%s237 + $0x5e4] sm:%s230]
                %298 = vst [vmem:[%s238 + $0x1d0] sm:%s230] %v297
                %v299 = vld [vmem:[%s237 + $0x618] sm:%s230]
                %300 = vst [vmem:[%s238 + $0x1e0] sm:%s230] %v299
                %v301 = vld [vmem:[%s237 + $0x64c] sm:%s230]
                %302 = vst [vmem:[%s238 + $0x1f0] sm:%s230] %v301
                %v303 = vld [vmem:[%s237 + $0x680] sm:%s230]
                %304 = vst [vmem:[%s238 + $0x200] sm:%s230] %v303
                %v305 = vld [vmem:[%s237 + $0x6b4] sm:%s230]
                %306 = vst [vmem:[%s238 + $0x210] sm:%s230] %v305
                %v307 = vld [vmem:[%s237 + $0x6e8] sm:%s230]
                %308 = vst [vmem:[%s238 + $0x220] sm:%s230] %v307
                %v309 = vld [vmem:[%s237 + $0x71c] sm:%s230]
                %310 = vst [vmem:[%s238 + $0x230] sm:%s230] %v309
                %v311 = vld [vmem:[%s237 + $0x750] sm:%s230]
                %312 = vst [vmem:[%s238 + $0x240] sm:%s230] %v311
                %v313 = vld [vmem:[%s237 + $0x784] sm:%s230]
                %314 = vst [vmem:[%s238 + $0x250] sm:%s230] %v313
                %v315 = vld [vmem:[%s237 + $0x7b8] sm:%s230]
                %316 = vst [vmem:[%s238 + $0x260] sm:%s230] %v315
                %v317 = vld [vmem:[%s237 + $0x7ec] sm:%s230]
                %318 = vst [vmem:[%s238 + $0x270] sm:%s230] %v317
                %v319 = vld [vmem:[%s237 + $0x820] sm:%s230]
                %320 = vst [vmem:[%s238 + $0x280] sm:%s230] %v319
                %v321 = vld [vmem:[%s237 + $0x854] sm:%s230]
                %322 = vst [vmem:[%s238 + $0x290] sm:%s230] %v321
                %v323 = vld [vmem:[%s237 + $0x888] sm:%s230]
                %324 = vst [vmem:[%s238 + $0x2a0] sm:%s230] %v323
                %v325 = vld [vmem:[%s237 + $0x8bc] sm:%s230]
                %326 = vst [vmem:[%s238 + $0x2b0] sm:%s230] %v325
                %v327 = vld [vmem:[%s237 + $0x8f0] sm:%s230]
                %328 = vst [vmem:[%s238 + $0x2c0] sm:%s230] %v327
                %v329 = vld [vmem:[%s237 + $0x924] sm:%s230]
                %330 = vst [vmem:[%s238 + $0x2d0] sm:%s230] %v329
                %v331 = vld [vmem:[%s237 + $0x958] sm:%s230]
                %332 = vst [vmem:[%s238 + $0x2e0] sm:%s230] %v331
                %v333 = vld [vmem:[%s237 + $0x98c] sm:%s230]
                %334 = vst [vmem:[%s238 + $0x2f0] sm:%s230] %v333
                %v335 = vld [vmem:[%s237 + $0x9c0] sm:%s230]
                %336 = vst [vmem:[%s238 + $0x300] sm:%s230] %v335
                %v337 = vld [vmem:[%s237 + $0x9f4] sm:%s230]
                %338 = vst [vmem:[%s238 + $0x310] sm:%s230] %v337
                %v339 = vld [vmem:[%s237 + $0xa28] sm:%s230]
                %340 = vst [vmem:[%s238 + $0x320] sm:%s230] %v339
                %v341 = vld [vmem:[%s237 + $0xa5c] sm:%s230]
                %342 = vst [vmem:[%s238 + $0x330] sm:%s230] %v341
                %v343 = vld [vmem:[%s237 + $0xa90] sm:%s230]
                %344 = vst [vmem:[%s238 + $0x340] sm:%s230] %v343
                %v345 = vld [vmem:[%s237 + $0xac4] sm:%s230]
                %346 = vst [vmem:[%s238 + $0x350] sm:%s230] %v345
                %v347 = vld [vmem:[%s237 + $0xaf8] sm:%s230]
                %348 = vst [vmem:[%s238 + $0x360] sm:%s230] %v347
                %v349 = vld [vmem:[%s237 + $0xb2c] sm:%s230]
                %350 = vst [vmem:[%s238 + $0x370] sm:%s230] %v349
                %v351 = vld [vmem:[%s237 + $0xb60] sm:%s230]
                %352 = vst [vmem:[%s238 + $0x380] sm:%s230] %v351
                %v353 = vld [vmem:[%s237 + $0xb94] sm:%s230]
                %354 = vst [vmem:[%s238 + $0x390] sm:%s230] %v353
                %v355 = vld [vmem:[%s237 + $0xbc8] sm:%s230]
                %356 = vst [vmem:[%s238 + $0x3a0] sm:%s230] %v355
                %v357 = vld [vmem:[%s237 + $0xbfc] sm:%s230]
                %358 = vst [vmem:[%s238 + $0x3b0] sm:%s230] %v357
                %v359 = vld [vmem:[%s237 + $0xc30] sm:%s230]
                %360 = vst [vmem:[%s238 + $0x3c0] sm:%s230] %v359
                %v361 = vld [vmem:[%s237 + $0xc64] sm:%s230]
                %362 = vst [vmem:[%s238 + $0x3d0] sm:%s230] %v361
                %v363 = vld [vmem:[%s237 + $0xc98] sm:%s230]
                %364 = vst [vmem:[%s238 + $0x3e0] sm:%s230] %v363
                %v365 = vld [vmem:[%s237 + $0xccc] sm:%s230]
                %366 = vst [vmem:[%s238 + $0x3f0] sm:%s230] %v365
                %v367 = vld [vmem:[%s237 + $0xd00] sm:%s230]
                %368 = vst [vmem:[%s238 + $0x400] sm:%s230] %v367
                %v369 = vld [vmem:[%s237 + $0xd34] sm:%s230]
                %370 = vst [vmem:[%s238 + $0x410] sm:%s230] %v369
                %v371 = vld [vmem:[%s237 + $0xd68] sm:%s230]
                %372 = vst [vmem:[%s238 + $0x420] sm:%s230] %v371
                %v373 = vld [vmem:[%s237 + $0xd9c] sm:%s230]
                %374 = vst [vmem:[%s238 + $0x430] sm:%s230] %v373
                %v375 = vld [vmem:[%s237 + $0xdd0] sm:%s230]
                %376 = vst [vmem:[%s238 + $0x440] sm:%s230] %v375
                %v377 = vld [vmem:[%s237 + $0xe04] sm:%s230]
                %378 = vst [vmem:[%s238 + $0x450] sm:%s230] %v377
                %v379 = vld [vmem:[%s237 + $0xe38] sm:%s230]
                %380 = vst [vmem:[%s238 + $0x460] sm:%s230] %v379
                %v381 = vld [vmem:[%s237 + $0xe6c] sm:%s230]
                %382 = vst [vmem:[%s238 + $0x470] sm:%s230] %v381
                %v383 = vld [vmem:[%s237 + $0xea0] sm:%s230]
                %384 = vst [vmem:[%s238 + $0x480] sm:%s230] %v383
                %v385 = vld [vmem:[%s237 + $0xed4] sm:%s230]
                %386 = vst [vmem:[%s238 + $0x490] sm:%s230] %v385
                %v387 = vld [vmem:[%s237 + $0xf08] sm:%s230]
                %388 = vst [vmem:[%s238 + $0x4a0] sm:%s230] %v387
                %v389 = vld [vmem:[%s237 + $0xf3c] sm:%s230]
                %390 = vst [vmem:[%s238 + $0x4b0] sm:%s230] %v389
                %v391 = vld [vmem:[%s237 + $0xf70] sm:%s230]
                %392 = vst [vmem:[%s238 + $0x4c0] sm:%s230] %v391
                %v393 = vld [vmem:[%s237 + $0xfa4] sm:%s230]
                %394 = vst [vmem:[%s238 + $0x4d0] sm:%s230] %v393
                %v395 = vld [vmem:[%s237 + $0xfd8] sm:%s230]
                %396 = vst [vmem:[%s238 + $0x4e0] sm:%s230] %v395
                %v397 = vld [vmem:[%s237 + $0x100c] sm:%s230]
                %398 = vst [vmem:[%s238 + $0x4f0] sm:%s230] %v397
                %v399 = vld [vmem:[%s237 + $0x1040] sm:%s230]
                %400 = vst [vmem:[%s238 + $0x500] sm:%s230] %v399
                %v401 = vld [vmem:[%s237 + $0x1074] sm:%s230]
                %402 = vst [vmem:[%s238 + $0x510] sm:%s230] %v401
                %v403 = vld [vmem:[%s237 + $0x10a8] sm:%s230]
                %404 = vst [vmem:[%s238 + $0x520] sm:%s230] %v403
                %v405 = vld [vmem:[%s237 + $0x10dc] sm:%s230]
                %406 = vst [vmem:[%s238 + $0x530] sm:%s230] %v405
                %v407 = vld [vmem:[%s237 + $0x1110] sm:%s230]
                %408 = vst [vmem:[%s238 + $0x540] sm:%s230] %v407
                %v409 = vld [vmem:[%s237 + $0x1144] sm:%s230]
                %410 = vst [vmem:[%s238 + $0x550] sm:%s230] %v409
                %v411 = vld [vmem:[%s237 + $0x1178] sm:%s230]
                %412 = vst [vmem:[%s238 + $0x560] sm:%s230] %v411
                %v413 = vld [vmem:[%s237 + $0x11ac] sm:%s230]
                %414 = vst [vmem:[%s238 + $0x570] sm:%s230] %v413
                %v415 = vld [vmem:[%s237 + $0x11e0] sm:%s230]
                %416 = vst [vmem:[%s238 + $0x580] sm:%s230] %v415
                %v417 = vld [vmem:[%s237 + $0x1214] sm:%s230]
                %418 = vst [vmem:[%s238 + $0x590] sm:%s230] %v417
                %v419 = vld [vmem:[%s237 + $0x1248] sm:%s230]
                %420 = vst [vmem:[%s238 + $0x5a0] sm:%s230] %v419
                %v421 = vld [vmem:[%s237 + $0x127c] sm:%s230]
                %422 = vst [vmem:[%s238 + $0x5b0] sm:%s230] %v421
                %v423 = vld [vmem:[%s237 + $0x12b0] sm:%s230]
                %424 = vst [vmem:[%s238 + $0x5c0] sm:%s230] %v423
                %v425 = vld [vmem:[%s237 + $0x12e4] sm:%s230]
                %426 = vst [vmem:[%s238 + $0x5d0] sm:%s230] %v425
                %v427 = vld [vmem:[%s237 + $0x1318] sm:%s230]
                %428 = vst [vmem:[%s238 + $0x5e0] sm:%s230] %v427
                %v429 = vld [vmem:[%s237 + $0x134c] sm:%s230]
                %430 = vst [vmem:[%s238 + $0x5f0] sm:%s230] %v429
                %v431 = vld [vmem:[%s237 + $0x1380] sm:%s230]
                %432 = vst [vmem:[%s238 + $0x600] sm:%s230] %v431
                %v433 = vld [vmem:[%s237 + $0x13b4] sm:%s230]
                %434 = vst [vmem:[%s238 + $0x610] sm:%s230] %v433
                %v435 = vld [vmem:[%s237 + $0x13e8] sm:%s230]
                %436 = vst [vmem:[%s238 + $0x620] sm:%s230] %v435
                %v437 = vld [vmem:[%s237 + $0x141c] sm:%s230]
                %438 = vst [vmem:[%s238 + $0x630] sm:%s230] %v437
                %v439 = vld [vmem:[%s237 + $0x1450] sm:%s230]
                %440 = vst [vmem:[%s238 + $0x640] sm:%s230] %v439
                %v441 = vld [vmem:[%s237 + $0x1484] sm:%s230]
                %442 = vst [vmem:[%s238 + $0x650] sm:%s230] %v441
                %v443 = vld [vmem:[%s237 + $0x14b8] sm:%s230]
                %444 = vst [vmem:[%s238 + $0x660] sm:%s230] %v443
                %v445 = vld [vmem:[%s237 + $0x14ec] sm:%s230]
                %446 = vst [vmem:[%s238 + $0x670] sm:%s230] %v445
                %v447 = vld [vmem:[%s237 + $0x1520] sm:%s230]
                %448 = vst [vmem:[%s238 + $0x680] sm:%s230] %v447
                %v449 = vld [vmem:[%s237 + $0x1554] sm:%s230]
                %450 = vst [vmem:[%s238 + $0x690] sm:%s230] %v449
                %v451 = vld [vmem:[%s237 + $0x1588] sm:%s230]
                %452 = vst [vmem:[%s238 + $0x6a0] sm:%s230] %v451
                %v453 = vld [vmem:[%s237 + $0x15bc] sm:%s230]
                %454 = vst [vmem:[%s238 + $0x6b0] sm:%s230] %v453
                %v455 = vld [vmem:[%s237 + $0x15f0] sm:%s230]
                %456 = vst [vmem:[%s238 + $0x6c0] sm:%s230] %v455
                %v457 = vld [vmem:[%s237 + $0x1624] sm:%s230]
                %458 = vst [vmem:[%s238 + $0x6d0] sm:%s230] %v457
                %v459 = vld [vmem:[%s237 + $0x1658] sm:%s230]
                %460 = vst [vmem:[%s238 + $0x6e0] sm:%s230] %v459
                %v461 = vld [vmem:[%s237 + $0x168c] sm:%s230]
                %462 = vst [vmem:[%s238 + $0x6f0] sm:%s230] %v461
                %v463 = vld [vmem:[%s237 + $0x16c0] sm:%s230]
                %464 = vst [vmem:[%s238 + $0x700] sm:%s230] %v463
                %v465 = vld [vmem:[%s237 + $0x16f4] sm:%s230]
                %466 = vst [vmem:[%s238 + $0x710] sm:%s230] %v465
                %v467 = vld [vmem:[%s237 + $0x1728] sm:%s230]
                %468 = vst [vmem:[%s238 + $0x720] sm:%s230] %v467
                %v469 = vld [vmem:[%s237 + $0x175c] sm:%s230]
                %470 = vst [vmem:[%s238 + $0x730] sm:%s230] %v469
                %v471 = vld [vmem:[%s237 + $0x1790] sm:%s230]
                %472 = vst [vmem:[%s238 + $0x740] sm:%s230] %v471
                %v473 = vld [vmem:[%s237 + $0x17c4] sm:%s230]
                %474 = vst [vmem:[%s238 + $0x750] sm:%s230] %v473
                %v475 = vld [vmem:[%s237 + $0x17f8] sm:%s230]
                %476 = vst [vmem:[%s238 + $0x760] sm:%s230] %v475
                %v477 = vld [vmem:[%s237 + $0x182c] sm:%s230]
                %478 = vst [vmem:[%s238 + $0x770] sm:%s230] %v477
                %v479 = vld [vmem:[%s237 + $0x1860] sm:%s230]
                %480 = vst [vmem:[%s238 + $0x780] sm:%s230] %v479
                %v481 = vld [vmem:[%s237 + $0x1894] sm:%s230]
                %482 = vst [vmem:[%s238 + $0x790] sm:%s230] %v481
                %v483 = vld [vmem:[%s237 + $0x18c8] sm:%s230]
                %484 = vst [vmem:[%s238 + $0x7a0] sm:%s230] %v483
                %v485 = vld [vmem:[%s237 + $0x18fc] sm:%s230]
                %486 = vst [vmem:[%s238 + $0x7b0] sm:%s230] %v485
                %v487 = vld [vmem:[%s237 + $0x1930] sm:%s230]
                %488 = vst [vmem:[%s238 + $0x7c0] sm:%s230] %v487
                %v489 = vld [vmem:[%s237 + $0x1964] sm:%s230]
                %490 = vst [vmem:[%s238 + $0x7d0] sm:%s230] %v489
                %v491 = vld [vmem:[%s237 + $0x1998] sm:%s230]
                %492 = vst [vmem:[%s238 + $0x7e0] sm:%s230] %v491
                %v493 = vld [vmem:[%s237 + $0x19cc] sm:%s230]
                %494 = vst [vmem:[%s238 + $0x7f0] sm:%s230] %v493
              $region41: #{lenet_forward.9} parent=35 // loop_footer
                %s236 = sadd.s32 1, %s232
              $region42: #{lenet_forward.9} parent=35 // loop_footer_branch
                %231 = sbr.rel target = $region38
              $region43: #{lenet_forward.9} parent=35 // loop_exit
                _
            $region36: #{lenet_forward.9} parent=27 // pred_fallthru
              _
          $region28: #{lenet_forward.9} parent=23 // pred_fallthru
            _
          %1323 = vnop
        $region24: #{lenet_forward.9} parent=15 // pred_fallthru
          _
        // Predicated region
        $region73: #{lenet_forward.9} parent=15 // pred_check
          %p1324 = pneg %p108
        $region74: #{lenet_forward.9} parent=15 // pred_check_branch
          %1326 = sbr.rel (%p1324) target = $region76
        $region75: #{lenet_forward.9} parent=15 // pred_region
          %s1327 = smul.u32 4, %s21
          %s1328 = ssub.s32 13, %s1327
          %p1329 = scmp.lt.s32.totalorder %s1328, 4
          %s1330 = scalar_select %p1329, %s1328, 4
          %s1331 = smul.u32 16, %s1330
          %p1332 = scmp.lt.s32.totalorder %s1327, 12
          %s1333 = scalar_select %p1332, %s1327, 12
          %s1334 = scalar_lea.vmem %s2, %s1333
          %s1335 = smul.u32 4, %s21
          %s1336 = ssub.s32 13, %s1335
          %p1337 = scmp.lt.s32.totalorder %s1336, 4
          %s1338 = scalar_select %p1337, %s1336, 4
          %s1339 = smul.u32 16, %s1338
        $region76: #{lenet_forward.9} parent=15 // pred_fallthru
          _
        // Predicated region
        $region77: #{lenet_forward.9} parent=15 // pred_check
          %p1340 = pneg %p136
        $region78: #{lenet_forward.9} parent=15 // pred_check_branch
          %1342 = sbr.rel (%p1340) target = $region80
        $region79: #{lenet_forward.9} parent=15 // pred_region
          %s1343 = smul.u32 4, %s21
          %s1344 = ssub.s32 13, %s1343
          %p1345 = scmp.lt.s32.totalorder %s1344, 4
          %s1346 = scalar_select %p1345, %s1344, 4
          %s1347 = smul.u32 32, %s1346
          %p1348 = scmp.lt.s32.totalorder %s20, 0
          %s1349 = scalar_select %p1348, %s20, 0
          %p1350 = scmp.lt.s32.totalorder %s1343, 12
          %s1351 = scalar_select %p1350, %s1343, 12
          %s1352 = smul.addr %s1349, 13
          %s1353 = sadd.s32 %s1351, %s1352
          %s1354 = smul.addr %s1353, 2
          %s1355 = scalar_lea.vmem %s3, %s1354
          %s1356 = smul.u32 4, %s21
          %s1357 = ssub.s32 13, %s1356
          %p1358 = scmp.lt.s32.totalorder %s1357, 4
          %s1359 = scalar_select %p1358, %s1357, 4
          %s1360 = smul.u32 32, %s1359
        $region80: #{lenet_forward.9} parent=15 // pred_fallthru
          _
      $region16: #{lenet_forward.9} parent=5 // pred_fallthru
        _
      %p1361 = scmp.le.s32.totalorder 1, %s13
      %p1362 = scmp.lt.s32.totalorder %s13, 17
      %p1363 = pnand %p1361, %p1362
      %p1364 = pneg %p1363
      // Predicated region
      $region81: #{lenet_forward.9} parent=5 // pred_check
        _
      $region82: #{lenet_forward.9} parent=5 // pred_check_branch
        %1366 = sbr.rel (%p1363) target = $region84
      $region83: #{lenet_forward.9} parent=5 // pred_region
        %s1367 = ssub.s32 %s13, 1
        %s1368 = sand.u32 %s75, 1
        %s1369 = sand.u32 %s75, 1
        %s1370 = smul.addr %s1369, 2048
        %s1371 = scalar_lea.vmem [#allocation3], %s1370
        // Predicated region
        $region85: #{lenet_forward.9} parent=83 // pred_check
          %p1372 = pneg %p88
        $region86: #{lenet_forward.9} parent=83 // pred_check_branch
          %1374 = sbr.rel (%p1372) target = $region88
        $region87: #{lenet_forward.9} parent=83 // pred_region
          _
        $region88: #{lenet_forward.9} parent=83 // pred_fallthru
          _
        %s1375 = smul.u32 8, %s25
        %p1376 = scmp.lt.s32.totalorder %s23, 0
        %s1377 = scalar_select %p1376, %s23, 0
        %p1378 = scmp.lt.s32.totalorder %s1375, 31
        %s1379 = scalar_select %p1378, %s1375, 31
        %s1380 = smul.addr %s1377, 32
        %s1381 = sadd.s32 %s1379, %s1380
        %s1382 = scalar_lea.vmem %s0, %s1381
        %p1383 = pneg %p60
        %p1384 = pneg %p57
        %s1385 = sand.u32 %s75, 1
        %s1386 = sand.u32 %s75, 1
        %s1387 = smul.addr %s1386, 2048
        %s1388 = scalar_lea.vmem [#allocation3], %s1387
        %p1389 = pneg %p88
        %p1390 = pneg %p85
        %s1391 = smul.u32 4, %s24
        %s1392 = ssub.s32 13, %s1391
        %p1393 = scmp.lt.s32.totalorder %s1392, 4
        %s1394 = scalar_select %p1393, %s1392, 4
        %s1395 = smul.u32 16, %s1394
        %p1396 = scmp.lt.s32.totalorder %s1391, 12
        %s1397 = scalar_select %p1396, %s1391, 12
        %s1398 = scalar_lea.vmem %s2, %s1397
        %p1399 = pneg %p114
        %p1400 = pneg %p111
        %s1401 = smul.u32 4, %s24
        %s1402 = ssub.s32 13, %s1401
        %p1403 = scmp.lt.s32.totalorder %s1402, 4
        %s1404 = scalar_select %p1403, %s1402, 4
        %s1405 = smul.u32 32, %s1404
        %p1406 = scmp.lt.s32.totalorder %s23, 0
        %s1407 = scalar_select %p1406, %s23, 0
        %p1408 = scmp.lt.s32.totalorder %s1401, 12
        %s1409 = scalar_select %p1408, %s1401, 12
        %s1410 = smul.addr %s1407, 13
        %s1411 = sadd.s32 %s1409, %s1410
        %s1412 = smul.addr %s1411, 2
        %s1413 = scalar_lea.vmem %s3, %s1412
        %p1414 = pneg %p142
        %p1415 = pneg %p139
        %p1416 = pneg %p170
        %p1417 = pneg %p167
        %s1418 = sand.u32 %s157, 1
        %s1419 = scalar_lea.sflag [#allocation5], %s1418
        %s1420 = sand.u32 %s157, 1
        %s1421 = smul.addr %s1420, 8
        %s1422 = scalar_lea.vmem [#allocation4], %s1421
        %s1423 = smul.u32 8, %s25
        %p1424 = scmp.lt.s32.totalorder %s23, 0
        %s1425 = scalar_select %p1424, %s23, 0
        %p1426 = scmp.lt.s32.totalorder %s1423, 31
        %s1427 = scalar_select %p1426, %s1423, 31
        %s1428 = smul.addr %s1425, 32
        %s1429 = sadd.s32 %s1427, %s1428
        %s1430 = scalar_lea.vmem %s0, %s1429
        %s1431 = smul.u32 8, %s25
        %s1432 = smul.u32 128, %s25
        %s1433 = smul.u32 4, %s24
        %s1434 = ssub.s32 13, %s1433
        %p1435 = scmp.lt.s32.totalorder %s1434, 4
        %s1436 = scalar_select %p1435, %s1434, 4
        %s1437 = smul.u32 8192, %s1436
        %s1438 = smul.u32 4, %s24
        %s1439 = ssub.s32 13, %s1438
        %p1440 = scmp.lt.s32.totalorder %s1439, 4
        %s1441 = scalar_select %p1440, %s1439, 4
        %s1442 = smul.u32 16, %s1441
        %p1443 = scmp.lt.s32.totalorder %s1438, 12
        %s1444 = scalar_select %p1443, %s1438, 12
        %s1445 = scalar_lea.vmem %s2, %s1444
        %s1446 = smul.u32 4, %s24
        %s1447 = ssub.s32 13, %s1446
        %p1448 = scmp.lt.s32.totalorder %s1447, 4
        %s1449 = scalar_select %p1448, %s1447, 4
        %s1450 = smul.u32 16, %s1449
        %s1451 = smul.u32 4, %s24
        %s1452 = ssub.s32 13, %s1451
        %p1453 = scmp.lt.s32.totalorder %s1452, 4
        %s1454 = scalar_select %p1453, %s1452, 4
        %s1455 = smul.u32 32, %s1454
        %p1456 = scmp.lt.s32.totalorder %s23, 0
        %s1457 = scalar_select %p1456, %s23, 0
        %p1458 = scmp.lt.s32.totalorder %s1451, 12
        %s1459 = scalar_select %p1458, %s1451, 12
        %s1460 = smul.addr %s1457, 13
        %s1461 = sadd.s32 %s1459, %s1460
        %s1462 = smul.addr %s1461, 2
        %s1463 = scalar_lea.vmem %s3, %s1462
        %s1464 = smul.u32 4, %s24
        %s1465 = ssub.s32 13, %s1464
        %p1466 = scmp.lt.s32.totalorder %s1465, 4
        %s1467 = scalar_select %p1466, %s1465, 4
        %s1468 = smul.u32 32, %s1467
        %s1469 = smul.u32 4, %s24
        %s1470 = ssub.s32 13, %s1469
        %p1471 = scmp.lt.s32.totalorder %s1470, 4
        %s1472 = scalar_select %p1471, %s1470, 4
        %s1473 = smul.u32 32, %s1472
        %p1474 = scmp.eq.s32.totalorder %s25, 0
        // Predicated region
        $region89: #{lenet_forward.9} parent=83 // pred_check
          %p1475 = pneg %p1474
        $region90: #{lenet_forward.9} parent=83 // pred_check_branch
          %1477 = sbr.rel (%p1475) target = $region92
        $region91: #{lenet_forward.9} parent=83 // pred_region
          %1478 = vst [vmem:[#allocation2] sm:$0xff] 0.0
        $region92: #{lenet_forward.9} parent=83 // pred_fallthru
          _
        %v1479 = vld [vmem:[#allocation2] sm:$0xff]
        %v1480 = vld [vmem:[%s1430] sm:$0xff]
        %v1481 = vld [vmem:[%s1371] sm:$0xff]
        %v1482 = vld [vmem:[%s1371 + $0x8] sm:$0xff]
        %v1483 = vld [vmem:[%s1371 + $0x10] sm:$0xff]
        %v1484 = vld [vmem:[%s1371 + $0x18] sm:$0xff]
        %v1485 = vld [vmem:[%s1371 + $0x20] sm:$0xff]
        %v1486 = vld [vmem:[%s1371 + $0x28] sm:$0xff]
        %v1487 = vld [vmem:[%s1371 + $0x30] sm:$0xff]
        %v1488 = vld [vmem:[%s1371 + $0x38] sm:$0xff]
        %v1489 = vld [vmem:[%s1371 + $0x40] sm:$0xff]
        %v1490 = vld [vmem:[%s1371 + $0x48] sm:$0xff]
        %v1491 = vld [vmem:[%s1371 + $0x50] sm:$0xff]
        %v1492 = vld [vmem:[%s1371 + $0x58] sm:$0xff]
        %v1493 = vld [vmem:[%s1371 + $0x60] sm:$0xff]
        %v1494 = vld [vmem:[%s1371 + $0x68] sm:$0xff]
        %v1495 = vld [vmem:[%s1371 + $0x70] sm:$0xff]
        %v1496 = vld [vmem:[%s1371 + $0x78] sm:$0xff]
        %v1497 = vld [vmem:[%s1371 + $0x80] sm:$0xff]
        %v1498 = vld [vmem:[%s1371 + $0x88] sm:$0xff]
        %v1499 = vld [vmem:[%s1371 + $0x90] sm:$0xff]
        %v1500 = vld [vmem:[%s1371 + $0x98] sm:$0xff]
        %v1501 = vld [vmem:[%s1371 + $0xa0] sm:$0xff]
        %v1502 = vld [vmem:[%s1371 + $0xa8] sm:$0xff]
        %v1503 = vld [vmem:[%s1371 + $0xb0] sm:$0xff]
        %v1504 = vld [vmem:[%s1371 + $0xb8] sm:$0xff]
        %v1505 = vld [vmem:[%s1371 + $0xc0] sm:$0xff]
        %v1506 = vld [vmem:[%s1371 + $0xc8] sm:$0xff]
        %v1507 = vld [vmem:[%s1371 + $0xd0] sm:$0xff]
        %v1508 = vld [vmem:[%s1371 + $0xd8] sm:$0xff]
        %v1509 = vld [vmem:[%s1371 + $0xe0] sm:$0xff]
        %v1510 = vld [vmem:[%s1371 + $0xe8] sm:$0xff]
        %v1511 = vld [vmem:[%s1371 + $0xf0] sm:$0xff]
        %v1512 = vld [vmem:[%s1371 + $0xf8] sm:$0xff]
        %v1513 = vld [vmem:[%s1371 + $0x100] sm:$0xff]
        %v1514 = vld [vmem:[%s1371 + $0x108] sm:$0xff]
        %v1515 = vld [vmem:[%s1371 + $0x110] sm:$0xff]
        %v1516 = vld [vmem:[%s1371 + $0x118] sm:$0xff]
        %v1517 = vld [vmem:[%s1371 + $0x120] sm:$0xff]
        %v1518 = vld [vmem:[%s1371 + $0x128] sm:$0xff]
        %v1519 = vld [vmem:[%s1371 + $0x130] sm:$0xff]
        %v1520 = vld [vmem:[%s1371 + $0x138] sm:$0xff]
        %v1521 = vld [vmem:[%s1371 + $0x140] sm:$0xff]
        %v1522 = vld [vmem:[%s1371 + $0x148] sm:$0xff]
        %v1523 = vld [vmem:[%s1371 + $0x150] sm:$0xff]
        %v1524 = vld [vmem:[%s1371 + $0x158] sm:$0xff]
        %v1525 = vld [vmem:[%s1371 + $0x160] sm:$0xff]
        %v1526 = vld [vmem:[%s1371 + $0x168] sm:$0xff]
        %v1527 = vld [vmem:[%s1371 + $0x170] sm:$0xff]
        %v1528 = vld [vmem:[%s1371 + $0x178] sm:$0xff]
        %v1529 = vld [vmem:[%s1371 + $0x180] sm:$0xff]
        %v1530 = vld [vmem:[%s1371 + $0x188] sm:$0xff]
        %v1531 = vld [vmem:[%s1371 + $0x190] sm:$0xff]
        %v1532 = vld [vmem:[%s1371 + $0x198] sm:$0xff]
        %v1533 = vld [vmem:[%s1371 + $0x1a0] sm:$0xff]
        %v1534 = vld [vmem:[%s1371 + $0x1a8] sm:$0xff]
        %v1535 = vld [vmem:[%s1371 + $0x1b0] sm:$0xff]
        %v1536 = vld [vmem:[%s1371 + $0x1b8] sm:$0xff]
        %v1537 = vld [vmem:[%s1371 + $0x1c0] sm:$0xff]
        %v1538 = vld [vmem:[%s1371 + $0x1c8] sm:$0xff]
        %v1539 = vld [vmem:[%s1371 + $0x1d0] sm:$0xff]
        %v1540 = vld [vmem:[%s1371 + $0x1d8] sm:$0xff]
        %v1541 = vld [vmem:[%s1371 + $0x1e0] sm:$0xff]
        %v1542 = vld [vmem:[%s1371 + $0x1e8] sm:$0xff]
        %v1543 = vld [vmem:[%s1371 + $0x1f0] sm:$0xff]
        %v1544 = vld [vmem:[%s1371 + $0x1f8] sm:$0xff]
        %v1545 = vld [vmem:[%s1371 + $0x200] sm:$0xff]
        %v1546 = vld [vmem:[%s1371 + $0x208] sm:$0xff]
        %v1547 = vld [vmem:[%s1371 + $0x210] sm:$0xff]
        %v1548 = vld [vmem:[%s1371 + $0x218] sm:$0xff]
        %v1549 = vld [vmem:[%s1371 + $0x220] sm:$0xff]
        %v1550 = vld [vmem:[%s1371 + $0x228] sm:$0xff]
        %v1551 = vld [vmem:[%s1371 + $0x230] sm:$0xff]
        %v1552 = vld [vmem:[%s1371 + $0x238] sm:$0xff]
        %v1553 = vld [vmem:[%s1371 + $0x240] sm:$0xff]
        %v1554 = vld [vmem:[%s1371 + $0x248] sm:$0xff]
        %v1555 = vld [vmem:[%s1371 + $0x250] sm:$0xff]
        %v1556 = vld [vmem:[%s1371 + $0x258] sm:$0xff]
        %v1557 = vld [vmem:[%s1371 + $0x260] sm:$0xff]
        %v1558 = vld [vmem:[%s1371 + $0x268] sm:$0xff]
        %v1559 = vld [vmem:[%s1371 + $0x270] sm:$0xff]
        %v1560 = vld [vmem:[%s1371 + $0x278] sm:$0xff]
        %v1561 = vld [vmem:[%s1371 + $0x280] sm:$0xff]
        %v1562 = vld [vmem:[%s1371 + $0x288] sm:$0xff]
        %v1563 = vld [vmem:[%s1371 + $0x290] sm:$0xff]
        %v1564 = vld [vmem:[%s1371 + $0x298] sm:$0xff]
        %v1565 = vld [vmem:[%s1371 + $0x2a0] sm:$0xff]
        %v1566 = vld [vmem:[%s1371 + $0x2a8] sm:$0xff]
        %v1567 = vld [vmem:[%s1371 + $0x2b0] sm:$0xff]
        %v1568 = vld [vmem:[%s1371 + $0x2b8] sm:$0xff]
        %v1569 = vld [vmem:[%s1371 + $0x2c0] sm:$0xff]
        %v1570 = vld [vmem:[%s1371 + $0x2c8] sm:$0xff]
        %v1571 = vld [vmem:[%s1371 + $0x2d0] sm:$0xff]
        %v1572 = vld [vmem:[%s1371 + $0x2d8] sm:$0xff]
        %v1573 = vld [vmem:[%s1371 + $0x2e0] sm:$0xff]
        %v1574 = vld [vmem:[%s1371 + $0x2e8] sm:$0xff]
        %v1575 = vld [vmem:[%s1371 + $0x2f0] sm:$0xff]
        %v1576 = vld [vmem:[%s1371 + $0x2f8] sm:$0xff]
        %v1577 = vld [vmem:[%s1371 + $0x300] sm:$0xff]
        %v1578 = vld [vmem:[%s1371 + $0x308] sm:$0xff]
        %v1579 = vld [vmem:[%s1371 + $0x310] sm:$0xff]
        %v1580 = vld [vmem:[%s1371 + $0x318] sm:$0xff]
        %v1581 = vld [vmem:[%s1371 + $0x320] sm:$0xff]
        %v1582 = vld [vmem:[%s1371 + $0x328] sm:$0xff]
        %v1583 = vld [vmem:[%s1371 + $0x330] sm:$0xff]
        %v1584 = vld [vmem:[%s1371 + $0x338] sm:$0xff]
        %v1585 = vld [vmem:[%s1371 + $0x340] sm:$0xff]
        %v1586 = vld [vmem:[%s1371 + $0x348] sm:$0xff]
        %v1587 = vld [vmem:[%s1371 + $0x350] sm:$0xff]
        %v1588 = vld [vmem:[%s1371 + $0x358] sm:$0xff]
        %v1589 = vld [vmem:[%s1371 + $0x360] sm:$0xff]
        %v1590 = vld [vmem:[%s1371 + $0x368] sm:$0xff]
        %v1591 = vld [vmem:[%s1371 + $0x370] sm:$0xff]
        %v1592 = vld [vmem:[%s1371 + $0x378] sm:$0xff]
        %v1593 = vld [vmem:[%s1371 + $0x380] sm:$0xff]
        %v1594 = vld [vmem:[%s1371 + $0x388] sm:$0xff]
        %v1595 = vld [vmem:[%s1371 + $0x390] sm:$0xff]
        %v1596 = vld [vmem:[%s1371 + $0x398] sm:$0xff]
        %v1597 = vld [vmem:[%s1371 + $0x3a0] sm:$0xff]
        %v1598 = vld [vmem:[%s1371 + $0x3a8] sm:$0xff]
        %v1599 = vld [vmem:[%s1371 + $0x3b0] sm:$0xff]
        %v1600 = vld [vmem:[%s1371 + $0x3b8] sm:$0xff]
        %v1601 = vld [vmem:[%s1371 + $0x3c0] sm:$0xff]
        %v1602 = vld [vmem:[%s1371 + $0x3c8] sm:$0xff]
        %v1603 = vld [vmem:[%s1371 + $0x3d0] sm:$0xff]
        %v1604 = vld [vmem:[%s1371 + $0x3d8] sm:$0xff]
        %v1605 = vld [vmem:[%s1371 + $0x3e0] sm:$0xff]
        %v1606 = vld [vmem:[%s1371 + $0x3e8] sm:$0xff]
        %v1607 = vld [vmem:[%s1371 + $0x3f0] sm:$0xff]
        %v1608 = vld [vmem:[%s1371 + $0x3f8] sm:$0xff]
        %v1609 = vld [vmem:[%s1371 + $0x400] sm:$0xff]
        %v1610 = vld [vmem:[%s1371 + $0x408] sm:$0xff]
        %v1611 = vld [vmem:[%s1371 + $0x410] sm:$0xff]
        %v1612 = vld [vmem:[%s1371 + $0x418] sm:$0xff]
        %v1613 = vld [vmem:[%s1371 + $0x420] sm:$0xff]
        %v1614 = vld [vmem:[%s1371 + $0x428] sm:$0xff]
        %v1615 = vld [vmem:[%s1371 + $0x430] sm:$0xff]
        %v1616 = vld [vmem:[%s1371 + $0x438] sm:$0xff]
        %v1617 = vld [vmem:[%s1371 + $0x440] sm:$0xff]
        %v1618 = vld [vmem:[%s1371 + $0x448] sm:$0xff]
        %v1619 = vld [vmem:[%s1371 + $0x450] sm:$0xff]
        %v1620 = vld [vmem:[%s1371 + $0x458] sm:$0xff]
        %v1621 = vld [vmem:[%s1371 + $0x460] sm:$0xff]
        %v1622 = vld [vmem:[%s1371 + $0x468] sm:$0xff]
        %v1623 = vld [vmem:[%s1371 + $0x470] sm:$0xff]
        %v1624 = vld [vmem:[%s1371 + $0x478] sm:$0xff]
        %v1625 = vld [vmem:[%s1371 + $0x480] sm:$0xff]
        %v1626 = vld [vmem:[%s1371 + $0x488] sm:$0xff]
        %v1627 = vld [vmem:[%s1371 + $0x490] sm:$0xff]
        %v1628 = vld [vmem:[%s1371 + $0x498] sm:$0xff]
        %v1629 = vld [vmem:[%s1371 + $0x4a0] sm:$0xff]
        %v1630 = vld [vmem:[%s1371 + $0x4a8] sm:$0xff]
        %v1631 = vld [vmem:[%s1371 + $0x4b0] sm:$0xff]
        %v1632 = vld [vmem:[%s1371 + $0x4b8] sm:$0xff]
        %v1633 = vld [vmem:[%s1371 + $0x4c0] sm:$0xff]
        %v1634 = vld [vmem:[%s1371 + $0x4c8] sm:$0xff]
        %v1635 = vld [vmem:[%s1371 + $0x4d0] sm:$0xff]
        %v1636 = vld [vmem:[%s1371 + $0x4d8] sm:$0xff]
        %v1637 = vld [vmem:[%s1371 + $0x4e0] sm:$0xff]
        %v1638 = vld [vmem:[%s1371 + $0x4e8] sm:$0xff]
        %v1639 = vld [vmem:[%s1371 + $0x4f0] sm:$0xff]
        %v1640 = vld [vmem:[%s1371 + $0x4f8] sm:$0xff]
        %v1641 = vld [vmem:[%s1371 + $0x500] sm:$0xff]
        %v1642 = vld [vmem:[%s1371 + $0x508] sm:$0xff]
        %v1643 = vld [vmem:[%s1371 + $0x510] sm:$0xff]
        %v1644 = vld [vmem:[%s1371 + $0x518] sm:$0xff]
        %v1645 = vld [vmem:[%s1371 + $0x520] sm:$0xff]
        %v1646 = vld [vmem:[%s1371 + $0x528] sm:$0xff]
        %v1647 = vld [vmem:[%s1371 + $0x530] sm:$0xff]
        %v1648 = vld [vmem:[%s1371 + $0x538] sm:$0xff]
        %v1649 = vld [vmem:[%s1371 + $0x540] sm:$0xff]
        %v1650 = vld [vmem:[%s1371 + $0x548] sm:$0xff]
        %v1651 = vld [vmem:[%s1371 + $0x550] sm:$0xff]
        %v1652 = vld [vmem:[%s1371 + $0x558] sm:$0xff]
        %v1653 = vld [vmem:[%s1371 + $0x560] sm:$0xff]
        %v1654 = vld [vmem:[%s1371 + $0x568] sm:$0xff]
        %v1655 = vld [vmem:[%s1371 + $0x570] sm:$0xff]
        %v1656 = vld [vmem:[%s1371 + $0x578] sm:$0xff]
        %v1657 = vld [vmem:[%s1371 + $0x580] sm:$0xff]
        %v1658 = vld [vmem:[%s1371 + $0x588] sm:$0xff]
        %v1659 = vld [vmem:[%s1371 + $0x590] sm:$0xff]
        %v1660 = vld [vmem:[%s1371 + $0x598] sm:$0xff]
        %v1661 = vld [vmem:[%s1371 + $0x5a0] sm:$0xff]
        %v1662 = vld [vmem:[%s1371 + $0x5a8] sm:$0xff]
        %v1663 = vld [vmem:[%s1371 + $0x5b0] sm:$0xff]
        %v1664 = vld [vmem:[%s1371 + $0x5b8] sm:$0xff]
        %v1665 = vld [vmem:[%s1371 + $0x5c0] sm:$0xff]
        %v1666 = vld [vmem:[%s1371 + $0x5c8] sm:$0xff]
        %v1667 = vld [vmem:[%s1371 + $0x5d0] sm:$0xff]
        %v1668 = vld [vmem:[%s1371 + $0x5d8] sm:$0xff]
        %v1669 = vld [vmem:[%s1371 + $0x5e0] sm:$0xff]
        %v1670 = vld [vmem:[%s1371 + $0x5e8] sm:$0xff]
        %v1671 = vld [vmem:[%s1371 + $0x5f0] sm:$0xff]
        %v1672 = vld [vmem:[%s1371 + $0x5f8] sm:$0xff]
        %v1673 = vld [vmem:[%s1371 + $0x600] sm:$0xff]
        %v1674 = vld [vmem:[%s1371 + $0x608] sm:$0xff]
        %v1675 = vld [vmem:[%s1371 + $0x610] sm:$0xff]
        %v1676 = vld [vmem:[%s1371 + $0x618] sm:$0xff]
        %v1677 = vld [vmem:[%s1371 + $0x620] sm:$0xff]
        %v1678 = vld [vmem:[%s1371 + $0x628] sm:$0xff]
        %v1679 = vld [vmem:[%s1371 + $0x630] sm:$0xff]
        %v1680 = vld [vmem:[%s1371 + $0x638] sm:$0xff]
        %v1681 = vld [vmem:[%s1371 + $0x640] sm:$0xff]
        %v1682 = vld [vmem:[%s1371 + $0x648] sm:$0xff]
        %v1683 = vld [vmem:[%s1371 + $0x650] sm:$0xff]
        %v1684 = vld [vmem:[%s1371 + $0x658] sm:$0xff]
        %v1685 = vld [vmem:[%s1371 + $0x660] sm:$0xff]
        %v1686 = vld [vmem:[%s1371 + $0x668] sm:$0xff]
        %v1687 = vld [vmem:[%s1371 + $0x670] sm:$0xff]
        %v1688 = vld [vmem:[%s1371 + $0x678] sm:$0xff]
        %v1689 = vld [vmem:[%s1371 + $0x680] sm:$0xff]
        %v1690 = vld [vmem:[%s1371 + $0x688] sm:$0xff]
        %v1691 = vld [vmem:[%s1371 + $0x690] sm:$0xff]
        %v1692 = vld [vmem:[%s1371 + $0x698] sm:$0xff]
        %v1693 = vld [vmem:[%s1371 + $0x6a0] sm:$0xff]
        %v1694 = vld [vmem:[%s1371 + $0x6a8] sm:$0xff]
        %v1695 = vld [vmem:[%s1371 + $0x6b0] sm:$0xff]
        %v1696 = vld [vmem:[%s1371 + $0x6b8] sm:$0xff]
        %v1697 = vld [vmem:[%s1371 + $0x6c0] sm:$0xff]
        %v1698 = vld [vmem:[%s1371 + $0x6c8] sm:$0xff]
        %v1699 = vld [vmem:[%s1371 + $0x6d0] sm:$0xff]
        %v1700 = vld [vmem:[%s1371 + $0x6d8] sm:$0xff]
        %v1701 = vld [vmem:[%s1371 + $0x6e0] sm:$0xff]
        %v1702 = vld [vmem:[%s1371 + $0x6e8] sm:$0xff]
        %v1703 = vld [vmem:[%s1371 + $0x6f0] sm:$0xff]
        %v1704 = vld [vmem:[%s1371 + $0x6f8] sm:$0xff]
        %v1705 = vld [vmem:[%s1371 + $0x700] sm:$0xff]
        %v1706 = vld [vmem:[%s1371 + $0x708] sm:$0xff]
        %v1707 = vld [vmem:[%s1371 + $0x710] sm:$0xff]
        %v1708 = vld [vmem:[%s1371 + $0x718] sm:$0xff]
        %v1709 = vld [vmem:[%s1371 + $0x720] sm:$0xff]
        %v1710 = vld [vmem:[%s1371 + $0x728] sm:$0xff]
        %v1711 = vld [vmem:[%s1371 + $0x730] sm:$0xff]
        %v1712 = vld [vmem:[%s1371 + $0x738] sm:$0xff]
        %v1713 = vld [vmem:[%s1371 + $0x740] sm:$0xff]
        %v1714 = vld [vmem:[%s1371 + $0x748] sm:$0xff]
        %v1715 = vld [vmem:[%s1371 + $0x750] sm:$0xff]
        %v1716 = vld [vmem:[%s1371 + $0x758] sm:$0xff]
        %v1717 = vld [vmem:[%s1371 + $0x760] sm:$0xff]
        %v1718 = vld [vmem:[%s1371 + $0x768] sm:$0xff]
        %v1719 = vld [vmem:[%s1371 + $0x770] sm:$0xff]
        %v1720 = vld [vmem:[%s1371 + $0x778] sm:$0xff]
        %v1721 = vld [vmem:[%s1371 + $0x780] sm:$0xff]
        %v1722 = vld [vmem:[%s1371 + $0x788] sm:$0xff]
        %v1723 = vld [vmem:[%s1371 + $0x790] sm:$0xff]
        %v1724 = vld [vmem:[%s1371 + $0x798] sm:$0xff]
        %v1725 = vld [vmem:[%s1371 + $0x7a0] sm:$0xff]
        %v1726 = vld [vmem:[%s1371 + $0x7a8] sm:$0xff]
        %v1727 = vld [vmem:[%s1371 + $0x7b0] sm:$0xff]
        %v1728 = vld [vmem:[%s1371 + $0x7b8] sm:$0xff]
        %v1729 = vld [vmem:[%s1371 + $0x7c0] sm:$0xff]
        %v1730 = vld [vmem:[%s1371 + $0x7c8] sm:$0xff]
        %v1731 = vld [vmem:[%s1371 + $0x7d0] sm:$0xff]
        %v1732 = vld [vmem:[%s1371 + $0x7d8] sm:$0xff]
        %v1733 = vld [vmem:[%s1371 + $0x7e0] sm:$0xff]
        %v1734 = vld [vmem:[%s1371 + $0x7e8] sm:$0xff]
        %v1735 = vld [vmem:[%s1371 + $0x7f0] sm:$0xff]
        %v1736 = vld [vmem:[%s1371 + $0x7f8] sm:$0xff]
        %v1738 = vcombine.high %v1480, %v1480
        %v1740 = vunpack.c.l.s4 1966171168
        %v1741 = vunpack.c.0.s8 %v1740
        %v1742 = vlaneseq
        %v1743 = vshrl.u32 %v1742, 7
        %v1744 = vsub.s32 %v1741, %v1743
        %v1745 = vrot.slane %v1480, %v1744
        %v1747 = vunpack.c.l.s4 1966171168
        %v1748 = vunpack.c.0.s8 %v1747
        %v1749 = vlaneseq
        %v1750 = vshrl.u32 %v1749, 7
        %v1751 = vsub.s32 %v1748, %v1750
        %v1752 = vrot.slane %v1738, %v1751
        %v1753 = vcombine.high %v1745, %v1745
        %v1754 = vcombine.high %v1752, %v1752
        %v1756 = vunpack.c.l.s4 1966171168
        %v1757 = vunpack.c.0.s8 %v1756
        %v1758 = vlaneseq
        %v1759 = vshrl.u32 %v1758, 7
        %v1760 = vsub.s32 %v1757, %v1759
        %v1761 = vrot.slane %v1745, %v1760
        %v1763 = vunpack.c.l.s4 1966171168
        %v1764 = vunpack.c.0.s8 %v1763
        %v1765 = vlaneseq
        %v1766 = vshrl.u32 %v1765, 7
        %v1767 = vsub.s32 %v1764, %v1766
        %v1768 = vrot.slane %v1752, %v1767
        %v1770 = vunpack.c.l.s4 1966171168
        %v1771 = vunpack.c.0.s8 %v1770
        %v1772 = vlaneseq
        %v1773 = vshrl.u32 %v1772, 7
        %v1774 = vsub.s32 %v1771, %v1773
        %v1775 = vrot.slane %v1753, %v1774
        %v1777 = vunpack.c.l.s4 1966171168
        %v1778 = vunpack.c.0.s8 %v1777
        %v1779 = vlaneseq
        %v1780 = vshrl.u32 %v1779, 7
        %v1781 = vsub.s32 %v1778, %v1780
        %v1782 = vrot.slane %v1754, %v1781
        %v1783 = vcombine.high %v1761, %v1761
        %v1784 = vcombine.high %v1768, %v1768
        %v1785 = vcombine.high %v1775, %v1775
        %v1786 = vcombine.high %v1782, %v1782
        %v2051 = vunpack.c.l.b16 %v1481
        %v2052 = vunpack.c.h.b16 %v1481
        %v2053 = vunpack.c.l.b16 %v1482
        %v2054 = vunpack.c.h.b16 %v1482
        %v2055 = vunpack.c.l.b16 %v1483
        %v2056 = vunpack.c.h.b16 %v1483
        %v2057 = vunpack.c.l.b16 %v1484
        %v2058 = vunpack.c.h.b16 %v1484
        %v2059 = vunpack.c.l.b16 %v1485
        %v2060 = vunpack.c.h.b16 %v1485
        %v2061 = vunpack.c.l.b16 %v1486
        %v2062 = vunpack.c.h.b16 %v1486
        %v2063 = vunpack.c.l.b16 %v1487
        %v2064 = vunpack.c.h.b16 %v1487
        %v2065 = vunpack.c.l.b16 %v1488
        %v2066 = vunpack.c.h.b16 %v1488
        %v2067 = vunpack.c.l.b16 %v1489
        %v2068 = vunpack.c.h.b16 %v1489
        %v2069 = vunpack.c.l.b16 %v1490
        %v2070 = vunpack.c.h.b16 %v1490
        %v2071 = vunpack.c.l.b16 %v1491
        %v2072 = vunpack.c.h.b16 %v1491
        %v2073 = vunpack.c.l.b16 %v1492
        %v2074 = vunpack.c.h.b16 %v1492
        %v2075 = vunpack.c.l.b16 %v1493
        %v2076 = vunpack.c.h.b16 %v1493
        %v2077 = vunpack.c.l.b16 %v1494
        %v2078 = vunpack.c.h.b16 %v1494
        %v2079 = vunpack.c.l.b16 %v1495
        %v2080 = vunpack.c.h.b16 %v1495
        %v2081 = vunpack.c.l.b16 %v1496
        %v2082 = vunpack.c.h.b16 %v1496
        %v2083 = vunpack.c.l.b16 %v1497
        %v2084 = vunpack.c.h.b16 %v1497
        %v2085 = vunpack.c.l.b16 %v1498
        %v2086 = vunpack.c.h.b16 %v1498
        %v2087 = vunpack.c.l.b16 %v1499
        %v2088 = vunpack.c.h.b16 %v1499
        %v2089 = vunpack.c.l.b16 %v1500
        %v2090 = vunpack.c.h.b16 %v1500
        %v2091 = vunpack.c.l.b16 %v1501
        %v2092 = vunpack.c.h.b16 %v1501
        %v2093 = vunpack.c.l.b16 %v1502
        %v2094 = vunpack.c.h.b16 %v1502
        %v2095 = vunpack.c.l.b16 %v1503
        %v2096 = vunpack.c.h.b16 %v1503
        %v2097 = vunpack.c.l.b16 %v1504
        %v2098 = vunpack.c.h.b16 %v1504
        %v2099 = vunpack.c.l.b16 %v1505
        %v2100 = vunpack.c.h.b16 %v1505
        %v2101 = vunpack.c.l.b16 %v1506
        %v2102 = vunpack.c.h.b16 %v1506
        %v2103 = vunpack.c.l.b16 %v1507
        %v2104 = vunpack.c.h.b16 %v1507
        %v2105 = vunpack.c.l.b16 %v1508
        %v2106 = vunpack.c.h.b16 %v1508
        %v2107 = vunpack.c.l.b16 %v1509
        %v2108 = vunpack.c.h.b16 %v1509
        %v2109 = vunpack.c.l.b16 %v1510
        %v2110 = vunpack.c.h.b16 %v1510
        %v2111 = vunpack.c.l.b16 %v1511
        %v2112 = vunpack.c.h.b16 %v1511
        %v2113 = vunpack.c.l.b16 %v1512
        %v2114 = vunpack.c.h.b16 %v1512
        %v2115 = vunpack.c.l.b16 %v1513
        %v2116 = vunpack.c.h.b16 %v1513
        %v2117 = vunpack.c.l.b16 %v1514
        %v2118 = vunpack.c.h.b16 %v1514
        %v2119 = vunpack.c.l.b16 %v1515
        %v2120 = vunpack.c.h.b16 %v1515
        %v2121 = vunpack.c.l.b16 %v1516
        %v2122 = vunpack.c.h.b16 %v1516
        %v2123 = vunpack.c.l.b16 %v1517
        %v2124 = vunpack.c.h.b16 %v1517
        %v2125 = vunpack.c.l.b16 %v1518
        %v2126 = vunpack.c.h.b16 %v1518
        %v2127 = vunpack.c.l.b16 %v1519
        %v2128 = vunpack.c.h.b16 %v1519
        %v2129 = vunpack.c.l.b16 %v1520
        %v2130 = vunpack.c.h.b16 %v1520
        %v2131 = vunpack.c.l.b16 %v1521
        %v2132 = vunpack.c.h.b16 %v1521
        %v2133 = vunpack.c.l.b16 %v1522
        %v2134 = vunpack.c.h.b16 %v1522
        %v2135 = vunpack.c.l.b16 %v1523
        %v2136 = vunpack.c.h.b16 %v1523
        %v2137 = vunpack.c.l.b16 %v1524
        %v2138 = vunpack.c.h.b16 %v1524
        %v2139 = vunpack.c.l.b16 %v1525
        %v2140 = vunpack.c.h.b16 %v1525
        %v2141 = vunpack.c.l.b16 %v1526
        %v2142 = vunpack.c.h.b16 %v1526
        %v2143 = vunpack.c.l.b16 %v1527
        %v2144 = vunpack.c.h.b16 %v1527
        %v2145 = vunpack.c.l.b16 %v1528
        %v2146 = vunpack.c.h.b16 %v1528
        %v2147 = vunpack.c.l.b16 %v1529
        %v2148 = vunpack.c.h.b16 %v1529
        %v2149 = vunpack.c.l.b16 %v1530
        %v2150 = vunpack.c.h.b16 %v1530
        %v2151 = vunpack.c.l.b16 %v1531
        %v2152 = vunpack.c.h.b16 %v1531
        %v2153 = vunpack.c.l.b16 %v1532
        %v2154 = vunpack.c.h.b16 %v1532
        %v2155 = vunpack.c.l.b16 %v1533
        %v2156 = vunpack.c.h.b16 %v1533
        %v2157 = vunpack.c.l.b16 %v1534
        %v2158 = vunpack.c.h.b16 %v1534
        %v2159 = vunpack.c.l.b16 %v1535
        %v2160 = vunpack.c.h.b16 %v1535
        %v2161 = vunpack.c.l.b16 %v1536
        %v2162 = vunpack.c.h.b16 %v1536
        %v2163 = vunpack.c.l.b16 %v1537
        %v2164 = vunpack.c.h.b16 %v1537
        %v2165 = vunpack.c.l.b16 %v1538
        %v2166 = vunpack.c.h.b16 %v1538
        %v2167 = vunpack.c.l.b16 %v1539
        %v2168 = vunpack.c.h.b16 %v1539
        %v2169 = vunpack.c.l.b16 %v1540
        %v2170 = vunpack.c.h.b16 %v1540
        %v2171 = vunpack.c.l.b16 %v1541
        %v2172 = vunpack.c.h.b16 %v1541
        %v2173 = vunpack.c.l.b16 %v1542
        %v2174 = vunpack.c.h.b16 %v1542
        %v2175 = vunpack.c.l.b16 %v1543
        %v2176 = vunpack.c.h.b16 %v1543
        %v2177 = vunpack.c.l.b16 %v1544
        %v2178 = vunpack.c.h.b16 %v1544
        %v2179 = vunpack.c.l.b16 %v1545
        %v2180 = vunpack.c.h.b16 %v1545
        %v2181 = vunpack.c.l.b16 %v1546
        %v2182 = vunpack.c.h.b16 %v1546
        %v2183 = vunpack.c.l.b16 %v1547
        %v2184 = vunpack.c.h.b16 %v1547
        %v2185 = vunpack.c.l.b16 %v1548
        %v2186 = vunpack.c.h.b16 %v1548
        %v2187 = vunpack.c.l.b16 %v1549
        %v2188 = vunpack.c.h.b16 %v1549
        %v2189 = vunpack.c.l.b16 %v1550
        %v2190 = vunpack.c.h.b16 %v1550
        %v2191 = vunpack.c.l.b16 %v1551
        %v2192 = vunpack.c.h.b16 %v1551
        %v2193 = vunpack.c.l.b16 %v1552
        %v2194 = vunpack.c.h.b16 %v1552
        %v2195 = vunpack.c.l.b16 %v1553
        %v2196 = vunpack.c.h.b16 %v1553
        %v2197 = vunpack.c.l.b16 %v1554
        %v2198 = vunpack.c.h.b16 %v1554
        %v2199 = vunpack.c.l.b16 %v1555
        %v2200 = vunpack.c.h.b16 %v1555
        %v2201 = vunpack.c.l.b16 %v1556
        %v2202 = vunpack.c.h.b16 %v1556
        %v2203 = vunpack.c.l.b16 %v1557
        %v2204 = vunpack.c.h.b16 %v1557
        %v2205 = vunpack.c.l.b16 %v1558
        %v2206 = vunpack.c.h.b16 %v1558
        %v2207 = vunpack.c.l.b16 %v1559
        %v2208 = vunpack.c.h.b16 %v1559
        %v2209 = vunpack.c.l.b16 %v1560
        %v2210 = vunpack.c.h.b16 %v1560
        %v2211 = vunpack.c.l.b16 %v1561
        %v2212 = vunpack.c.h.b16 %v1561
        %v2213 = vunpack.c.l.b16 %v1562
        %v2214 = vunpack.c.h.b16 %v1562
        %v2215 = vunpack.c.l.b16 %v1563
        %v2216 = vunpack.c.h.b16 %v1563
        %v2217 = vunpack.c.l.b16 %v1564
        %v2218 = vunpack.c.h.b16 %v1564
        %v2219 = vunpack.c.l.b16 %v1565
        %v2220 = vunpack.c.h.b16 %v1565
        %v2221 = vunpack.c.l.b16 %v1566
        %v2222 = vunpack.c.h.b16 %v1566
        %v2223 = vunpack.c.l.b16 %v1567
        %v2224 = vunpack.c.h.b16 %v1567
        %v2225 = vunpack.c.l.b16 %v1568
        %v2226 = vunpack.c.h.b16 %v1568
        %v2227 = vunpack.c.l.b16 %v1569
        %v2228 = vunpack.c.h.b16 %v1569
        %v2229 = vunpack.c.l.b16 %v1570
        %v2230 = vunpack.c.h.b16 %v1570
        %v2231 = vunpack.c.l.b16 %v1571
        %v2232 = vunpack.c.h.b16 %v1571
        %v2233 = vunpack.c.l.b16 %v1572
        %v2234 = vunpack.c.h.b16 %v1572
        %v2235 = vunpack.c.l.b16 %v1573
        %v2236 = vunpack.c.h.b16 %v1573
        %v2237 = vunpack.c.l.b16 %v1574
        %v2238 = vunpack.c.h.b16 %v1574
        %v2239 = vunpack.c.l.b16 %v1575
        %v2240 = vunpack.c.h.b16 %v1575
        %v2241 = vunpack.c.l.b16 %v1576
        %v2242 = vunpack.c.h.b16 %v1576
        %v2243 = vunpack.c.l.b16 %v1577
        %v2244 = vunpack.c.h.b16 %v1577
        %v2245 = vunpack.c.l.b16 %v1578
        %v2246 = vunpack.c.h.b16 %v1578
        %v2247 = vunpack.c.l.b16 %v1579
        %v2248 = vunpack.c.h.b16 %v1579
        %v2249 = vunpack.c.l.b16 %v1580
        %v2250 = vunpack.c.h.b16 %v1580
        %v2251 = vunpack.c.l.b16 %v1581
        %v2252 = vunpack.c.h.b16 %v1581
        %v2253 = vunpack.c.l.b16 %v1582
        %v2254 = vunpack.c.h.b16 %v1582
        %v2255 = vunpack.c.l.b16 %v1583
        %v2256 = vunpack.c.h.b16 %v1583
        %v2257 = vunpack.c.l.b16 %v1584
        %v2258 = vunpack.c.h.b16 %v1584
        %v2259 = vunpack.c.l.b16 %v1585
        %v2260 = vunpack.c.h.b16 %v1585
        %v2261 = vunpack.c.l.b16 %v1586
        %v2262 = vunpack.c.h.b16 %v1586
        %v2263 = vunpack.c.l.b16 %v1587
        %v2264 = vunpack.c.h.b16 %v1587
        %v2265 = vunpack.c.l.b16 %v1588
        %v2266 = vunpack.c.h.b16 %v1588
        %v2267 = vunpack.c.l.b16 %v1589
        %v2268 = vunpack.c.h.b16 %v1589
        %v2269 = vunpack.c.l.b16 %v1590
        %v2270 = vunpack.c.h.b16 %v1590
        %v2271 = vunpack.c.l.b16 %v1591
        %v2272 = vunpack.c.h.b16 %v1591
        %v2273 = vunpack.c.l.b16 %v1592
        %v2274 = vunpack.c.h.b16 %v1592
        %v2275 = vunpack.c.l.b16 %v1593
        %v2276 = vunpack.c.h.b16 %v1593
        %v2277 = vunpack.c.l.b16 %v1594
        %v2278 = vunpack.c.h.b16 %v1594
        %v2279 = vunpack.c.l.b16 %v1595
        %v2280 = vunpack.c.h.b16 %v1595
        %v2281 = vunpack.c.l.b16 %v1596
        %v2282 = vunpack.c.h.b16 %v1596
        %v2283 = vunpack.c.l.b16 %v1597
        %v2284 = vunpack.c.h.b16 %v1597
        %v2285 = vunpack.c.l.b16 %v1598
        %v2286 = vunpack.c.h.b16 %v1598
        %v2287 = vunpack.c.l.b16 %v1599
        %v2288 = vunpack.c.h.b16 %v1599
        %v2289 = vunpack.c.l.b16 %v1600
        %v2290 = vunpack.c.h.b16 %v1600
        %v2291 = vunpack.c.l.b16 %v1601
        %v2292 = vunpack.c.h.b16 %v1601
        %v2293 = vunpack.c.l.b16 %v1602
        %v2294 = vunpack.c.h.b16 %v1602
        %v2295 = vunpack.c.l.b16 %v1603
        %v2296 = vunpack.c.h.b16 %v1603
        %v2297 = vunpack.c.l.b16 %v1604
        %v2298 = vunpack.c.h.b16 %v1604
        %v2299 = vunpack.c.l.b16 %v1605
        %v2300 = vunpack.c.h.b16 %v1605
        %v2301 = vunpack.c.l.b16 %v1606
        %v2302 = vunpack.c.h.b16 %v1606
        %v2303 = vunpack.c.l.b16 %v1607
        %v2304 = vunpack.c.h.b16 %v1607
        %v2305 = vunpack.c.l.b16 %v1608
        %v2306 = vunpack.c.h.b16 %v1608
        %v2307 = vunpack.c.l.b16 %v1609
        %v2308 = vunpack.c.h.b16 %v1609
        %v2309 = vunpack.c.l.b16 %v1610
        %v2310 = vunpack.c.h.b16 %v1610
        %v2311 = vunpack.c.l.b16 %v1611
        %v2312 = vunpack.c.h.b16 %v1611
        %v2313 = vunpack.c.l.b16 %v1612
        %v2314 = vunpack.c.h.b16 %v1612
        %v2315 = vunpack.c.l.b16 %v1613
        %v2316 = vunpack.c.h.b16 %v1613
        %v2317 = vunpack.c.l.b16 %v1614
        %v2318 = vunpack.c.h.b16 %v1614
        %v2319 = vunpack.c.l.b16 %v1615
        %v2320 = vunpack.c.h.b16 %v1615
        %v2321 = vunpack.c.l.b16 %v1616
        %v2322 = vunpack.c.h.b16 %v1616
        %v2323 = vunpack.c.l.b16 %v1617
        %v2324 = vunpack.c.h.b16 %v1617
        %v2325 = vunpack.c.l.b16 %v1618
        %v2326 = vunpack.c.h.b16 %v1618
        %v2327 = vunpack.c.l.b16 %v1619
        %v2328 = vunpack.c.h.b16 %v1619
        %v2329 = vunpack.c.l.b16 %v1620
        %v2330 = vunpack.c.h.b16 %v1620
        %v2331 = vunpack.c.l.b16 %v1621
        %v2332 = vunpack.c.h.b16 %v1621
        %v2333 = vunpack.c.l.b16 %v1622
        %v2334 = vunpack.c.h.b16 %v1622
        %v2335 = vunpack.c.l.b16 %v1623
        %v2336 = vunpack.c.h.b16 %v1623
        %v2337 = vunpack.c.l.b16 %v1624
        %v2338 = vunpack.c.h.b16 %v1624
        %v2339 = vunpack.c.l.b16 %v1625
        %v2340 = vunpack.c.h.b16 %v1625
        %v2341 = vunpack.c.l.b16 %v1626
        %v2342 = vunpack.c.h.b16 %v1626
        %v2343 = vunpack.c.l.b16 %v1627
        %v2344 = vunpack.c.h.b16 %v1627
        %v2345 = vunpack.c.l.b16 %v1628
        %v2346 = vunpack.c.h.b16 %v1628
        %v2347 = vunpack.c.l.b16 %v1629
        %v2348 = vunpack.c.h.b16 %v1629
        %v2349 = vunpack.c.l.b16 %v1630
        %v2350 = vunpack.c.h.b16 %v1630
        %v2351 = vunpack.c.l.b16 %v1631
        %v2352 = vunpack.c.h.b16 %v1631
        %v2353 = vunpack.c.l.b16 %v1632
        %v2354 = vunpack.c.h.b16 %v1632
        %v2355 = vunpack.c.l.b16 %v1633
        %v2356 = vunpack.c.h.b16 %v1633
        %v2357 = vunpack.c.l.b16 %v1634
        %v2358 = vunpack.c.h.b16 %v1634
        %v2359 = vunpack.c.l.b16 %v1635
        %v2360 = vunpack.c.h.b16 %v1635
        %v2361 = vunpack.c.l.b16 %v1636
        %v2362 = vunpack.c.h.b16 %v1636
        %v2363 = vunpack.c.l.b16 %v1637
        %v2364 = vunpack.c.h.b16 %v1637
        %v2365 = vunpack.c.l.b16 %v1638
        %v2366 = vunpack.c.h.b16 %v1638
        %v2367 = vunpack.c.l.b16 %v1639
        %v2368 = vunpack.c.h.b16 %v1639
        %v2369 = vunpack.c.l.b16 %v1640
        %v2370 = vunpack.c.h.b16 %v1640
        %v2371 = vunpack.c.l.b16 %v1641
        %v2372 = vunpack.c.h.b16 %v1641
        %v2373 = vunpack.c.l.b16 %v1642
        %v2374 = vunpack.c.h.b16 %v1642
        %v2375 = vunpack.c.l.b16 %v1643
        %v2376 = vunpack.c.h.b16 %v1643
        %v2377 = vunpack.c.l.b16 %v1644
        %v2378 = vunpack.c.h.b16 %v1644
        %v2379 = vunpack.c.l.b16 %v1645
        %v2380 = vunpack.c.h.b16 %v1645
        %v2381 = vunpack.c.l.b16 %v1646
        %v2382 = vunpack.c.h.b16 %v1646
        %v2383 = vunpack.c.l.b16 %v1647
        %v2384 = vunpack.c.h.b16 %v1647
        %v2385 = vunpack.c.l.b16 %v1648
        %v2386 = vunpack.c.h.b16 %v1648
        %v2387 = vunpack.c.l.b16 %v1649
        %v2388 = vunpack.c.h.b16 %v1649
        %v2389 = vunpack.c.l.b16 %v1650
        %v2390 = vunpack.c.h.b16 %v1650
        %v2391 = vunpack.c.l.b16 %v1651
        %v2392 = vunpack.c.h.b16 %v1651
        %v2393 = vunpack.c.l.b16 %v1652
        %v2394 = vunpack.c.h.b16 %v1652
        %v2395 = vunpack.c.l.b16 %v1653
        %v2396 = vunpack.c.h.b16 %v1653
        %v2397 = vunpack.c.l.b16 %v1654
        %v2398 = vunpack.c.h.b16 %v1654
        %v2399 = vunpack.c.l.b16 %v1655
        %v2400 = vunpack.c.h.b16 %v1655
        %v2401 = vunpack.c.l.b16 %v1656
        %v2402 = vunpack.c.h.b16 %v1656
        %v2403 = vunpack.c.l.b16 %v1657
        %v2404 = vunpack.c.h.b16 %v1657
        %v2405 = vunpack.c.l.b16 %v1658
        %v2406 = vunpack.c.h.b16 %v1658
        %v2407 = vunpack.c.l.b16 %v1659
        %v2408 = vunpack.c.h.b16 %v1659
        %v2409 = vunpack.c.l.b16 %v1660
        %v2410 = vunpack.c.h.b16 %v1660
        %v2411 = vunpack.c.l.b16 %v1661
        %v2412 = vunpack.c.h.b16 %v1661
        %v2413 = vunpack.c.l.b16 %v1662
        %v2414 = vunpack.c.h.b16 %v1662
        %v2415 = vunpack.c.l.b16 %v1663
        %v2416 = vunpack.c.h.b16 %v1663
        %v2417 = vunpack.c.l.b16 %v1664
        %v2418 = vunpack.c.h.b16 %v1664
        %v2419 = vunpack.c.l.b16 %v1665
        %v2420 = vunpack.c.h.b16 %v1665
        %v2421 = vunpack.c.l.b16 %v1666
        %v2422 = vunpack.c.h.b16 %v1666
        %v2423 = vunpack.c.l.b16 %v1667
        %v2424 = vunpack.c.h.b16 %v1667
        %v2425 = vunpack.c.l.b16 %v1668
        %v2426 = vunpack.c.h.b16 %v1668
        %v2427 = vunpack.c.l.b16 %v1669
        %v2428 = vunpack.c.h.b16 %v1669
        %v2429 = vunpack.c.l.b16 %v1670
        %v2430 = vunpack.c.h.b16 %v1670
        %v2431 = vunpack.c.l.b16 %v1671
        %v2432 = vunpack.c.h.b16 %v1671
        %v2433 = vunpack.c.l.b16 %v1672
        %v2434 = vunpack.c.h.b16 %v1672
        %v2435 = vunpack.c.l.b16 %v1673
        %v2436 = vunpack.c.h.b16 %v1673
        %v2437 = vunpack.c.l.b16 %v1674
        %v2438 = vunpack.c.h.b16 %v1674
        %v2439 = vunpack.c.l.b16 %v1675
        %v2440 = vunpack.c.h.b16 %v1675
        %v2441 = vunpack.c.l.b16 %v1676
        %v2442 = vunpack.c.h.b16 %v1676
        %v2443 = vunpack.c.l.b16 %v1677
        %v2444 = vunpack.c.h.b16 %v1677
        %v2445 = vunpack.c.l.b16 %v1678
        %v2446 = vunpack.c.h.b16 %v1678
        %v2447 = vunpack.c.l.b16 %v1679
        %v2448 = vunpack.c.h.b16 %v1679
        %v2449 = vunpack.c.l.b16 %v1680
        %v2450 = vunpack.c.h.b16 %v1680
        %v2451 = vunpack.c.l.b16 %v1681
        %v2452 = vunpack.c.h.b16 %v1681
        %v2453 = vunpack.c.l.b16 %v1682
        %v2454 = vunpack.c.h.b16 %v1682
        %v2455 = vunpack.c.l.b16 %v1683
        %v2456 = vunpack.c.h.b16 %v1683
        %v2457 = vunpack.c.l.b16 %v1684
        %v2458 = vunpack.c.h.b16 %v1684
        %v2459 = vunpack.c.l.b16 %v1685
        %v2460 = vunpack.c.h.b16 %v1685
        %v2461 = vunpack.c.l.b16 %v1686
        %v2462 = vunpack.c.h.b16 %v1686
        %v2463 = vunpack.c.l.b16 %v1687
        %v2464 = vunpack.c.h.b16 %v1687
        %v2465 = vunpack.c.l.b16 %v1688
        %v2466 = vunpack.c.h.b16 %v1688
        %v2467 = vunpack.c.l.b16 %v1689
        %v2468 = vunpack.c.h.b16 %v1689
        %v2469 = vunpack.c.l.b16 %v1690
        %v2470 = vunpack.c.h.b16 %v1690
        %v2471 = vunpack.c.l.b16 %v1691
        %v2472 = vunpack.c.h.b16 %v1691
        %v2473 = vunpack.c.l.b16 %v1692
        %v2474 = vunpack.c.h.b16 %v1692
        %v2475 = vunpack.c.l.b16 %v1693
        %v2476 = vunpack.c.h.b16 %v1693
        %v2477 = vunpack.c.l.b16 %v1694
        %v2478 = vunpack.c.h.b16 %v1694
        %v2479 = vunpack.c.l.b16 %v1695
        %v2480 = vunpack.c.h.b16 %v1695
        %v2481 = vunpack.c.l.b16 %v1696
        %v2482 = vunpack.c.h.b16 %v1696
        %v2483 = vunpack.c.l.b16 %v1697
        %v2484 = vunpack.c.h.b16 %v1697
        %v2485 = vunpack.c.l.b16 %v1698
        %v2486 = vunpack.c.h.b16 %v1698
        %v2487 = vunpack.c.l.b16 %v1699
        %v2488 = vunpack.c.h.b16 %v1699
        %v2489 = vunpack.c.l.b16 %v1700
        %v2490 = vunpack.c.h.b16 %v1700
        %v2491 = vunpack.c.l.b16 %v1701
        %v2492 = vunpack.c.h.b16 %v1701
        %v2493 = vunpack.c.l.b16 %v1702
        %v2494 = vunpack.c.h.b16 %v1702
        %v2495 = vunpack.c.l.b16 %v1703
        %v2496 = vunpack.c.h.b16 %v1703
        %v2497 = vunpack.c.l.b16 %v1704
        %v2498 = vunpack.c.h.b16 %v1704
        %v2499 = vunpack.c.l.b16 %v1705
        %v2500 = vunpack.c.h.b16 %v1705
        %v2501 = vunpack.c.l.b16 %v1706
        %v2502 = vunpack.c.h.b16 %v1706
        %v2503 = vunpack.c.l.b16 %v1707
        %v2504 = vunpack.c.h.b16 %v1707
        %v2505 = vunpack.c.l.b16 %v1708
        %v2506 = vunpack.c.h.b16 %v1708
        %v2507 = vunpack.c.l.b16 %v1709
        %v2508 = vunpack.c.h.b16 %v1709
        %v2509 = vunpack.c.l.b16 %v1710
        %v2510 = vunpack.c.h.b16 %v1710
        %v2511 = vunpack.c.l.b16 %v1711
        %v2512 = vunpack.c.h.b16 %v1711
        %v2513 = vunpack.c.l.b16 %v1712
        %v2514 = vunpack.c.h.b16 %v1712
        %v2515 = vunpack.c.l.b16 %v1713
        %v2516 = vunpack.c.h.b16 %v1713
        %v2517 = vunpack.c.l.b16 %v1714
        %v2518 = vunpack.c.h.b16 %v1714
        %v2519 = vunpack.c.l.b16 %v1715
        %v2520 = vunpack.c.h.b16 %v1715
        %v2521 = vunpack.c.l.b16 %v1716
        %v2522 = vunpack.c.h.b16 %v1716
        %v2523 = vunpack.c.l.b16 %v1717
        %v2524 = vunpack.c.h.b16 %v1717
        %v2525 = vunpack.c.l.b16 %v1718
        %v2526 = vunpack.c.h.b16 %v1718
        %v2527 = vunpack.c.l.b16 %v1719
        %v2528 = vunpack.c.h.b16 %v1719
        %v2529 = vunpack.c.l.b16 %v1720
        %v2530 = vunpack.c.h.b16 %v1720
        %v2531 = vunpack.c.l.b16 %v1721
        %v2532 = vunpack.c.h.b16 %v1721
        %v2533 = vunpack.c.l.b16 %v1722
        %v2534 = vunpack.c.h.b16 %v1722
        %v2535 = vunpack.c.l.b16 %v1723
        %v2536 = vunpack.c.h.b16 %v1723
        %v2537 = vunpack.c.l.b16 %v1724
        %v2538 = vunpack.c.h.b16 %v1724
        %v2539 = vunpack.c.l.b16 %v1725
        %v2540 = vunpack.c.h.b16 %v1725
        %v2541 = vunpack.c.l.b16 %v1726
        %v2542 = vunpack.c.h.b16 %v1726
        %v2543 = vunpack.c.l.b16 %v1727
        %v2544 = vunpack.c.h.b16 %v1727
        %v2545 = vunpack.c.l.b16 %v1728
        %v2546 = vunpack.c.h.b16 %v1728
        %v2547 = vunpack.c.l.b16 %v1729
        %v2548 = vunpack.c.h.b16 %v1729
        %v2549 = vunpack.c.l.b16 %v1730
        %v2550 = vunpack.c.h.b16 %v1730
        %v2551 = vunpack.c.l.b16 %v1731
        %v2552 = vunpack.c.h.b16 %v1731
        %v2553 = vunpack.c.l.b16 %v1732
        %v2554 = vunpack.c.h.b16 %v1732
        %v2555 = vunpack.c.l.b16 %v1733
        %v2556 = vunpack.c.h.b16 %v1733
        %v2557 = vunpack.c.l.b16 %v1734
        %v2558 = vunpack.c.h.b16 %v1734
        %v2559 = vunpack.c.l.b16 %v1735
        %v2560 = vunpack.c.h.b16 %v1735
        %v2561 = vunpack.c.l.b16 %v1736
        %v2562 = vunpack.c.h.b16 %v1736
        %v2563 = vpack.c.b16 %v2055, %v2051
        %v2564 = vpack.c.b16 %v2056, %v2052
        %v2565 = vpack.c.b16 %v2057, %v2053
        %v2566 = vpack.c.b16 %v2058, %v2054
        %v2567 = vpack.c.b16 %v2063, %v2059
        %v2568 = vpack.c.b16 %v2064, %v2060
        %v2569 = vpack.c.b16 %v2065, %v2061
        %v2570 = vpack.c.b16 %v2066, %v2062
        %v2571 = vpack.c.b16 %v2071, %v2067
        %v2572 = vpack.c.b16 %v2072, %v2068
        %v2573 = vpack.c.b16 %v2073, %v2069
        %v2574 = vpack.c.b16 %v2074, %v2070
        %v2575 = vpack.c.b16 %v2079, %v2075
        %v2576 = vpack.c.b16 %v2080, %v2076
        %v2577 = vpack.c.b16 %v2081, %v2077
        %v2578 = vpack.c.b16 %v2082, %v2078
        %v2579 = vpack.c.b16 %v2087, %v2083
        %v2580 = vpack.c.b16 %v2088, %v2084
        %v2581 = vpack.c.b16 %v2089, %v2085
        %v2582 = vpack.c.b16 %v2090, %v2086
        %v2583 = vpack.c.b16 %v2095, %v2091
        %v2584 = vpack.c.b16 %v2096, %v2092
        %v2585 = vpack.c.b16 %v2097, %v2093
        %v2586 = vpack.c.b16 %v2098, %v2094
        %v2587 = vpack.c.b16 %v2103, %v2099
        %v2588 = vpack.c.b16 %v2104, %v2100
        %v2589 = vpack.c.b16 %v2105, %v2101
        %v2590 = vpack.c.b16 %v2106, %v2102
        %v2591 = vpack.c.b16 %v2111, %v2107
        %v2592 = vpack.c.b16 %v2112, %v2108
        %v2593 = vpack.c.b16 %v2113, %v2109
        %v2594 = vpack.c.b16 %v2114, %v2110
        %v2595 = vpack.c.b16 %v2119, %v2115
        %v2596 = vpack.c.b16 %v2120, %v2116
        %v2597 = vpack.c.b16 %v2121, %v2117
        %v2598 = vpack.c.b16 %v2122, %v2118
        %v2599 = vpack.c.b16 %v2127, %v2123
        %v2600 = vpack.c.b16 %v2128, %v2124
        %v2601 = vpack.c.b16 %v2129, %v2125
        %v2602 = vpack.c.b16 %v2130, %v2126
        %v2603 = vpack.c.b16 %v2135, %v2131
        %v2604 = vpack.c.b16 %v2136, %v2132
        %v2605 = vpack.c.b16 %v2137, %v2133
        %v2606 = vpack.c.b16 %v2138, %v2134
        %v2607 = vpack.c.b16 %v2143, %v2139
        %v2608 = vpack.c.b16 %v2144, %v2140
        %v2609 = vpack.c.b16 %v2145, %v2141
        %v2610 = vpack.c.b16 %v2146, %v2142
        %v2611 = vpack.c.b16 %v2151, %v2147
        %v2612 = vpack.c.b16 %v2152, %v2148
        %v2613 = vpack.c.b16 %v2153, %v2149
        %v2614 = vpack.c.b16 %v2154, %v2150
        %v2615 = vpack.c.b16 %v2159, %v2155
        %v2616 = vpack.c.b16 %v2160, %v2156
        %v2617 = vpack.c.b16 %v2161, %v2157
        %v2618 = vpack.c.b16 %v2162, %v2158
        %v2619 = vpack.c.b16 %v2167, %v2163
        %v2620 = vpack.c.b16 %v2168, %v2164
        %v2621 = vpack.c.b16 %v2169, %v2165
        %v2622 = vpack.c.b16 %v2170, %v2166
        %v2623 = vpack.c.b16 %v2175, %v2171
        %v2624 = vpack.c.b16 %v2176, %v2172
        %v2625 = vpack.c.b16 %v2177, %v2173
        %v2626 = vpack.c.b16 %v2178, %v2174
        %v2627 = vpack.c.b16 %v2183, %v2179
        %v2628 = vpack.c.b16 %v2184, %v2180
        %v2629 = vpack.c.b16 %v2185, %v2181
        %v2630 = vpack.c.b16 %v2186, %v2182
        %v2631 = vpack.c.b16 %v2191, %v2187
        %v2632 = vpack.c.b16 %v2192, %v2188
        %v2633 = vpack.c.b16 %v2193, %v2189
        %v2634 = vpack.c.b16 %v2194, %v2190
        %v2635 = vpack.c.b16 %v2199, %v2195
        %v2636 = vpack.c.b16 %v2200, %v2196
        %v2637 = vpack.c.b16 %v2201, %v2197
        %v2638 = vpack.c.b16 %v2202, %v2198
        %v2639 = vpack.c.b16 %v2207, %v2203
        %v2640 = vpack.c.b16 %v2208, %v2204
        %v2641 = vpack.c.b16 %v2209, %v2205
        %v2642 = vpack.c.b16 %v2210, %v2206
        %v2643 = vpack.c.b16 %v2215, %v2211
        %v2644 = vpack.c.b16 %v2216, %v2212
        %v2645 = vpack.c.b16 %v2217, %v2213
        %v2646 = vpack.c.b16 %v2218, %v2214
        %v2647 = vpack.c.b16 %v2223, %v2219
        %v2648 = vpack.c.b16 %v2224, %v2220
        %v2649 = vpack.c.b16 %v2225, %v2221
        %v2650 = vpack.c.b16 %v2226, %v2222
        %v2651 = vpack.c.b16 %v2231, %v2227
        %v2652 = vpack.c.b16 %v2232, %v2228
        %v2653 = vpack.c.b16 %v2233, %v2229
        %v2654 = vpack.c.b16 %v2234, %v2230
        %v2655 = vpack.c.b16 %v2239, %v2235
        %v2656 = vpack.c.b16 %v2240, %v2236
        %v2657 = vpack.c.b16 %v2241, %v2237
        %v2658 = vpack.c.b16 %v2242, %v2238
        %v2659 = vpack.c.b16 %v2247, %v2243
        %v2660 = vpack.c.b16 %v2248, %v2244
        %v2661 = vpack.c.b16 %v2249, %v2245
        %v2662 = vpack.c.b16 %v2250, %v2246
        %v2663 = vpack.c.b16 %v2255, %v2251
        %v2664 = vpack.c.b16 %v2256, %v2252
        %v2665 = vpack.c.b16 %v2257, %v2253
        %v2666 = vpack.c.b16 %v2258, %v2254
        %v2667 = vpack.c.b16 %v2263, %v2259
        %v2668 = vpack.c.b16 %v2264, %v2260
        %v2669 = vpack.c.b16 %v2265, %v2261
        %v2670 = vpack.c.b16 %v2266, %v2262
        %v2671 = vpack.c.b16 %v2271, %v2267
        %v2672 = vpack.c.b16 %v2272, %v2268
        %v2673 = vpack.c.b16 %v2273, %v2269
        %v2674 = vpack.c.b16 %v2274, %v2270
        %v2675 = vpack.c.b16 %v2279, %v2275
        %v2676 = vpack.c.b16 %v2280, %v2276
        %v2677 = vpack.c.b16 %v2281, %v2277
        %v2678 = vpack.c.b16 %v2282, %v2278
        %v2679 = vpack.c.b16 %v2287, %v2283
        %v2680 = vpack.c.b16 %v2288, %v2284
        %v2681 = vpack.c.b16 %v2289, %v2285
        %v2682 = vpack.c.b16 %v2290, %v2286
        %v2683 = vpack.c.b16 %v2295, %v2291
        %v2684 = vpack.c.b16 %v2296, %v2292
        %v2685 = vpack.c.b16 %v2297, %v2293
        %v2686 = vpack.c.b16 %v2298, %v2294
        %v2687 = vpack.c.b16 %v2303, %v2299
        %v2688 = vpack.c.b16 %v2304, %v2300
        %v2689 = vpack.c.b16 %v2305, %v2301
        %v2690 = vpack.c.b16 %v2306, %v2302
        %v2691 = vpack.c.b16 %v2311, %v2307
        %v2692 = vpack.c.b16 %v2312, %v2308
        %v2693 = vpack.c.b16 %v2313, %v2309
        %v2694 = vpack.c.b16 %v2314, %v2310
        %v2695 = vpack.c.b16 %v2319, %v2315
        %v2696 = vpack.c.b16 %v2320, %v2316
        %v2697 = vpack.c.b16 %v2321, %v2317
        %v2698 = vpack.c.b16 %v2322, %v2318
        %v2699 = vpack.c.b16 %v2327, %v2323
        %v2700 = vpack.c.b16 %v2328, %v2324
        %v2701 = vpack.c.b16 %v2329, %v2325
        %v2702 = vpack.c.b16 %v2330, %v2326
        %v2703 = vpack.c.b16 %v2335, %v2331
        %v2704 = vpack.c.b16 %v2336, %v2332
        %v2705 = vpack.c.b16 %v2337, %v2333
        %v2706 = vpack.c.b16 %v2338, %v2334
        %v2707 = vpack.c.b16 %v2343, %v2339
        %v2708 = vpack.c.b16 %v2344, %v2340
        %v2709 = vpack.c.b16 %v2345, %v2341
        %v2710 = vpack.c.b16 %v2346, %v2342
        %v2711 = vpack.c.b16 %v2351, %v2347
        %v2712 = vpack.c.b16 %v2352, %v2348
        %v2713 = vpack.c.b16 %v2353, %v2349
        %v2714 = vpack.c.b16 %v2354, %v2350
        %v2715 = vpack.c.b16 %v2359, %v2355
        %v2716 = vpack.c.b16 %v2360, %v2356
        %v2717 = vpack.c.b16 %v2361, %v2357
        %v2718 = vpack.c.b16 %v2362, %v2358
        %v2719 = vpack.c.b16 %v2367, %v2363
        %v2720 = vpack.c.b16 %v2368, %v2364
        %v2721 = vpack.c.b16 %v2369, %v2365
        %v2722 = vpack.c.b16 %v2370, %v2366
        %v2723 = vpack.c.b16 %v2375, %v2371
        %v2724 = vpack.c.b16 %v2376, %v2372
        %v2725 = vpack.c.b16 %v2377, %v2373
        %v2726 = vpack.c.b16 %v2378, %v2374
        %v2727 = vpack.c.b16 %v2383, %v2379
        %v2728 = vpack.c.b16 %v2384, %v2380
        %v2729 = vpack.c.b16 %v2385, %v2381
        %v2730 = vpack.c.b16 %v2386, %v2382
        %v2731 = vpack.c.b16 %v2391, %v2387
        %v2732 = vpack.c.b16 %v2392, %v2388
        %v2733 = vpack.c.b16 %v2393, %v2389
        %v2734 = vpack.c.b16 %v2394, %v2390
        %v2735 = vpack.c.b16 %v2399, %v2395
        %v2736 = vpack.c.b16 %v2400, %v2396
        %v2737 = vpack.c.b16 %v2401, %v2397
        %v2738 = vpack.c.b16 %v2402, %v2398
        %v2739 = vpack.c.b16 %v2407, %v2403
        %v2740 = vpack.c.b16 %v2408, %v2404
        %v2741 = vpack.c.b16 %v2409, %v2405
        %v2742 = vpack.c.b16 %v2410, %v2406
        %v2743 = vpack.c.b16 %v2415, %v2411
        %v2744 = vpack.c.b16 %v2416, %v2412
        %v2745 = vpack.c.b16 %v2417, %v2413
        %v2746 = vpack.c.b16 %v2418, %v2414
        %v2747 = vpack.c.b16 %v2423, %v2419
        %v2748 = vpack.c.b16 %v2424, %v2420
        %v2749 = vpack.c.b16 %v2425, %v2421
        %v2750 = vpack.c.b16 %v2426, %v2422
        %v2751 = vpack.c.b16 %v2431, %v2427
        %v2752 = vpack.c.b16 %v2432, %v2428
        %v2753 = vpack.c.b16 %v2433, %v2429
        %v2754 = vpack.c.b16 %v2434, %v2430
        %v2755 = vpack.c.b16 %v2439, %v2435
        %v2756 = vpack.c.b16 %v2440, %v2436
        %v2757 = vpack.c.b16 %v2441, %v2437
        %v2758 = vpack.c.b16 %v2442, %v2438
        %v2759 = vpack.c.b16 %v2447, %v2443
        %v2760 = vpack.c.b16 %v2448, %v2444
        %v2761 = vpack.c.b16 %v2449, %v2445
        %v2762 = vpack.c.b16 %v2450, %v2446
        %v2763 = vpack.c.b16 %v2455, %v2451
        %v2764 = vpack.c.b16 %v2456, %v2452
        %v2765 = vpack.c.b16 %v2457, %v2453
        %v2766 = vpack.c.b16 %v2458, %v2454
        %v2767 = vpack.c.b16 %v2463, %v2459
        %v2768 = vpack.c.b16 %v2464, %v2460
        %v2769 = vpack.c.b16 %v2465, %v2461
        %v2770 = vpack.c.b16 %v2466, %v2462
        %v2771 = vpack.c.b16 %v2471, %v2467
        %v2772 = vpack.c.b16 %v2472, %v2468
        %v2773 = vpack.c.b16 %v2473, %v2469
        %v2774 = vpack.c.b16 %v2474, %v2470
        %v2775 = vpack.c.b16 %v2479, %v2475
        %v2776 = vpack.c.b16 %v2480, %v2476
        %v2777 = vpack.c.b16 %v2481, %v2477
        %v2778 = vpack.c.b16 %v2482, %v2478
        %v2779 = vpack.c.b16 %v2487, %v2483
        %v2780 = vpack.c.b16 %v2488, %v2484
        %v2781 = vpack.c.b16 %v2489, %v2485
        %v2782 = vpack.c.b16 %v2490, %v2486
        %v2783 = vpack.c.b16 %v2495, %v2491
        %v2784 = vpack.c.b16 %v2496, %v2492
        %v2785 = vpack.c.b16 %v2497, %v2493
        %v2786 = vpack.c.b16 %v2498, %v2494
        %v2787 = vpack.c.b16 %v2503, %v2499
        %v2788 = vpack.c.b16 %v2504, %v2500
        %v2789 = vpack.c.b16 %v2505, %v2501
        %v2790 = vpack.c.b16 %v2506, %v2502
        %v2791 = vpack.c.b16 %v2511, %v2507
        %v2792 = vpack.c.b16 %v2512, %v2508
        %v2793 = vpack.c.b16 %v2513, %v2509
        %v2794 = vpack.c.b16 %v2514, %v2510
        %v2795 = vpack.c.b16 %v2519, %v2515
        %v2796 = vpack.c.b16 %v2520, %v2516
        %v2797 = vpack.c.b16 %v2521, %v2517
        %v2798 = vpack.c.b16 %v2522, %v2518
        %v2799 = vpack.c.b16 %v2527, %v2523
        %v2800 = vpack.c.b16 %v2528, %v2524
        %v2801 = vpack.c.b16 %v2529, %v2525
        %v2802 = vpack.c.b16 %v2530, %v2526
        %v2803 = vpack.c.b16 %v2535, %v2531
        %v2804 = vpack.c.b16 %v2536, %v2532
        %v2805 = vpack.c.b16 %v2537, %v2533
        %v2806 = vpack.c.b16 %v2538, %v2534
        %v2807 = vpack.c.b16 %v2543, %v2539
        %v2808 = vpack.c.b16 %v2544, %v2540
        %v2809 = vpack.c.b16 %v2545, %v2541
        %v2810 = vpack.c.b16 %v2546, %v2542
        %v2811 = vpack.c.b16 %v2551, %v2547
        %v2812 = vpack.c.b16 %v2552, %v2548
        %v2813 = vpack.c.b16 %v2553, %v2549
        %v2814 = vpack.c.b16 %v2554, %v2550
        %v2815 = vpack.c.b16 %v2559, %v2555
        %v2816 = vpack.c.b16 %v2560, %v2556
        %v2817 = vpack.c.b16 %v2561, %v2557
        %v2818 = vpack.c.b16 %v2562, %v2558
        %3075 = vmatprep.subr.bf16.mxu0 %v2564
        %3076 = vmatpush1.bf16.msra.mxu0 %v2563
        %3077 = vmatprep.subr.bf16.mxu0 %v2568
        %3078 = vmatpush1.bf16.msra.mxu0 %v2567
        %3079 = vmatprep.subr.bf16.mxu0 %v2572
        %3080 = vmatpush1.bf16.msra.mxu0 %v2571
        %3081 = vmatprep.subr.bf16.mxu0 %v2576
        %3082 = vmatpush1.bf16.msra.mxu0 %v2575
        %3083 = vmatprep.subr.bf16.mxu0 %v2580
        %3084 = vmatpush1.bf16.msra.mxu0 %v2579
        %3085 = vmatprep.subr.bf16.mxu0 %v2584
        %3086 = vmatpush1.bf16.msra.mxu0 %v2583
        %3087 = vmatprep.subr.bf16.mxu0 %v2588
        %3088 = vmatpush1.bf16.msra.mxu0 %v2587
        %3089 = vmatprep.subr.bf16.mxu0 %v2592
        %3090 = vmatpush1.bf16.msra.mxu0 %v2591
        %3091 = vmatprep.subr.bf16.mxu0 %v2596
        %3092 = vmatpush1.bf16.msra.mxu0 %v2595
        %3093 = vmatprep.subr.bf16.mxu0 %v2600
        %3094 = vmatpush1.bf16.msra.mxu0 %v2599
        %3095 = vmatprep.subr.bf16.mxu0 %v2604
        %3096 = vmatpush1.bf16.msra.mxu0 %v2603
        %3097 = vmatprep.subr.bf16.mxu0 %v2608
        %3098 = vmatpush1.bf16.msra.mxu0 %v2607
        %3099 = vmatprep.subr.bf16.mxu0 %v2612
        %3100 = vmatpush1.bf16.msra.mxu0 %v2611
        %3101 = vmatprep.subr.bf16.mxu0 %v2616
        %3102 = vmatpush1.bf16.msra.mxu0 %v2615
        %3103 = vmatprep.subr.bf16.mxu0 %v2620
        %3104 = vmatpush1.bf16.msra.mxu0 %v2619
        %3105 = vmatprep.subr.bf16.mxu0 %v2624
        %3106 = vmatpush1.bf16.msra.mxu0 %v2623
        %3107 = vmatprep.mubr.bf16.mxu0 %v1775
        %3108 = vmatmul.mubr.bf16.gmra.mrb[0].mxu0 %v1761
        %v3109 = vpop.f32.mrb[0].mxu0
        %v3110 = vadd.f32 0.0, %v3109
        %v3111 = vpop.f32.mrb[0].mxu0
        %v3112 = vadd.f32 0.0, %v3111
        %v3113 = vpop.f32.mrb[0].mxu0
        %v3114 = vpop.f32.mrb[0].mxu0
        %3115 = vdwg.mxu0
        %3116 = vmatprep.subr.bf16.mxu0 %v2628
        %3117 = vmatpush1.bf16.msra.mxu0 %v2627
        %3118 = vmatprep.subr.bf16.mxu0 %v2632
        %3119 = vmatpush1.bf16.msra.mxu0 %v2631
        %3120 = vmatprep.subr.bf16.mxu0 %v2636
        %3121 = vmatpush1.bf16.msra.mxu0 %v2635
        %3122 = vmatprep.subr.bf16.mxu0 %v2640
        %3123 = vmatpush1.bf16.msra.mxu0 %v2639
        %3124 = vmatprep.subr.bf16.mxu0 %v2644
        %3125 = vmatpush1.bf16.msra.mxu0 %v2643
        %3126 = vmatprep.subr.bf16.mxu0 %v2648
        %3127 = vmatpush1.bf16.msra.mxu0 %v2647
        %3128 = vmatprep.subr.bf16.mxu0 %v2652
        %3129 = vmatpush1.bf16.msra.mxu0 %v2651
        %3130 = vmatprep.subr.bf16.mxu0 %v2656
        %3131 = vmatpush1.bf16.msra.mxu0 %v2655
        %3132 = vmatprep.subr.bf16.mxu0 %v2660
        %3133 = vmatpush1.bf16.msra.mxu0 %v2659
        %3134 = vmatprep.subr.bf16.mxu0 %v2664
        %3135 = vmatpush1.bf16.msra.mxu0 %v2663
        %3136 = vmatprep.subr.bf16.mxu0 %v2668
        %3137 = vmatpush1.bf16.msra.mxu0 %v2667
        %3138 = vmatprep.subr.bf16.mxu0 %v2672
        %3139 = vmatpush1.bf16.msra.mxu0 %v2671
        %3140 = vmatprep.subr.bf16.mxu0 %v2676
        %3141 = vmatpush1.bf16.msra.mxu0 %v2675
        %3142 = vmatprep.subr.bf16.mxu0 %v2680
        %3143 = vmatpush1.bf16.msra.mxu0 %v2679
        %3144 = vmatprep.subr.bf16.mxu0 %v2684
        %3145 = vmatpush1.bf16.msra.mxu0 %v2683
        %3146 = vmatprep.subr.bf16.mxu0 %v2688
        %3147 = vmatpush1.bf16.msra.mxu0 %v2687
        %3148 = vmatprep.mubr.bf16.mxu0 %v1785
        %3149 = vmatmul.mubr.bf16.gmra.mrb[0].mxu0 %v1783
        %v3150 = vpop.f32.mrb[0].mxu0
        %v3151 = vadd.f32 %v3110, %v3150
        %v3152 = vpop.f32.mrb[0].mxu0
        %v3153 = vadd.f32 %v3112, %v3152
        %v3154 = vpop.f32.mrb[0].mxu0
        %v3155 = vpop.f32.mrb[0].mxu0
        %3156 = vdwg.mxu0
        %3157 = vmatprep.subr.bf16.mxu0 %v2692
        %3158 = vmatpush1.bf16.msra.mxu0 %v2691
        %3159 = vmatprep.subr.bf16.mxu0 %v2696
        %3160 = vmatpush1.bf16.msra.mxu0 %v2695
        %3161 = vmatprep.subr.bf16.mxu0 %v2700
        %3162 = vmatpush1.bf16.msra.mxu0 %v2699
        %3163 = vmatprep.subr.bf16.mxu0 %v2704
        %3164 = vmatpush1.bf16.msra.mxu0 %v2703
        %3165 = vmatprep.subr.bf16.mxu0 %v2708
        %3166 = vmatpush1.bf16.msra.mxu0 %v2707
        %3167 = vmatprep.subr.bf16.mxu0 %v2712
        %3168 = vmatpush1.bf16.msra.mxu0 %v2711
        %3169 = vmatprep.subr.bf16.mxu0 %v2716
        %3170 = vmatpush1.bf16.msra.mxu0 %v2715
        %3171 = vmatprep.subr.bf16.mxu0 %v2720
        %3172 = vmatpush1.bf16.msra.mxu0 %v2719
        %3173 = vmatprep.subr.bf16.mxu0 %v2724
        %3174 = vmatpush1.bf16.msra.mxu0 %v2723
        %3175 = vmatprep.subr.bf16.mxu0 %v2728
        %3176 = vmatpush1.bf16.msra.mxu0 %v2727
        %3177 = vmatprep.subr.bf16.mxu0 %v2732
        %3178 = vmatpush1.bf16.msra.mxu0 %v2731
        %3179 = vmatprep.subr.bf16.mxu0 %v2736
        %3180 = vmatpush1.bf16.msra.mxu0 %v2735
        %3181 = vmatprep.subr.bf16.mxu0 %v2740
        %3182 = vmatpush1.bf16.msra.mxu0 %v2739
        %3183 = vmatprep.subr.bf16.mxu0 %v2744
        %3184 = vmatpush1.bf16.msra.mxu0 %v2743
        %3185 = vmatprep.subr.bf16.mxu0 %v2748
        %3186 = vmatpush1.bf16.msra.mxu0 %v2747
        %3187 = vmatprep.subr.bf16.mxu0 %v2752
        %3188 = vmatpush1.bf16.msra.mxu0 %v2751
        %3189 = vmatprep.mubr.bf16.mxu0 %v1782
        %3190 = vmatmul.mubr.bf16.gmra.mrb[0].mxu0 %v1768
        %v3191 = vpop.f32.mrb[0].mxu0
        %v3192 = vadd.f32 %v3151, %v3191
        %v3193 = vpop.f32.mrb[0].mxu0
        %v3194 = vadd.f32 %v3153, %v3193
        %v3195 = vpop.f32.mrb[0].mxu0
        %v3196 = vpop.f32.mrb[0].mxu0
        %3197 = vdwg.mxu0
        %3198 = vmatprep.subr.bf16.mxu0 %v2756
        %3199 = vmatpush1.bf16.msra.mxu0 %v2755
        %3200 = vmatprep.subr.bf16.mxu0 %v2760
        %3201 = vmatpush1.bf16.msra.mxu0 %v2759
        %3202 = vmatprep.subr.bf16.mxu0 %v2764
        %3203 = vmatpush1.bf16.msra.mxu0 %v2763
        %3204 = vmatprep.subr.bf16.mxu0 %v2768
        %3205 = vmatpush1.bf16.msra.mxu0 %v2767
        %3206 = vmatprep.subr.bf16.mxu0 %v2772
        %3207 = vmatpush1.bf16.msra.mxu0 %v2771
        %3208 = vmatprep.subr.bf16.mxu0 %v2776
        %3209 = vmatpush1.bf16.msra.mxu0 %v2775
        %3210 = vmatprep.subr.bf16.mxu0 %v2780
        %3211 = vmatpush1.bf16.msra.mxu0 %v2779
        %3212 = vmatprep.subr.bf16.mxu0 %v2784
        %3213 = vmatpush1.bf16.msra.mxu0 %v2783
        %3214 = vmatprep.subr.bf16.mxu0 %v2788
        %3215 = vmatpush1.bf16.msra.mxu0 %v2787
        %3216 = vmatprep.subr.bf16.mxu0 %v2792
        %3217 = vmatpush1.bf16.msra.mxu0 %v2791
        %3218 = vmatprep.subr.bf16.mxu0 %v2796
        %3219 = vmatpush1.bf16.msra.mxu0 %v2795
        %3220 = vmatprep.subr.bf16.mxu0 %v2800
        %3221 = vmatpush1.bf16.msra.mxu0 %v2799
        %3222 = vmatprep.subr.bf16.mxu0 %v2804
        %3223 = vmatpush1.bf16.msra.mxu0 %v2803
        %3224 = vmatprep.subr.bf16.mxu0 %v2808
        %3225 = vmatpush1.bf16.msra.mxu0 %v2807
        %3226 = vmatprep.subr.bf16.mxu0 %v2812
        %3227 = vmatpush1.bf16.msra.mxu0 %v2811
        %3228 = vmatprep.subr.bf16.mxu0 %v2816
        %3229 = vmatpush1.bf16.msra.mxu0 %v2815
        %3230 = vmatprep.mubr.bf16.mxu0 %v1786
        %3231 = vmatmul.mubr.bf16.gmra.mrb[0].mxu0 %v1784
        %v3232 = vpop.f32.mrb[0].mxu0
        %v3233 = vadd.f32 %v3192, %v3232
        %v3234 = vpop.f32.mrb[0].mxu0
        %v3235 = vadd.f32 %v3194, %v3234
        %v3236 = vpop.f32.mrb[0].mxu0
        %v3237 = vpop.f32.mrb[0].mxu0
        %3238 = vdwg.mxu0
        %3239 = vmatprep.subr.bf16.mxu0 %v2566
        %3240 = vmatpush1.bf16.msra.mxu0 %v2565
        %3241 = vmatprep.subr.bf16.mxu0 %v2570
        %3242 = vmatpush1.bf16.msra.mxu0 %v2569
        %3243 = vmatprep.subr.bf16.mxu0 %v2574
        %3244 = vmatpush1.bf16.msra.mxu0 %v2573
        %3245 = vmatprep.subr.bf16.mxu0 %v2578
        %3246 = vmatpush1.bf16.msra.mxu0 %v2577
        %3247 = vmatprep.subr.bf16.mxu0 %v2582
        %3248 = vmatpush1.bf16.msra.mxu0 %v2581
        %3249 = vmatprep.subr.bf16.mxu0 %v2586
        %3250 = vmatpush1.bf16.msra.mxu0 %v2585
        %3251 = vmatprep.subr.bf16.mxu0 %v2590
        %3252 = vmatpush1.bf16.msra.mxu0 %v2589
        %3253 = vmatprep.subr.bf16.mxu0 %v2594
        %3254 = vmatpush1.bf16.msra.mxu0 %v2593
        %3255 = vmatprep.subr.bf16.mxu0 %v2598
        %3256 = vmatpush1.bf16.msra.mxu0 %v2597
        %3257 = vmatprep.subr.bf16.mxu0 %v2602
        %3258 = vmatpush1.bf16.msra.mxu0 %v2601
        %3259 = vmatprep.subr.bf16.mxu0 %v2606
        %3260 = vmatpush1.bf16.msra.mxu0 %v2605
        %3261 = vmatprep.subr.bf16.mxu0 %v2610
        %3262 = vmatpush1.bf16.msra.mxu0 %v2609
        %3263 = vmatprep.subr.bf16.mxu0 %v2614
        %3264 = vmatpush1.bf16.msra.mxu0 %v2613
        %3265 = vmatprep.subr.bf16.mxu0 %v2618
        %3266 = vmatpush1.bf16.msra.mxu0 %v2617
        %3267 = vmatprep.subr.bf16.mxu0 %v2622
        %3268 = vmatpush1.bf16.msra.mxu0 %v2621
        %3269 = vmatprep.subr.bf16.mxu0 %v2626
        %3270 = vmatpush1.bf16.msra.mxu0 %v2625
        %3271 = vmatprep.mubr.bf16.mxu0 %v1775
        %3272 = vmatmul.mubr.bf16.gmra.mrb[0].mxu0 %v1761
        %v3273 = vpop.f32.mrb[0].mxu0
        %v3274 = vadd.f32 0.0, %v3273
        %v3275 = vpop.f32.mrb[0].mxu0
        %v3276 = vadd.f32 0.0, %v3275
        %v3277 = vpop.f32.mrb[0].mxu0
        %v3278 = vpop.f32.mrb[0].mxu0
        %3279 = vdwg.mxu0
        %3280 = vmatprep.subr.bf16.mxu0 %v2630
        %3281 = vmatpush1.bf16.msra.mxu0 %v2629
        %3282 = vmatprep.subr.bf16.mxu0 %v2634
        %3283 = vmatpush1.bf16.msra.mxu0 %v2633
        %3284 = vmatprep.subr.bf16.mxu0 %v2638
        %3285 = vmatpush1.bf16.msra.mxu0 %v2637
        %3286 = vmatprep.subr.bf16.mxu0 %v2642
        %3287 = vmatpush1.bf16.msra.mxu0 %v2641
        %3288 = vmatprep.subr.bf16.mxu0 %v2646
        %3289 = vmatpush1.bf16.msra.mxu0 %v2645
        %3290 = vmatprep.subr.bf16.mxu0 %v2650
        %3291 = vmatpush1.bf16.msra.mxu0 %v2649
        %3292 = vmatprep.subr.bf16.mxu0 %v2654
        %3293 = vmatpush1.bf16.msra.mxu0 %v2653
        %3294 = vmatprep.subr.bf16.mxu0 %v2658
        %3295 = vmatpush1.bf16.msra.mxu0 %v2657
        %3296 = vmatprep.subr.bf16.mxu0 %v2662
        %3297 = vmatpush1.bf16.msra.mxu0 %v2661
        %3298 = vmatprep.subr.bf16.mxu0 %v2666
        %3299 = vmatpush1.bf16.msra.mxu0 %v2665
        %3300 = vmatprep.subr.bf16.mxu0 %v2670
        %3301 = vmatpush1.bf16.msra.mxu0 %v2669
        %3302 = vmatprep.subr.bf16.mxu0 %v2674
        %3303 = vmatpush1.bf16.msra.mxu0 %v2673
        %3304 = vmatprep.subr.bf16.mxu0 %v2678
        %3305 = vmatpush1.bf16.msra.mxu0 %v2677
        %3306 = vmatprep.subr.bf16.mxu0 %v2682
        %3307 = vmatpush1.bf16.msra.mxu0 %v2681
        %3308 = vmatprep.subr.bf16.mxu0 %v2686
        %3309 = vmatpush1.bf16.msra.mxu0 %v2685
        %3310 = vmatprep.subr.bf16.mxu0 %v2690
        %3311 = vmatpush1.bf16.msra.mxu0 %v2689
        %3312 = vmatprep.mubr.bf16.mxu0 %v1785
        %3313 = vmatmul.mubr.bf16.gmra.mrb[0].mxu0 %v1783
        %v3314 = vpop.f32.mrb[0].mxu0
        %v3315 = vadd.f32 %v3274, %v3314
        %v3316 = vpop.f32.mrb[0].mxu0
        %v3317 = vadd.f32 %v3276, %v3316
        %v3318 = vpop.f32.mrb[0].mxu0
        %v3319 = vpop.f32.mrb[0].mxu0
        %3320 = vdwg.mxu0
        %3321 = vmatprep.subr.bf16.mxu0 %v2694
        %3322 = vmatpush1.bf16.msra.mxu0 %v2693
        %3323 = vmatprep.subr.bf16.mxu0 %v2698
        %3324 = vmatpush1.bf16.msra.mxu0 %v2697
        %3325 = vmatprep.subr.bf16.mxu0 %v2702
        %3326 = vmatpush1.bf16.msra.mxu0 %v2701
        %3327 = vmatprep.subr.bf16.mxu0 %v2706
        %3328 = vmatpush1.bf16.msra.mxu0 %v2705
        %3329 = vmatprep.subr.bf16.mxu0 %v2710
        %3330 = vmatpush1.bf16.msra.mxu0 %v2709
        %3331 = vmatprep.subr.bf16.mxu0 %v2714
        %3332 = vmatpush1.bf16.msra.mxu0 %v2713
        %3333 = vmatprep.subr.bf16.mxu0 %v2718
        %3334 = vmatpush1.bf16.msra.mxu0 %v2717
        %3335 = vmatprep.subr.bf16.mxu0 %v2722
        %3336 = vmatpush1.bf16.msra.mxu0 %v2721
        %3337 = vmatprep.subr.bf16.mxu0 %v2726
        %3338 = vmatpush1.bf16.msra.mxu0 %v2725
        %3339 = vmatprep.subr.bf16.mxu0 %v2730
        %3340 = vmatpush1.bf16.msra.mxu0 %v2729
        %3341 = vmatprep.subr.bf16.mxu0 %v2734
        %3342 = vmatpush1.bf16.msra.mxu0 %v2733
        %3343 = vmatprep.subr.bf16.mxu0 %v2738
        %3344 = vmatpush1.bf16.msra.mxu0 %v2737
        %3345 = vmatprep.subr.bf16.mxu0 %v2742
        %3346 = vmatpush1.bf16.msra.mxu0 %v2741
        %3347 = vmatprep.subr.bf16.mxu0 %v2746
        %3348 = vmatpush1.bf16.msra.mxu0 %v2745
        %3349 = vmatprep.subr.bf16.mxu0 %v2750
        %3350 = vmatpush1.bf16.msra.mxu0 %v2749
        %3351 = vmatprep.subr.bf16.mxu0 %v2754
        %3352 = vmatpush1.bf16.msra.mxu0 %v2753
        %3353 = vmatprep.mubr.bf16.mxu0 %v1782
        %3354 = vmatmul.mubr.bf16.gmra.mrb[0].mxu0 %v1768
        %v3355 = vpop.f32.mrb[0].mxu0
        %v3356 = vadd.f32 %v3315, %v3355
        %v3357 = vpop.f32.mrb[0].mxu0
        %v3358 = vadd.f32 %v3317, %v3357
        %v3359 = vpop.f32.mrb[0].mxu0
        %v3360 = vpop.f32.mrb[0].mxu0
        %3361 = vdwg.mxu0
        %3362 = vmatprep.subr.bf16.mxu0 %v2758
        %3363 = vmatpush1.bf16.msra.mxu0 %v2757
        %3364 = vmatprep.subr.bf16.mxu0 %v2762
        %3365 = vmatpush1.bf16.msra.mxu0 %v2761
        %3366 = vmatprep.subr.bf16.mxu0 %v2766
        %3367 = vmatpush1.bf16.msra.mxu0 %v2765
        %3368 = vmatprep.subr.bf16.mxu0 %v2770
        %3369 = vmatpush1.bf16.msra.mxu0 %v2769
        %3370 = vmatprep.subr.bf16.mxu0 %v2774
        %3371 = vmatpush1.bf16.msra.mxu0 %v2773
        %3372 = vmatprep.subr.bf16.mxu0 %v2778
        %3373 = vmatpush1.bf16.msra.mxu0 %v2777
        %3374 = vmatprep.subr.bf16.mxu0 %v2782
        %3375 = vmatpush1.bf16.msra.mxu0 %v2781
        %3376 = vmatprep.subr.bf16.mxu0 %v2786
        %3377 = vmatpush1.bf16.msra.mxu0 %v2785
        %3378 = vmatprep.subr.bf16.mxu0 %v2790
        %3379 = vmatpush1.bf16.msra.mxu0 %v2789
        %3380 = vmatprep.subr.bf16.mxu0 %v2794
        %3381 = vmatpush1.bf16.msra.mxu0 %v2793
        %3382 = vmatprep.subr.bf16.mxu0 %v2798
        %3383 = vmatpush1.bf16.msra.mxu0 %v2797
        %3384 = vmatprep.subr.bf16.mxu0 %v2802
        %3385 = vmatpush1.bf16.msra.mxu0 %v2801
        %3386 = vmatprep.subr.bf16.mxu0 %v2806
        %3387 = vmatpush1.bf16.msra.mxu0 %v2805
        %3388 = vmatprep.subr.bf16.mxu0 %v2810
        %3389 = vmatpush1.bf16.msra.mxu0 %v2809
        %3390 = vmatprep.subr.bf16.mxu0 %v2814
        %3391 = vmatpush1.bf16.msra.mxu0 %v2813
        %3392 = vmatprep.subr.bf16.mxu0 %v2818
        %3393 = vmatpush1.bf16.msra.mxu0 %v2817
        %3394 = vmatprep.mubr.bf16.mxu0 %v1786
        %3395 = vmatmul.mubr.bf16.gmra.mrb[0].mxu0 %v1784
        %v3396 = vpop.f32.mrb[0].mxu0
        %v3397 = vadd.f32 %v3356, %v3396
        %v3398 = vpop.f32.mrb[0].mxu0
        %v3399 = vadd.f32 %v3358, %v3398
        %v3400 = vpop.f32.mrb[0].mxu0
        %v3401 = vpop.f32.mrb[0].mxu0
        %3402 = vdwg.mxu0
        %v3407 = vcombine.low %v3233, %v3235
        %v3408 = vcombine.low %v3397, %v3399
        %v3410 = vunpack.c.l.s4 1983009808
        %v3411 = vunpack.c.0.s8 %v3410
        %v3412 = vlaneseq
        %v3413 = vshrl.u32 %v3412, 7
        %v3414 = vsub.s32 %v3411, %v3413
        %v3415 = vrot.slane %v3407, %v3414
        %v3417 = vunpack.c.l.s4 1983009808
        %v3418 = vunpack.c.0.s8 %v3417
        %v3419 = vlaneseq
        %v3420 = vshrl.u32 %v3419, 7
        %v3421 = vsub.s32 %v3418, %v3420
        %v3422 = vrot.slane %v3408, %v3421
        %v3423 = vcombine.low %v3415, %v3422
        %v3425 = vadd.f32 %v1479, %v3423
        %3426 = vst [vmem:[#allocation2] sm:$0xff] %v3425
        %p3427 = scmp.eq.s32.totalorder %s25, 3
        // Predicated region
        $region93: #{lenet_forward.9} parent=83 // pred_check
          %p3428 = pneg %p3427
        $region94: #{lenet_forward.9} parent=83 // pred_check_branch
          %3430 = sbr.rel (%p3428) target = $region96
        $region95: #{lenet_forward.9} parent=83 // pred_region
          %v3431 = vld [vmem:[#allocation2] sm:$0xff]
          %v3432 = vld [vmem:[%s1445] sm:$0xf]
          %v3434 = vlaneseq
          %v3435 = vshrl.u32 %v3434, 7
          %v3436 = vsub.s32 0, %v3435
          %v3437 = vrot.slane %v3432, %v3436
          %v3438 = vlaneseq
          %v3439 = vshrl.u32 %v3438, 7
          %v3440 = vsub.s32 1, %v3439
          %v3441 = vrot.slane %v3432, %v3440
          %v3442 = vlaneseq
          %v3443 = vshrl.u32 %v3442, 7
          %v3444 = vsub.s32 2, %v3443
          %v3445 = vrot.slane %v3432, %v3444
          %v3446 = vlaneseq
          %v3447 = vshrl.u32 %v3446, 7
          %v3448 = vsub.s32 3, %v3447
          %v3449 = vrot.slane %v3432, %v3448
          %v3450 = vcombine.low %v3437, %v3441
          %v3451 = vcombine.low %v3445, %v3449
          %v3453 = vunpack.c.l.s4 1983009808
          %v3454 = vunpack.c.0.s8 %v3453
          %v3455 = vlaneseq
          %v3456 = vshrl.u32 %v3455, 7
          %v3457 = vsub.s32 %v3454, %v3456
          %v3458 = vrot.slane %v3450, %v3457
          %v3460 = vunpack.c.l.s4 1983009808
          %v3461 = vunpack.c.0.s8 %v3460
          %v3462 = vlaneseq
          %v3463 = vshrl.u32 %v3462, 7
          %v3464 = vsub.s32 %v3461, %v3463
          %v3465 = vrot.slane %v3451, %v3464
          %v3466 = vcombine.low %v3458, %v3465
          %v3468 = vadd.f32 %v3431, %v3466
          %v3469 = vld [vmem:[%s1463] sm:$0xff]
          %v3470 = vmul.f32 %v3468, %v3469
          %3471 = vst [vmem:[%s1422] sm:$0xff] %v3470
        $region96: #{lenet_forward.9} parent=83 // pred_fallthru
          _
        %s3472 = sand.u32 %s157, 1
        %s3473 = scalar_lea.sflag [#allocation5], %s3472
        %s3474 = sand.u32 %s157, 1
        %s3475 = smul.addr %s3474, 8
        %s3476 = scalar_lea.vmem [#allocation4], %s3475
        // Predicated region
        $region97: #{lenet_forward.9} parent=83 // pred_check
          %p3477 = pneg %p167
        $region98: #{lenet_forward.9} parent=83 // pred_check_branch
          %3479 = sbr.rel (%p3477) target = $region100
        $region99: #{lenet_forward.9} parent=83 // pred_region
          %s3480 = smul.u32 4, %s24
          %s3481 = ssub.s32 13, %s3480
          %p3482 = scmp.lt.s32.totalorder %s3481, 4
          %s3483 = scalar_select %p3482, %s3481, 4
          %s3484 = smul.u32 32, %s3483
          %s3486 = ssub.s32 128, %s3484
          %3487 = vsyncadd %s3473, %s3486
          %p3488 = scmp.ne.s32.totalorder 0, %s3484
          %s3489 = smul.addr %s23, 13
          %s3490 = sadd.s32 %s3480, %s3489
          %s3491 = smul.addr %s3490, 32
          %s3492 = scalar_lea.hbm %s4, %s3491
          %s3493 = smul.u32 %s3483, 2
          %s3494 = sshll.u32 %s3493, 4
          %s3495 = sshll.u32 %s3476, 4
          %s3496 = int_to_ptr.vmem [resolvable:$true] %s3495
          %3498 = dma.vmem_to_hbm [thread:$0]  (%p3488), %s3496, %s3494, %s3492, %s3473
        $region100: #{lenet_forward.9} parent=83 // pred_fallthru
          _
      $region84: #{lenet_forward.9} parent=5 // pred_fallthru
        _
      %p3499 = scmp.le.s32.totalorder 2, %s13
      // Predicated region
      $region101: #{lenet_forward.9} parent=5 // pred_check
        %p3500 = pneg %p3499
      $region102: #{lenet_forward.9} parent=5 // pred_check_branch
        %3502 = sbr.rel (%p3500) target = $region104
      $region103: #{lenet_forward.9} parent=5 // pred_region
        %s3503 = ssub.s32 %s13, 2
        // Predicated region
        $region105: #{lenet_forward.9} parent=103 // pred_check
          %p3504 = pneg %p173
        $region106: #{lenet_forward.9} parent=103 // pred_check_branch
          %3506 = sbr.rel (%p3504) target = $region108
        $region107: #{lenet_forward.9} parent=103 // pred_region
          %s3507 = sand.u32 %s158, 1
          %s3508 = scalar_lea.sflag [#allocation5], %s3507
          %s3509 = sand.u32 %s158, 1
          %s3510 = smul.addr %s3509, 8
          %s3511 = scalar_lea.vmem [#allocation4], %s3510
          %3512 = dma.done %s3508, 128
        $region108: #{lenet_forward.9} parent=103 // pred_fallthru
          _
      $region104: #{lenet_forward.9} parent=5 // pred_fallthru
        _
    $region6: #{lenet_forward.9} parent=1 // loop_footer
      %s17 = sadd.s32 1, %s13
    $region7: #{lenet_forward.9} parent=1 // loop_footer_branch
      %12 = sbr.rel target = $region3
    $region8: #{lenet_forward.9} parent=1 // loop_exit
      _
    %3513 = vsyncpa [#allocation5], 1
    %s3514 = scalar_lea.sflag [#allocation5], 1
    %3515 = vsyncpa %s3514, 1

</llo_original>
